<compile_context>
chip_gen: v7x
topology: tpu7x:2x2x1
jax: 0.10.0
libtpu: 0.0.40
codegen_flags: <defaults>
</compile_context>

<pallas_src>
import math

import jax
import jax.numpy as jnp
from jax import lax
from jax.experimental import pallas as pl
from jax.experimental.pallas import tpu as pltpu

# ----- small, module-consistent configuration (spec: H=256, 4 heads, 4 layers) -----
HIDDEN = 256
NUM_HEADS = 4
HEAD_DIM = HIDDEN // NUM_HEADS
FFN = 4 * HIDDEN
NUM_LAYERS = 4
VOCAB = 1000            # kept small so the (glue) embedding gather stays cheap
TYPE_VOCAB = 2
MAX_SEQ = 64
BATCH = 2
SEQ = 64
LN_EPS = 1e-12
VEC_W = max(FFN, 3 * HIDDEN)     # lane width of the packed per-layer vector slab


# ---------------------------------------------------------------------------
# Kernel helpers
# ---------------------------------------------------------------------------
def _layernorm(x, gamma, beta):
    # reuse (x - mu) once for the variance reduction (one centering pass)
    mu = jnp.mean(x, axis=-1, keepdims=True)
    xc = x - mu
    var = jnp.mean(xc * xc, axis=-1, keepdims=True)
    return xc * jax.lax.rsqrt(var + LN_EPS) * gamma + beta


def _gelu_exact(x):
    # matches torch.nn.GELU() (erf formulation)
    return 0.5 * x * (1.0 + jax.lax.erf(x * (1.0 / math.sqrt(2.0))))


# ---------------------------------------------------------------------------
# Fused kernel: embeddings-LN + all encoder layers; grid = (num_layers,)
# NOTE: the layer-carry (x read from o_ref, same out-block index every step)
# is only correct because the layer axis is the whole grid and is marked
# "arbitrary" — do not reorder the grid or mark it "parallel".
# ---------------------------------------------------------------------------
def bert_kernel(emb_ref, eln_ref, wqkv_ref, wo_ref, w1_ref, w2_ref, vec_ref,
                o_ref):
    layer = pl.program_id(0)

    # --- embedding sum + LayerNorm once, at the first layer step ---
    @pl.when(layer == 0)
    def _():
        o_ref[...] = _layernorm(emb_ref[...], eln_ref[0:1, :], eln_ref[1:2, :])

    x = o_ref[...]                                  # (M, H) f32, VMEM-resident

    # --- unpack the per-layer small-vector slab (one DMA per step) ---
    bqkv = vec_ref[0, 0:1, 0:3 * HIDDEN]            # (1, 3H)  (bq pre-scaled)
    b1   = vec_ref[0, 1:2, :]                       # (1, F)
    bo   = vec_ref[0, 2:3, 0:HIDDEN]
    b2   = vec_ref[0, 3:4, 0:HIDDEN]
    g1   = vec_ref[0, 4:5, 0:HIDDEN]
    be1  = vec_ref[0, 5:6, 0:HIDDEN]
    g2   = vec_ref[0, 6:7, 0:HIDDEN]
    be2  = vec_ref[0, 7:8, 0:HIDDEN]

    # --- fused QKV projection: one (M,H) x (H,3H) bf16 MXU matmul ---
    xb = x.astype(jnp.bfloat16)
    qkv = jnp.dot(xb, wqkv_ref[0],
                  preferred_element_type=jnp.float32) + bqkv   # (M, 3H) f32
    qkvb = qkv.astype(jnp.bfloat16)      # bf16 MXU operands for attention

    # --- per-head V @ Wo[h]: lane-dense (M, H) partial output projections ---
    vWo = []
    for h in range(NUM_HEADS):
        lo = h * HEAD_DIM
        v_h = qkvb[:, 2 * HIDDEN + lo:2 * HIDDEN + lo + HEAD_DIM]   # (M, Dh)
        wo_h = wo_ref[0, lo:lo + HEAD_DIM, :]                       # (Dh, H)
        vWo.append(jnp.dot(v_h, wo_h,
                           preferred_element_type=jnp.float32).astype(jnp.bfloat16))

    # --- block-diagonal attention over (batch, head); batch is folded in M ---
    rows = []
    for b in range(BATCH):                          # static unroll
        r = b * SEQ
        acc = None
        for h in range(NUM_HEADS):                  # static unroll
            lo = h * HEAD_DIM
            q = qkvb[r:r + SEQ, lo:lo + HEAD_DIM]
            k = qkvb[r:r + SEQ, HIDDEN + lo:HIDDEN + lo + HEAD_DIM]
            # q @ k.T via dot_general (transpose folded into MXU operand load)
            s = lax.dot_general(q, k, (((1,), (1,)), ((), ())),
                                preferred_element_type=jnp.float32)
            s = s - jnp.max(s, axis=-1, keepdims=True)
            p = jnp.exp(s)
            p = p / jnp.sum(p, axis=-1, keepdims=True)      # exact softmax
            c = jnp.dot(p.astype(jnp.bfloat16), vWo[h][r:r + SEQ, :],
                        preferred_element_type=jnp.float32)  # (S, H), lane-dense
            acc = c if acc is None else acc + c
        rows.append(acc)
    attn_out = jnp.concatenate(rows, axis=0) + bo   # (M, H) f32

    x = _layernorm(x + attn_out, g1, be1)

    # --- position-wise feed-forward ---
    h1 = jnp.dot(x.astype(jnp.bfloat16), w1_ref[0],
                 preferred_element_type=jnp.float32) + b1
    h1 = _gelu_exact(h1)
    ffn_out = jnp.dot(h1.astype(jnp.bfloat16), w2_ref[0],
                      preferred_element_type=jnp.float32) + b2
    o_ref[...] = _layernorm(x + ffn_out, g2, be2)


def _fused_encoder(emb, pk):
    M, H = emb.shape
    L = pk["wqkv"].shape[0]
    F = pk["w1"].shape[-1]

    res_spec = pl.BlockSpec((M, H), lambda l: (0, 0))       # resident activation

    def perlayer(*shape):
        return pl.BlockSpec((1,) + shape, lambda l: (l,) + (0,) * len(shape))

    return pl.pallas_call(
        bert_kernel,
        out_shape=jax.ShapeDtypeStruct((M, H), jnp.float32),
        grid=(L,),
        in_specs=[
            res_spec,                                  # summed embeddings (M,H)
            pl.BlockSpec((2, H), lambda l: (0, 0)),    # embedding LN [gamma; beta]
            perlayer(H, 3 * H),                        # fused Wqkv (bf16)
            perlayer(H, H),                            # Wo (bf16)
            perlayer(H, F),                            # W1 (bf16)
            perlayer(F, H),                            # W2 (bf16)
            perlayer(8, VEC_W),                        # packed per-layer vectors
        ],
        out_specs=res_spec,
        compiler_params=pltpu.CompilerParams(
            dimension_semantics=("arbitrary",)),       # layer carry => arbitrary
    )(emb, pk["eln"], pk["wqkv"], pk["wo"], pk["w1"], pk["w2"], pk["vec"])


@jax.jit
def bert_encoder_forward(input_ids, token_type_ids, pk):
    B, S = input_ids.shape
    we = jnp.take(pk["word_emb"], input_ids, axis=0)          # (B,S,H)  (glue)
    te = jnp.take(pk["type_emb"], token_type_ids, axis=0)     # (B,S,H)  (glue)
    emb = (we + te + pk["pos_emb"][:S][None]).reshape(B * S, HIDDEN)
    out = _fused_encoder(emb, pk)                             # (B*S, H)
    return out.reshape(B, S, HIDDEN)


# ---------------------------------------------------------------------------
# Parameter init (deterministic, PyTorch-layout-equivalent) and packing
# ---------------------------------------------------------------------------
def init_params(key):
    std = 0.02
    ks = jax.random.split(key, 4 + NUM_LAYERS)
    params = {
        "word_emb": jax.random.normal(ks[0], (VOCAB, HIDDEN), jnp.float32) * std,
        "pos_emb": jax.random.normal(ks[1], (MAX_SEQ, HIDDEN), jnp.float32) * std,
        "type_emb": jax.random.normal(ks[2], (TYPE_VOCAB, HIDDEN), jnp.float32) * std,
        "emb_ln_g": jnp.ones((1, HIDDEN), jnp.float32),
        "emb_ln_b": jnp.zeros((1, HIDDEN), jnp.float32),
        "layers": [],
    }
    for li in range(NUM_LAYERS):
        lk = jax.random.split(ks[4 + li], 12)
        layer = {
            "wq": jax.random.normal(lk[0], (HIDDEN, HIDDEN), jnp.float32) * std,
            "bq": jax.random.normal(lk[1], (1, HIDDEN), jnp.float32) * std,
            "wk": jax.random.normal(lk[2], (HIDDEN, HIDDEN), jnp.float32) * std,
            "bk": jax.random.normal(lk[3], (1, HIDDEN), jnp.float32) * std,
            "wv": jax.random.normal(lk[4], (HIDDEN, HIDDEN), jnp.float32) * std,
            "bv": jax.random.normal(lk[5], (1, HIDDEN), jnp.float32) * std,
            "wo": jax.random.normal(lk[6], (HIDDEN, HIDDEN), jnp.float32) * std,
            "bo": jax.random.normal(lk[7], (1, HIDDEN), jnp.float32) * std,
            "ln1_g": jnp.ones((1, HIDDEN), jnp.float32),
            "ln1_b": jnp.zeros((1, HIDDEN), jnp.float32),
            "w1": jax.random.normal(lk[8], (HIDDEN, FFN), jnp.float32) * std,
            "b1": jax.random.normal(lk[9], (1, FFN), jnp.float32) * std,
            "w2": jax.random.normal(lk[10], (FFN, HIDDEN), jnp.float32) * std,
            "b2": jax.random.normal(lk[11], (1, HIDDEN), jnp.float32) * std,
            "ln2_g": jnp.ones((1, HIDDEN), jnp.float32),
            "ln2_b": jnp.zeros((1, HIDDEN), jnp.float32),
        }
        params["layers"].append(layer)
    return params


def pack_params(params):
    """Stack per-layer weights along a leading layer dim, fuse QKV (with the
    1/sqrt(head_dim) scale folded into Wq / bq — exact, power-of-two scale),
    cast matmul weights to bf16, and pack all small per-layer vectors into a
    single (L, 8, 1024) f32 slab."""
    inv_scale = 1.0 / math.sqrt(HEAD_DIM)
    ls = params["layers"]
    st = lambda name: jnp.stack([lp[name] for lp in ls])

    def vec_slab(lp):
        rows = jnp.zeros((8, VEC_W), jnp.float32)
        bqkv = jnp.concatenate([lp["bq"] * inv_scale, lp["bk"], lp["bv"]], axis=-1)
        rows = rows.at[0, :3 * HIDDEN].set(bqkv[0])
        rows = rows.at[1, :FFN].set(lp["b1"][0])
        rows = rows.at[2, :HIDDEN].set(lp["bo"][0])
        rows = rows.at[3, :HIDDEN].set(lp["b2"][0])
        rows = rows.at[4, :HIDDEN].set(lp["ln1_g"][0])
        rows = rows.at[5, :HIDDEN].set(lp["ln1_b"][0])
        rows = rows.at[6, :HIDDEN].set(lp["ln2_g"][0])
        rows = rows.at[7, :HIDDEN].set(lp["ln2_b"][0])
        return rows

    return {
        "word_emb": params["word_emb"],
        "type_emb": params["type_emb"],
        "pos_emb": params["pos_emb"],
        "eln": jnp.concatenate([params["emb_ln_g"], params["emb_ln_b"]], axis=0),
        "wqkv": jnp.stack([jnp.concatenate(
            [lp["wq"] * inv_scale, lp["wk"], lp["wv"]], axis=-1)
            for lp in ls]).astype(jnp.bfloat16),                 # (L, H, 3H)
        "wo": st("wo").astype(jnp.bfloat16),                     # (L, H, H)
        "w1": st("w1").astype(jnp.bfloat16),                     # (L, H, F)
        "w2": st("w2").astype(jnp.bfloat16),                     # (L, F, H)
        "vec": jnp.stack([vec_slab(lp) for lp in ls]),           # (L, 8, 1024)
    }


# ---------------------------------------------------------------------------
# Pure-JAX f32 reference (mirrors the PyTorch module, inference semantics)
# ---------------------------------------------------------------------------
def _ref_layernorm(x, g, b):
    mu = jnp.mean(x, axis=-1, keepdims=True)
    var = jnp.mean((x - mu) ** 2, axis=-1, keepdims=True)
    return (x - mu) / jnp.sqrt(var + LN_EPS) * g + b


def bert_encoder_ref(input_ids, token_type_ids, params):
    B, S = input_ids.shape
    we = jnp.take(params["word_emb"], input_ids, axis=0)
    pe = params["pos_emb"][:S][None]
    te = jnp.take(params["type_emb"], token_type_ids, axis=0)
    x = _ref_layernorm(we + pe + te, params["emb_ln_g"], params["emb_ln_b"])
    for p in params["layers"]:
        q = x @ p["wq"] + p["bq"]
        k = x @ p["wk"] + p["bk"]
        v = x @ p["wv"] + p["bv"]
        q = q.reshape(B, S, NUM_HEADS, HEAD_DIM).transpose(0, 2, 1, 3)
        k = k.reshape(B, S, NUM_HEADS, HEAD_DIM).transpose(0, 2, 1, 3)
        v = v.reshape(B, S, NUM_HEADS, HEAD_DIM).transpose(0, 2, 1, 3)
        scores = jnp.einsum("bhqd,bhkd->bhqk", q, k) / math.sqrt(HEAD_DIM)
        attn = jax.nn.softmax(scores, axis=-1)
        ctx = jnp.einsum("bhqk,bhkd->bhqd", attn, v)
        ctx = ctx.transpose(0, 2, 1, 3).reshape(B, S, HIDDEN)
        attn_out = ctx @ p["wo"] + p["bo"]
        x = _ref_layernorm(x + attn_out, p["ln1_g"], p["ln1_b"])
        h1 = jax.nn.gelu(x @ p["w1"] + p["b1"], approximate=False)
        ffn_out = h1 @ p["w2"] + p["b2"]
        x = _ref_layernorm(x + ffn_out, p["ln2_g"], p["ln2_b"])
    return x


# ---------------------------------------------------------------------------
if __name__ == "__main__":
    key = jax.random.PRNGKey(0)
    kp, kids, ktype = jax.random.split(key, 3)
    params = init_params(kp)
    packed = pack_params(params)

    input_ids = jax.random.randint(kids, (BATCH, SEQ), 0, VOCAB, dtype=jnp.int32)
    token_type_ids = jax.random.randint(ktype, (BATCH, SEQ), 0, TYPE_VOCAB,
                                        dtype=jnp.int32)

    out = jax.block_until_ready(bert_encoder_forward(input_ids, token_type_ids, packed))
    ref = jax.block_until_ready(bert_encoder_ref(input_ids, token_type_ids, params))

    assert out.shape == (BATCH, SEQ, HIDDEN)
    # bf16 MXU operands (f32 accumulate) vs. the pure-f32 reference: expected
    # error ~1e-3 over 4 layers; 2e-2 tolerance catches real bugs (O(0.1+)).
    max_err = float(jnp.max(jnp.abs(out - ref)))
    assert jnp.allclose(out, ref, atol=2e-2, rtol=2e-2), \
        f"mismatch vs JAX f32 reference (max abs err = {max_err:.4e})"

    print("KERNEL_OK")
</pallas_src>

<mosaic_0001>
module attributes {stable_mosaic.version = 11 : i64} {
  func.func @bert_kernel(%arg0: i32, %arg1: memref<128x256xf32, #tpu.memory_space<vmem>>, %arg2: memref<2x256xf32, #tpu.memory_space<vmem>>, %arg3: memref<1x256x768xbf16, #tpu.memory_space<vmem>>, %arg4: memref<1x256x256xbf16, #tpu.memory_space<vmem>>, %arg5: memref<1x256x1024xbf16, #tpu.memory_space<vmem>>, %arg6: memref<1x1024x256xbf16, #tpu.memory_space<vmem>>, %arg7: memref<1x8x1024xf32, #tpu.memory_space<vmem>>, %arg8: memref<128x256xf32, #tpu.memory_space<vmem>>) attributes {dimension_semantics = [#tpu.dimension_semantics<arbitrary>], iteration_bounds = array<i64: 4>, scalar_prefetch = 0 : i64, scratch_operands = 0 : i64, tpu.core_type = #tpu.core_type<tc>, window_params = [{pipeline_mode = #tpu.pipeline_mode<synchronous>, transform_indices = @transform_0, window_bounds = array<i64: 128, 256>}, {pipeline_mode = #tpu.pipeline_mode<synchronous>, transform_indices = @transform_1, window_bounds = array<i64: 2, 256>}, {transform_indices = @transform_2, window_bounds = array<i64: 1, 256, 768>}, {transform_indices = @transform_3, window_bounds = array<i64: 1, 256, 256>}, {transform_indices = @transform_4, window_bounds = array<i64: 1, 256, 1024>}, {transform_indices = @transform_5, window_bounds = array<i64: 1, 1024, 256>}, {transform_indices = @transform_6, window_bounds = array<i64: 1, 8, 1024>}, {pipeline_mode = #tpu.pipeline_mode<synchronous>, transform_indices = @transform_7, window_bounds = array<i64: 128, 256>}]} {
    %c0_i32 = arith.constant 0 : i32
    %0 = arith.cmpi eq, %arg0, %c0_i32 : i32
    %1 = arith.extui %0 : i1 to i32
    %c0_i32_0 = arith.constant 0 : i32
    %2 = arith.cmpi ne, %1, %c0_i32_0 : i32
    scf.if %2 {
      %c0_90 = arith.constant 0 : index
      %c0_91 = arith.constant 0 : index
      %239 = vector.load %arg1[%c0_90, %c0_91] : memref<128x256xf32, #tpu.memory_space<vmem>>, vector<128x256xf32>
      %c0_92 = arith.constant 0 : index
      %c0_93 = arith.constant 0 : index
      %240 = vector.load %arg2[%c0_92, %c0_93] : memref<2x256xf32, #tpu.memory_space<vmem>>, vector<1x256xf32>
      %c1_94 = arith.constant 1 : index
      %c0_95 = arith.constant 0 : index
      %241 = vector.load %arg2[%c1_94, %c0_95] : memref<2x256xf32, #tpu.memory_space<vmem>>, vector<1x256xf32>
      %cst_96 = arith.constant dense<0.000000e+00> : vector<128xf32>
      %242 = vector.multi_reduction <add>, %239, %cst_96 [1] : vector<128x256xf32> to vector<128xf32>
      %243 = vector.shape_cast %242 : vector<128xf32> to vector<128x1xf32>
      %cst_97 = arith.constant 2.560000e+02 : f32
      %244 = vector.broadcast %cst_97 : f32 to vector<128x1xf32>
      %245 = arith.divf %243, %244 : vector<128x1xf32>
      %246 = vector.broadcast %245 : vector<128x1xf32> to vector<128x256xf32>
      %247 = arith.subf %239, %246 : vector<128x256xf32>
      %248 = arith.mulf %247, %247 : vector<128x256xf32>
      %cst_98 = arith.constant dense<0.000000e+00> : vector<128xf32>
      %249 = vector.multi_reduction <add>, %248, %cst_98 [1] : vector<128x256xf32> to vector<128xf32>
      %250 = vector.shape_cast %249 : vector<128xf32> to vector<128x1xf32>
      %cst_99 = arith.constant 2.560000e+02 : f32
      %251 = vector.broadcast %cst_99 : f32 to vector<128x1xf32>
      %252 = arith.divf %250, %251 : vector<128x1xf32>
      %cst_100 = arith.constant 9.99999996E-13 : f32
      %253 = vector.broadcast %cst_100 : f32 to vector<128x1xf32>
      %254 = arith.addf %252, %253 : vector<128x1xf32>
      %255 = math.rsqrt %254 : vector<128x1xf32>
      %256 = vector.broadcast %255 : vector<128x1xf32> to vector<128x256xf32>
      %257 = arith.mulf %247, %256 : vector<128x256xf32>
      %258 = vector.broadcast %240 : vector<1x256xf32> to vector<128x256xf32>
      %259 = arith.mulf %257, %258 : vector<128x256xf32>
      %260 = vector.broadcast %241 : vector<1x256xf32> to vector<128x256xf32>
      %261 = arith.addf %259, %260 : vector<128x256xf32>
      %c0_101 = arith.constant 0 : index
      %c0_102 = arith.constant 0 : index
      %262 = vector.load %arg8[%c0_101, %c0_102] : memref<128x256xf32, #tpu.memory_space<vmem>>, vector<128x256xf32>
      tpu.vector_store %arg8[%c0_101, %c0_102], %261 {strides = array<i32>} : memref<128x256xf32, #tpu.memory_space<vmem>>, vector<128x256xf32>,
    } else {
    }
    %c0 = arith.constant 0 : index
    %c0_1 = arith.constant 0 : index
    %3 = vector.load %arg8[%c0, %c0_1] : memref<128x256xf32, #tpu.memory_space<vmem>>, vector<128x256xf32>
    %c0_2 = arith.constant 0 : index
    %c0_3 = arith.constant 0 : index
    %c0_4 = arith.constant 0 : index
    %4 = vector.load %arg7[%c0_2, %c0_3, %c0_4] : memref<1x8x1024xf32, #tpu.memory_space<vmem>>, vector<1x1x768xf32>
    %5 = vector.shape_cast %4 : vector<1x1x768xf32> to vector<1x768xf32>
    %c0_5 = arith.constant 0 : index
    %c1 = arith.constant 1 : index
    %c0_6 = arith.constant 0 : index
    %6 = vector.load %arg7[%c0_5, %c1, %c0_6] : memref<1x8x1024xf32, #tpu.memory_space<vmem>>, vector<1x1x1024xf32>
    %7 = vector.shape_cast %6 : vector<1x1x1024xf32> to vector<1x1024xf32>
    %c0_7 = arith.constant 0 : index
    %c2 = arith.constant 2 : index
    %c0_8 = arith.constant 0 : index
    %8 = vector.load %arg7[%c0_7, %c2, %c0_8] : memref<1x8x1024xf32, #tpu.memory_space<vmem>>, vector<1x1x256xf32>
    %9 = vector.shape_cast %8 : vector<1x1x256xf32> to vector<1x256xf32>
    %c0_9 = arith.constant 0 : index
    %c3 = arith.constant 3 : index
    %c0_10 = arith.constant 0 : index
    %10 = vector.load %arg7[%c0_9, %c3, %c0_10] : memref<1x8x1024xf32, #tpu.memory_space<vmem>>, vector<1x1x256xf32>
    %11 = vector.shape_cast %10 : vector<1x1x256xf32> to vector<1x256xf32>
    %c0_11 = arith.constant 0 : index
    %c4 = arith.constant 4 : index
    %c0_12 = arith.constant 0 : index
    %12 = vector.load %arg7[%c0_11, %c4, %c0_12] : memref<1x8x1024xf32, #tpu.memory_space<vmem>>, vector<1x1x256xf32>
    %13 = vector.shape_cast %12 : vector<1x1x256xf32> to vector<1x256xf32>
    %c0_13 = arith.constant 0 : index
    %c5 = arith.constant 5 : index
    %c0_14 = arith.constant 0 : index
    %14 = vector.load %arg7[%c0_13, %c5, %c0_14] : memref<1x8x1024xf32, #tpu.memory_space<vmem>>, vector<1x1x256xf32>
    %15 = vector.shape_cast %14 : vector<1x1x256xf32> to vector<1x256xf32>
    %c0_15 = arith.constant 0 : index
    %c6 = arith.constant 6 : index
    %c0_16 = arith.constant 0 : index
    %16 = vector.load %arg7[%c0_15, %c6, %c0_16] : memref<1x8x1024xf32, #tpu.memory_space<vmem>>, vector<1x1x256xf32>
    %17 = vector.shape_cast %16 : vector<1x1x256xf32> to vector<1x256xf32>
    %c0_17 = arith.constant 0 : index
    %c7 = arith.constant 7 : index
    %c0_18 = arith.constant 0 : index
    %18 = vector.load %arg7[%c0_17, %c7, %c0_18] : memref<1x8x1024xf32, #tpu.memory_space<vmem>>, vector<1x1x256xf32>
    %19 = vector.shape_cast %18 : vector<1x1x256xf32> to vector<1x256xf32>
    %20 = arith.truncf %3 : vector<128x256xf32> to vector<128x256xbf16>
    %c0_19 = arith.constant 0 : index
    %c0_20 = arith.constant 0 : index
    %c0_21 = arith.constant 0 : index
    %21 = vector.load %arg3[%c0_19, %c0_20, %c0_21] : memref<1x256x768xbf16, #tpu.memory_space<vmem>>, vector<1x256x768xbf16>
    %22 = vector.shape_cast %21 : vector<1x256x768xbf16> to vector<256x768xbf16>
    %cst = arith.constant dense<0.000000e+00> : vector<128x768xf32>
    %23 = tpu.matmul %20, %22, %cst {dimension_numbers = #tpu.dot_dimension_numbers<[1], [0], [0], [1], [0, 0, 1, 1], [], []>} : vector<128x256xbf16>, vector<256x768xbf16>, vector<128x768xf32> -> vector<128x768xf32>
    %24 = vector.broadcast %5 : vector<1x768xf32> to vector<128x768xf32>
    %25 = arith.addf %23, %24 : vector<128x768xf32>
    %26 = arith.truncf %25 : vector<128x768xf32> to vector<128x768xbf16>
    %27 = vector.extract_strided_slice %26 {offsets = [0, 512], sizes = [128, 64], strides = [1, 1]} : vector<128x768xbf16> to vector<128x64xbf16>
    %c0_22 = arith.constant 0 : index
    %c0_23 = arith.constant 0 : index
    %c0_24 = arith.constant 0 : index
    %28 = vector.load %arg4[%c0_22, %c0_23, %c0_24] : memref<1x256x256xbf16, #tpu.memory_space<vmem>>, vector<1x64x256xbf16>
    %29 = vector.shape_cast %28 : vector<1x64x256xbf16> to vector<64x256xbf16>
    %cst_25 = arith.constant dense<0.000000e+00> : vector<128x256xf32>
    %30 = tpu.matmul %27, %29, %cst_25 {dimension_numbers = #tpu.dot_dimension_numbers<[1], [0], [0], [1], [0, 0, 1, 1], [], []>} : vector<128x64xbf16>, vector<64x256xbf16>, vector<128x256xf32> -> vector<128x256xf32>
    %31 = arith.truncf %30 : vector<128x256xf32> to vector<128x256xbf16>
    %32 = vector.extract_strided_slice %26 {offsets = [0, 576], sizes = [128, 64], strides = [1, 1]} : vector<128x768xbf16> to vector<128x64xbf16>
    %c0_26 = arith.constant 0 : index
    %c64 = arith.constant 64 : index
    %c0_27 = arith.constant 0 : index
    %33 = vector.load %arg4[%c0_26, %c64, %c0_27] : memref<1x256x256xbf16, #tpu.memory_space<vmem>>, vector<1x64x256xbf16>
    %34 = vector.shape_cast %33 : vector<1x64x256xbf16> to vector<64x256xbf16>
    %cst_28 = arith.constant dense<0.000000e+00> : vector<128x256xf32>
    %35 = tpu.matmul %32, %34, %cst_28 {dimension_numbers = #tpu.dot_dimension_numbers<[1], [0], [0], [1], [0, 0, 1, 1], [], []>} : vector<128x64xbf16>, vector<64x256xbf16>, vector<128x256xf32> -> vector<128x256xf32>
    %36 = arith.truncf %35 : vector<128x256xf32> to vector<128x256xbf16>
    %37 = vector.extract_strided_slice %26 {offsets = [0, 640], sizes = [128, 64], strides = [1, 1]} : vector<128x768xbf16> to vector<128x64xbf16>
    %c0_29 = arith.constant 0 : index
    %c128 = arith.constant 128 : index
    %c0_30 = arith.constant 0 : index
    %38 = vector.load %arg4[%c0_29, %c128, %c0_30] : memref<1x256x256xbf16, #tpu.memory_space<vmem>>, vector<1x64x256xbf16>
    %39 = vector.shape_cast %38 : vector<1x64x256xbf16> to vector<64x256xbf16>
    %cst_31 = arith.constant dense<0.000000e+00> : vector<128x256xf32>
    %40 = tpu.matmul %37, %39, %cst_31 {dimension_numbers = #tpu.dot_dimension_numbers<[1], [0], [0], [1], [0, 0, 1, 1], [], []>} : vector<128x64xbf16>, vector<64x256xbf16>, vector<128x256xf32> -> vector<128x256xf32>
    %41 = arith.truncf %40 : vector<128x256xf32> to vector<128x256xbf16>
    %42 = vector.extract_strided_slice %26 {offsets = [0, 704], sizes = [128, 64], strides = [1, 1]} : vector<128x768xbf16> to vector<128x64xbf16>
    %c0_32 = arith.constant 0 : index
    %c192 = arith.constant 192 : index
    %c0_33 = arith.constant 0 : index
    %43 = vector.load %arg4[%c0_32, %c192, %c0_33] : memref<1x256x256xbf16, #tpu.memory_space<vmem>>, vector<1x64x256xbf16>
    %44 = vector.shape_cast %43 : vector<1x64x256xbf16> to vector<64x256xbf16>
    %cst_34 = arith.constant dense<0.000000e+00> : vector<128x256xf32>
    %45 = tpu.matmul %42, %44, %cst_34 {dimension_numbers = #tpu.dot_dimension_numbers<[1], [0], [0], [1], [0, 0, 1, 1], [], []>} : vector<128x64xbf16>, vector<64x256xbf16>, vector<128x256xf32> -> vector<128x256xf32>
    %46 = arith.truncf %45 : vector<128x256xf32> to vector<128x256xbf16>
    %47 = vector.extract_strided_slice %26 {offsets = [0, 0], sizes = [64, 64], strides = [1, 1]} : vector<128x768xbf16> to vector<64x64xbf16>
    %48 = vector.extract_strided_slice %26 {offsets = [0, 256], sizes = [64, 64], strides = [1, 1]} : vector<128x768xbf16> to vector<64x64xbf16>
    %cst_35 = arith.constant dense<0.000000e+00> : vector<64x64xf32>
    %49 = tpu.matmul %47, %48, %cst_35 {dimension_numbers = #tpu.dot_dimension_numbers<[1], [1], [0], [0], [0, 0, 1, 0], [], []>} : vector<64x64xbf16>, vector<64x64xbf16>, vector<64x64xf32> -> vector<64x64xf32>
    %cst_36 = arith.constant dense<0xFF800000> : vector<64xf32>
    %50 = vector.multi_reduction <maximumf>, %49, %cst_36 [1] : vector<64x64xf32> to vector<64xf32>
    %51 = vector.shape_cast %50 : vector<64xf32> to vector<64x1xf32>
    %52 = vector.broadcast %51 : vector<64x1xf32> to vector<64x64xf32>
    %53 = arith.subf %49, %52 : vector<64x64xf32>
    %54 = math.exp %53 : vector<64x64xf32>
    %cst_37 = arith.constant dense<0.000000e+00> : vector<64xf32>
    %55 = vector.multi_reduction <add>, %54, %cst_37 [1] : vector<64x64xf32> to vector<64xf32>
    %56 = vector.shape_cast %55 : vector<64xf32> to vector<64x1xf32>
    %57 = vector.broadcast %56 : vector<64x1xf32> to vector<64x64xf32>
    %58 = arith.divf %54, %57 : vector<64x64xf32>
    %59 = arith.truncf %58 : vector<64x64xf32> to vector<64x64xbf16>
    %60 = vector.extract_strided_slice %31 {offsets = [0, 0], sizes = [64, 256], strides = [1, 1]} : vector<128x256xbf16> to vector<64x256xbf16>
    %cst_38 = arith.constant dense<0.000000e+00> : vector<64x256xf32>
    %61 = tpu.matmul %59, %60, %cst_38 {dimension_numbers = #tpu.dot_dimension_numbers<[1], [0], [0], [1], [0, 0, 1, 1], [], []>} : vector<64x64xbf16>, vector<64x256xbf16>, vector<64x256xf32> -> vector<64x256xf32>
    %62 = vector.extract_strided_slice %26 {offsets = [0, 64], sizes = [64, 64], strides = [1, 1]} : vector<128x768xbf16> to vector<64x64xbf16>
    %63 = vector.extract_strided_slice %26 {offsets = [0, 320], sizes = [64, 64], strides = [1, 1]} : vector<128x768xbf16> to vector<64x64xbf16>
    %cst_39 = arith.constant dense<0.000000e+00> : vector<64x64xf32>
    %64 = tpu.matmul %62, %63, %cst_39 {dimension_numbers = #tpu.dot_dimension_numbers<[1], [1], [0], [0], [0, 0, 1, 0], [], []>} : vector<64x64xbf16>, vector<64x64xbf16>, vector<64x64xf32> -> vector<64x64xf32>
    %cst_40 = arith.constant dense<0xFF800000> : vector<64xf32>
    %65 = vector.multi_reduction <maximumf>, %64, %cst_40 [1] : vector<64x64xf32> to vector<64xf32>
    %66 = vector.shape_cast %65 : vector<64xf32> to vector<64x1xf32>
    %67 = vector.broadcast %66 : vector<64x1xf32> to vector<64x64xf32>
    %68 = arith.subf %64, %67 : vector<64x64xf32>
    %69 = math.exp %68 : vector<64x64xf32>
    %cst_41 = arith.constant dense<0.000000e+00> : vector<64xf32>
    %70 = vector.multi_reduction <add>, %69, %cst_41 [1] : vector<64x64xf32> to vector<64xf32>
    %71 = vector.shape_cast %70 : vector<64xf32> to vector<64x1xf32>
    %72 = vector.broadcast %71 : vector<64x1xf32> to vector<64x64xf32>
    %73 = arith.divf %69, %72 : vector<64x64xf32>
    %74 = arith.truncf %73 : vector<64x64xf32> to vector<64x64xbf16>
    %75 = vector.extract_strided_slice %36 {offsets = [0, 0], sizes = [64, 256], strides = [1, 1]} : vector<128x256xbf16> to vector<64x256xbf16>
    %cst_42 = arith.constant dense<0.000000e+00> : vector<64x256xf32>
    %76 = tpu.matmul %74, %75, %cst_42 {dimension_numbers = #tpu.dot_dimension_numbers<[1], [0], [0], [1], [0, 0, 1, 1], [], []>} : vector<64x64xbf16>, vector<64x256xbf16>, vector<64x256xf32> -> vector<64x256xf32>
    %77 = arith.addf %61, %76 : vector<64x256xf32>
    %78 = vector.extract_strided_slice %26 {offsets = [0, 128], sizes = [64, 64], strides = [1, 1]} : vector<128x768xbf16> to vector<64x64xbf16>
    %79 = vector.extract_strided_slice %26 {offsets = [0, 384], sizes = [64, 64], strides = [1, 1]} : vector<128x768xbf16> to vector<64x64xbf16>
    %cst_43 = arith.constant dense<0.000000e+00> : vector<64x64xf32>
    %80 = tpu.matmul %78, %79, %cst_43 {dimension_numbers = #tpu.dot_dimension_numbers<[1], [1], [0], [0], [0, 0, 1, 0], [], []>} : vector<64x64xbf16>, vector<64x64xbf16>, vector<64x64xf32> -> vector<64x64xf32>
    %cst_44 = arith.constant dense<0xFF800000> : vector<64xf32>
    %81 = vector.multi_reduction <maximumf>, %80, %cst_44 [1] : vector<64x64xf32> to vector<64xf32>
    %82 = vector.shape_cast %81 : vector<64xf32> to vector<64x1xf32>
    %83 = vector.broadcast %82 : vector<64x1xf32> to vector<64x64xf32>
    %84 = arith.subf %80, %83 : vector<64x64xf32>
    %85 = math.exp %84 : vector<64x64xf32>
    %cst_45 = arith.constant dense<0.000000e+00> : vector<64xf32>
    %86 = vector.multi_reduction <add>, %85, %cst_45 [1] : vector<64x64xf32> to vector<64xf32>
    %87 = vector.shape_cast %86 : vector<64xf32> to vector<64x1xf32>
    %88 = vector.broadcast %87 : vector<64x1xf32> to vector<64x64xf32>
    %89 = arith.divf %85, %88 : vector<64x64xf32>
    %90 = arith.truncf %89 : vector<64x64xf32> to vector<64x64xbf16>
    %91 = vector.extract_strided_slice %41 {offsets = [0, 0], sizes = [64, 256], strides = [1, 1]} : vector<128x256xbf16> to vector<64x256xbf16>
    %cst_46 = arith.constant dense<0.000000e+00> : vector<64x256xf32>
    %92 = tpu.matmul %90, %91, %cst_46 {dimension_numbers = #tpu.dot_dimension_numbers<[1], [0], [0], [1], [0, 0, 1, 1], [], []>} : vector<64x64xbf16>, vector<64x256xbf16>, vector<64x256xf32> -> vector<64x256xf32>
    %93 = arith.addf %77, %92 : vector<64x256xf32>
    %94 = vector.extract_strided_slice %26 {offsets = [0, 192], sizes = [64, 64], strides = [1, 1]} : vector<128x768xbf16> to vector<64x64xbf16>
    %95 = vector.extract_strided_slice %26 {offsets = [0, 448], sizes = [64, 64], strides = [1, 1]} : vector<128x768xbf16> to vector<64x64xbf16>
    %cst_47 = arith.constant dense<0.000000e+00> : vector<64x64xf32>
    %96 = tpu.matmul %94, %95, %cst_47 {dimension_numbers = #tpu.dot_dimension_numbers<[1], [1], [0], [0], [0, 0, 1, 0], [], []>} : vector<64x64xbf16>, vector<64x64xbf16>, vector<64x64xf32> -> vector<64x64xf32>
    %cst_48 = arith.constant dense<0xFF800000> : vector<64xf32>
    %97 = vector.multi_reduction <maximumf>, %96, %cst_48 [1] : vector<64x64xf32> to vector<64xf32>
    %98 = vector.shape_cast %97 : vector<64xf32> to vector<64x1xf32>
    %99 = vector.broadcast %98 : vector<64x1xf32> to vector<64x64xf32>
    %100 = arith.subf %96, %99 : vector<64x64xf32>
    %101 = math.exp %100 : vector<64x64xf32>
    %cst_49 = arith.constant dense<0.000000e+00> : vector<64xf32>
    %102 = vector.multi_reduction <add>, %101, %cst_49 [1] : vector<64x64xf32> to vector<64xf32>
    %103 = vector.shape_cast %102 : vector<64xf32> to vector<64x1xf32>
    %104 = vector.broadcast %103 : vector<64x1xf32> to vector<64x64xf32>
    %105 = arith.divf %101, %104 : vector<64x64xf32>
    %106 = arith.truncf %105 : vector<64x64xf32> to vector<64x64xbf16>
    %107 = vector.extract_strided_slice %46 {offsets = [0, 0], sizes = [64, 256], strides = [1, 1]} : vector<128x256xbf16> to vector<64x256xbf16>
    %cst_50 = arith.constant dense<0.000000e+00> : vector<64x256xf32>
    %108 = tpu.matmul %106, %107, %cst_50 {dimension_numbers = #tpu.dot_dimension_numbers<[1], [0], [0], [1], [0, 0, 1, 1], [], []>} : vector<64x64xbf16>, vector<64x256xbf16>, vector<64x256xf32> -> vector<64x256xf32>
    %109 = arith.addf %93, %108 : vector<64x256xf32>
    %110 = vector.extract_strided_slice %26 {offsets = [64, 0], sizes = [64, 64], strides = [1, 1]} : vector<128x768xbf16> to vector<64x64xbf16>
    %111 = vector.extract_strided_slice %26 {offsets = [64, 256], sizes = [64, 64], strides = [1, 1]} : vector<128x768xbf16> to vector<64x64xbf16>
    %cst_51 = arith.constant dense<0.000000e+00> : vector<64x64xf32>
    %112 = tpu.matmul %110, %111, %cst_51 {dimension_numbers = #tpu.dot_dimension_numbers<[1], [1], [0], [0], [0, 0, 1, 0], [], []>} : vector<64x64xbf16>, vector<64x64xbf16>, vector<64x64xf32> -> vector<64x64xf32>
    %cst_52 = arith.constant dense<0xFF800000> : vector<64xf32>
    %113 = vector.multi_reduction <maximumf>, %112, %cst_52 [1] : vector<64x64xf32> to vector<64xf32>
    %114 = vector.shape_cast %113 : vector<64xf32> to vector<64x1xf32>
    %115 = vector.broadcast %114 : vector<64x1xf32> to vector<64x64xf32>
    %116 = arith.subf %112, %115 : vector<64x64xf32>
    %117 = math.exp %116 : vector<64x64xf32>
    %cst_53 = arith.constant dense<0.000000e+00> : vector<64xf32>
    %118 = vector.multi_reduction <add>, %117, %cst_53 [1] : vector<64x64xf32> to vector<64xf32>
    %119 = vector.shape_cast %118 : vector<64xf32> to vector<64x1xf32>
    %120 = vector.broadcast %119 : vector<64x1xf32> to vector<64x64xf32>
    %121 = arith.divf %117, %120 : vector<64x64xf32>
    %122 = arith.truncf %121 : vector<64x64xf32> to vector<64x64xbf16>
    %123 = vector.extract_strided_slice %31 {offsets = [64, 0], sizes = [64, 256], strides = [1, 1]} : vector<128x256xbf16> to vector<64x256xbf16>
    %cst_54 = arith.constant dense<0.000000e+00> : vector<64x256xf32>
    %124 = tpu.matmul %122, %123, %cst_54 {dimension_numbers = #tpu.dot_dimension_numbers<[1], [0], [0], [1], [0, 0, 1, 1], [], []>} : vector<64x64xbf16>, vector<64x256xbf16>, vector<64x256xf32> -> vector<64x256xf32>
    %125 = vector.extract_strided_slice %26 {offsets = [64, 64], sizes = [64, 64], strides = [1, 1]} : vector<128x768xbf16> to vector<64x64xbf16>
    %126 = vector.extract_strided_slice %26 {offsets = [64, 320], sizes = [64, 64], strides = [1, 1]} : vector<128x768xbf16> to vector<64x64xbf16>
    %cst_55 = arith.constant dense<0.000000e+00> : vector<64x64xf32>
    %127 = tpu.matmul %125, %126, %cst_55 {dimension_numbers = #tpu.dot_dimension_numbers<[1], [1], [0], [0], [0, 0, 1, 0], [], []>} : vector<64x64xbf16>, vector<64x64xbf16>, vector<64x64xf32> -> vector<64x64xf32>
    %cst_56 = arith.constant dense<0xFF800000> : vector<64xf32>
    %128 = vector.multi_reduction <maximumf>, %127, %cst_56 [1] : vector<64x64xf32> to vector<64xf32>
    %129 = vector.shape_cast %128 : vector<64xf32> to vector<64x1xf32>
    %130 = vector.broadcast %129 : vector<64x1xf32> to vector<64x64xf32>
    %131 = arith.subf %127, %130 : vector<64x64xf32>
    %132 = math.exp %131 : vector<64x64xf32>
    %cst_57 = arith.constant dense<0.000000e+00> : vector<64xf32>
    %133 = vector.multi_reduction <add>, %132, %cst_57 [1] : vector<64x64xf32> to vector<64xf32>
    %134 = vector.shape_cast %133 : vector<64xf32> to vector<64x1xf32>
    %135 = vector.broadcast %134 : vector<64x1xf32> to vector<64x64xf32>
    %136 = arith.divf %132, %135 : vector<64x64xf32>
    %137 = arith.truncf %136 : vector<64x64xf32> to vector<64x64xbf16>
    %138 = vector.extract_strided_slice %36 {offsets = [64, 0], sizes = [64, 256], strides = [1, 1]} : vector<128x256xbf16> to vector<64x256xbf16>
    %cst_58 = arith.constant dense<0.000000e+00> : vector<64x256xf32>
    %139 = tpu.matmul %137, %138, %cst_58 {dimension_numbers = #tpu.dot_dimension_numbers<[1], [0], [0], [1], [0, 0, 1, 1], [], []>} : vector<64x64xbf16>, vector<64x256xbf16>, vector<64x256xf32> -> vector<64x256xf32>
    %140 = arith.addf %124, %139 : vector<64x256xf32>
    %141 = vector.extract_strided_slice %26 {offsets = [64, 128], sizes = [64, 64], strides = [1, 1]} : vector<128x768xbf16> to vector<64x64xbf16>
    %142 = vector.extract_strided_slice %26 {offsets = [64, 384], sizes = [64, 64], strides = [1, 1]} : vector<128x768xbf16> to vector<64x64xbf16>
    %cst_59 = arith.constant dense<0.000000e+00> : vector<64x64xf32>
    %143 = tpu.matmul %141, %142, %cst_59 {dimension_numbers = #tpu.dot_dimension_numbers<[1], [1], [0], [0], [0, 0, 1, 0], [], []>} : vector<64x64xbf16>, vector<64x64xbf16>, vector<64x64xf32> -> vector<64x64xf32>
    %cst_60 = arith.constant dense<0xFF800000> : vector<64xf32>
    %144 = vector.multi_reduction <maximumf>, %143, %cst_60 [1] : vector<64x64xf32> to vector<64xf32>
    %145 = vector.shape_cast %144 : vector<64xf32> to vector<64x1xf32>
    %146 = vector.broadcast %145 : vector<64x1xf32> to vector<64x64xf32>
    %147 = arith.subf %143, %146 : vector<64x64xf32>
    %148 = math.exp %147 : vector<64x64xf32>
    %cst_61 = arith.constant dense<0.000000e+00> : vector<64xf32>
    %149 = vector.multi_reduction <add>, %148, %cst_61 [1] : vector<64x64xf32> to vector<64xf32>
    %150 = vector.shape_cast %149 : vector<64xf32> to vector<64x1xf32>
    %151 = vector.broadcast %150 : vector<64x1xf32> to vector<64x64xf32>
    %152 = arith.divf %148, %151 : vector<64x64xf32>
    %153 = arith.truncf %152 : vector<64x64xf32> to vector<64x64xbf16>
    %154 = vector.extract_strided_slice %41 {offsets = [64, 0], sizes = [64, 256], strides = [1, 1]} : vector<128x256xbf16> to vector<64x256xbf16>
    %cst_62 = arith.constant dense<0.000000e+00> : vector<64x256xf32>
    %155 = tpu.matmul %153, %154, %cst_62 {dimension_numbers = #tpu.dot_dimension_numbers<[1], [0], [0], [1], [0, 0, 1, 1], [], []>} : vector<64x64xbf16>, vector<64x256xbf16>, vector<64x256xf32> -> vector<64x256xf32>
    %156 = arith.addf %140, %155 : vector<64x256xf32>
    %157 = vector.extract_strided_slice %26 {offsets = [64, 192], sizes = [64, 64], strides = [1, 1]} : vector<128x768xbf16> to vector<64x64xbf16>
    %158 = vector.extract_strided_slice %26 {offsets = [64, 448], sizes = [64, 64], strides = [1, 1]} : vector<128x768xbf16> to vector<64x64xbf16>
    %cst_63 = arith.constant dense<0.000000e+00> : vector<64x64xf32>
    %159 = tpu.matmul %157, %158, %cst_63 {dimension_numbers = #tpu.dot_dimension_numbers<[1], [1], [0], [0], [0, 0, 1, 0], [], []>} : vector<64x64xbf16>, vector<64x64xbf16>, vector<64x64xf32> -> vector<64x64xf32>
    %cst_64 = arith.constant dense<0xFF800000> : vector<64xf32>
    %160 = vector.multi_reduction <maximumf>, %159, %cst_64 [1] : vector<64x64xf32> to vector<64xf32>
    %161 = vector.shape_cast %160 : vector<64xf32> to vector<64x1xf32>
    %162 = vector.broadcast %161 : vector<64x1xf32> to vector<64x64xf32>
    %163 = arith.subf %159, %162 : vector<64x64xf32>
    %164 = math.exp %163 : vector<64x64xf32>
    %cst_65 = arith.constant dense<0.000000e+00> : vector<64xf32>
    %165 = vector.multi_reduction <add>, %164, %cst_65 [1] : vector<64x64xf32> to vector<64xf32>
    %166 = vector.shape_cast %165 : vector<64xf32> to vector<64x1xf32>
    %167 = vector.broadcast %166 : vector<64x1xf32> to vector<64x64xf32>
    %168 = arith.divf %164, %167 : vector<64x64xf32>
    %169 = arith.truncf %168 : vector<64x64xf32> to vector<64x64xbf16>
    %170 = vector.extract_strided_slice %46 {offsets = [64, 0], sizes = [64, 256], strides = [1, 1]} : vector<128x256xbf16> to vector<64x256xbf16>
    %cst_66 = arith.constant dense<0.000000e+00> : vector<64x256xf32>
    %171 = tpu.matmul %169, %170, %cst_66 {dimension_numbers = #tpu.dot_dimension_numbers<[1], [0], [0], [1], [0, 0, 1, 1], [], []>} : vector<64x64xbf16>, vector<64x256xbf16>, vector<64x256xf32> -> vector<64x256xf32>
    %172 = arith.addf %156, %171 : vector<64x256xf32>
    %173 = tpu.concatenate %109, %172 in 0 : vector<64x256xf32>, vector<64x256xf32> -> vector<128x256xf32>
    %174 = vector.broadcast %9 : vector<1x256xf32> to vector<128x256xf32>
    %175 = arith.addf %173, %174 : vector<128x256xf32>
    %176 = arith.addf %3, %175 : vector<128x256xf32>
    %cst_67 = arith.constant dense<0.000000e+00> : vector<128xf32>
    %177 = vector.multi_reduction <add>, %176, %cst_67 [1] : vector<128x256xf32> to vector<128xf32>
    %178 = vector.shape_cast %177 : vector<128xf32> to vector<128x1xf32>
    %cst_68 = arith.constant 2.560000e+02 : f32
    %179 = vector.broadcast %cst_68 : f32 to vector<128x1xf32>
    %180 = arith.divf %178, %179 : vector<128x1xf32>
    %181 = vector.broadcast %180 : vector<128x1xf32> to vector<128x256xf32>
    %182 = arith.subf %176, %181 : vector<128x256xf32>
    %183 = arith.mulf %182, %182 : vector<128x256xf32>
    %cst_69 = arith.constant dense<0.000000e+00> : vector<128xf32>
    %184 = vector.multi_reduction <add>, %183, %cst_69 [1] : vector<128x256xf32> to vector<128xf32>
    %185 = vector.shape_cast %184 : vector<128xf32> to vector<128x1xf32>
    %cst_70 = arith.constant 2.560000e+02 : f32
    %186 = vector.broadcast %cst_70 : f32 to vector<128x1xf32>
    %187 = arith.divf %185, %186 : vector<128x1xf32>
    %cst_71 = arith.constant 9.99999996E-13 : f32
    %188 = vector.broadcast %cst_71 : f32 to vector<128x1xf32>
    %189 = arith.addf %187, %188 : vector<128x1xf32>
    %190 = math.rsqrt %189 : vector<128x1xf32>
    %191 = vector.broadcast %190 : vector<128x1xf32> to vector<128x256xf32>
    %192 = arith.mulf %182, %191 : vector<128x256xf32>
    %193 = vector.broadcast %13 : vector<1x256xf32> to vector<128x256xf32>
    %194 = arith.mulf %192, %193 : vector<128x256xf32>
    %195 = vector.broadcast %15 : vector<1x256xf32> to vector<128x256xf32>
    %196 = arith.addf %194, %195 : vector<128x256xf32>
    %197 = arith.truncf %196 : vector<128x256xf32> to vector<128x256xbf16>
    %c0_72 = arith.constant 0 : index
    %c0_73 = arith.constant 0 : index
    %c0_74 = arith.constant 0 : index
    %198 = vector.load %arg5[%c0_72, %c0_73, %c0_74] : memref<1x256x1024xbf16, #tpu.memory_space<vmem>>, vector<1x256x1024xbf16>
    %199 = vector.shape_cast %198 : vector<1x256x1024xbf16> to vector<256x1024xbf16>
    %cst_75 = arith.constant dense<0.000000e+00> : vector<128x1024xf32>
    %200 = tpu.matmul %197, %199, %cst_75 {dimension_numbers = #tpu.dot_dimension_numbers<[1], [0], [0], [1], [0, 0, 1, 1], [], []>} : vector<128x256xbf16>, vector<256x1024xbf16>, vector<128x1024xf32> -> vector<128x1024xf32>
    %201 = vector.broadcast %7 : vector<1x1024xf32> to vector<128x1024xf32>
    %202 = arith.addf %200, %201 : vector<128x1024xf32>
    %cst_76 = arith.constant 5.000000e-01 : f32
    %203 = vector.broadcast %cst_76 : f32 to vector<128x1024xf32>
    %204 = arith.mulf %203, %202 : vector<128x1024xf32>
    %cst_77 = arith.constant 0.707106769 : f32
    %205 = vector.broadcast %cst_77 : f32 to vector<128x1024xf32>
    %206 = arith.mulf %202, %205 : vector<128x1024xf32>
    %207 = math.erf %206 : vector<128x1024xf32>
    %cst_78 = arith.constant 1.000000e+00 : f32
    %208 = vector.broadcast %cst_78 : f32 to vector<128x1024xf32>
    %209 = arith.addf %208, %207 : vector<128x1024xf32>
    %210 = arith.mulf %204, %209 : vector<128x1024xf32>
    %211 = arith.truncf %210 : vector<128x1024xf32> to vector<128x1024xbf16>
    %c0_79 = arith.constant 0 : index
    %c0_80 = arith.constant 0 : index
    %c0_81 = arith.constant 0 : index
    %212 = vector.load %arg6[%c0_79, %c0_80, %c0_81] : memref<1x1024x256xbf16, #tpu.memory_space<vmem>>, vector<1x1024x256xbf16>
    %213 = vector.shape_cast %212 : vector<1x1024x256xbf16> to vector<1024x256xbf16>
    %cst_82 = arith.constant dense<0.000000e+00> : vector<128x256xf32>
    %214 = tpu.matmul %211, %213, %cst_82 {dimension_numbers = #tpu.dot_dimension_numbers<[1], [0], [0], [1], [0, 0, 1, 1], [], []>} : vector<128x1024xbf16>, vector<1024x256xbf16>, vector<128x256xf32> -> vector<128x256xf32>
    %215 = vector.broadcast %11 : vector<1x256xf32> to vector<128x256xf32>
    %216 = arith.addf %214, %215 : vector<128x256xf32>
    %217 = arith.addf %196, %216 : vector<128x256xf32>
    %cst_83 = arith.constant dense<0.000000e+00> : vector<128xf32>
    %218 = vector.multi_reduction <add>, %217, %cst_83 [1] : vector<128x256xf32> to vector<128xf32>
    %219 = vector.shape_cast %218 : vector<128xf32> to vector<128x1xf32>
    %cst_84 = arith.constant 2.560000e+02 : f32
    %220 = vector.broadcast %cst_84 : f32 to vector<128x1xf32>
    %221 = arith.divf %219, %220 : vector<128x1xf32>
    %222 = vector.broadcast %221 : vector<128x1xf32> to vector<128x256xf32>
    %223 = arith.subf %217, %222 : vector<128x256xf32>
    %224 = arith.mulf %223, %223 : vector<128x256xf32>
    %cst_85 = arith.constant dense<0.000000e+00> : vector<128xf32>
    %225 = vector.multi_reduction <add>, %224, %cst_85 [1] : vector<128x256xf32> to vector<128xf32>
    %226 = vector.shape_cast %225 : vector<128xf32> to vector<128x1xf32>
    %cst_86 = arith.constant 2.560000e+02 : f32
    %227 = vector.broadcast %cst_86 : f32 to vector<128x1xf32>
    %228 = arith.divf %226, %227 : vector<128x1xf32>
    %cst_87 = arith.constant 9.99999996E-13 : f32
    %229 = vector.broadcast %cst_87 : f32 to vector<128x1xf32>
    %230 = arith.addf %228, %229 : vector<128x1xf32>
    %231 = math.rsqrt %230 : vector<128x1xf32>
    %232 = vector.broadcast %231 : vector<128x1xf32> to vector<128x256xf32>
    %233 = arith.mulf %223, %232 : vector<128x256xf32>
    %234 = vector.broadcast %17 : vector<1x256xf32> to vector<128x256xf32>
    %235 = arith.mulf %233, %234 : vector<128x256xf32>
    %236 = vector.broadcast %19 : vector<1x256xf32> to vector<128x256xf32>
    %237 = arith.addf %235, %236 : vector<128x256xf32>
    %c0_88 = arith.constant 0 : index
    %c0_89 = arith.constant 0 : index
    %238 = vector.load %arg8[%c0_88, %c0_89] : memref<128x256xf32, #tpu.memory_space<vmem>>, vector<128x256xf32>
    tpu.vector_store %arg8[%c0_88, %c0_89], %237 {strides = array<i32>} : memref<128x256xf32, #tpu.memory_space<vmem>>, vector<128x256xf32>,
    return
  }
  func.func @transform_0(%arg0: i32) -> (i32, i32) {
    %c0_i32 = arith.constant 0 : i32
    %c0_i32_0 = arith.constant 0 : i32
    %c0_i32_1 = arith.constant 0 : i32
    return %c0_i32, %c0_i32_0 : i32, i32
  }
  func.func @transform_1(%arg0: i32) -> (i32, i32) {
    %c0_i32 = arith.constant 0 : i32
    %c0_i32_0 = arith.constant 0 : i32
    %c0_i32_1 = arith.constant 0 : i32
    return %c0_i32, %c0_i32_0 : i32, i32
  }
  func.func @transform_2(%arg0: i32) -> (i32, i32, i32) {
    %c0_i32 = arith.constant 0 : i32
    %c0_i32_0 = arith.constant 0 : i32
    %c0_i32_1 = arith.constant 0 : i32
    return %arg0, %c0_i32, %c0_i32_0 : i32, i32, i32
  }
  func.func @transform_3(%arg0: i32) -> (i32, i32, i32) {
    %c0_i32 = arith.constant 0 : i32
    %c0_i32_0 = arith.constant 0 : i32
    %c0_i32_1 = arith.constant 0 : i32
    return %arg0, %c0_i32, %c0_i32_0 : i32, i32, i32
  }
  func.func @transform_4(%arg0: i32) -> (i32, i32, i32) {
    %c0_i32 = arith.constant 0 : i32
    %c0_i32_0 = arith.constant 0 : i32
    %c0_i32_1 = arith.constant 0 : i32
    return %arg0, %c0_i32, %c0_i32_0 : i32, i32, i32
  }
  func.func @transform_5(%arg0: i32) -> (i32, i32, i32) {
    %c0_i32 = arith.constant 0 : i32
    %c0_i32_0 = arith.constant 0 : i32
    %c0_i32_1 = arith.constant 0 : i32
    return %arg0, %c0_i32, %c0_i32_0 : i32, i32, i32
  }
  func.func @transform_6(%arg0: i32) -> (i32, i32, i32) {
    %c0_i32 = arith.constant 0 : i32
    %c0_i32_0 = arith.constant 0 : i32
    %c0_i32_1 = arith.constant 0 : i32
    return %arg0, %c0_i32, %c0_i32_0 : i32, i32, i32
  }
  func.func @transform_7(%arg0: i32) -> (i32, i32) {
    %c0_i32 = arith.constant 0 : i32
    %c0_i32_0 = arith.constant 0 : i32
    %c0_i32_1 = arith.constant 0 : i32
    return %c0_i32, %c0_i32_0 : i32, i32
  }
}

</mosaic_0001>

<llo_original>
// kernel: bert_encoder_forward.1
$region0: #{bert_encoder_forward.1}
  #allocation0 [shape = 'u32[]', space=smem, size = 0x4, offset = 0x4, fixed_abs, tag = 'smem constant byte address 0x4 - core index']
  #allocation1 [shape = 'u32[144,128]{1,0:T(1,128)}', space=vmem, size = 0x12000, scoped, tag = 'internal scratch']
  %s0 = inlined_call_operand.vmem [shape: f32[128,256], index: 0, kind: input, shape index: {}]
  %s1 = inlined_call_operand.vmem [shape: f32[2,256], index: 1, kind: input, shape index: {}]
  %s2 = inlined_call_operand.hbm [shape: bf16[4,256,768], index: 2, kind: input, shape index: {}]
  %s3 = inlined_call_operand.vmem [shape: bf16[4,256,256], index: 3, kind: input, shape index: {}]
  %s4 = inlined_call_operand.vmem [shape: bf16[4,256,1024], index: 4, kind: input, shape index: {}]
  %s5 = inlined_call_operand.hbm [shape: bf16[4,1024,256], index: 5, kind: input, shape index: {}]
  %s6 = inlined_call_operand.vmem [shape: f32[4,8,1024], index: 6, kind: input, shape index: {}]
  %s7 = inlined_call_operand.hbm [shape: f32[128,256], index: 7, kind: output, shape index: {}]
  %s8 = sld [smem:[#allocation0]]
  $region73: #{bert_encoder_forward.1} parent=0
    _
  %s10 = ssub.s32 1, %s8
  %s11 = scalar_select 0, %s10, %s8
  $region1: #{bert_encoder_forward.1} parent=0
    #allocation2 [shape = 'u8[786432]{0}', space=vmem, size = 0xc0000, scoped, tag = 'input window, operand 2']
    #allocation3 [shape = 's32[2]{0}', space=sflag, size = 0x8, scoped, tag = 'scoped memory for bert_encoder_forward.1']
    #allocation4 [shape = 's32[2]{0}', space=sflag, size = 0x8, scoped, tag = 'scoped memory for bert_encoder_forward.1']
    #allocation5 [shape = 'u8[1048576]{0}', space=vmem, size = 0x100000, scoped, tag = 'input window, operand 5']
    #allocation6 [shape = 's32[2]{0}', space=sflag, size = 0x8, scoped, tag = 'scoped memory for bert_encoder_forward.1']
    #allocation7 [shape = 'u8[131072]{0}', space=vmem, size = 0x20000, scoped, tag = 'output window, operand 0, single buffered']
    %12 = vsyncpa [#allocation3], 0
    %s13 = scalar_lea.sflag [#allocation3], 1
    %14 = vsyncpa %s13, 0
    %15 = vsyncpa [#allocation6], 0
    %s16 = scalar_lea.sflag [#allocation6], 1
    %17 = vsyncpa %s16, 0
    %18 = vsyncpa [#allocation4], 0
    loop: start=0, step=1, limit=6
    $region2: #{bert_encoder_forward.1} parent=1 // loop_pre_header
      _
    $region3: #{bert_encoder_forward.1} parent=1 // loop_header
      %s20 = sphi 0, %s24
      %p21 = scmp.ge.s32.totalorder %s20, 6
      %s28 = sphi 0, %s28
      %s30 = sphi 0, %s28
      %s31 = sphi 0, %s30
      %s45 = sphi 0, %s31
      %s49 = sphi 0, %s49
      %s51 = sphi 0, %s49
      %s52 = sphi 0, %s51
      %s66 = sphi 0, %s52
      %s72 = sphi 0, %s74
      %s75 = sphi 0, %s72
      %s76 = sphi 0, %s75
      %s92 = sphi 0, %s76
      %s98 = sphi 0, %s100
      %s101 = sphi 0, %s98
      %s102 = sphi 0, %s101
      %s118 = sphi 0, %s102
      %s124 = sphi 0, %s126
      %s127 = sphi 0, %s124
      %s128 = sphi 0, %s127
      %s144 = sphi 0, %s128
      %s150 = sphi 0, %s152
      %s153 = sphi 0, %s150
      %s154 = sphi 0, %s153
      %s170 = sphi 0, %s154
      %s176 = sphi 0, %s178
      %s179 = sphi 0, %s176
      %s180 = sphi 0, %s179
      %s196 = sphi 0, %s180
      %s200 = sphi 0, %s200
      %s202 = sphi 0, %s200
      %s203 = sphi 0, %s202
      %s217 = sphi 0, %s203
    $region4: #{bert_encoder_forward.1} parent=1 // loop_header_branch
      %23 = sbr.rel (%p21) target = $region8
    $region5: #{bert_encoder_forward.1} parent=1 // loop_body
      %s25 = ssub.s32 %s20, 1
      %s26 = ssub.s32 %s20, 2
      %s27 = sadd.s32 %s20, 1
      %s29 = sadd.s32 %s28, 1
      %p32 = scmp.eq.s32.totalorder %s20, 3
      %p33 = scmp.ne.s32.totalorder %s28, %s30
      %p34 = scmp.eq.s32.totalorder %s20, 0
      %p35 = por %p33, %p34
      %p36 = scmp.ne.s32.totalorder %s28, %s30
      %p37 = scmp.eq.s32.totalorder %s25, 3
      %p38 = por %p36, %p37
      %p39 = scmp.ne.s32.totalorder %s30, %s31
      %p40 = scmp.eq.s32.totalorder %s25, 0
      %p41 = por %p39, %p40
      %p42 = scmp.ne.s32.totalorder %s30, %s31
      %p43 = scmp.eq.s32.totalorder %s26, 3
      %p44 = por %p42, %p43
      %p46 = scmp.ne.s32.totalorder %s31, %s45
      %p47 = scmp.eq.s32.totalorder %s26, 0
      %p48 = por %p46, %p47
      %s50 = sadd.s32 %s49, 1
      %p53 = scmp.eq.s32.totalorder %s20, 3
      %p54 = scmp.ne.s32.totalorder %s49, %s51
      %p55 = scmp.eq.s32.totalorder %s20, 0
      %p56 = por %p54, %p55
      %p57 = scmp.ne.s32.totalorder %s49, %s51
      %p58 = scmp.eq.s32.totalorder %s25, 3
      %p59 = por %p57, %p58
      %p60 = scmp.ne.s32.totalorder %s51, %s52
      %p61 = scmp.eq.s32.totalorder %s25, 0
      %p62 = por %p60, %p61
      %p63 = scmp.ne.s32.totalorder %s51, %s52
      %p64 = scmp.eq.s32.totalorder %s26, 3
      %p65 = por %p63, %p64
      %p67 = scmp.ne.s32.totalorder %s52, %s66
      %p68 = scmp.eq.s32.totalorder %s26, 0
      %p69 = por %p67, %p68
      %s70 = ssub.s32 %s20, %s27
      %p71 = scmp.eq.s32.totalorder %s70, 0
      %s73 = sadd.s32 %s72, 1
      %s74 = scalar_select %p71, %s72, %s73
      %p77 = pneg %p71
      %p78 = scmp.eq.s32.totalorder %s20, 3
      %p79 = por %p77, %p78
      %p80 = scmp.ne.s32.totalorder %s72, %s75
      %p81 = scmp.eq.s32.totalorder %s20, 0
      %p82 = por %p80, %p81
      %p83 = scmp.ne.s32.totalorder %s72, %s75
      %p84 = scmp.eq.s32.totalorder %s25, 3
      %p85 = por %p83, %p84
      %p86 = scmp.ne.s32.totalorder %s75, %s76
      %p87 = scmp.eq.s32.totalorder %s25, 0
      %p88 = por %p86, %p87
      %p89 = scmp.ne.s32.totalorder %s75, %s76
      %p90 = scmp.eq.s32.totalorder %s26, 3
      %p91 = por %p89, %p90
      %p93 = scmp.ne.s32.totalorder %s76, %s92
      %p94 = scmp.eq.s32.totalorder %s26, 0
      %p95 = por %p93, %p94
      %s96 = ssub.s32 %s20, %s27
      %p97 = scmp.eq.s32.totalorder %s96, 0
      %s99 = sadd.s32 %s98, 1
      %s100 = scalar_select %p97, %s98, %s99
      %p103 = pneg %p97
      %p104 = scmp.eq.s32.totalorder %s20, 3
      %p105 = por %p103, %p104
      %p106 = scmp.ne.s32.totalorder %s98, %s101
      %p107 = scmp.eq.s32.totalorder %s20, 0
      %p108 = por %p106, %p107
      %p109 = scmp.ne.s32.totalorder %s98, %s101
      %p110 = scmp.eq.s32.totalorder %s25, 3
      %p111 = por %p109, %p110
      %p112 = scmp.ne.s32.totalorder %s101, %s102
      %p113 = scmp.eq.s32.totalorder %s25, 0
      %p114 = por %p112, %p113
      %p115 = scmp.ne.s32.totalorder %s101, %s102
      %p116 = scmp.eq.s32.totalorder %s26, 3
      %p117 = por %p115, %p116
      %p119 = scmp.ne.s32.totalorder %s102, %s118
      %p120 = scmp.eq.s32.totalorder %s26, 0
      %p121 = por %p119, %p120
      %s122 = ssub.s32 %s20, %s27
      %p123 = scmp.eq.s32.totalorder %s122, 0
      %s125 = sadd.s32 %s124, 1
      %s126 = scalar_select %p123, %s124, %s125
      %p129 = pneg %p123
      %p130 = scmp.eq.s32.totalorder %s20, 3
      %p131 = por %p129, %p130
      %p132 = scmp.ne.s32.totalorder %s124, %s127
      %p133 = scmp.eq.s32.totalorder %s20, 0
      %p134 = por %p132, %p133
      %p135 = scmp.ne.s32.totalorder %s124, %s127
      %p136 = scmp.eq.s32.totalorder %s25, 3
      %p137 = por %p135, %p136
      %p138 = scmp.ne.s32.totalorder %s127, %s128
      %p139 = scmp.eq.s32.totalorder %s25, 0
      %p140 = por %p138, %p139
      %p141 = scmp.ne.s32.totalorder %s127, %s128
      %p142 = scmp.eq.s32.totalorder %s26, 3
      %p143 = por %p141, %p142
      %p145 = scmp.ne.s32.totalorder %s128, %s144
      %p146 = scmp.eq.s32.totalorder %s26, 0
      %p147 = por %p145, %p146
      %s148 = ssub.s32 %s20, %s27
      %p149 = scmp.eq.s32.totalorder %s148, 0
      %s151 = sadd.s32 %s150, 1
      %s152 = scalar_select %p149, %s150, %s151
      %p155 = pneg %p149
      %p156 = scmp.eq.s32.totalorder %s20, 3
      %p157 = por %p155, %p156
      %p158 = scmp.ne.s32.totalorder %s150, %s153
      %p159 = scmp.eq.s32.totalorder %s20, 0
      %p160 = por %p158, %p159
      %p161 = scmp.ne.s32.totalorder %s150, %s153
      %p162 = scmp.eq.s32.totalorder %s25, 3
      %p163 = por %p161, %p162
      %p164 = scmp.ne.s32.totalorder %s153, %s154
      %p165 = scmp.eq.s32.totalorder %s25, 0
      %p166 = por %p164, %p165
      %p167 = scmp.ne.s32.totalorder %s153, %s154
      %p168 = scmp.eq.s32.totalorder %s26, 3
      %p169 = por %p167, %p168
      %p171 = scmp.ne.s32.totalorder %s154, %s170
      %p172 = scmp.eq.s32.totalorder %s26, 0
      %p173 = por %p171, %p172
      %s174 = ssub.s32 %s20, %s27
      %p175 = scmp.eq.s32.totalorder %s174, 0
      %s177 = sadd.s32 %s176, 1
      %s178 = scalar_select %p175, %s176, %s177
      %p181 = pneg %p175
      %p182 = scmp.eq.s32.totalorder %s20, 3
      %p183 = por %p181, %p182
      %p184 = scmp.ne.s32.totalorder %s176, %s179
      %p185 = scmp.eq.s32.totalorder %s20, 0
      %p186 = por %p184, %p185
      %p187 = scmp.ne.s32.totalorder %s176, %s179
      %p188 = scmp.eq.s32.totalorder %s25, 3
      %p189 = por %p187, %p188
      %p190 = scmp.ne.s32.totalorder %s179, %s180
      %p191 = scmp.eq.s32.totalorder %s25, 0
      %p192 = por %p190, %p191
      %p193 = scmp.ne.s32.totalorder %s179, %s180
      %p194 = scmp.eq.s32.totalorder %s26, 3
      %p195 = por %p193, %p194
      %p197 = scmp.ne.s32.totalorder %s180, %s196
      %p198 = scmp.eq.s32.totalorder %s26, 0
      %p199 = por %p197, %p198
      %s201 = sadd.s32 %s200, 1
      %p204 = scmp.eq.s32.totalorder %s20, 3
      %p205 = scmp.ne.s32.totalorder %s200, %s202
      %p206 = scmp.eq.s32.totalorder %s20, 0
      %p207 = por %p205, %p206
      %p208 = scmp.ne.s32.totalorder %s200, %s202
      %p209 = scmp.eq.s32.totalorder %s25, 3
      %p210 = por %p208, %p209
      %p211 = scmp.ne.s32.totalorder %s202, %s203
      %p212 = scmp.eq.s32.totalorder %s25, 0
      %p213 = por %p211, %p212
      %p214 = scmp.ne.s32.totalorder %s202, %s203
      %p215 = scmp.eq.s32.totalorder %s26, 3
      %p216 = por %p214, %p215
      %p218 = scmp.ne.s32.totalorder %s203, %s217
      %p219 = scmp.eq.s32.totalorder %s26, 0
      %p220 = por %p218, %p219
      %p221 = scmp.le.s32.totalorder 1, %s20
      %p222 = scmp.lt.s32.totalorder %s20, 5
      %p223 = pnand %p221, %p222
      %p224 = pneg %p223
      // Predicated region
      $region9: #{bert_encoder_forward.1} parent=5 // pred_check
        _
      $region10: #{bert_encoder_forward.1} parent=5 // pred_check_branch
        %226 = sbr.rel (%p223) target = $region12
      $region11: #{bert_encoder_forward.1} parent=5 // pred_region
        %s227 = ssub.s32 %s20, 1
        // Predicated region
        $region13: #{bert_encoder_forward.1} parent=11 // pred_check
          %p228 = pneg %p41
        $region14: #{bert_encoder_forward.1} parent=11 // pred_check_branch
          %230 = sbr.rel (%p228) target = $region16
        $region15: #{bert_encoder_forward.1} parent=11 // pred_region
          _
        $region16: #{bert_encoder_forward.1} parent=11 // pred_fallthru
          _
        // Predicated region
        $region17: #{bert_encoder_forward.1} parent=11 // pred_check
          %p231 = pneg %p62
        $region18: #{bert_encoder_forward.1} parent=11 // pred_check_branch
          %233 = sbr.rel (%p231) target = $region20
        $region19: #{bert_encoder_forward.1} parent=11 // pred_region
          _
        $region20: #{bert_encoder_forward.1} parent=11 // pred_fallthru
          _
      $region12: #{bert_encoder_forward.1} parent=5 // pred_fallthru
        _
      %p234 = scmp.lt.s32.totalorder %s20, 4
      // Predicated region
      $region21: #{bert_encoder_forward.1} parent=5 // pred_check
        %p235 = pneg %p234
      $region22: #{bert_encoder_forward.1} parent=5 // pred_check_branch
        %237 = sbr.rel (%p235) target = $region24
      $region23: #{bert_encoder_forward.1} parent=5 // pred_region
        // Predicated region
        $region25: #{bert_encoder_forward.1} parent=23 // pred_check
          %p238 = pneg %p82
        $region26: #{bert_encoder_forward.1} parent=23 // pred_check_branch
          %240 = sbr.rel (%p238) target = $region28
        $region27: #{bert_encoder_forward.1} parent=23 // pred_region
          %s241 = sand.u32 %s72, 1
          %s242 = scalar_lea.sflag [#allocation3], %s241
          %s243 = sand.u32 %s72, 1
          %s244 = smul.addr %s243, 768
          %s245 = scalar_lea.vmem [#allocation2], %s244
          %s247 = ssub.s32 12288, 12288
          %248 = vsyncadd %s242, %s247
          %s249 = smul.addr %s20, 192
          %s250 = smul.addr %s249, 64
          %s251 = scalar_lea.hbm %s2, %s250
          %s252 = sshll.u32 %s245, 4
          %s253 = int_to_ptr.vmem [resolvable:$true] %s252
          %258 = dma.hbm_to_vmem [thread:$0]  %s251, 12288, %s253, %s242, 384, 384, 24
        $region28: #{bert_encoder_forward.1} parent=23 // pred_fallthru
          _
        // Predicated region
        $region29: #{bert_encoder_forward.1} parent=23 // pred_check
          %p259 = pneg %p108
        $region30: #{bert_encoder_forward.1} parent=23 // pred_check_branch
          %261 = sbr.rel (%p259) target = $region32
        $region31: #{bert_encoder_forward.1} parent=23 // pred_region
          %p262 = scmp.lt.s32.totalorder %s20, 3
          %s263 = scalar_select %p262, %s20, 3
          %s264 = smul.addr %s263, 64
          %s265 = smul.addr %s264, 4
          %s266 = scalar_lea.vmem %s3, %s265
        $region32: #{bert_encoder_forward.1} parent=23 // pred_fallthru
          _
        // Predicated region
        $region33: #{bert_encoder_forward.1} parent=23 // pred_check
          %p267 = pneg %p134
        $region34: #{bert_encoder_forward.1} parent=23 // pred_check_branch
          %269 = sbr.rel (%p267) target = $region36
        $region35: #{bert_encoder_forward.1} parent=23 // pred_region
          %p270 = scmp.lt.s32.totalorder %s20, 3
          %s271 = scalar_select %p270, %s20, 3
          %s272 = smul.addr %s271, 256
          %s273 = smul.addr %s272, 4
          %s274 = scalar_lea.vmem %s4, %s273
        $region36: #{bert_encoder_forward.1} parent=23 // pred_fallthru
          _
        // Predicated region
        $region37: #{bert_encoder_forward.1} parent=23 // pred_check
          %p275 = pneg %p160
        $region38: #{bert_encoder_forward.1} parent=23 // pred_check_branch
          %277 = sbr.rel (%p275) target = $region40
        $region39: #{bert_encoder_forward.1} parent=23 // pred_region
          %s278 = sand.u32 %s150, 1
          %s279 = scalar_lea.sflag [#allocation6], %s278
          %s280 = sand.u32 %s150, 1
          %s281 = smul.addr %s280, 1024
          %s282 = scalar_lea.vmem [#allocation5], %s281
          %s284 = ssub.s32 16384, 16384
          %285 = vsyncadd %s279, %s284
          %s286 = smul.addr %s20, 256
          %s287 = smul.addr %s286, 64
          %s288 = scalar_lea.hbm %s5, %s287
          %s289 = sshll.u32 %s282, 4
          %s290 = int_to_ptr.vmem [resolvable:$true] %s289
          %295 = dma.hbm_to_vmem [thread:$0]  %s288, 16384, %s290, %s279, 128, 128, 8
        $region40: #{bert_encoder_forward.1} parent=23 // pred_fallthru
          _
        // Predicated region
        $region41: #{bert_encoder_forward.1} parent=23 // pred_check
          %p296 = pneg %p186
        $region42: #{bert_encoder_forward.1} parent=23 // pred_check_branch
          %298 = sbr.rel (%p296) target = $region44
        $region43: #{bert_encoder_forward.1} parent=23 // pred_region
          %p299 = scmp.lt.s32.totalorder %s20, 3
          %s300 = scalar_select %p299, %s20, 3
          %s301 = smul.addr %s300, 8
          %s302 = smul.addr %s301, 8
          %s303 = scalar_lea.vmem %s6, %s302
        $region44: #{bert_encoder_forward.1} parent=23 // pred_fallthru
          _
      $region24: #{bert_encoder_forward.1} parent=5 // pred_fallthru
        _
      %p304 = scmp.le.s32.totalorder 1, %s20
      %p305 = scmp.lt.s32.totalorder %s20, 5
      %p306 = pnand %p304, %p305
      %p307 = pneg %p306
      // Predicated region
      $region45: #{bert_encoder_forward.1} parent=5 // pred_check
        _
      $region46: #{bert_encoder_forward.1} parent=5 // pred_check_branch
        %309 = sbr.rel (%p306) target = $region48
      $region47: #{bert_encoder_forward.1} parent=5 // pred_region
        %s310 = ssub.s32 %s20, 1
        %s311 = sand.u32 %s75, 1
        %s312 = scalar_lea.sflag [#allocation3], %s311
        %s313 = sand.u32 %s75, 1
        %s314 = smul.addr %s313, 768
        %s315 = scalar_lea.vmem [#allocation2], %s314
        // Predicated region
        $region49: #{bert_encoder_forward.1} parent=47 // pred_check
          %p316 = pneg %p88
        $region50: #{bert_encoder_forward.1} parent=47 // pred_check_branch
          %318 = sbr.rel (%p316) target = $region52
        $region51: #{bert_encoder_forward.1} parent=47 // pred_region
          %319 = dma.done %s312, 12288
        $region52: #{bert_encoder_forward.1} parent=47 // pred_fallthru
          _
        %s320 = sand.u32 %s153, 1
        %s321 = scalar_lea.sflag [#allocation6], %s320
        %s322 = sand.u32 %s153, 1
        %s323 = smul.addr %s322, 1024
        %s324 = scalar_lea.vmem [#allocation5], %s323
        // Predicated region
        $region53: #{bert_encoder_forward.1} parent=47 // pred_check
          %p325 = pneg %p166
        $region54: #{bert_encoder_forward.1} parent=47 // pred_check_branch
          %327 = sbr.rel (%p325) target = $region56
        $region55: #{bert_encoder_forward.1} parent=47 // pred_region
          %328 = dma.done %s321, 16384
        $region56: #{bert_encoder_forward.1} parent=47 // pred_fallthru
          _
        %p329 = pneg %p41
        %p330 = pneg %p38
        %p331 = pneg %p62
        %p332 = pneg %p59
        %s333 = sand.u32 %s75, 1
        %s334 = scalar_lea.sflag [#allocation3], %s333
        %s335 = sand.u32 %s75, 1
        %s336 = smul.addr %s335, 768
        %s337 = scalar_lea.vmem [#allocation2], %s336
        %p338 = pneg %p88
        %p339 = pneg %p85
        %p340 = scmp.lt.s32.totalorder %s25, 3
        %s341 = scalar_select %p340, %s25, 3
        %s342 = smul.addr %s341, 64
        %s343 = smul.addr %s342, 4
        %s344 = scalar_lea.vmem %s3, %s343
        %p345 = pneg %p114
        %p346 = pneg %p111
        %p347 = scmp.lt.s32.totalorder %s25, 3
        %s348 = scalar_select %p347, %s25, 3
        %s349 = smul.addr %s348, 256
        %s350 = smul.addr %s349, 4
        %s351 = scalar_lea.vmem %s4, %s350
        %p352 = pneg %p140
        %p353 = pneg %p137
        %s354 = sand.u32 %s153, 1
        %s355 = scalar_lea.sflag [#allocation6], %s354
        %s356 = sand.u32 %s153, 1
        %s357 = smul.addr %s356, 1024
        %s358 = scalar_lea.vmem [#allocation5], %s357
        %p359 = pneg %p166
        %p360 = pneg %p163
        %p361 = scmp.lt.s32.totalorder %s25, 3
        %s362 = scalar_select %p361, %s25, 3
        %s363 = smul.addr %s362, 8
        %s364 = smul.addr %s363, 8
        %s365 = scalar_lea.vmem %s6, %s364
        %p366 = pneg %p192
        %p367 = pneg %p189
        %p368 = pneg %p213
        %p369 = pneg %p210
        %p370 = scmp.lt.s32.totalorder %s25, 3
        %s371 = scalar_select %p370, %s25, 3
        %s372 = smul.addr %s371, 64
        %s373 = smul.addr %s372, 4
        %s374 = scalar_lea.vmem %s3, %s373
        %p375 = scmp.lt.s32.totalorder %s25, 3
        %s376 = scalar_select %p375, %s25, 3
        %s377 = smul.addr %s376, 256
        %s378 = smul.addr %s377, 4
        %s379 = scalar_lea.vmem %s4, %s378
        %p380 = scmp.lt.s32.totalorder %s25, 3
        %s381 = scalar_select %p380, %s25, 3
        %s382 = smul.addr %s381, 8
        %s383 = smul.addr %s382, 8
        %s384 = scalar_lea.vmem %s6, %s383
        %p386 = scmp.eq.s32.totalorder %s25, 0
        // Predicated region
        $region57: #{bert_encoder_forward.1} parent=47 // pred_check
          %p387 = pneg %p386
        $region58: #{bert_encoder_forward.1} parent=47 // pred_check_branch
          %389 = sbr.rel (%p387) target = $region60
        $region59: #{bert_encoder_forward.1} parent=47 // pred_region
          %v390 = vld [vmem:[%s0] sm:$0xff]
          %v391 = vld [vmem:[%s0 + $0x8] sm:$0xff]
          %v392 = vld [vmem:[%s0 + $0x10] sm:$0xff]
          %v393 = vld [vmem:[%s0 + $0x18] sm:$0xff]
          %v394 = vld [vmem:[%s0 + $0x20] sm:$0xff]
          %v395 = vld [vmem:[%s0 + $0x28] sm:$0xff]
          %v396 = vld [vmem:[%s0 + $0x30] sm:$0xff]
          %v397 = vld [vmem:[%s0 + $0x38] sm:$0xff]
          %v398 = vld [vmem:[%s0 + $0x40] sm:$0xff]
          %v399 = vld [vmem:[%s0 + $0x48] sm:$0xff]
          %v400 = vld [vmem:[%s0 + $0x50] sm:$0xff]
          %v401 = vld [vmem:[%s0 + $0x58] sm:$0xff]
          %v402 = vld [vmem:[%s0 + $0x60] sm:$0xff]
          %v403 = vld [vmem:[%s0 + $0x68] sm:$0xff]
          %v404 = vld [vmem:[%s0 + $0x70] sm:$0xff]
          %v405 = vld [vmem:[%s0 + $0x78] sm:$0xff]
          %v406 = vld [vmem:[%s0 + $0x80] sm:$0xff]
          %v407 = vld [vmem:[%s0 + $0x88] sm:$0xff]
          %v408 = vld [vmem:[%s0 + $0x90] sm:$0xff]
          %v409 = vld [vmem:[%s0 + $0x98] sm:$0xff]
          %v410 = vld [vmem:[%s0 + $0xa0] sm:$0xff]
          %v411 = vld [vmem:[%s0 + $0xa8] sm:$0xff]
          %v412 = vld [vmem:[%s0 + $0xb0] sm:$0xff]
          %v413 = vld [vmem:[%s0 + $0xb8] sm:$0xff]
          %v414 = vld [vmem:[%s0 + $0xc0] sm:$0xff]
          %v415 = vld [vmem:[%s0 + $0xc8] sm:$0xff]
          %v416 = vld [vmem:[%s0 + $0xd0] sm:$0xff]
          %v417 = vld [vmem:[%s0 + $0xd8] sm:$0xff]
          %v418 = vld [vmem:[%s0 + $0xe0] sm:$0xff]
          %v419 = vld [vmem:[%s0 + $0xe8] sm:$0xff]
          %v420 = vld [vmem:[%s0 + $0xf0] sm:$0xff]
          %v421 = vld [vmem:[%s0 + $0xf8] sm:$0xff]
          %v422 = vld [vmem:[%s1] ss:$2 sm:$0x3]
          %s423 = scalar_lea.vmem %s1, 1
          %v424 = vld [vmem:[%s423] ss:$2 sm:$0x3]
          %v425 = vadd.f32 %v390, %v391
          %426 = vadd.xlane.f32.xlu0 %v425
          %v427 = vpop.xlane.xlu0 %426
          %v428 = vadd.f32 %v392, %v393
          %429 = vadd.xlane.f32.xlu0 %v428
          %v430 = vpop.xlane.xlu0 %429
          %v431 = vadd.f32 %v394, %v395
          %432 = vadd.xlane.f32.xlu0 %v431
          %v433 = vpop.xlane.xlu0 %432
          %v434 = vadd.f32 %v396, %v397
          %435 = vadd.xlane.f32.xlu0 %v434
          %v436 = vpop.xlane.xlu0 %435
          %v437 = vadd.f32 %v398, %v399
          %438 = vadd.xlane.f32.xlu0 %v437
          %v439 = vpop.xlane.xlu0 %438
          %v440 = vadd.f32 %v400, %v401
          %441 = vadd.xlane.f32.xlu0 %v440
          %v442 = vpop.xlane.xlu0 %441
          %v443 = vadd.f32 %v402, %v403
          %444 = vadd.xlane.f32.xlu0 %v443
          %v445 = vpop.xlane.xlu0 %444
          %v446 = vadd.f32 %v404, %v405
          %447 = vadd.xlane.f32.xlu0 %v446
          %v448 = vpop.xlane.xlu0 %447
          %v449 = vadd.f32 %v406, %v407
          %450 = vadd.xlane.f32.xlu0 %v449
          %v451 = vpop.xlane.xlu0 %450
          %v452 = vadd.f32 %v408, %v409
          %453 = vadd.xlane.f32.xlu0 %v452
          %v454 = vpop.xlane.xlu0 %453
          %v455 = vadd.f32 %v410, %v411
          %456 = vadd.xlane.f32.xlu0 %v455
          %v457 = vpop.xlane.xlu0 %456
          %v458 = vadd.f32 %v412, %v413
          %459 = vadd.xlane.f32.xlu0 %v458
          %v460 = vpop.xlane.xlu0 %459
          %v461 = vadd.f32 %v414, %v415
          %462 = vadd.xlane.f32.xlu0 %v461
          %v463 = vpop.xlane.xlu0 %462
          %v464 = vadd.f32 %v416, %v417
          %465 = vadd.xlane.f32.xlu0 %v464
          %v466 = vpop.xlane.xlu0 %465
          %v467 = vadd.f32 %v418, %v419
          %468 = vadd.xlane.f32.xlu0 %v467
          %v469 = vpop.xlane.xlu0 %468
          %v470 = vadd.f32 %v420, %v421
          %471 = vadd.xlane.f32.xlu0 %v470
          %v472 = vpop.xlane.xlu0 %471
          %v473 = vrcp.pop 256.0
          %v474 = vmul.f32 %v427, %v473
          %v475 = vmul.f32 %v430, %v473
          %v476 = vmul.f32 %v433, %v473
          %v477 = vmul.f32 %v436, %v473
          %v478 = vmul.f32 %v439, %v473
          %v479 = vmul.f32 %v442, %v473
          %v480 = vmul.f32 %v445, %v473
          %v481 = vmul.f32 %v448, %v473
          %v482 = vmul.f32 %v451, %v473
          %v483 = vmul.f32 %v454, %v473
          %v484 = vmul.f32 %v457, %v473
          %v485 = vmul.f32 %v460, %v473
          %v486 = vmul.f32 %v463, %v473
          %v487 = vmul.f32 %v466, %v473
          %v488 = vmul.f32 %v469, %v473
          %v489 = vmul.f32 %v472, %v473
          %v490 = vsub.f32 %v390, %v474
          %v491 = vsub.f32 %v391, %v474
          %v492 = vsub.f32 %v392, %v475
          %v493 = vsub.f32 %v393, %v475
          %v494 = vsub.f32 %v394, %v476
          %v495 = vsub.f32 %v395, %v476
          %v496 = vsub.f32 %v396, %v477
          %v497 = vsub.f32 %v397, %v477
          %v498 = vsub.f32 %v398, %v478
          %v499 = vsub.f32 %v399, %v478
          %v500 = vsub.f32 %v400, %v479
          %v501 = vsub.f32 %v401, %v479
          %v502 = vsub.f32 %v402, %v480
          %v503 = vsub.f32 %v403, %v480
          %v504 = vsub.f32 %v404, %v481
          %v505 = vsub.f32 %v405, %v481
          %v506 = vsub.f32 %v406, %v482
          %v507 = vsub.f32 %v407, %v482
          %v508 = vsub.f32 %v408, %v483
          %v509 = vsub.f32 %v409, %v483
          %v510 = vsub.f32 %v410, %v484
          %v511 = vsub.f32 %v411, %v484
          %v512 = vsub.f32 %v412, %v485
          %v513 = vsub.f32 %v413, %v485
          %v514 = vsub.f32 %v414, %v486
          %v515 = vsub.f32 %v415, %v486
          %v516 = vsub.f32 %v416, %v487
          %v517 = vsub.f32 %v417, %v487
          %v518 = vsub.f32 %v418, %v488
          %v519 = vsub.f32 %v419, %v488
          %v520 = vsub.f32 %v420, %v489
          %v521 = vsub.f32 %v421, %v489
          %v522 = vmul.f32 %v490, %v490
          %v523 = vmul.f32 %v491, %v491
          %v524 = vmul.f32 %v492, %v492
          %v525 = vmul.f32 %v493, %v493
          %v526 = vmul.f32 %v494, %v494
          %v527 = vmul.f32 %v495, %v495
          %v528 = vmul.f32 %v496, %v496
          %v529 = vmul.f32 %v497, %v497
          %v530 = vmul.f32 %v498, %v498
          %v531 = vmul.f32 %v499, %v499
          %v532 = vmul.f32 %v500, %v500
          %v533 = vmul.f32 %v501, %v501
          %v534 = vmul.f32 %v502, %v502
          %v535 = vmul.f32 %v503, %v503
          %v536 = vmul.f32 %v504, %v504
          %v537 = vmul.f32 %v505, %v505
          %v538 = vmul.f32 %v506, %v506
          %v539 = vmul.f32 %v507, %v507
          %v540 = vmul.f32 %v508, %v508
          %v541 = vmul.f32 %v509, %v509
          %v542 = vmul.f32 %v510, %v510
          %v543 = vmul.f32 %v511, %v511
          %v544 = vmul.f32 %v512, %v512
          %v545 = vmul.f32 %v513, %v513
          %v546 = vmul.f32 %v514, %v514
          %v547 = vmul.f32 %v515, %v515
          %v548 = vmul.f32 %v516, %v516
          %v549 = vmul.f32 %v517, %v517
          %v550 = vmul.f32 %v518, %v518
          %v551 = vmul.f32 %v519, %v519
          %v552 = vmul.f32 %v520, %v520
          %v553 = vmul.f32 %v521, %v521
          %v554 = vadd.f32 %v522, %v523
          %555 = vadd.xlane.f32.xlu0 %v554
          %v556 = vpop.xlane.xlu0 %555
          %v557 = vadd.f32 %v524, %v525
          %558 = vadd.xlane.f32.xlu0 %v557
          %v559 = vpop.xlane.xlu0 %558
          %v560 = vadd.f32 %v526, %v527
          %561 = vadd.xlane.f32.xlu0 %v560
          %v562 = vpop.xlane.xlu0 %561
          %v563 = vadd.f32 %v528, %v529
          %564 = vadd.xlane.f32.xlu0 %v563
          %v565 = vpop.xlane.xlu0 %564
          %v566 = vadd.f32 %v530, %v531
          %567 = vadd.xlane.f32.xlu0 %v566
          %v568 = vpop.xlane.xlu0 %567
          %v569 = vadd.f32 %v532, %v533
          %570 = vadd.xlane.f32.xlu0 %v569
          %v571 = vpop.xlane.xlu0 %570
          %v572 = vadd.f32 %v534, %v535
          %573 = vadd.xlane.f32.xlu0 %v572
          %v574 = vpop.xlane.xlu0 %573
          %v575 = vadd.f32 %v536, %v537
          %576 = vadd.xlane.f32.xlu0 %v575
          %v577 = vpop.xlane.xlu0 %576
          %v578 = vadd.f32 %v538, %v539
          %579 = vadd.xlane.f32.xlu0 %v578
          %v580 = vpop.xlane.xlu0 %579
          %v581 = vadd.f32 %v540, %v541
          %582 = vadd.xlane.f32.xlu0 %v581
          %v583 = vpop.xlane.xlu0 %582
          %v584 = vadd.f32 %v542, %v543
          %585 = vadd.xlane.f32.xlu0 %v584
          %v586 = vpop.xlane.xlu0 %585
          %v587 = vadd.f32 %v544, %v545
          %588 = vadd.xlane.f32.xlu0 %v587
          %v589 = vpop.xlane.xlu0 %588
          %v590 = vadd.f32 %v546, %v547
          %591 = vadd.xlane.f32.xlu0 %v590
          %v592 = vpop.xlane.xlu0 %591
          %v593 = vadd.f32 %v548, %v549
          %594 = vadd.xlane.f32.xlu0 %v593
          %v595 = vpop.xlane.xlu0 %594
          %v596 = vadd.f32 %v550, %v551
          %597 = vadd.xlane.f32.xlu0 %v596
          %v598 = vpop.xlane.xlu0 %597
          %v599 = vadd.f32 %v552, %v553
          %600 = vadd.xlane.f32.xlu0 %v599
          %v601 = vpop.xlane.xlu0 %600
          %v602 = vmul.f32 %v556, %v473
          %v603 = vmul.f32 %v559, %v473
          %v604 = vmul.f32 %v562, %v473
          %v605 = vmul.f32 %v565, %v473
          %v606 = vmul.f32 %v568, %v473
          %v607 = vmul.f32 %v571, %v473
          %v608 = vmul.f32 %v574, %v473
          %v609 = vmul.f32 %v577, %v473
          %v610 = vmul.f32 %v580, %v473
          %v611 = vmul.f32 %v583, %v473
          %v612 = vmul.f32 %v586, %v473
          %v613 = vmul.f32 %v589, %v473
          %v614 = vmul.f32 %v592, %v473
          %v615 = vmul.f32 %v595, %v473
          %v616 = vmul.f32 %v598, %v473
          %v617 = vmul.f32 %v601, %v473
          %v618 = vadd.f32 %v602, 1e-12
          %v619 = vadd.f32 %v603, 1e-12
          %v620 = vadd.f32 %v604, 1e-12
          %v621 = vadd.f32 %v605, 1e-12
          %v622 = vadd.f32 %v606, 1e-12
          %v623 = vadd.f32 %v607, 1e-12
          %v624 = vadd.f32 %v608, 1e-12
          %v625 = vadd.f32 %v609, 1e-12
          %v626 = vadd.f32 %v610, 1e-12
          %v627 = vadd.f32 %v611, 1e-12
          %v628 = vadd.f32 %v612, 1e-12
          %v629 = vadd.f32 %v613, 1e-12
          %v630 = vadd.f32 %v614, 1e-12
          %v631 = vadd.f32 %v615, 1e-12
          %v632 = vadd.f32 %v616, 1e-12
          %v633 = vadd.f32 %v617, 1e-12
          %v634 = vrsqrt.pop %v618
          %v635 = vrsqrt.pop %v619
          %v636 = vrsqrt.pop %v620
          %v637 = vrsqrt.pop %v621
          %v638 = vrsqrt.pop %v622
          %v639 = vrsqrt.pop %v623
          %v640 = vrsqrt.pop %v624
          %v641 = vrsqrt.pop %v625
          %v642 = vrsqrt.pop %v626
          %v643 = vrsqrt.pop %v627
          %v644 = vrsqrt.pop %v628
          %v645 = vrsqrt.pop %v629
          %v646 = vrsqrt.pop %v630
          %v647 = vrsqrt.pop %v631
          %v648 = vrsqrt.pop %v632
          %v649 = vrsqrt.pop %v633
          %v650 = vmul.f32 %v490, %v634
          %v651 = vmul.f32 %v491, %v634
          %v652 = vmul.f32 %v492, %v635
          %v653 = vmul.f32 %v493, %v635
          %v654 = vmul.f32 %v494, %v636
          %v655 = vmul.f32 %v495, %v636
          %v656 = vmul.f32 %v496, %v637
          %v657 = vmul.f32 %v497, %v637
          %v658 = vmul.f32 %v498, %v638
          %v659 = vmul.f32 %v499, %v638
          %v660 = vmul.f32 %v500, %v639
          %v661 = vmul.f32 %v501, %v639
          %v662 = vmul.f32 %v502, %v640
          %v663 = vmul.f32 %v503, %v640
          %v664 = vmul.f32 %v504, %v641
          %v665 = vmul.f32 %v505, %v641
          %v666 = vmul.f32 %v506, %v642
          %v667 = vmul.f32 %v507, %v642
          %v668 = vmul.f32 %v508, %v643
          %v669 = vmul.f32 %v509, %v643
          %v670 = vmul.f32 %v510, %v644
          %v671 = vmul.f32 %v511, %v644
          %v672 = vmul.f32 %v512, %v645
          %v673 = vmul.f32 %v513, %v645
          %v674 = vmul.f32 %v514, %v646
          %v675 = vmul.f32 %v515, %v646
          %v676 = vmul.f32 %v516, %v647
          %v677 = vmul.f32 %v517, %v647
          %v678 = vmul.f32 %v518, %v648
          %v679 = vmul.f32 %v519, %v648
          %v680 = vmul.f32 %v520, %v649
          %v681 = vmul.f32 %v521, %v649
          %v683 = vlaneseq
          %v684 = vshrl.u32 %v683, 7
          %v685 = vsub.s32 0, %v684
          %v686 = vrot.slane %v422, %v685
          %v687 = vlaneseq
          %v688 = vshrl.u32 %v687, 7
          %v689 = vsub.s32 1, %v688
          %v690 = vrot.slane %v422, %v689
          %v693 = vmul.f32 %v650, %v686
          %v694 = vmul.f32 %v651, %v690
          %v695 = vmul.f32 %v652, %v686
          %v696 = vmul.f32 %v653, %v690
          %v697 = vmul.f32 %v654, %v686
          %v698 = vmul.f32 %v655, %v690
          %v699 = vmul.f32 %v656, %v686
          %v700 = vmul.f32 %v657, %v690
          %v701 = vmul.f32 %v658, %v686
          %v702 = vmul.f32 %v659, %v690
          %v703 = vmul.f32 %v660, %v686
          %v704 = vmul.f32 %v661, %v690
          %v705 = vmul.f32 %v662, %v686
          %v706 = vmul.f32 %v663, %v690
          %v707 = vmul.f32 %v664, %v686
          %v708 = vmul.f32 %v665, %v690
          %v709 = vmul.f32 %v666, %v686
          %v710 = vmul.f32 %v667, %v690
          %v711 = vmul.f32 %v668, %v686
          %v712 = vmul.f32 %v669, %v690
          %v713 = vmul.f32 %v670, %v686
          %v714 = vmul.f32 %v671, %v690
          %v715 = vmul.f32 %v672, %v686
          %v716 = vmul.f32 %v673, %v690
          %v717 = vmul.f32 %v674, %v686
          %v718 = vmul.f32 %v675, %v690
          %v719 = vmul.f32 %v676, %v686
          %v720 = vmul.f32 %v677, %v690
          %v721 = vmul.f32 %v678, %v686
          %v722 = vmul.f32 %v679, %v690
          %v723 = vmul.f32 %v680, %v686
          %v724 = vmul.f32 %v681, %v690
          %v726 = vlaneseq
          %v727 = vshrl.u32 %v726, 7
          %v728 = vsub.s32 0, %v727
          %v729 = vrot.slane %v424, %v728
          %v730 = vlaneseq
          %v731 = vshrl.u32 %v730, 7
          %v732 = vsub.s32 1, %v731
          %v733 = vrot.slane %v424, %v732
          %v736 = vadd.f32 %v693, %v729
          %v737 = vadd.f32 %v694, %v733
          %v738 = vadd.f32 %v695, %v729
          %v739 = vadd.f32 %v696, %v733
          %v740 = vadd.f32 %v697, %v729
          %v741 = vadd.f32 %v698, %v733
          %v742 = vadd.f32 %v699, %v729
          %v743 = vadd.f32 %v700, %v733
          %v744 = vadd.f32 %v701, %v729
          %v745 = vadd.f32 %v702, %v733
          %v746 = vadd.f32 %v703, %v729
          %v747 = vadd.f32 %v704, %v733
          %v748 = vadd.f32 %v705, %v729
          %v749 = vadd.f32 %v706, %v733
          %v750 = vadd.f32 %v707, %v729
          %v751 = vadd.f32 %v708, %v733
          %v752 = vadd.f32 %v709, %v729
          %v753 = vadd.f32 %v710, %v733
          %v754 = vadd.f32 %v711, %v729
          %v755 = vadd.f32 %v712, %v733
          %v756 = vadd.f32 %v713, %v729
          %v757 = vadd.f32 %v714, %v733
          %v758 = vadd.f32 %v715, %v729
          %v759 = vadd.f32 %v716, %v733
          %v760 = vadd.f32 %v717, %v729
          %v761 = vadd.f32 %v718, %v733
          %v762 = vadd.f32 %v719, %v729
          %v763 = vadd.f32 %v720, %v733
          %v764 = vadd.f32 %v721, %v729
          %v765 = vadd.f32 %v722, %v733
          %v766 = vadd.f32 %v723, %v729
          %v767 = vadd.f32 %v724, %v733
          %768 = vst [vmem:[#allocation7] sm:$0xff] %v736
          %769 = vst [vmem:[#allocation7 + $0x8] sm:$0xff] %v737
          %770 = vst [vmem:[#allocation7 + $0x10] sm:$0xff] %v738
          %771 = vst [vmem:[#allocation7 + $0x18] sm:$0xff] %v739
          %772 = vst [vmem:[#allocation7 + $0x20] sm:$0xff] %v740
          %773 = vst [vmem:[#allocation7 + $0x28] sm:$0xff] %v741
          %774 = vst [vmem:[#allocation7 + $0x30] sm:$0xff] %v742
          %775 = vst [vmem:[#allocation7 + $0x38] sm:$0xff] %v743
          %776 = vst [vmem:[#allocation7 + $0x40] sm:$0xff] %v744
          %777 = vst [vmem:[#allocation7 + $0x48] sm:$0xff] %v745
          %778 = vst [vmem:[#allocation7 + $0x50] sm:$0xff] %v746
          %779 = vst [vmem:[#allocation7 + $0x58] sm:$0xff] %v747
          %780 = vst [vmem:[#allocation7 + $0x60] sm:$0xff] %v748
          %781 = vst [vmem:[#allocation7 + $0x68] sm:$0xff] %v749
          %782 = vst [vmem:[#allocation7 + $0x70] sm:$0xff] %v750
          %783 = vst [vmem:[#allocation7 + $0x78] sm:$0xff] %v751
          %784 = vst [vmem:[#allocation7 + $0x80] sm:$0xff] %v752
          %785 = vst [vmem:[#allocation7 + $0x88] sm:$0xff] %v753
          %786 = vst [vmem:[#allocation7 + $0x90] sm:$0xff] %v754
          %787 = vst [vmem:[#allocation7 + $0x98] sm:$0xff] %v755
          %788 = vst [vmem:[#allocation7 + $0xa0] sm:$0xff] %v756
          %789 = vst [vmem:[#allocation7 + $0xa8] sm:$0xff] %v757
          %790 = vst [vmem:[#allocation7 + $0xb0] sm:$0xff] %v758
          %791 = vst [vmem:[#allocation7 + $0xb8] sm:$0xff] %v759
          %792 = vst [vmem:[#allocation7 + $0xc0] sm:$0xff] %v760
          %793 = vst [vmem:[#allocation7 + $0xc8] sm:$0xff] %v761
          %794 = vst [vmem:[#allocation7 + $0xd0] sm:$0xff] %v762
          %795 = vst [vmem:[#allocation7 + $0xd8] sm:$0xff] %v763
          %796 = vst [vmem:[#allocation7 + $0xe0] sm:$0xff] %v764
          %797 = vst [vmem:[#allocation7 + $0xe8] sm:$0xff] %v765
          %798 = vst [vmem:[#allocation7 + $0xf0] sm:$0xff] %v766
          %799 = vst [vmem:[#allocation7 + $0xf8] sm:$0xff] %v767
        $region60: #{bert_encoder_forward.1} parent=47 // pred_fallthru
          _
        %v800 = vld [vmem:[#allocation7] sm:$0xff]
        %v801 = vld [vmem:[#allocation7 + $0x8] sm:$0xff]
        %v802 = vld [vmem:[#allocation7 + $0x10] sm:$0xff]
        %v803 = vld [vmem:[#allocation7 + $0x18] sm:$0xff]
        %v804 = vld [vmem:[#allocation7 + $0x20] sm:$0xff]
        %v805 = vld [vmem:[#allocation7 + $0x28] sm:$0xff]
        %v806 = vld [vmem:[#allocation7 + $0x30] sm:$0xff]
        %v807 = vld [vmem:[#allocation7 + $0x38] sm:$0xff]
        %v808 = vld [vmem:[#allocation7 + $0x40] sm:$0xff]
        %v809 = vld [vmem:[#allocation7 + $0x48] sm:$0xff]
        %v810 = vld [vmem:[#allocation7 + $0x50] sm:$0xff]
        %v811 = vld [vmem:[#allocation7 + $0x58] sm:$0xff]
        %v812 = vld [vmem:[#allocation7 + $0x60] sm:$0xff]
        %v813 = vld [vmem:[#allocation7 + $0x68] sm:$0xff]
        %v814 = vld [vmem:[#allocation7 + $0x70] sm:$0xff]
        %v815 = vld [vmem:[#allocation7 + $0x78] sm:$0xff]
        %v816 = vld [vmem:[#allocation7 + $0x80] sm:$0xff]
        %v817 = vld [vmem:[#allocation7 + $0x88] sm:$0xff]
        %v818 = vld [vmem:[#allocation7 + $0x90] sm:$0xff]
        %v819 = vld [vmem:[#allocation7 + $0x98] sm:$0xff]
        %v820 = vld [vmem:[#allocation7 + $0xa0] sm:$0xff]
        %v821 = vld [vmem:[#allocation7 + $0xa8] sm:$0xff]
        %v822 = vld [vmem:[#allocation7 + $0xb0] sm:$0xff]
        %v823 = vld [vmem:[#allocation7 + $0xb8] sm:$0xff]
        %v824 = vld [vmem:[#allocation7 + $0xc0] sm:$0xff]
        %v825 = vld [vmem:[#allocation7 + $0xc8] sm:$0xff]
        %v826 = vld [vmem:[#allocation7 + $0xd0] sm:$0xff]
        %v827 = vld [vmem:[#allocation7 + $0xd8] sm:$0xff]
        %v828 = vld [vmem:[#allocation7 + $0xe0] sm:$0xff]
        %v829 = vld [vmem:[#allocation7 + $0xe8] sm:$0xff]
        %v830 = vld [vmem:[#allocation7 + $0xf0] sm:$0xff]
        %v831 = vld [vmem:[#allocation7 + $0xf8] sm:$0xff]
        %v832 = vld [vmem:[%s384] ss:$8 sm:$0xf]
        %v833 = vld [vmem:[%s384] ss:$8 sm:$0x30]
        %v834 = vor.u32 %v832, %v833
        %s835 = scalar_lea.vmem %s384, 1
        %v836 = vld [vmem:[%s835] ss:$8 sm:$0xf]
        %v837 = vld [vmem:[%s835] ss:$8 sm:$0xf0]
        %v838 = vor.u32 %v836, %v837
        %s839 = scalar_lea.vmem %s384, 2
        %v840 = vld [vmem:[%s839] ss:$8 sm:$0x3]
        %s841 = scalar_lea.vmem %s384, 3
        %v842 = vld [vmem:[%s841] ss:$8 sm:$0x3]
        %s843 = scalar_lea.vmem %s384, 4
        %v844 = vld [vmem:[%s843] ss:$8 sm:$0x3]
        %s845 = scalar_lea.vmem %s384, 5
        %v846 = vld [vmem:[%s845] ss:$8 sm:$0x3]
        %s847 = scalar_lea.vmem %s384, 6
        %v848 = vld [vmem:[%s847] ss:$8 sm:$0x3]
        %s849 = scalar_lea.vmem %s384, 7
        %v850 = vld [vmem:[%s849] ss:$8 sm:$0x3]
        %v851 = vpack.c.bf16 %v802, %v800
        %v852 = vpack.c.bf16 %v803, %v801
        %v853 = vpack.c.bf16 %v806, %v804
        %v854 = vpack.c.bf16 %v807, %v805
        %v855 = vpack.c.bf16 %v810, %v808
        %v856 = vpack.c.bf16 %v811, %v809
        %v857 = vpack.c.bf16 %v814, %v812
        %v858 = vpack.c.bf16 %v815, %v813
        %v859 = vpack.c.bf16 %v818, %v816
        %v860 = vpack.c.bf16 %v819, %v817
        %v861 = vpack.c.bf16 %v822, %v820
        %v862 = vpack.c.bf16 %v823, %v821
        %v863 = vpack.c.bf16 %v826, %v824
        %v864 = vpack.c.bf16 %v827, %v825
        %v865 = vpack.c.bf16 %v830, %v828
        %v866 = vpack.c.bf16 %v831, %v829
        %v867 = vld [vmem:[%s315] sm:$0xff]
        %v868 = vld [vmem:[%s315 + $0x8] sm:$0xff]
        %v869 = vld [vmem:[%s315 + $0x10] sm:$0xff]
        %v870 = vld [vmem:[%s315 + $0x18] sm:$0xff]
        %v871 = vld [vmem:[%s315 + $0x20] sm:$0xff]
        %v872 = vld [vmem:[%s315 + $0x28] sm:$0xff]
        %v873 = vld [vmem:[%s315 + $0x30] sm:$0xff]
        %v874 = vld [vmem:[%s315 + $0x38] sm:$0xff]
        %v875 = vld [vmem:[%s315 + $0x40] sm:$0xff]
        %v876 = vld [vmem:[%s315 + $0x48] sm:$0xff]
        %v877 = vld [vmem:[%s315 + $0x50] sm:$0xff]
        %v878 = vld [vmem:[%s315 + $0x58] sm:$0xff]
        %v879 = vld [vmem:[%s315 + $0x60] sm:$0xff]
        %v880 = vld [vmem:[%s315 + $0x68] sm:$0xff]
        %v881 = vld [vmem:[%s315 + $0x70] sm:$0xff]
        %v882 = vld [vmem:[%s315 + $0x78] sm:$0xff]
        %v883 = vld [vmem:[%s315 + $0x80] sm:$0xff]
        %v884 = vld [vmem:[%s315 + $0x88] sm:$0xff]
        %v885 = vld [vmem:[%s315 + $0x90] sm:$0xff]
        %v886 = vld [vmem:[%s315 + $0x98] sm:$0xff]
        %v887 = vld [vmem:[%s315 + $0xa0] sm:$0xff]
        %v888 = vld [vmem:[%s315 + $0xa8] sm:$0xff]
        %v889 = vld [vmem:[%s315 + $0xb0] sm:$0xff]
        %v890 = vld [vmem:[%s315 + $0xb8] sm:$0xff]
        %v891 = vld [vmem:[%s315 + $0xc0] sm:$0xff]
        %v892 = vld [vmem:[%s315 + $0xc8] sm:$0xff]
        %v893 = vld [vmem:[%s315 + $0xd0] sm:$0xff]
        %v894 = vld [vmem:[%s315 + $0xd8] sm:$0xff]
        %v895 = vld [vmem:[%s315 + $0xe0] sm:$0xff]
        %v896 = vld [vmem:[%s315 + $0xe8] sm:$0xff]
        %v897 = vld [vmem:[%s315 + $0xf0] sm:$0xff]
        %v898 = vld [vmem:[%s315 + $0xf8] sm:$0xff]
        %v899 = vld [vmem:[%s315 + $0x100] sm:$0xff]
        %v900 = vld [vmem:[%s315 + $0x108] sm:$0xff]
        %v901 = vld [vmem:[%s315 + $0x110] sm:$0xff]
        %v902 = vld [vmem:[%s315 + $0x118] sm:$0xff]
        %v903 = vld [vmem:[%s315 + $0x120] sm:$0xff]
        %v904 = vld [vmem:[%s315 + $0x128] sm:$0xff]
        %v905 = vld [vmem:[%s315 + $0x130] sm:$0xff]
        %v906 = vld [vmem:[%s315 + $0x138] sm:$0xff]
        %v907 = vld [vmem:[%s315 + $0x140] sm:$0xff]
        %v908 = vld [vmem:[%s315 + $0x148] sm:$0xff]
        %v909 = vld [vmem:[%s315 + $0x150] sm:$0xff]
        %v910 = vld [vmem:[%s315 + $0x158] sm:$0xff]
        %v911 = vld [vmem:[%s315 + $0x160] sm:$0xff]
        %v912 = vld [vmem:[%s315 + $0x168] sm:$0xff]
        %v913 = vld [vmem:[%s315 + $0x170] sm:$0xff]
        %v914 = vld [vmem:[%s315 + $0x178] sm:$0xff]
        %v915 = vld [vmem:[%s315 + $0x180] sm:$0xff]
        %v916 = vld [vmem:[%s315 + $0x188] sm:$0xff]
        %v917 = vld [vmem:[%s315 + $0x190] sm:$0xff]
        %v918 = vld [vmem:[%s315 + $0x198] sm:$0xff]
        %v919 = vld [vmem:[%s315 + $0x1a0] sm:$0xff]
        %v920 = vld [vmem:[%s315 + $0x1a8] sm:$0xff]
        %v921 = vld [vmem:[%s315 + $0x1b0] sm:$0xff]
        %v922 = vld [vmem:[%s315 + $0x1b8] sm:$0xff]
        %v923 = vld [vmem:[%s315 + $0x1c0] sm:$0xff]
        %v924 = vld [vmem:[%s315 + $0x1c8] sm:$0xff]
        %v925 = vld [vmem:[%s315 + $0x1d0] sm:$0xff]
        %v926 = vld [vmem:[%s315 + $0x1d8] sm:$0xff]
        %v927 = vld [vmem:[%s315 + $0x1e0] sm:$0xff]
        %v928 = vld [vmem:[%s315 + $0x1e8] sm:$0xff]
        %v929 = vld [vmem:[%s315 + $0x1f0] sm:$0xff]
        %v930 = vld [vmem:[%s315 + $0x1f8] sm:$0xff]
        %v931 = vld [vmem:[%s315 + $0x200] sm:$0xff]
        %v932 = vld [vmem:[%s315 + $0x208] sm:$0xff]
        %v933 = vld [vmem:[%s315 + $0x210] sm:$0xff]
        %v934 = vld [vmem:[%s315 + $0x218] sm:$0xff]
        %v935 = vld [vmem:[%s315 + $0x220] sm:$0xff]
        %v936 = vld [vmem:[%s315 + $0x228] sm:$0xff]
        %v937 = vld [vmem:[%s315 + $0x230] sm:$0xff]
        %v938 = vld [vmem:[%s315 + $0x238] sm:$0xff]
        %v939 = vld [vmem:[%s315 + $0x240] sm:$0xff]
        %v940 = vld [vmem:[%s315 + $0x248] sm:$0xff]
        %v941 = vld [vmem:[%s315 + $0x250] sm:$0xff]
        %v942 = vld [vmem:[%s315 + $0x258] sm:$0xff]
        %v943 = vld [vmem:[%s315 + $0x260] sm:$0xff]
        %v944 = vld [vmem:[%s315 + $0x268] sm:$0xff]
        %v945 = vld [vmem:[%s315 + $0x270] sm:$0xff]
        %v946 = vld [vmem:[%s315 + $0x278] sm:$0xff]
        %v947 = vld [vmem:[%s315 + $0x280] sm:$0xff]
        %v948 = vld [vmem:[%s315 + $0x288] sm:$0xff]
        %v949 = vld [vmem:[%s315 + $0x290] sm:$0xff]
        %v950 = vld [vmem:[%s315 + $0x298] sm:$0xff]
        %v951 = vld [vmem:[%s315 + $0x2a0] sm:$0xff]
        %v952 = vld [vmem:[%s315 + $0x2a8] sm:$0xff]
        %v953 = vld [vmem:[%s315 + $0x2b0] sm:$0xff]
        %v954 = vld [vmem:[%s315 + $0x2b8] sm:$0xff]
        %v955 = vld [vmem:[%s315 + $0x2c0] sm:$0xff]
        %v956 = vld [vmem:[%s315 + $0x2c8] sm:$0xff]
        %v957 = vld [vmem:[%s315 + $0x2d0] sm:$0xff]
        %v958 = vld [vmem:[%s315 + $0x2d8] sm:$0xff]
        %v959 = vld [vmem:[%s315 + $0x2e0] sm:$0xff]
        %v960 = vld [vmem:[%s315 + $0x2e8] sm:$0xff]
        %v961 = vld [vmem:[%s315 + $0x2f0] sm:$0xff]
        %v962 = vld [vmem:[%s315 + $0x2f8] sm:$0xff]
        %v964 = vlaneseq
        %v965 = vshrl.u32 %v964, 7
        %v966 = vsub.s32 0, %v965
        %v967 = vrot.slane %v834, %v966
        %v968 = vlaneseq
        %v969 = vshrl.u32 %v968, 7
        %v970 = vsub.s32 1, %v969
        %v971 = vrot.slane %v834, %v970
        %v972 = vlaneseq
        %v973 = vshrl.u32 %v972, 7
        %v974 = vsub.s32 2, %v973
        %v975 = vrot.slane %v834, %v974
        %v976 = vlaneseq
        %v977 = vshrl.u32 %v976, 7
        %v978 = vsub.s32 3, %v977
        %v979 = vrot.slane %v834, %v978
        %v980 = vlaneseq
        %v981 = vshrl.u32 %v980, 7
        %v982 = vsub.s32 4, %v981
        %v983 = vrot.slane %v834, %v982
        %v984 = vlaneseq
        %v985 = vshrl.u32 %v984, 7
        %v986 = vsub.s32 5, %v985
        %v987 = vrot.slane %v834, %v986
        %v1090 = vunpack.c.l.b16 %v867
        %v1091 = vunpack.c.h.b16 %v867
        %v1092 = vunpack.c.l.b16 %v868
        %v1093 = vunpack.c.h.b16 %v868
        %v1094 = vunpack.c.l.b16 %v869
        %v1095 = vunpack.c.h.b16 %v869
        %v1096 = vunpack.c.l.b16 %v870
        %v1097 = vunpack.c.h.b16 %v870
        %v1098 = vunpack.c.l.b16 %v871
        %v1099 = vunpack.c.h.b16 %v871
        %v1100 = vunpack.c.l.b16 %v872
        %v1101 = vunpack.c.h.b16 %v872
        %v1102 = vunpack.c.l.b16 %v873
        %v1103 = vunpack.c.h.b16 %v873
        %v1104 = vunpack.c.l.b16 %v874
        %v1105 = vunpack.c.h.b16 %v874
        %v1106 = vunpack.c.l.b16 %v875
        %v1107 = vunpack.c.h.b16 %v875
        %v1108 = vunpack.c.l.b16 %v876
        %v1109 = vunpack.c.h.b16 %v876
        %v1110 = vunpack.c.l.b16 %v877
        %v1111 = vunpack.c.h.b16 %v877
        %v1112 = vunpack.c.l.b16 %v878
        %v1113 = vunpack.c.h.b16 %v878
        %v1114 = vunpack.c.l.b16 %v879
        %v1115 = vunpack.c.h.b16 %v879
        %v1116 = vunpack.c.l.b16 %v880
        %v1117 = vunpack.c.h.b16 %v880
        %v1118 = vunpack.c.l.b16 %v881
        %v1119 = vunpack.c.h.b16 %v881
        %v1120 = vunpack.c.l.b16 %v882
        %v1121 = vunpack.c.h.b16 %v882
        %v1122 = vunpack.c.l.b16 %v883
        %v1123 = vunpack.c.h.b16 %v883
        %v1124 = vunpack.c.l.b16 %v884
        %v1125 = vunpack.c.h.b16 %v884
        %v1126 = vunpack.c.l.b16 %v885
        %v1127 = vunpack.c.h.b16 %v885
        %v1128 = vunpack.c.l.b16 %v886
        %v1129 = vunpack.c.h.b16 %v886
        %v1130 = vunpack.c.l.b16 %v887
        %v1131 = vunpack.c.h.b16 %v887
        %v1132 = vunpack.c.l.b16 %v888
        %v1133 = vunpack.c.h.b16 %v888
        %v1134 = vunpack.c.l.b16 %v889
        %v1135 = vunpack.c.h.b16 %v889
        %v1136 = vunpack.c.l.b16 %v890
        %v1137 = vunpack.c.h.b16 %v890
        %v1138 = vunpack.c.l.b16 %v891
        %v1139 = vunpack.c.h.b16 %v891
        %v1140 = vunpack.c.l.b16 %v892
        %v1141 = vunpack.c.h.b16 %v892
        %v1142 = vunpack.c.l.b16 %v893
        %v1143 = vunpack.c.h.b16 %v893
        %v1144 = vunpack.c.l.b16 %v894
        %v1145 = vunpack.c.h.b16 %v894
        %v1146 = vunpack.c.l.b16 %v895
        %v1147 = vunpack.c.h.b16 %v895
        %v1148 = vunpack.c.l.b16 %v896
        %v1149 = vunpack.c.h.b16 %v896
        %v1150 = vunpack.c.l.b16 %v897
        %v1151 = vunpack.c.h.b16 %v897
        %v1152 = vunpack.c.l.b16 %v898
        %v1153 = vunpack.c.h.b16 %v898
        %v1154 = vunpack.c.l.b16 %v899
        %v1155 = vunpack.c.h.b16 %v899
        %v1156 = vunpack.c.l.b16 %v900
        %v1157 = vunpack.c.h.b16 %v900
        %v1158 = vunpack.c.l.b16 %v901
        %v1159 = vunpack.c.h.b16 %v901
        %v1160 = vunpack.c.l.b16 %v902
        %v1161 = vunpack.c.h.b16 %v902
        %v1162 = vunpack.c.l.b16 %v903
        %v1163 = vunpack.c.h.b16 %v903
        %v1164 = vunpack.c.l.b16 %v904
        %v1165 = vunpack.c.h.b16 %v904
        %v1166 = vunpack.c.l.b16 %v905
        %v1167 = vunpack.c.h.b16 %v905
        %v1168 = vunpack.c.l.b16 %v906
        %v1169 = vunpack.c.h.b16 %v906
        %v1170 = vunpack.c.l.b16 %v907
        %v1171 = vunpack.c.h.b16 %v907
        %v1172 = vunpack.c.l.b16 %v908
        %v1173 = vunpack.c.h.b16 %v908
        %v1174 = vunpack.c.l.b16 %v909
        %v1175 = vunpack.c.h.b16 %v909
        %v1176 = vunpack.c.l.b16 %v910
        %v1177 = vunpack.c.h.b16 %v910
        %v1178 = vunpack.c.l.b16 %v911
        %v1179 = vunpack.c.h.b16 %v911
        %v1180 = vunpack.c.l.b16 %v912
        %v1181 = vunpack.c.h.b16 %v912
        %v1182 = vunpack.c.l.b16 %v913
        %v1183 = vunpack.c.h.b16 %v913
        %v1184 = vunpack.c.l.b16 %v914
        %v1185 = vunpack.c.h.b16 %v914
        %v1186 = vunpack.c.l.b16 %v915
        %v1187 = vunpack.c.h.b16 %v915
        %v1188 = vunpack.c.l.b16 %v916
        %v1189 = vunpack.c.h.b16 %v916
        %v1190 = vunpack.c.l.b16 %v917
        %v1191 = vunpack.c.h.b16 %v917
        %v1192 = vunpack.c.l.b16 %v918
        %v1193 = vunpack.c.h.b16 %v918
        %v1194 = vunpack.c.l.b16 %v919
        %v1195 = vunpack.c.h.b16 %v919
        %v1196 = vunpack.c.l.b16 %v920
        %v1197 = vunpack.c.h.b16 %v920
        %v1198 = vunpack.c.l.b16 %v921
        %v1199 = vunpack.c.h.b16 %v921
        %v1200 = vunpack.c.l.b16 %v922
        %v1201 = vunpack.c.h.b16 %v922
        %v1202 = vunpack.c.l.b16 %v923
        %v1203 = vunpack.c.h.b16 %v923
        %v1204 = vunpack.c.l.b16 %v924
        %v1205 = vunpack.c.h.b16 %v924
        %v1206 = vunpack.c.l.b16 %v925
        %v1207 = vunpack.c.h.b16 %v925
        %v1208 = vunpack.c.l.b16 %v926
        %v1209 = vunpack.c.h.b16 %v926
        %v1210 = vunpack.c.l.b16 %v927
        %v1211 = vunpack.c.h.b16 %v927
        %v1212 = vunpack.c.l.b16 %v928
        %v1213 = vunpack.c.h.b16 %v928
        %v1214 = vunpack.c.l.b16 %v929
        %v1215 = vunpack.c.h.b16 %v929
        %v1216 = vunpack.c.l.b16 %v930
        %v1217 = vunpack.c.h.b16 %v930
        %v1218 = vunpack.c.l.b16 %v931
        %v1219 = vunpack.c.h.b16 %v931
        %v1220 = vunpack.c.l.b16 %v932
        %v1221 = vunpack.c.h.b16 %v932
        %v1222 = vunpack.c.l.b16 %v933
        %v1223 = vunpack.c.h.b16 %v933
        %v1224 = vunpack.c.l.b16 %v934
        %v1225 = vunpack.c.h.b16 %v934
        %v1226 = vunpack.c.l.b16 %v935
        %v1227 = vunpack.c.h.b16 %v935
        %v1228 = vunpack.c.l.b16 %v936
        %v1229 = vunpack.c.h.b16 %v936
        %v1230 = vunpack.c.l.b16 %v937
        %v1231 = vunpack.c.h.b16 %v937
        %v1232 = vunpack.c.l.b16 %v938
        %v1233 = vunpack.c.h.b16 %v938
        %v1234 = vunpack.c.l.b16 %v939
        %v1235 = vunpack.c.h.b16 %v939
        %v1236 = vunpack.c.l.b16 %v940
        %v1237 = vunpack.c.h.b16 %v940
        %v1238 = vunpack.c.l.b16 %v941
        %v1239 = vunpack.c.h.b16 %v941
        %v1240 = vunpack.c.l.b16 %v942
        %v1241 = vunpack.c.h.b16 %v942
        %v1242 = vunpack.c.l.b16 %v943
        %v1243 = vunpack.c.h.b16 %v943
        %v1244 = vunpack.c.l.b16 %v944
        %v1245 = vunpack.c.h.b16 %v944
        %v1246 = vunpack.c.l.b16 %v945
        %v1247 = vunpack.c.h.b16 %v945
        %v1248 = vunpack.c.l.b16 %v946
        %v1249 = vunpack.c.h.b16 %v946
        %v1250 = vunpack.c.l.b16 %v947
        %v1251 = vunpack.c.h.b16 %v947
        %v1252 = vunpack.c.l.b16 %v948
        %v1253 = vunpack.c.h.b16 %v948
        %v1254 = vunpack.c.l.b16 %v949
        %v1255 = vunpack.c.h.b16 %v949
        %v1256 = vunpack.c.l.b16 %v950
        %v1257 = vunpack.c.h.b16 %v950
        %v1258 = vunpack.c.l.b16 %v951
        %v1259 = vunpack.c.h.b16 %v951
        %v1260 = vunpack.c.l.b16 %v952
        %v1261 = vunpack.c.h.b16 %v952
        %v1262 = vunpack.c.l.b16 %v953
        %v1263 = vunpack.c.h.b16 %v953
        %v1264 = vunpack.c.l.b16 %v954
        %v1265 = vunpack.c.h.b16 %v954
        %v1266 = vunpack.c.l.b16 %v955
        %v1267 = vunpack.c.h.b16 %v955
        %v1268 = vunpack.c.l.b16 %v956
        %v1269 = vunpack.c.h.b16 %v956
        %v1270 = vunpack.c.l.b16 %v957
        %v1271 = vunpack.c.h.b16 %v957
        %v1272 = vunpack.c.l.b16 %v958
        %v1273 = vunpack.c.h.b16 %v958
        %v1274 = vunpack.c.l.b16 %v959
        %v1275 = vunpack.c.h.b16 %v959
        %v1276 = vunpack.c.l.b16 %v960
        %v1277 = vunpack.c.h.b16 %v960
        %v1278 = vunpack.c.l.b16 %v961
        %v1279 = vunpack.c.h.b16 %v961
        %v1280 = vunpack.c.l.b16 %v962
        %v1281 = vunpack.c.h.b16 %v962
        %v1282 = vpack.c.b16 %v1096, %v1090
        %v1283 = vpack.c.b16 %v1097, %v1091
        %v1284 = vpack.c.b16 %v1098, %v1092
        %v1285 = vpack.c.b16 %v1099, %v1093
        %v1286 = vpack.c.b16 %v1100, %v1094
        %v1287 = vpack.c.b16 %v1101, %v1095
        %v1288 = vpack.c.b16 %v1108, %v1102
        %v1289 = vpack.c.b16 %v1109, %v1103
        %v1290 = vpack.c.b16 %v1110, %v1104
        %v1291 = vpack.c.b16 %v1111, %v1105
        %v1292 = vpack.c.b16 %v1112, %v1106
        %v1293 = vpack.c.b16 %v1113, %v1107
        %v1294 = vpack.c.b16 %v1120, %v1114
        %v1295 = vpack.c.b16 %v1121, %v1115
        %v1296 = vpack.c.b16 %v1122, %v1116
        %v1297 = vpack.c.b16 %v1123, %v1117
        %v1298 = vpack.c.b16 %v1124, %v1118
        %v1299 = vpack.c.b16 %v1125, %v1119
        %v1300 = vpack.c.b16 %v1132, %v1126
        %v1301 = vpack.c.b16 %v1133, %v1127
        %v1302 = vpack.c.b16 %v1134, %v1128
        %v1303 = vpack.c.b16 %v1135, %v1129
        %v1304 = vpack.c.b16 %v1136, %v1130
        %v1305 = vpack.c.b16 %v1137, %v1131
        %v1306 = vpack.c.b16 %v1144, %v1138
        %v1307 = vpack.c.b16 %v1145, %v1139
        %v1308 = vpack.c.b16 %v1146, %v1140
        %v1309 = vpack.c.b16 %v1147, %v1141
        %v1310 = vpack.c.b16 %v1148, %v1142
        %v1311 = vpack.c.b16 %v1149, %v1143
        %v1312 = vpack.c.b16 %v1156, %v1150
        %v1313 = vpack.c.b16 %v1157, %v1151
        %v1314 = vpack.c.b16 %v1158, %v1152
        %v1315 = vpack.c.b16 %v1159, %v1153
        %v1316 = vpack.c.b16 %v1160, %v1154
        %v1317 = vpack.c.b16 %v1161, %v1155
        %v1318 = vpack.c.b16 %v1168, %v1162
        %v1319 = vpack.c.b16 %v1169, %v1163
        %v1320 = vpack.c.b16 %v1170, %v1164
        %v1321 = vpack.c.b16 %v1171, %v1165
        %v1322 = vpack.c.b16 %v1172, %v1166
        %v1323 = vpack.c.b16 %v1173, %v1167
        %v1324 = vpack.c.b16 %v1180, %v1174
        %v1325 = vpack.c.b16 %v1181, %v1175
        %v1326 = vpack.c.b16 %v1182, %v1176
        %v1327 = vpack.c.b16 %v1183, %v1177
        %v1328 = vpack.c.b16 %v1184, %v1178
        %v1329 = vpack.c.b16 %v1185, %v1179
        %v1330 = vpack.c.b16 %v1192, %v1186
        %v1331 = vpack.c.b16 %v1193, %v1187
        %v1332 = vpack.c.b16 %v1194, %v1188
        %v1333 = vpack.c.b16 %v1195, %v1189
        %v1334 = vpack.c.b16 %v1196, %v1190
        %v1335 = vpack.c.b16 %v1197, %v1191
        %v1336 = vpack.c.b16 %v1204, %v1198
        %v1337 = vpack.c.b16 %v1205, %v1199
        %v1338 = vpack.c.b16 %v1206, %v1200
        %v1339 = vpack.c.b16 %v1207, %v1201
        %v1340 = vpack.c.b16 %v1208, %v1202
        %v1341 = vpack.c.b16 %v1209, %v1203
        %v1342 = vpack.c.b16 %v1216, %v1210
        %v1343 = vpack.c.b16 %v1217, %v1211
        %v1344 = vpack.c.b16 %v1218, %v1212
        %v1345 = vpack.c.b16 %v1219, %v1213
        %v1346 = vpack.c.b16 %v1220, %v1214
        %v1347 = vpack.c.b16 %v1221, %v1215
        %v1348 = vpack.c.b16 %v1228, %v1222
        %v1349 = vpack.c.b16 %v1229, %v1223
        %v1350 = vpack.c.b16 %v1230, %v1224
        %v1351 = vpack.c.b16 %v1231, %v1225
        %v1352 = vpack.c.b16 %v1232, %v1226
        %v1353 = vpack.c.b16 %v1233, %v1227
        %v1354 = vpack.c.b16 %v1240, %v1234
        %v1355 = vpack.c.b16 %v1241, %v1235
        %v1356 = vpack.c.b16 %v1242, %v1236
        %v1357 = vpack.c.b16 %v1243, %v1237
        %v1358 = vpack.c.b16 %v1244, %v1238
        %v1359 = vpack.c.b16 %v1245, %v1239
        %v1360 = vpack.c.b16 %v1252, %v1246
        %v1361 = vpack.c.b16 %v1253, %v1247
        %v1362 = vpack.c.b16 %v1254, %v1248
        %v1363 = vpack.c.b16 %v1255, %v1249
        %v1364 = vpack.c.b16 %v1256, %v1250
        %v1365 = vpack.c.b16 %v1257, %v1251
        %v1366 = vpack.c.b16 %v1264, %v1258
        %v1367 = vpack.c.b16 %v1265, %v1259
        %v1368 = vpack.c.b16 %v1266, %v1260
        %v1369 = vpack.c.b16 %v1267, %v1261
        %v1370 = vpack.c.b16 %v1268, %v1262
        %v1371 = vpack.c.b16 %v1269, %v1263
        %v1372 = vpack.c.b16 %v1276, %v1270
        %v1373 = vpack.c.b16 %v1277, %v1271
        %v1374 = vpack.c.b16 %v1278, %v1272
        %v1375 = vpack.c.b16 %v1279, %v1273
        %v1376 = vpack.c.b16 %v1280, %v1274
        %v1377 = vpack.c.b16 %v1281, %v1275
        %1474 = vmatprep.subr.bf16.mxu0 %v1283
        %1475 = vmatpush1.bf16.msra.mxu0 %v1282
        %1476 = vmatprep.subr.bf16.mxu0 %v1289
        %1477 = vmatpush1.bf16.msra.mxu0 %v1288
        %1478 = vmatprep.subr.bf16.mxu0 %v1295
        %1479 = vmatpush1.bf16.msra.mxu0 %v1294
        %1480 = vmatprep.subr.bf16.mxu0 %v1301
        %1481 = vmatpush1.bf16.msra.mxu0 %v1300
        %1482 = vmatprep.subr.bf16.mxu0 %v1307
        %1483 = vmatpush1.bf16.msra.mxu0 %v1306
        %1484 = vmatprep.subr.bf16.mxu0 %v1313
        %1485 = vmatpush1.bf16.msra.mxu0 %v1312
        %1486 = vmatprep.subr.bf16.mxu0 %v1319
        %1487 = vmatpush1.bf16.msra.mxu0 %v1318
        %1488 = vmatprep.subr.bf16.mxu0 %v1325
        %1489 = vmatpush1.bf16.msra.mxu0 %v1324
        %1490 = vmatprep.subr.bf16.mxu0 %v1331
        %1491 = vmatpush1.bf16.msra.mxu0 %v1330
        %1492 = vmatprep.subr.bf16.mxu0 %v1337
        %1493 = vmatpush1.bf16.msra.mxu0 %v1336
        %1494 = vmatprep.subr.bf16.mxu0 %v1343
        %1495 = vmatpush1.bf16.msra.mxu0 %v1342
        %1496 = vmatprep.subr.bf16.mxu0 %v1349
        %1497 = vmatpush1.bf16.msra.mxu0 %v1348
        %1498 = vmatprep.subr.bf16.mxu0 %v1355
        %1499 = vmatpush1.bf16.msra.mxu0 %v1354
        %1500 = vmatprep.subr.bf16.mxu0 %v1361
        %1501 = vmatpush1.bf16.msra.mxu0 %v1360
        %1502 = vmatprep.subr.bf16.mxu0 %v1367
        %1503 = vmatpush1.bf16.msra.mxu0 %v1366
        %1504 = vmatprep.subr.bf16.mxu0 %v1373
        %1505 = vmatpush1.bf16.msra.mxu0 %v1372
        %1506 = vmatprep.mubr.bf16.mxu0 %v852
        %1507 = vmatmul.mubr.bf16.gmra.mrb[0].mxu0 %v851
        %v1508 = vpop.f32.mrb[0].mxu0
        %v1509 = vadd.f32 %v967, %v1508
        %v1510 = vpop.f32.mrb[0].mxu0
        %v1511 = vadd.f32 %v971, %v1510
        %v1512 = vpop.f32.mrb[0].mxu0
        %v1513 = vadd.f32 %v967, %v1512
        %v1514 = vpop.f32.mrb[0].mxu0
        %v1515 = vadd.f32 %v971, %v1514
        %1516 = vmatprep.mubr.bf16.mxu0 %v854
        %1517 = vmatmul.mubr.bf16.gmra.mrb[0].mxu0 %v853
        %v1518 = vpop.f32.mrb[0].mxu0
        %v1519 = vadd.f32 %v967, %v1518
        %v1520 = vpop.f32.mrb[0].mxu0
        %v1521 = vadd.f32 %v971, %v1520
        %v1522 = vpop.f32.mrb[0].mxu0
        %v1523 = vadd.f32 %v967, %v1522
        %v1524 = vpop.f32.mrb[0].mxu0
        %v1525 = vadd.f32 %v971, %v1524
        %1526 = vmatprep.mubr.bf16.mxu0 %v856
        %1527 = vmatmul.mubr.bf16.gmra.mrb[0].mxu0 %v855
        %v1528 = vpop.f32.mrb[0].mxu0
        %v1529 = vadd.f32 %v967, %v1528
        %v1530 = vpop.f32.mrb[0].mxu0
        %v1531 = vadd.f32 %v971, %v1530
        %v1532 = vpop.f32.mrb[0].mxu0
        %v1533 = vadd.f32 %v967, %v1532
        %v1534 = vpop.f32.mrb[0].mxu0
        %v1535 = vadd.f32 %v971, %v1534
        %1536 = vmatprep.mubr.bf16.mxu0 %v858
        %1537 = vmatmul.mubr.bf16.gmra.mrb[0].mxu0 %v857
        %v1538 = vpop.f32.mrb[0].mxu0
        %v1539 = vadd.f32 %v967, %v1538
        %v1540 = vpop.f32.mrb[0].mxu0
        %v1541 = vadd.f32 %v971, %v1540
        %v1542 = vpop.f32.mrb[0].mxu0
        %v1543 = vadd.f32 %v967, %v1542
        %v1544 = vpop.f32.mrb[0].mxu0
        %v1545 = vadd.f32 %v971, %v1544
        %1546 = vmatprep.mubr.bf16.mxu0 %v860
        %1547 = vmatmul.mubr.bf16.gmra.mrb[0].mxu0 %v859
        %v1548 = vpop.f32.mrb[0].mxu0
        %v1549 = vadd.f32 %v967, %v1548
        %v1550 = vpop.f32.mrb[0].mxu0
        %v1551 = vadd.f32 %v971, %v1550
        %v1552 = vpop.f32.mrb[0].mxu0
        %v1553 = vadd.f32 %v967, %v1552
        %v1554 = vpop.f32.mrb[0].mxu0
        %v1555 = vadd.f32 %v971, %v1554
        %1556 = vmatprep.mubr.bf16.mxu0 %v862
        %1557 = vmatmul.mubr.bf16.gmra.mrb[0].mxu0 %v861
        %v1558 = vpop.f32.mrb[0].mxu0
        %v1559 = vadd.f32 %v967, %v1558
        %v1560 = vpop.f32.mrb[0].mxu0
        %v1561 = vadd.f32 %v971, %v1560
        %v1562 = vpop.f32.mrb[0].mxu0
        %v1563 = vadd.f32 %v967, %v1562
        %v1564 = vpop.f32.mrb[0].mxu0
        %v1565 = vadd.f32 %v971, %v1564
        %1566 = vmatprep.mubr.bf16.mxu0 %v864
        %1567 = vmatmul.mubr.bf16.gmra.mrb[0].mxu0 %v863
        %v1568 = vpop.f32.mrb[0].mxu0
        %v1569 = vadd.f32 %v967, %v1568
        %v1570 = vpop.f32.mrb[0].mxu0
        %v1571 = vadd.f32 %v971, %v1570
        %v1572 = vpop.f32.mrb[0].mxu0
        %v1573 = vadd.f32 %v967, %v1572
        %v1574 = vpop.f32.mrb[0].mxu0
        %v1575 = vadd.f32 %v971, %v1574
        %1576 = vmatprep.mubr.bf16.mxu0 %v866
        %1577 = vmatmul.mubr.bf16.gmra.mrb[0].mxu0 %v865
        %v1578 = vpop.f32.mrb[0].mxu0
        %v1579 = vadd.f32 %v967, %v1578
        %v1580 = vpop.f32.mrb[0].mxu0
        %v1581 = vadd.f32 %v971, %v1580
        %v1582 = vpop.f32.mrb[0].mxu0
        %v1583 = vadd.f32 %v967, %v1582
        %v1584 = vpop.f32.mrb[0].mxu0
        %v1585 = vadd.f32 %v971, %v1584
        %1586 = vdwg.mxu0
        %1587 = vmatprep.subr.bf16.mxu0 %v1285
        %1588 = vmatpush1.bf16.msra.mxu0 %v1284
        %1589 = vmatprep.subr.bf16.mxu0 %v1291
        %1590 = vmatpush1.bf16.msra.mxu0 %v1290
        %1591 = vmatprep.subr.bf16.mxu0 %v1297
        %1592 = vmatpush1.bf16.msra.mxu0 %v1296
        %1593 = vmatprep.subr.bf16.mxu0 %v1303
        %1594 = vmatpush1.bf16.msra.mxu0 %v1302
        %1595 = vmatprep.subr.bf16.mxu0 %v1309
        %1596 = vmatpush1.bf16.msra.mxu0 %v1308
        %1597 = vmatprep.subr.bf16.mxu0 %v1315
        %1598 = vmatpush1.bf16.msra.mxu0 %v1314
        %1599 = vmatprep.subr.bf16.mxu0 %v1321
        %1600 = vmatpush1.bf16.msra.mxu0 %v1320
        %1601 = vmatprep.subr.bf16.mxu0 %v1327
        %1602 = vmatpush1.bf16.msra.mxu0 %v1326
        %1603 = vmatprep.subr.bf16.mxu0 %v1333
        %1604 = vmatpush1.bf16.msra.mxu0 %v1332
        %1605 = vmatprep.subr.bf16.mxu0 %v1339
        %1606 = vmatpush1.bf16.msra.mxu0 %v1338
        %1607 = vmatprep.subr.bf16.mxu0 %v1345
        %1608 = vmatpush1.bf16.msra.mxu0 %v1344
        %1609 = vmatprep.subr.bf16.mxu0 %v1351
        %1610 = vmatpush1.bf16.msra.mxu0 %v1350
        %1611 = vmatprep.subr.bf16.mxu0 %v1357
        %1612 = vmatpush1.bf16.msra.mxu0 %v1356
        %1613 = vmatprep.subr.bf16.mxu0 %v1363
        %1614 = vmatpush1.bf16.msra.mxu0 %v1362
        %1615 = vmatprep.subr.bf16.mxu0 %v1369
        %1616 = vmatpush1.bf16.msra.mxu0 %v1368
        %1617 = vmatprep.subr.bf16.mxu0 %v1375
        %1618 = vmatpush1.bf16.msra.mxu0 %v1374
        %1619 = vmatprep.mubr.bf16.mxu0 %v852
        %1620 = vmatmul.mubr.bf16.gmra.mrb[0].mxu0 %v851
        %v1621 = vpop.f32.mrb[0].mxu0
        %v1622 = vadd.f32 %v975, %v1621
        %v1623 = vpop.f32.mrb[0].mxu0
        %v1624 = vadd.f32 %v979, %v1623
        %v1625 = vpop.f32.mrb[0].mxu0
        %v1626 = vadd.f32 %v975, %v1625
        %v1627 = vpop.f32.mrb[0].mxu0
        %v1628 = vadd.f32 %v979, %v1627
        %1629 = vmatprep.mubr.bf16.mxu0 %v854
        %1630 = vmatmul.mubr.bf16.gmra.mrb[0].mxu0 %v853
        %v1631 = vpop.f32.mrb[0].mxu0
        %v1632 = vadd.f32 %v975, %v1631
        %v1633 = vpop.f32.mrb[0].mxu0
        %v1634 = vadd.f32 %v979, %v1633
        %v1635 = vpop.f32.mrb[0].mxu0
        %v1636 = vadd.f32 %v975, %v1635
        %v1637 = vpop.f32.mrb[0].mxu0
        %v1638 = vadd.f32 %v979, %v1637
        %1639 = vmatprep.mubr.bf16.mxu0 %v856
        %1640 = vmatmul.mubr.bf16.gmra.mrb[0].mxu0 %v855
        %v1641 = vpop.f32.mrb[0].mxu0
        %v1642 = vadd.f32 %v975, %v1641
        %v1643 = vpop.f32.mrb[0].mxu0
        %v1644 = vadd.f32 %v979, %v1643
        %v1645 = vpop.f32.mrb[0].mxu0
        %v1646 = vadd.f32 %v975, %v1645
        %v1647 = vpop.f32.mrb[0].mxu0
        %v1648 = vadd.f32 %v979, %v1647
        %1649 = vmatprep.mubr.bf16.mxu0 %v858
        %1650 = vmatmul.mubr.bf16.gmra.mrb[0].mxu0 %v857
        %v1651 = vpop.f32.mrb[0].mxu0
        %v1652 = vadd.f32 %v975, %v1651
        %v1653 = vpop.f32.mrb[0].mxu0
        %v1654 = vadd.f32 %v979, %v1653
        %v1655 = vpop.f32.mrb[0].mxu0
        %v1656 = vadd.f32 %v975, %v1655
        %v1657 = vpop.f32.mrb[0].mxu0
        %v1658 = vadd.f32 %v979, %v1657
        %1659 = vmatprep.mubr.bf16.mxu0 %v860
        %1660 = vmatmul.mubr.bf16.gmra.mrb[0].mxu0 %v859
        %v1661 = vpop.f32.mrb[0].mxu0
        %v1662 = vadd.f32 %v975, %v1661
        %v1663 = vpop.f32.mrb[0].mxu0
        %v1664 = vadd.f32 %v979, %v1663
        %v1665 = vpop.f32.mrb[0].mxu0
        %v1666 = vadd.f32 %v975, %v1665
        %v1667 = vpop.f32.mrb[0].mxu0
        %v1668 = vadd.f32 %v979, %v1667
        %1669 = vmatprep.mubr.bf16.mxu0 %v862
        %1670 = vmatmul.mubr.bf16.gmra.mrb[0].mxu0 %v861
        %v1671 = vpop.f32.mrb[0].mxu0
        %v1672 = vadd.f32 %v975, %v1671
        %v1673 = vpop.f32.mrb[0].mxu0
        %v1674 = vadd.f32 %v979, %v1673
        %v1675 = vpop.f32.mrb[0].mxu0
        %v1676 = vadd.f32 %v975, %v1675
        %v1677 = vpop.f32.mrb[0].mxu0
        %v1678 = vadd.f32 %v979, %v1677
        %1679 = vmatprep.mubr.bf16.mxu0 %v864
        %1680 = vmatmul.mubr.bf16.gmra.mrb[0].mxu0 %v863
        %v1681 = vpop.f32.mrb[0].mxu0
        %v1682 = vadd.f32 %v975, %v1681
        %v1683 = vpop.f32.mrb[0].mxu0
        %v1684 = vadd.f32 %v979, %v1683
        %v1685 = vpop.f32.mrb[0].mxu0
        %v1686 = vadd.f32 %v975, %v1685
        %v1687 = vpop.f32.mrb[0].mxu0
        %v1688 = vadd.f32 %v979, %v1687
        %1689 = vmatprep.mubr.bf16.mxu0 %v866
        %1690 = vmatmul.mubr.bf16.gmra.mrb[0].mxu0 %v865
        %v1691 = vpop.f32.mrb[0].mxu0
        %v1692 = vadd.f32 %v975, %v1691
        %v1693 = vpop.f32.mrb[0].mxu0
        %v1694 = vadd.f32 %v979, %v1693
        %v1695 = vpop.f32.mrb[0].mxu0
        %v1696 = vadd.f32 %v975, %v1695
        %v1697 = vpop.f32.mrb[0].mxu0
        %v1698 = vadd.f32 %v979, %v1697
        %1699 = vdwg.mxu0
        %1700 = vmatprep.subr.bf16.mxu0 %v1287
        %1701 = vmatpush1.bf16.msra.mxu0 %v1286
        %1702 = vmatprep.subr.bf16.mxu0 %v1293
        %1703 = vmatpush1.bf16.msra.mxu0 %v1292
        %1704 = vmatprep.subr.bf16.mxu0 %v1299
        %1705 = vmatpush1.bf16.msra.mxu0 %v1298
        %1706 = vmatprep.subr.bf16.mxu0 %v1305
        %1707 = vmatpush1.bf16.msra.mxu0 %v1304
        %1708 = vmatprep.subr.bf16.mxu0 %v1311
        %1709 = vmatpush1.bf16.msra.mxu0 %v1310
        %1710 = vmatprep.subr.bf16.mxu0 %v1317
        %1711 = vmatpush1.bf16.msra.mxu0 %v1316
        %1712 = vmatprep.subr.bf16.mxu0 %v1323
        %1713 = vmatpush1.bf16.msra.mxu0 %v1322
        %1714 = vmatprep.subr.bf16.mxu0 %v1329
        %1715 = vmatpush1.bf16.msra.mxu0 %v1328
        %1716 = vmatprep.subr.bf16.mxu0 %v1335
        %1717 = vmatpush1.bf16.msra.mxu0 %v1334
        %1718 = vmatprep.subr.bf16.mxu0 %v1341
        %1719 = vmatpush1.bf16.msra.mxu0 %v1340
        %1720 = vmatprep.subr.bf16.mxu0 %v1347
        %1721 = vmatpush1.bf16.msra.mxu0 %v1346
        %1722 = vmatprep.subr.bf16.mxu0 %v1353
        %1723 = vmatpush1.bf16.msra.mxu0 %v1352
        %1724 = vmatprep.subr.bf16.mxu0 %v1359
        %1725 = vmatpush1.bf16.msra.mxu0 %v1358
        %1726 = vmatprep.subr.bf16.mxu0 %v1365
        %1727 = vmatpush1.bf16.msra.mxu0 %v1364
        %1728 = vmatprep.subr.bf16.mxu0 %v1371
        %1729 = vmatpush1.bf16.msra.mxu0 %v1370
        %1730 = vmatprep.subr.bf16.mxu0 %v1377
        %1731 = vmatpush1.bf16.msra.mxu0 %v1376
        %1732 = vmatprep.mubr.bf16.mxu0 %v852
        %1733 = vmatmul.mubr.bf16.gmra.mrb[0].mxu0 %v851
        %v1734 = vpop.f32.mrb[0].mxu0
        %v1735 = vadd.f32 %v983, %v1734
        %v1736 = vpop.f32.mrb[0].mxu0
        %v1737 = vadd.f32 %v987, %v1736
        %v1738 = vpop.f32.mrb[0].mxu0
        %v1739 = vadd.f32 %v983, %v1738
        %v1740 = vpop.f32.mrb[0].mxu0
        %v1741 = vadd.f32 %v987, %v1740
        %1742 = vmatprep.mubr.bf16.mxu0 %v854
        %1743 = vmatmul.mubr.bf16.gmra.mrb[0].mxu0 %v853
        %v1744 = vpop.f32.mrb[0].mxu0
        %v1745 = vadd.f32 %v983, %v1744
        %v1746 = vpop.f32.mrb[0].mxu0
        %v1747 = vadd.f32 %v987, %v1746
        %v1748 = vpop.f32.mrb[0].mxu0
        %v1749 = vadd.f32 %v983, %v1748
        %v1750 = vpop.f32.mrb[0].mxu0
        %v1751 = vadd.f32 %v987, %v1750
        %1752 = vmatprep.mubr.bf16.mxu0 %v856
        %1753 = vmatmul.mubr.bf16.gmra.mrb[0].mxu0 %v855
        %v1754 = vpop.f32.mrb[0].mxu0
        %v1755 = vadd.f32 %v983, %v1754
        %v1756 = vpop.f32.mrb[0].mxu0
        %v1757 = vadd.f32 %v987, %v1756
        %v1758 = vpop.f32.mrb[0].mxu0
        %v1759 = vadd.f32 %v983, %v1758
        %v1760 = vpop.f32.mrb[0].mxu0
        %v1761 = vadd.f32 %v987, %v1760
        %1762 = vmatprep.mubr.bf16.mxu0 %v858
        %1763 = vmatmul.mubr.bf16.gmra.mrb[0].mxu0 %v857
        %v1764 = vpop.f32.mrb[0].mxu0
        %v1765 = vadd.f32 %v983, %v1764
        %v1766 = vpop.f32.mrb[0].mxu0
        %v1767 = vadd.f32 %v987, %v1766
        %v1768 = vpop.f32.mrb[0].mxu0
        %v1769 = vadd.f32 %v983, %v1768
        %v1770 = vpop.f32.mrb[0].mxu0
        %v1771 = vadd.f32 %v987, %v1770
        %1772 = vmatprep.mubr.bf16.mxu0 %v860
        %1773 = vmatmul.mubr.bf16.gmra.mrb[0].mxu0 %v859
        %v1774 = vpop.f32.mrb[0].mxu0
        %v1775 = vadd.f32 %v983, %v1774
        %v1776 = vpop.f32.mrb[0].mxu0
        %v1777 = vadd.f32 %v987, %v1776
        %v1778 = vpop.f32.mrb[0].mxu0
        %v1779 = vadd.f32 %v983, %v1778
        %v1780 = vpop.f32.mrb[0].mxu0
        %v1781 = vadd.f32 %v987, %v1780
        %1782 = vmatprep.mubr.bf16.mxu0 %v862
        %1783 = vmatmul.mubr.bf16.gmra.mrb[0].mxu0 %v861
        %v1784 = vpop.f32.mrb[0].mxu0
        %v1785 = vadd.f32 %v983, %v1784
        %v1786 = vpop.f32.mrb[0].mxu0
        %v1787 = vadd.f32 %v987, %v1786
        %v1788 = vpop.f32.mrb[0].mxu0
        %v1789 = vadd.f32 %v983, %v1788
        %v1790 = vpop.f32.mrb[0].mxu0
        %v1791 = vadd.f32 %v987, %v1790
        %1792 = vmatprep.mubr.bf16.mxu0 %v864
        %1793 = vmatmul.mubr.bf16.gmra.mrb[0].mxu0 %v863
        %v1794 = vpop.f32.mrb[0].mxu0
        %v1795 = vadd.f32 %v983, %v1794
        %v1796 = vpop.f32.mrb[0].mxu0
        %v1797 = vadd.f32 %v987, %v1796
        %v1798 = vpop.f32.mrb[0].mxu0
        %v1799 = vadd.f32 %v983, %v1798
        %v1800 = vpop.f32.mrb[0].mxu0
        %v1801 = vadd.f32 %v987, %v1800
        %1802 = vmatprep.mubr.bf16.mxu0 %v866
        %1803 = vmatmul.mubr.bf16.gmra.mrb[0].mxu0 %v865
        %v1804 = vpop.f32.mrb[0].mxu0
        %v1805 = vadd.f32 %v983, %v1804
        %v1806 = vpop.f32.mrb[0].mxu0
        %v1807 = vadd.f32 %v987, %v1806
        %v1808 = vpop.f32.mrb[0].mxu0
        %v1809 = vadd.f32 %v983, %v1808
        %v1810 = vpop.f32.mrb[0].mxu0
        %v1811 = vadd.f32 %v987, %v1810
        %1812 = vdwg.mxu0
        %v1813 = vpack.c.bf16 %v1513, %v1509
        %v1814 = vpack.c.bf16 %v1515, %v1511
        %v1815 = vpack.c.bf16 %v1626, %v1622
        %v1816 = vpack.c.bf16 %v1628, %v1624
        %v1817 = vpack.c.bf16 %v1739, %v1735
        %v1818 = vpack.c.bf16 %v1741, %v1737
        %v1819 = vpack.c.bf16 %v1523, %v1519
        %v1820 = vpack.c.bf16 %v1525, %v1521
        %v1821 = vpack.c.bf16 %v1636, %v1632
        %v1822 = vpack.c.bf16 %v1638, %v1634
        %v1823 = vpack.c.bf16 %v1749, %v1745
        %v1824 = vpack.c.bf16 %v1751, %v1747
        %v1825 = vpack.c.bf16 %v1533, %v1529
        %v1826 = vpack.c.bf16 %v1535, %v1531
        %v1827 = vpack.c.bf16 %v1646, %v1642
        %v1828 = vpack.c.bf16 %v1648, %v1644
        %v1829 = vpack.c.bf16 %v1759, %v1755
        %v1830 = vpack.c.bf16 %v1761, %v1757
        %v1831 = vpack.c.bf16 %v1543, %v1539
        %v1832 = vpack.c.bf16 %v1545, %v1541
        %v1833 = vpack.c.bf16 %v1656, %v1652
        %v1834 = vpack.c.bf16 %v1658, %v1654
        %v1835 = vpack.c.bf16 %v1769, %v1765
        %v1836 = vpack.c.bf16 %v1771, %v1767
        %v1837 = vpack.c.bf16 %v1553, %v1549
        %v1838 = vpack.c.bf16 %v1555, %v1551
        %v1839 = vpack.c.bf16 %v1666, %v1662
        %v1840 = vpack.c.bf16 %v1668, %v1664
        %v1841 = vpack.c.bf16 %v1779, %v1775
        %v1842 = vpack.c.bf16 %v1781, %v1777
        %v1843 = vpack.c.bf16 %v1563, %v1559
        %v1844 = vpack.c.bf16 %v1565, %v1561
        %v1845 = vpack.c.bf16 %v1676, %v1672
        %v1846 = vpack.c.bf16 %v1678, %v1674
        %v1847 = vpack.c.bf16 %v1789, %v1785
        %v1848 = vpack.c.bf16 %v1791, %v1787
        %v1849 = vpack.c.bf16 %v1573, %v1569
        %v1850 = vpack.c.bf16 %v1575, %v1571
        %v1851 = vpack.c.bf16 %v1686, %v1682
        %v1852 = vpack.c.bf16 %v1688, %v1684
        %v1853 = vpack.c.bf16 %v1799, %v1795
        %v1854 = vpack.c.bf16 %v1801, %v1797
        %v1855 = vpack.c.bf16 %v1583, %v1579
        %v1856 = vpack.c.bf16 %v1585, %v1581
        %v1857 = vpack.c.bf16 %v1696, %v1692
        %v1858 = vpack.c.bf16 %v1698, %v1694
        %v1859 = vpack.c.bf16 %v1809, %v1805
        %v1860 = vpack.c.bf16 %v1811, %v1807
        %v1861 = vld [vmem:[%s374] sm:$0xff]
        %v1862 = vld [vmem:[%s374 + $0x8] sm:$0xff]
        %v1863 = vld [vmem:[%s374 + $0x10] sm:$0xff]
        %v1864 = vld [vmem:[%s374 + $0x18] sm:$0xff]
        %v1865 = vld [vmem:[%s374 + $0x20] sm:$0xff]
        %v1866 = vld [vmem:[%s374 + $0x28] sm:$0xff]
        %v1867 = vld [vmem:[%s374 + $0x30] sm:$0xff]
        %v1868 = vld [vmem:[%s374 + $0x38] sm:$0xff]
        %v1877 = vunpack.c.l.b16 %v1861
        %v1878 = vunpack.c.h.b16 %v1861
        %v1879 = vunpack.c.l.b16 %v1862
        %v1880 = vunpack.c.h.b16 %v1862
        %v1881 = vunpack.c.l.b16 %v1863
        %v1882 = vunpack.c.h.b16 %v1863
        %v1883 = vunpack.c.l.b16 %v1864
        %v1884 = vunpack.c.h.b16 %v1864
        %v1885 = vunpack.c.l.b16 %v1865
        %v1886 = vunpack.c.h.b16 %v1865
        %v1887 = vunpack.c.l.b16 %v1866
        %v1888 = vunpack.c.h.b16 %v1866
        %v1889 = vunpack.c.l.b16 %v1867
        %v1890 = vunpack.c.h.b16 %v1867
        %v1891 = vunpack.c.l.b16 %v1868
        %v1892 = vunpack.c.h.b16 %v1868
        %v1893 = vpack.c.b16 %v1879, %v1877
        %v1894 = vpack.c.b16 %v1880, %v1878
        %v1895 = vpack.c.b16 %v1883, %v1881
        %v1896 = vpack.c.b16 %v1884, %v1882
        %v1897 = vpack.c.b16 %v1887, %v1885
        %v1898 = vpack.c.b16 %v1888, %v1886
        %v1899 = vpack.c.b16 %v1891, %v1889
        %v1900 = vpack.c.b16 %v1892, %v1890
        %vm1909 = vcmask 523264
        %v1911 = vsel %vm1909, %v1817, 0
        %v1914 = vsel %vm1909, %v1823, 0
        %v1917 = vsel %vm1909, %v1829, 0
        %v1920 = vsel %vm1909, %v1835, 0
        %v1923 = vsel %vm1909, %v1841, 0
        %v1926 = vsel %vm1909, %v1847, 0
        %v1929 = vsel %vm1909, %v1853, 0
        %v1932 = vsel %vm1909, %v1859, 0
        %1934 = vmatprep.subr.bf16.mxu0 %v1894
        %1935 = vmatpush1.bf16.msra.mxu0 %v1893
        %1936 = vmatprep.subr.bf16.mxu0 %v1896
        %1937 = vmatpush1.bf16.msra.mxu0 %v1895
        %1938 = vmatprep.subr.bf16.mxu0 %v1898
        %1939 = vmatpush1.bf16.msra.mxu0 %v1897
        %1940 = vmatprep.subr.bf16.mxu0 %v1900
        %1941 = vmatpush1.bf16.msra.mxu0 %v1899
        %1942 = vmatprep.subr.bf16.mxu0 0
        %1943 = vmatpush1.bf16.msra.mxu0 0
        %1944 = vmatprep.subr.bf16.mxu0 0
        %1945 = vmatpush1.bf16.msra.mxu0 0
        %1946 = vmatprep.subr.bf16.mxu0 0
        %1947 = vmatpush1.bf16.msra.mxu0 0
        %1948 = vmatprep.subr.bf16.mxu0 0
        %1949 = vmatpush1.bf16.msra.mxu0 0
        %1950 = vmatprep.subr.bf16.mxu0 0
        %1951 = vmatpush1.bf16.msra.mxu0 0
        %1952 = vmatprep.subr.bf16.mxu0 0
        %1953 = vmatpush1.bf16.msra.mxu0 0
        %1954 = vmatprep.subr.bf16.mxu0 0
        %1955 = vmatpush1.bf16.msra.mxu0 0
        %1956 = vmatprep.subr.bf16.mxu0 0
        %1957 = vmatpush1.bf16.msra.mxu0 0
        %1958 = vmatprep.subr.bf16.mxu0 0
        %1959 = vmatpush1.bf16.msra.mxu0 0
        %1960 = vmatprep.subr.bf16.mxu0 0
        %1961 = vmatpush1.bf16.msra.mxu0 0
        %1962 = vmatprep.subr.bf16.mxu0 0
        %1963 = vmatpush1.bf16.msra.mxu0 0
        %1964 = vmatprep.subr.bf16.mxu0 0
        %1965 = vmatpush1.bf16.msra.mxu0 0
        %1966 = vmatprep.mubr.bf16.mxu0 0
        %1967 = vmatmul.mubr.bf16.gmra.mrb[0].mxu0 %v1911
        %v1968 = vpop.f32.mrb[0].mxu0
        %v1969 = vadd.f32 0.0, %v1968
        %v1970 = vpop.f32.mrb[0].mxu0
        %v1971 = vadd.f32 0.0, %v1970
        %v1972 = vpop.f32.mrb[0].mxu0
        %v1973 = vadd.f32 0.0, %v1972
        %v1974 = vpop.f32.mrb[0].mxu0
        %v1975 = vadd.f32 0.0, %v1974
        %1976 = vmatprep.mubr.bf16.mxu0 0
        %1977 = vmatmul.mubr.bf16.gmra.mrb[0].mxu0 %v1914
        %v1978 = vpop.f32.mrb[0].mxu0
        %v1979 = vadd.f32 0.0, %v1978
        %v1980 = vpop.f32.mrb[0].mxu0
        %v1981 = vadd.f32 0.0, %v1980
        %v1982 = vpop.f32.mrb[0].mxu0
        %v1983 = vadd.f32 0.0, %v1982
        %v1984 = vpop.f32.mrb[0].mxu0
        %v1985 = vadd.f32 0.0, %v1984
        %1986 = vmatprep.mubr.bf16.mxu0 0
        %1987 = vmatmul.mubr.bf16.gmra.mrb[0].mxu0 %v1917
        %v1988 = vpop.f32.mrb[0].mxu0
        %v1989 = vadd.f32 0.0, %v1988
        %v1990 = vpop.f32.mrb[0].mxu0
        %v1991 = vadd.f32 0.0, %v1990
        %v1992 = vpop.f32.mrb[0].mxu0
        %v1993 = vadd.f32 0.0, %v1992
        %v1994 = vpop.f32.mrb[0].mxu0
        %v1995 = vadd.f32 0.0, %v1994
        %1996 = vmatprep.mubr.bf16.mxu0 0
        %1997 = vmatmul.mubr.bf16.gmra.mrb[0].mxu0 %v1920
        %v1998 = vpop.f32.mrb[0].mxu0
        %v1999 = vadd.f32 0.0, %v1998
        %v2000 = vpop.f32.mrb[0].mxu0
        %v2001 = vadd.f32 0.0, %v2000
        %v2002 = vpop.f32.mrb[0].mxu0
        %v2003 = vadd.f32 0.0, %v2002
        %v2004 = vpop.f32.mrb[0].mxu0
        %v2005 = vadd.f32 0.0, %v2004
        %2006 = vmatprep.mubr.bf16.mxu0 0
        %2007 = vmatmul.mubr.bf16.gmra.mrb[0].mxu0 %v1923
        %v2008 = vpop.f32.mrb[0].mxu0
        %v2009 = vadd.f32 0.0, %v2008
        %v2010 = vpop.f32.mrb[0].mxu0
        %v2011 = vadd.f32 0.0, %v2010
        %v2012 = vpop.f32.mrb[0].mxu0
        %v2013 = vadd.f32 0.0, %v2012
        %v2014 = vpop.f32.mrb[0].mxu0
        %v2015 = vadd.f32 0.0, %v2014
        %2016 = vmatprep.mubr.bf16.mxu0 0
        %2017 = vmatmul.mubr.bf16.gmra.mrb[0].mxu0 %v1926
        %v2018 = vpop.f32.mrb[0].mxu0
        %v2019 = vadd.f32 0.0, %v2018
        %v2020 = vpop.f32.mrb[0].mxu0
        %v2021 = vadd.f32 0.0, %v2020
        %v2022 = vpop.f32.mrb[0].mxu0
        %v2023 = vadd.f32 0.0, %v2022
        %v2024 = vpop.f32.mrb[0].mxu0
        %v2025 = vadd.f32 0.0, %v2024
        %2026 = vmatprep.mubr.bf16.mxu0 0
        %2027 = vmatmul.mubr.bf16.gmra.mrb[0].mxu0 %v1929
        %v2028 = vpop.f32.mrb[0].mxu0
        %v2029 = vadd.f32 0.0, %v2028
        %v2030 = vpop.f32.mrb[0].mxu0
        %v2031 = vadd.f32 0.0, %v2030
        %v2032 = vpop.f32.mrb[0].mxu0
        %v2033 = vadd.f32 0.0, %v2032
        %v2034 = vpop.f32.mrb[0].mxu0
        %v2035 = vadd.f32 0.0, %v2034
        %2036 = vmatprep.mubr.bf16.mxu0 0
        %2037 = vmatmul.mubr.bf16.gmra.mrb[0].mxu0 %v1932
        %v2038 = vpop.f32.mrb[0].mxu0
        %v2039 = vadd.f32 0.0, %v2038
        %v2040 = vpop.f32.mrb[0].mxu0
        %v2041 = vadd.f32 0.0, %v2040
        %v2042 = vpop.f32.mrb[0].mxu0
        %v2043 = vadd.f32 0.0, %v2042
        %v2044 = vpop.f32.mrb[0].mxu0
        %v2045 = vadd.f32 0.0, %v2044
        %2046 = vdwg.mxu0
        %v2047 = vpack.c.bf16 %v1973, %v1969
        %v2048 = vpack.c.bf16 %v1975, %v1971
        %v2049 = vpack.c.bf16 %v1983, %v1979
        %v2050 = vpack.c.bf16 %v1985, %v1981
        %v2051 = vpack.c.bf16 %v1993, %v1989
        %v2052 = vpack.c.bf16 %v1995, %v1991
        %v2053 = vpack.c.bf16 %v2003, %v1999
        %v2054 = vpack.c.bf16 %v2005, %v2001
        %v2055 = vpack.c.bf16 %v2013, %v2009
        %v2056 = vpack.c.bf16 %v2015, %v2011
        %v2057 = vpack.c.bf16 %v2023, %v2019
        %v2058 = vpack.c.bf16 %v2025, %v2021
        %v2059 = vpack.c.bf16 %v2033, %v2029
        %v2060 = vpack.c.bf16 %v2035, %v2031
        %v2061 = vpack.c.bf16 %v2043, %v2039
        %v2062 = vpack.c.bf16 %v2045, %v2041
        %v2063 = vld [vmem:[%s374 + $0x40] sm:$0xff]
        %v2064 = vld [vmem:[%s374 + $0x48] sm:$0xff]
        %v2065 = vld [vmem:[%s374 + $0x50] sm:$0xff]
        %v2066 = vld [vmem:[%s374 + $0x58] sm:$0xff]
        %v2067 = vld [vmem:[%s374 + $0x60] sm:$0xff]
        %v2068 = vld [vmem:[%s374 + $0x68] sm:$0xff]
        %v2069 = vld [vmem:[%s374 + $0x70] sm:$0xff]
        %v2070 = vld [vmem:[%s374 + $0x78] sm:$0xff]
        %2079 = vrot.lane.b32.xlu0 %v1817, 64
        %v2080 = vpop.permute.xlu0 %2079
        %2081 = vrot.lane.b32.xlu0 %v1823, 64
        %v2082 = vpop.permute.xlu0 %2081
        %2083 = vrot.lane.b32.xlu0 %v1829, 64
        %v2084 = vpop.permute.xlu0 %2083
        %2085 = vrot.lane.b32.xlu0 %v1835, 64
        %v2086 = vpop.permute.xlu0 %2085
        %2087 = vrot.lane.b32.xlu0 %v1841, 64
        %v2088 = vpop.permute.xlu0 %2087
        %2089 = vrot.lane.b32.xlu0 %v1847, 64
        %v2090 = vpop.permute.xlu0 %2089
        %2091 = vrot.lane.b32.xlu0 %v1853, 64
        %v2092 = vpop.permute.xlu0 %2091
        %2093 = vrot.lane.b32.xlu0 %v1859, 64
        %v2094 = vpop.permute.xlu0 %2093
        %v2103 = vunpack.c.l.b16 %v2063
        %v2104 = vunpack.c.h.b16 %v2063
        %v2105 = vunpack.c.l.b16 %v2064
        %v2106 = vunpack.c.h.b16 %v2064
        %v2107 = vunpack.c.l.b16 %v2065
        %v2108 = vunpack.c.h.b16 %v2065
        %v2109 = vunpack.c.l.b16 %v2066
        %v2110 = vunpack.c.h.b16 %v2066
        %v2111 = vunpack.c.l.b16 %v2067
        %v2112 = vunpack.c.h.b16 %v2067
        %v2113 = vunpack.c.l.b16 %v2068
        %v2114 = vunpack.c.h.b16 %v2068
        %v2115 = vunpack.c.l.b16 %v2069
        %v2116 = vunpack.c.h.b16 %v2069
        %v2117 = vunpack.c.l.b16 %v2070
        %v2118 = vunpack.c.h.b16 %v2070
        %v2119 = vpack.c.b16 %v2105, %v2103
        %v2120 = vpack.c.b16 %v2106, %v2104
        %v2121 = vpack.c.b16 %v2109, %v2107
        %v2122 = vpack.c.b16 %v2110, %v2108
        %v2123 = vpack.c.b16 %v2113, %v2111
        %v2124 = vpack.c.b16 %v2114, %v2112
        %v2125 = vpack.c.b16 %v2117, %v2115
        %v2126 = vpack.c.b16 %v2118, %v2116
        %v2136 = vsel %vm1909, %v2080, 0
        %v2139 = vsel %vm1909, %v2082, 0
        %v2142 = vsel %vm1909, %v2084, 0
        %v2145 = vsel %vm1909, %v2086, 0
        %v2148 = vsel %vm1909, %v2088, 0
        %v2151 = vsel %vm1909, %v2090, 0
        %v2154 = vsel %vm1909, %v2092, 0
        %v2157 = vsel %vm1909, %v2094, 0
        %2159 = vmatprep.subr.bf16.mxu0 %v2120
        %2160 = vmatpush1.bf16.msra.mxu0 %v2119
        %2161 = vmatprep.subr.bf16.mxu0 %v2122
        %2162 = vmatpush1.bf16.msra.mxu0 %v2121
        %2163 = vmatprep.subr.bf16.mxu0 %v2124
        %2164 = vmatpush1.bf16.msra.mxu0 %v2123
        %2165 = vmatprep.subr.bf16.mxu0 %v2126
        %2166 = vmatpush1.bf16.msra.mxu0 %v2125
        %2167 = vmatprep.subr.bf16.mxu0 0
        %2168 = vmatpush1.bf16.msra.mxu0 0
        %2169 = vmatprep.subr.bf16.mxu0 0
        %2170 = vmatpush1.bf16.msra.mxu0 0
        %2171 = vmatprep.subr.bf16.mxu0 0
        %2172 = vmatpush1.bf16.msra.mxu0 0
        %2173 = vmatprep.subr.bf16.mxu0 0
        %2174 = vmatpush1.bf16.msra.mxu0 0
        %2175 = vmatprep.subr.bf16.mxu0 0
        %2176 = vmatpush1.bf16.msra.mxu0 0
        %2177 = vmatprep.subr.bf16.mxu0 0
        %2178 = vmatpush1.bf16.msra.mxu0 0
        %2179 = vmatprep.subr.bf16.mxu0 0
        %2180 = vmatpush1.bf16.msra.mxu0 0
        %2181 = vmatprep.subr.bf16.mxu0 0
        %2182 = vmatpush1.bf16.msra.mxu0 0
        %2183 = vmatprep.subr.bf16.mxu0 0
        %2184 = vmatpush1.bf16.msra.mxu0 0
        %2185 = vmatprep.subr.bf16.mxu0 0
        %2186 = vmatpush1.bf16.msra.mxu0 0
        %2187 = vmatprep.subr.bf16.mxu0 0
        %2188 = vmatpush1.bf16.msra.mxu0 0
        %2189 = vmatprep.subr.bf16.mxu0 0
        %2190 = vmatpush1.bf16.msra.mxu0 0
        %2191 = vmatprep.mubr.bf16.mxu0 0
        %2192 = vmatmul.mubr.bf16.gmra.mrb[0].mxu0 %v2136
        %v2193 = vpop.f32.mrb[0].mxu0
        %v2194 = vadd.f32 0.0, %v2193
        %v2195 = vpop.f32.mrb[0].mxu0
        %v2196 = vadd.f32 0.0, %v2195
        %v2197 = vpop.f32.mrb[0].mxu0
        %v2198 = vadd.f32 0.0, %v2197
        %v2199 = vpop.f32.mrb[0].mxu0
        %v2200 = vadd.f32 0.0, %v2199
        %2201 = vmatprep.mubr.bf16.mxu0 0
        %2202 = vmatmul.mubr.bf16.gmra.mrb[0].mxu0 %v2139
        %v2203 = vpop.f32.mrb[0].mxu0
        %v2204 = vadd.f32 0.0, %v2203
        %v2205 = vpop.f32.mrb[0].mxu0
        %v2206 = vadd.f32 0.0, %v2205
        %v2207 = vpop.f32.mrb[0].mxu0
        %v2208 = vadd.f32 0.0, %v2207
        %v2209 = vpop.f32.mrb[0].mxu0
        %v2210 = vadd.f32 0.0, %v2209
        %2211 = vmatprep.mubr.bf16.mxu0 0
        %2212 = vmatmul.mubr.bf16.gmra.mrb[0].mxu0 %v2142
        %v2213 = vpop.f32.mrb[0].mxu0
        %v2214 = vadd.f32 0.0, %v2213
        %v2215 = vpop.f32.mrb[0].mxu0
        %v2216 = vadd.f32 0.0, %v2215
        %v2217 = vpop.f32.mrb[0].mxu0
        %v2218 = vadd.f32 0.0, %v2217
        %v2219 = vpop.f32.mrb[0].mxu0
        %v2220 = vadd.f32 0.0, %v2219
        %2221 = vmatprep.mubr.bf16.mxu0 0
        %2222 = vmatmul.mubr.bf16.gmra.mrb[0].mxu0 %v2145
        %v2223 = vpop.f32.mrb[0].mxu0
        %v2224 = vadd.f32 0.0, %v2223
        %v2225 = vpop.f32.mrb[0].mxu0
        %v2226 = vadd.f32 0.0, %v2225
        %v2227 = vpop.f32.mrb[0].mxu0
        %v2228 = vadd.f32 0.0, %v2227
        %v2229 = vpop.f32.mrb[0].mxu0
        %v2230 = vadd.f32 0.0, %v2229
        %2231 = vmatprep.mubr.bf16.mxu0 0
        %2232 = vmatmul.mubr.bf16.gmra.mrb[0].mxu0 %v2148
        %v2233 = vpop.f32.mrb[0].mxu0
        %v2234 = vadd.f32 0.0, %v2233
        %v2235 = vpop.f32.mrb[0].mxu0
        %v2236 = vadd.f32 0.0, %v2235
        %v2237 = vpop.f32.mrb[0].mxu0
        %v2238 = vadd.f32 0.0, %v2237
        %v2239 = vpop.f32.mrb[0].mxu0
        %v2240 = vadd.f32 0.0, %v2239
        %2241 = vmatprep.mubr.bf16.mxu0 0
        %2242 = vmatmul.mubr.bf16.gmra.mrb[0].mxu0 %v2151
        %v2243 = vpop.f32.mrb[0].mxu0
        %v2244 = vadd.f32 0.0, %v2243
        %v2245 = vpop.f32.mrb[0].mxu0
        %v2246 = vadd.f32 0.0, %v2245
        %v2247 = vpop.f32.mrb[0].mxu0
        %v2248 = vadd.f32 0.0, %v2247
        %v2249 = vpop.f32.mrb[0].mxu0
        %v2250 = vadd.f32 0.0, %v2249
        %2251 = vmatprep.mubr.bf16.mxu0 0
        %2252 = vmatmul.mubr.bf16.gmra.mrb[0].mxu0 %v2154
        %v2253 = vpop.f32.mrb[0].mxu0
        %v2254 = vadd.f32 0.0, %v2253
        %v2255 = vpop.f32.mrb[0].mxu0
        %v2256 = vadd.f32 0.0, %v2255
        %v2257 = vpop.f32.mrb[0].mxu0
        %v2258 = vadd.f32 0.0, %v2257
        %v2259 = vpop.f32.mrb[0].mxu0
        %v2260 = vadd.f32 0.0, %v2259
        %2261 = vmatprep.mubr.bf16.mxu0 0
        %2262 = vmatmul.mubr.bf16.gmra.mrb[0].mxu0 %v2157
        %v2263 = vpop.f32.mrb[0].mxu0
        %v2264 = vadd.f32 0.0, %v2263
        %v2265 = vpop.f32.mrb[0].mxu0
        %v2266 = vadd.f32 0.0, %v2265
        %v2267 = vpop.f32.mrb[0].mxu0
        %v2268 = vadd.f32 0.0, %v2267
        %v2269 = vpop.f32.mrb[0].mxu0
        %v2270 = vadd.f32 0.0, %v2269
        %2271 = vdwg.mxu0
        %v2272 = vpack.c.bf16 %v2198, %v2194
        %v2273 = vpack.c.bf16 %v2200, %v2196
        %v2274 = vpack.c.bf16 %v2208, %v2204
        %v2275 = vpack.c.bf16 %v2210, %v2206
        %v2276 = vpack.c.bf16 %v2218, %v2214
        %v2277 = vpack.c.bf16 %v2220, %v2216
        %v2278 = vpack.c.bf16 %v2228, %v2224
        %v2279 = vpack.c.bf16 %v2230, %v2226
        %v2280 = vpack.c.bf16 %v2238, %v2234
        %v2281 = vpack.c.bf16 %v2240, %v2236
        %v2282 = vpack.c.bf16 %v2248, %v2244
        %v2283 = vpack.c.bf16 %v2250, %v2246
        %v2284 = vpack.c.bf16 %v2258, %v2254
        %v2285 = vpack.c.bf16 %v2260, %v2256
        %v2286 = vpack.c.bf16 %v2268, %v2264
        %v2287 = vpack.c.bf16 %v2270, %v2266
        %v2288 = vld [vmem:[%s374 + $0x80] sm:$0xff]
        %v2289 = vld [vmem:[%s374 + $0x88] sm:$0xff]
        %v2290 = vld [vmem:[%s374 + $0x90] sm:$0xff]
        %v2291 = vld [vmem:[%s374 + $0x98] sm:$0xff]
        %v2292 = vld [vmem:[%s374 + $0xa0] sm:$0xff]
        %v2293 = vld [vmem:[%s374 + $0xa8] sm:$0xff]
        %v2294 = vld [vmem:[%s374 + $0xb0] sm:$0xff]
        %v2295 = vld [vmem:[%s374 + $0xb8] sm:$0xff]
        %v2304 = vunpack.c.l.b16 %v2288
        %v2305 = vunpack.c.h.b16 %v2288
        %v2306 = vunpack.c.l.b16 %v2289
        %v2307 = vunpack.c.h.b16 %v2289
        %v2308 = vunpack.c.l.b16 %v2290
        %v2309 = vunpack.c.h.b16 %v2290
        %v2310 = vunpack.c.l.b16 %v2291
        %v2311 = vunpack.c.h.b16 %v2291
        %v2312 = vunpack.c.l.b16 %v2292
        %v2313 = vunpack.c.h.b16 %v2292
        %v2314 = vunpack.c.l.b16 %v2293
        %v2315 = vunpack.c.h.b16 %v2293
        %v2316 = vunpack.c.l.b16 %v2294
        %v2317 = vunpack.c.h.b16 %v2294
        %v2318 = vunpack.c.l.b16 %v2295
        %v2319 = vunpack.c.h.b16 %v2295
        %v2320 = vpack.c.b16 %v2306, %v2304
        %v2321 = vpack.c.b16 %v2307, %v2305
        %v2322 = vpack.c.b16 %v2310, %v2308
        %v2323 = vpack.c.b16 %v2311, %v2309
        %v2324 = vpack.c.b16 %v2314, %v2312
        %v2325 = vpack.c.b16 %v2315, %v2313
        %v2326 = vpack.c.b16 %v2318, %v2316
        %v2327 = vpack.c.b16 %v2319, %v2317
        %v2337 = vsel %vm1909, %v1818, 0
        %v2340 = vsel %vm1909, %v1824, 0
        %v2343 = vsel %vm1909, %v1830, 0
        %v2346 = vsel %vm1909, %v1836, 0
        %v2349 = vsel %vm1909, %v1842, 0
        %v2352 = vsel %vm1909, %v1848, 0
        %v2355 = vsel %vm1909, %v1854, 0
        %v2358 = vsel %vm1909, %v1860, 0
        %2360 = vmatprep.subr.bf16.mxu0 %v2321
        %2361 = vmatpush1.bf16.msra.mxu0 %v2320
        %2362 = vmatprep.subr.bf16.mxu0 %v2323
        %2363 = vmatpush1.bf16.msra.mxu0 %v2322
        %2364 = vmatprep.subr.bf16.mxu0 %v2325
        %2365 = vmatpush1.bf16.msra.mxu0 %v2324
        %2366 = vmatprep.subr.bf16.mxu0 %v2327
        %2367 = vmatpush1.bf16.msra.mxu0 %v2326
        %2368 = vmatprep.subr.bf16.mxu0 0
        %2369 = vmatpush1.bf16.msra.mxu0 0
        %2370 = vmatprep.subr.bf16.mxu0 0
        %2371 = vmatpush1.bf16.msra.mxu0 0
        %2372 = vmatprep.subr.bf16.mxu0 0
        %2373 = vmatpush1.bf16.msra.mxu0 0
        %2374 = vmatprep.subr.bf16.mxu0 0
        %2375 = vmatpush1.bf16.msra.mxu0 0
        %2376 = vmatprep.subr.bf16.mxu0 0
        %2377 = vmatpush1.bf16.msra.mxu0 0
        %2378 = vmatprep.subr.bf16.mxu0 0
        %2379 = vmatpush1.bf16.msra.mxu0 0
        %2380 = vmatprep.subr.bf16.mxu0 0
        %2381 = vmatpush1.bf16.msra.mxu0 0
        %2382 = vmatprep.subr.bf16.mxu0 0
        %2383 = vmatpush1.bf16.msra.mxu0 0
        %2384 = vmatprep.subr.bf16.mxu0 0
        %2385 = vmatpush1.bf16.msra.mxu0 0
        %2386 = vmatprep.subr.bf16.mxu0 0
        %2387 = vmatpush1.bf16.msra.mxu0 0
        %2388 = vmatprep.subr.bf16.mxu0 0
        %2389 = vmatpush1.bf16.msra.mxu0 0
        %2390 = vmatprep.subr.bf16.mxu0 0
        %2391 = vmatpush1.bf16.msra.mxu0 0
        %2392 = vmatprep.mubr.bf16.mxu0 0
        %2393 = vmatmul.mubr.bf16.gmra.mrb[0].mxu0 %v2337
        %v2394 = vpop.f32.mrb[0].mxu0
        %v2395 = vadd.f32 0.0, %v2394
        %v2396 = vpop.f32.mrb[0].mxu0
        %v2397 = vadd.f32 0.0, %v2396
        %v2398 = vpop.f32.mrb[0].mxu0
        %v2399 = vadd.f32 0.0, %v2398
        %v2400 = vpop.f32.mrb[0].mxu0
        %v2401 = vadd.f32 0.0, %v2400
        %2402 = vmatprep.mubr.bf16.mxu0 0
        %2403 = vmatmul.mubr.bf16.gmra.mrb[0].mxu0 %v2340
        %v2404 = vpop.f32.mrb[0].mxu0
        %v2405 = vadd.f32 0.0, %v2404
        %v2406 = vpop.f32.mrb[0].mxu0
        %v2407 = vadd.f32 0.0, %v2406
        %v2408 = vpop.f32.mrb[0].mxu0
        %v2409 = vadd.f32 0.0, %v2408
        %v2410 = vpop.f32.mrb[0].mxu0
        %v2411 = vadd.f32 0.0, %v2410
        %2412 = vmatprep.mubr.bf16.mxu0 0
        %2413 = vmatmul.mubr.bf16.gmra.mrb[0].mxu0 %v2343
        %v2414 = vpop.f32.mrb[0].mxu0
        %v2415 = vadd.f32 0.0, %v2414
        %v2416 = vpop.f32.mrb[0].mxu0
        %v2417 = vadd.f32 0.0, %v2416
        %v2418 = vpop.f32.mrb[0].mxu0
        %v2419 = vadd.f32 0.0, %v2418
        %v2420 = vpop.f32.mrb[0].mxu0
        %v2421 = vadd.f32 0.0, %v2420
        %2422 = vmatprep.mubr.bf16.mxu0 0
        %2423 = vmatmul.mubr.bf16.gmra.mrb[0].mxu0 %v2346
        %v2424 = vpop.f32.mrb[0].mxu0
        %v2425 = vadd.f32 0.0, %v2424
        %v2426 = vpop.f32.mrb[0].mxu0
        %v2427 = vadd.f32 0.0, %v2426
        %v2428 = vpop.f32.mrb[0].mxu0
        %v2429 = vadd.f32 0.0, %v2428
        %v2430 = vpop.f32.mrb[0].mxu0
        %v2431 = vadd.f32 0.0, %v2430
        %2432 = vmatprep.mubr.bf16.mxu0 0
        %2433 = vmatmul.mubr.bf16.gmra.mrb[0].mxu0 %v2349
        %v2434 = vpop.f32.mrb[0].mxu0
        %v2435 = vadd.f32 0.0, %v2434
        %v2436 = vpop.f32.mrb[0].mxu0
        %v2437 = vadd.f32 0.0, %v2436
        %v2438 = vpop.f32.mrb[0].mxu0
        %v2439 = vadd.f32 0.0, %v2438
        %v2440 = vpop.f32.mrb[0].mxu0
        %v2441 = vadd.f32 0.0, %v2440
        %2442 = vmatprep.mubr.bf16.mxu0 0
        %2443 = vmatmul.mubr.bf16.gmra.mrb[0].mxu0 %v2352
        %v2444 = vpop.f32.mrb[0].mxu0
        %v2445 = vadd.f32 0.0, %v2444
        %v2446 = vpop.f32.mrb[0].mxu0
        %v2447 = vadd.f32 0.0, %v2446
        %v2448 = vpop.f32.mrb[0].mxu0
        %v2449 = vadd.f32 0.0, %v2448
        %v2450 = vpop.f32.mrb[0].mxu0
        %v2451 = vadd.f32 0.0, %v2450
        %2452 = vmatprep.mubr.bf16.mxu0 0
        %2453 = vmatmul.mubr.bf16.gmra.mrb[0].mxu0 %v2355
        %v2454 = vpop.f32.mrb[0].mxu0
        %v2455 = vadd.f32 0.0, %v2454
        %v2456 = vpop.f32.mrb[0].mxu0
        %v2457 = vadd.f32 0.0, %v2456
        %v2458 = vpop.f32.mrb[0].mxu0
        %v2459 = vadd.f32 0.0, %v2458
        %v2460 = vpop.f32.mrb[0].mxu0
        %v2461 = vadd.f32 0.0, %v2460
        %2462 = vmatprep.mubr.bf16.mxu0 0
        %2463 = vmatmul.mubr.bf16.gmra.mrb[0].mxu0 %v2358
        %v2464 = vpop.f32.mrb[0].mxu0
        %v2465 = vadd.f32 0.0, %v2464
        %v2466 = vpop.f32.mrb[0].mxu0
        %v2467 = vadd.f32 0.0, %v2466
        %v2468 = vpop.f32.mrb[0].mxu0
        %v2469 = vadd.f32 0.0, %v2468
        %v2470 = vpop.f32.mrb[0].mxu0
        %v2471 = vadd.f32 0.0, %v2470
        %2472 = vdwg.mxu0
        %v2473 = vpack.c.bf16 %v2399, %v2395
        %v2474 = vpack.c.bf16 %v2401, %v2397
        %v2475 = vpack.c.bf16 %v2409, %v2405
        %v2476 = vpack.c.bf16 %v2411, %v2407
        %v2477 = vpack.c.bf16 %v2419, %v2415
        %v2478 = vpack.c.bf16 %v2421, %v2417
        %v2479 = vpack.c.bf16 %v2429, %v2425
        %v2480 = vpack.c.bf16 %v2431, %v2427
        %v2481 = vpack.c.bf16 %v2439, %v2435
        %v2482 = vpack.c.bf16 %v2441, %v2437
        %v2483 = vpack.c.bf16 %v2449, %v2445
        %v2484 = vpack.c.bf16 %v2451, %v2447
        %v2485 = vpack.c.bf16 %v2459, %v2455
        %v2486 = vpack.c.bf16 %v2461, %v2457
        %v2487 = vpack.c.bf16 %v2469, %v2465
        %v2488 = vpack.c.bf16 %v2471, %v2467
        %v2489 = vld [vmem:[%s374 + $0xc0] sm:$0xff]
        %v2490 = vld [vmem:[%s374 + $0xc8] sm:$0xff]
        %v2491 = vld [vmem:[%s374 + $0xd0] sm:$0xff]
        %v2492 = vld [vmem:[%s374 + $0xd8] sm:$0xff]
        %v2493 = vld [vmem:[%s374 + $0xe0] sm:$0xff]
        %v2494 = vld [vmem:[%s374 + $0xe8] sm:$0xff]
        %v2495 = vld [vmem:[%s374 + $0xf0] sm:$0xff]
        %v2496 = vld [vmem:[%s374 + $0xf8] sm:$0xff]
        %2505 = vrot.lane.b32.xlu0 %v1818, 64
        %v2506 = vpop.permute.xlu0 %2505
        %2507 = vrot.lane.b32.xlu0 %v1824, 64
        %v2508 = vpop.permute.xlu0 %2507
        %2509 = vrot.lane.b32.xlu0 %v1830, 64
        %v2510 = vpop.permute.xlu0 %2509
        %2511 = vrot.lane.b32.xlu0 %v1836, 64
        %v2512 = vpop.permute.xlu0 %2511
        %2513 = vrot.lane.b32.xlu0 %v1842, 64
        %v2514 = vpop.permute.xlu0 %2513
        %2515 = vrot.lane.b32.xlu0 %v1848, 64
        %v2516 = vpop.permute.xlu0 %2515
        %2517 = vrot.lane.b32.xlu0 %v1854, 64
        %v2518 = vpop.permute.xlu0 %2517
        %2519 = vrot.lane.b32.xlu0 %v1860, 64
        %v2520 = vpop.permute.xlu0 %2519
        %v2529 = vunpack.c.l.b16 %v2489
        %v2530 = vunpack.c.h.b16 %v2489
        %v2531 = vunpack.c.l.b16 %v2490
        %v2532 = vunpack.c.h.b16 %v2490
        %v2533 = vunpack.c.l.b16 %v2491
        %v2534 = vunpack.c.h.b16 %v2491
        %v2535 = vunpack.c.l.b16 %v2492
        %v2536 = vunpack.c.h.b16 %v2492
        %v2537 = vunpack.c.l.b16 %v2493
        %v2538 = vunpack.c.h.b16 %v2493
        %v2539 = vunpack.c.l.b16 %v2494
        %v2540 = vunpack.c.h.b16 %v2494
        %v2541 = vunpack.c.l.b16 %v2495
        %v2542 = vunpack.c.h.b16 %v2495
        %v2543 = vunpack.c.l.b16 %v2496
        %v2544 = vunpack.c.h.b16 %v2496
        %v2545 = vpack.c.b16 %v2531, %v2529
        %v2546 = vpack.c.b16 %v2532, %v2530
        %v2547 = vpack.c.b16 %v2535, %v2533
        %v2548 = vpack.c.b16 %v2536, %v2534
        %v2549 = vpack.c.b16 %v2539, %v2537
        %v2550 = vpack.c.b16 %v2540, %v2538
        %v2551 = vpack.c.b16 %v2543, %v2541
        %v2552 = vpack.c.b16 %v2544, %v2542
        %v2562 = vsel %vm1909, %v2506, 0
        %v2565 = vsel %vm1909, %v2508, 0
        %v2568 = vsel %vm1909, %v2510, 0
        %v2571 = vsel %vm1909, %v2512, 0
        %v2574 = vsel %vm1909, %v2514, 0
        %v2577 = vsel %vm1909, %v2516, 0
        %v2580 = vsel %vm1909, %v2518, 0
        %v2583 = vsel %vm1909, %v2520, 0
        %2585 = vmatprep.subr.bf16.mxu0 %v2546
        %2586 = vmatpush1.bf16.msra.mxu0 %v2545
        %2587 = vmatprep.subr.bf16.mxu0 %v2548
        %2588 = vmatpush1.bf16.msra.mxu0 %v2547
        %2589 = vmatprep.subr.bf16.mxu0 %v2550
        %2590 = vmatpush1.bf16.msra.mxu0 %v2549
        %2591 = vmatprep.subr.bf16.mxu0 %v2552
        %2592 = vmatpush1.bf16.msra.mxu0 %v2551
        %2593 = vmatprep.subr.bf16.mxu0 0
        %2594 = vmatpush1.bf16.msra.mxu0 0
        %2595 = vmatprep.subr.bf16.mxu0 0
        %2596 = vmatpush1.bf16.msra.mxu0 0
        %2597 = vmatprep.subr.bf16.mxu0 0
        %2598 = vmatpush1.bf16.msra.mxu0 0
        %2599 = vmatprep.subr.bf16.mxu0 0
        %2600 = vmatpush1.bf16.msra.mxu0 0
        %2601 = vmatprep.subr.bf16.mxu0 0
        %2602 = vmatpush1.bf16.msra.mxu0 0
        %2603 = vmatprep.subr.bf16.mxu0 0
        %2604 = vmatpush1.bf16.msra.mxu0 0
        %2605 = vmatprep.subr.bf16.mxu0 0
        %2606 = vmatpush1.bf16.msra.mxu0 0
        %2607 = vmatprep.subr.bf16.mxu0 0
        %2608 = vmatpush1.bf16.msra.mxu0 0
        %2609 = vmatprep.subr.bf16.mxu0 0
        %2610 = vmatpush1.bf16.msra.mxu0 0
        %2611 = vmatprep.subr.bf16.mxu0 0
        %2612 = vmatpush1.bf16.msra.mxu0 0
        %2613 = vmatprep.subr.bf16.mxu0 0
        %2614 = vmatpush1.bf16.msra.mxu0 0
        %2615 = vmatprep.subr.bf16.mxu0 0
        %2616 = vmatpush1.bf16.msra.mxu0 0
        %2617 = vmatprep.mubr.bf16.mxu0 0
        %2618 = vmatmul.mubr.bf16.gmra.mrb[0].mxu0 %v2562
        %v2619 = vpop.f32.mrb[0].mxu0
        %v2620 = vadd.f32 0.0, %v2619
        %v2621 = vpop.f32.mrb[0].mxu0
        %v2622 = vadd.f32 0.0, %v2621
        %v2623 = vpop.f32.mrb[0].mxu0
        %v2624 = vadd.f32 0.0, %v2623
        %v2625 = vpop.f32.mrb[0].mxu0
        %v2626 = vadd.f32 0.0, %v2625
        %2627 = vmatprep.mubr.bf16.mxu0 0
        %2628 = vmatmul.mubr.bf16.gmra.mrb[0].mxu0 %v2565
        %v2629 = vpop.f32.mrb[0].mxu0
        %v2630 = vadd.f32 0.0, %v2629
        %v2631 = vpop.f32.mrb[0].mxu0
        %v2632 = vadd.f32 0.0, %v2631
        %v2633 = vpop.f32.mrb[0].mxu0
        %v2634 = vadd.f32 0.0, %v2633
        %v2635 = vpop.f32.mrb[0].mxu0
        %v2636 = vadd.f32 0.0, %v2635
        %2637 = vmatprep.mubr.bf16.mxu0 0
        %2638 = vmatmul.mubr.bf16.gmra.mrb[0].mxu0 %v2568
        %v2639 = vpop.f32.mrb[0].mxu0
        %v2640 = vadd.f32 0.0, %v2639
        %v2641 = vpop.f32.mrb[0].mxu0
        %v2642 = vadd.f32 0.0, %v2641
        %v2643 = vpop.f32.mrb[0].mxu0
        %v2644 = vadd.f32 0.0, %v2643
        %v2645 = vpop.f32.mrb[0].mxu0
        %v2646 = vadd.f32 0.0, %v2645
        %2647 = vmatprep.mubr.bf16.mxu0 0
        %2648 = vmatmul.mubr.bf16.gmra.mrb[0].mxu0 %v2571
        %v2649 = vpop.f32.mrb[0].mxu0
        %v2650 = vadd.f32 0.0, %v2649
        %v2651 = vpop.f32.mrb[0].mxu0
        %v2652 = vadd.f32 0.0, %v2651
        %v2653 = vpop.f32.mrb[0].mxu0
        %v2654 = vadd.f32 0.0, %v2653
        %v2655 = vpop.f32.mrb[0].mxu0
        %v2656 = vadd.f32 0.0, %v2655
        %2657 = vmatprep.mubr.bf16.mxu0 0
        %2658 = vmatmul.mubr.bf16.gmra.mrb[0].mxu0 %v2574
        %v2659 = vpop.f32.mrb[0].mxu0
        %v2660 = vadd.f32 0.0, %v2659
        %v2661 = vpop.f32.mrb[0].mxu0
        %v2662 = vadd.f32 0.0, %v2661
        %v2663 = vpop.f32.mrb[0].mxu0
        %v2664 = vadd.f32 0.0, %v2663
        %v2665 = vpop.f32.mrb[0].mxu0
        %v2666 = vadd.f32 0.0, %v2665
        %2667 = vmatprep.mubr.bf16.mxu0 0
        %2668 = vmatmul.mubr.bf16.gmra.mrb[0].mxu0 %v2577
        %v2669 = vpop.f32.mrb[0].mxu0
        %v2670 = vadd.f32 0.0, %v2669
        %v2671 = vpop.f32.mrb[0].mxu0
        %v2672 = vadd.f32 0.0, %v2671
        %v2673 = vpop.f32.mrb[0].mxu0
        %v2674 = vadd.f32 0.0, %v2673
        %v2675 = vpop.f32.mrb[0].mxu0
        %v2676 = vadd.f32 0.0, %v2675
        %2677 = vmatprep.mubr.bf16.mxu0 0
        %2678 = vmatmul.mubr.bf16.gmra.mrb[0].mxu0 %v2580
        %v2679 = vpop.f32.mrb[0].mxu0
        %v2680 = vadd.f32 0.0, %v2679
        %v2681 = vpop.f32.mrb[0].mxu0
        %v2682 = vadd.f32 0.0, %v2681
        %v2683 = vpop.f32.mrb[0].mxu0
        %v2684 = vadd.f32 0.0, %v2683
        %v2685 = vpop.f32.mrb[0].mxu0
        %v2686 = vadd.f32 0.0, %v2685
        %2687 = vmatprep.mubr.bf16.mxu0 0
        %2688 = vmatmul.mubr.bf16.gmra.mrb[0].mxu0 %v2583
        %v2689 = vpop.f32.mrb[0].mxu0
        %v2690 = vadd.f32 0.0, %v2689
        %v2691 = vpop.f32.mrb[0].mxu0
        %v2692 = vadd.f32 0.0, %v2691
        %v2693 = vpop.f32.mrb[0].mxu0
        %v2694 = vadd.f32 0.0, %v2693
        %v2695 = vpop.f32.mrb[0].mxu0
        %v2696 = vadd.f32 0.0, %v2695
        %2697 = vdwg.mxu0
        %v2698 = vpack.c.bf16 %v2624, %v2620
        %v2699 = vpack.c.bf16 %v2626, %v2622
        %v2700 = vpack.c.bf16 %v2634, %v2630
        %v2701 = vpack.c.bf16 %v2636, %v2632
        %v2702 = vpack.c.bf16 %v2644, %v2640
        %v2703 = vpack.c.bf16 %v2646, %v2642
        %v2704 = vpack.c.bf16 %v2654, %v2650
        %v2705 = vpack.c.bf16 %v2656, %v2652
        %v2706 = vpack.c.bf16 %v2664, %v2660
        %v2707 = vpack.c.bf16 %v2666, %v2662
        %v2708 = vpack.c.bf16 %v2674, %v2670
        %v2709 = vpack.c.bf16 %v2676, %v2672
        %v2710 = vpack.c.bf16 %v2684, %v2680
        %v2711 = vpack.c.bf16 %v2686, %v2682
        %v2712 = vpack.c.bf16 %v2694, %v2690
        %v2713 = vpack.c.bf16 %v2696, %v2692
        %v2715 = vsel %vm1909, %v1813, 0
        %v2718 = vsel %vm1909, %v1819, 0
        %v2721 = vsel %vm1909, %v1825, 0
        %v2724 = vsel %vm1909, %v1831, 0
        %v2727 = vsel %vm1909, %v1815, 0
        %v2730 = vsel %vm1909, %v1821, 0
        %v2733 = vsel %vm1909, %v1827, 0
        %v2736 = vsel %vm1909, %v1833, 0
        %2738 = vmatprep.subr.bf16.mxu0 0
        %2739 = vmatpush1.bf16.xpose.msra.mxu0 %v2727
        %2740 = vmatprep.subr.bf16.mxu0 0
        %2741 = vmatpush1.bf16.xpose.msra.mxu0 %v2730
        %2742 = vmatprep.subr.bf16.mxu0 0
        %2743 = vmatpush1.bf16.xpose.msra.mxu0 %v2733
        %2744 = vmatprep.subr.bf16.mxu0 0
        %2745 = vmatpush1.bf16.xpose.msra.mxu0 %v2736
        %2746 = vmatprep.subr.bf16.mxu0 0
        %2747 = vmatpush1.bf16.xpose.msra.mxu0 0
        %2748 = vmatprep.subr.bf16.mxu0 0
        %2749 = vmatpush1.bf16.xpose.msra.mxu0 0
        %2750 = vmatprep.subr.bf16.mxu0 0
        %2751 = vmatpush1.bf16.xpose.msra.mxu0 0
        %2752 = vmatprep.subr.bf16.mxu0 0
        %2753 = vmatpush1.bf16.xpose.msra.mxu0 0
        %2754 = vmatprep.subr.bf16.mxu0 0
        %2755 = vmatpush1.bf16.xpose.msra.mxu0 0
        %2756 = vmatprep.subr.bf16.mxu0 0
        %2757 = vmatpush1.bf16.xpose.msra.mxu0 0
        %2758 = vmatprep.subr.bf16.mxu0 0
        %2759 = vmatpush1.bf16.xpose.msra.mxu0 0
        %2760 = vmatprep.subr.bf16.mxu0 0
        %2761 = vmatpush1.bf16.xpose.msra.mxu0 0
        %2762 = vmatprep.subr.bf16.mxu0 0
        %2763 = vmatpush1.bf16.xpose.msra.mxu0 0
        %2764 = vmatprep.subr.bf16.mxu0 0
        %2765 = vmatpush1.bf16.xpose.msra.mxu0 0
        %2766 = vmatprep.subr.bf16.mxu0 0
        %2767 = vmatpush1.bf16.xpose.msra.mxu0 0
        %2768 = vmatprep.subr.bf16.mxu0 0
        %2769 = vmatpush1.bf16.xpose.msra.mxu0 0
        %2770 = vmatprep.mubr.bf16.mxu0 0
        %2771 = vmatmul.mubr.bf16.gmra.mrb[0].mxu0 %v2715
        %v2772 = vpop.f32.mrb[0].mxu0
        %v2773 = vadd.f32 0.0, %v2772
        %v2774 = vpop.f32.mrb[0].mxu0
        %v2775 = vpop.f32.mrb[0].mxu0
        %v2776 = vadd.f32 0.0, %v2775
        %v2777 = vpop.f32.mrb[0].mxu0
        %2778 = vmatprep.mubr.bf16.mxu0 0
        %2779 = vmatmul.mubr.bf16.gmra.mrb[0].mxu0 %v2718
        %v2780 = vpop.f32.mrb[0].mxu0
        %v2781 = vadd.f32 0.0, %v2780
        %v2782 = vpop.f32.mrb[0].mxu0
        %v2783 = vpop.f32.mrb[0].mxu0
        %v2784 = vadd.f32 0.0, %v2783
        %v2785 = vpop.f32.mrb[0].mxu0
        %2786 = vmatprep.mubr.bf16.mxu0 0
        %2787 = vmatmul.mubr.bf16.gmra.mrb[0].mxu0 %v2721
        %v2788 = vpop.f32.mrb[0].mxu0
        %v2789 = vadd.f32 0.0, %v2788
        %v2790 = vpop.f32.mrb[0].mxu0
        %v2791 = vpop.f32.mrb[0].mxu0
        %v2792 = vadd.f32 0.0, %v2791
        %v2793 = vpop.f32.mrb[0].mxu0
        %2794 = vmatprep.mubr.bf16.mxu0 0
        %2795 = vmatmul.mubr.bf16.gmra.mrb[0].mxu0 %v2724
        %v2796 = vpop.f32.mrb[0].mxu0
        %v2797 = vadd.f32 0.0, %v2796
        %v2798 = vpop.f32.mrb[0].mxu0
        %v2799 = vpop.f32.mrb[0].mxu0
        %v2800 = vadd.f32 0.0, %v2799
        %v2801 = vpop.f32.mrb[0].mxu0
        %2802 = vdwg.mxu0
        %v2803 = vsel %vm1909, %v2773, -inf
        %2804 = vmax.xlane.f32.xlu0 %v2803
        %v2805 = vpop.xlane.xlu0 %2804
        %v2806 = vsel %vm1909, %v2776, -inf
        %2807 = vmax.xlane.f32.xlu0 %v2806
        %v2808 = vpop.xlane.xlu0 %2807
        %v2809 = vsel %vm1909, %v2781, -inf
        %2810 = vmax.xlane.f32.xlu0 %v2809
        %v2811 = vpop.xlane.xlu0 %2810
        %v2812 = vsel %vm1909, %v2784, -inf
        %2813 = vmax.xlane.f32.xlu0 %v2812
        %v2814 = vpop.xlane.xlu0 %2813
        %v2815 = vsel %vm1909, %v2789, -inf
        %2816 = vmax.xlane.f32.xlu0 %v2815
        %v2817 = vpop.xlane.xlu0 %2816
        %v2818 = vsel %vm1909, %v2792, -inf
        %2819 = vmax.xlane.f32.xlu0 %v2818
        %v2820 = vpop.xlane.xlu0 %2819
        %v2821 = vsel %vm1909, %v2797, -inf
        %2822 = vmax.xlane.f32.xlu0 %v2821
        %v2823 = vpop.xlane.xlu0 %2822
        %v2824 = vsel %vm1909, %v2800, -inf
        %2825 = vmax.xlane.f32.xlu0 %v2824
        %v2826 = vpop.xlane.xlu0 %2825
        %v2827 = vsub.f32 %v2773, %v2805
        %v2828 = vsub.f32 %v2776, %v2808
        %v2829 = vsub.f32 %v2781, %v2811
        %v2830 = vsub.f32 %v2784, %v2814
        %v2831 = vsub.f32 %v2789, %v2817
        %v2832 = vsub.f32 %v2792, %v2820
        %v2833 = vsub.f32 %v2797, %v2823
        %v2834 = vsub.f32 %v2800, %v2826
        %v2835 = vmul.f32 %v2827, 1.442695
        %v2836 = vpow.pop %v2835
        %v2837 = vmul.f32 %v2828, 1.442695
        %v2838 = vpow.pop %v2837
        %v2839 = vmul.f32 %v2829, 1.442695
        %v2840 = vpow.pop %v2839
        %v2841 = vmul.f32 %v2830, 1.442695
        %v2842 = vpow.pop %v2841
        %v2843 = vmul.f32 %v2831, 1.442695
        %v2844 = vpow.pop %v2843
        %v2845 = vmul.f32 %v2832, 1.442695
        %v2846 = vpow.pop %v2845
        %v2847 = vmul.f32 %v2833, 1.442695
        %v2848 = vpow.pop %v2847
        %v2849 = vmul.f32 %v2834, 1.442695
        %v2850 = vpow.pop %v2849
        %v2851 = vsel %vm1909, %v2836, 0.0
        %2852 = vadd.xlane.f32.xlu0 %v2851
        %v2853 = vpop.xlane.xlu0 %2852
        %v2854 = vsel %vm1909, %v2838, 0.0
        %2855 = vadd.xlane.f32.xlu0 %v2854
        %v2856 = vpop.xlane.xlu0 %2855
        %v2857 = vsel %vm1909, %v2840, 0.0
        %2858 = vadd.xlane.f32.xlu0 %v2857
        %v2859 = vpop.xlane.xlu0 %2858
        %v2860 = vsel %vm1909, %v2842, 0.0
        %2861 = vadd.xlane.f32.xlu0 %v2860
        %v2862 = vpop.xlane.xlu0 %2861
        %v2863 = vsel %vm1909, %v2844, 0.0
        %2864 = vadd.xlane.f32.xlu0 %v2863
        %v2865 = vpop.xlane.xlu0 %2864
        %v2866 = vsel %vm1909, %v2846, 0.0
        %2867 = vadd.xlane.f32.xlu0 %v2866
        %v2868 = vpop.xlane.xlu0 %2867
        %v2869 = vsel %vm1909, %v2848, 0.0
        %2870 = vadd.xlane.f32.xlu0 %v2869
        %v2871 = vpop.xlane.xlu0 %2870
        %v2872 = vsel %vm1909, %v2850, 0.0
        %2873 = vadd.xlane.f32.xlu0 %v2872
        %v2874 = vpop.xlane.xlu0 %2873
        %v2875 = vrcp.pop %v2853
        %v2876 = vmul.f32 %v2836, %v2875
        %v2877 = vrcp.pop %v2856
        %v2878 = vmul.f32 %v2838, %v2877
        %v2879 = vrcp.pop %v2859
        %v2880 = vmul.f32 %v2840, %v2879
        %v2881 = vrcp.pop %v2862
        %v2882 = vmul.f32 %v2842, %v2881
        %v2883 = vrcp.pop %v2865
        %v2884 = vmul.f32 %v2844, %v2883
        %v2885 = vrcp.pop %v2868
        %v2886 = vmul.f32 %v2846, %v2885
        %v2887 = vrcp.pop %v2871
        %v2888 = vmul.f32 %v2848, %v2887
        %v2889 = vrcp.pop %v2874
        %v2890 = vmul.f32 %v2850, %v2889
        %v2891 = vpack.c.bf16 %v2878, %v2876
        %v2892 = vpack.c.bf16 %v2882, %v2880
        %v2893 = vpack.c.bf16 %v2886, %v2884
        %v2894 = vpack.c.bf16 %v2890, %v2888
        %2899 = vrot.lane.b32.xlu0 %v1813, 64
        %v2900 = vpop.permute.xlu0 %2899
        %2901 = vrot.lane.b32.xlu0 %v1819, 64
        %v2902 = vpop.permute.xlu0 %2901
        %2903 = vrot.lane.b32.xlu0 %v1825, 64
        %v2904 = vpop.permute.xlu0 %2903
        %2905 = vrot.lane.b32.xlu0 %v1831, 64
        %v2906 = vpop.permute.xlu0 %2905
        %2911 = vrot.lane.b32.xlu0 %v1815, 64
        %v2912 = vpop.permute.xlu0 %2911
        %2913 = vrot.lane.b32.xlu0 %v1821, 64
        %v2914 = vpop.permute.xlu0 %2913
        %2915 = vrot.lane.b32.xlu0 %v1827, 64
        %v2916 = vpop.permute.xlu0 %2915
        %2917 = vrot.lane.b32.xlu0 %v1833, 64
        %v2918 = vpop.permute.xlu0 %2917
        %v2920 = vsel %vm1909, %v2900, 0
        %v2923 = vsel %vm1909, %v2902, 0
        %v2926 = vsel %vm1909, %v2904, 0
        %v2929 = vsel %vm1909, %v2906, 0
        %v2932 = vsel %vm1909, %v2912, 0
        %v2935 = vsel %vm1909, %v2914, 0
        %v2938 = vsel %vm1909, %v2916, 0
        %v2941 = vsel %vm1909, %v2918, 0
        %2943 = vmatprep.subr.bf16.mxu0 0
        %2944 = vmatpush1.bf16.xpose.msra.mxu0 %v2932
        %2945 = vmatprep.subr.bf16.mxu0 0
        %2946 = vmatpush1.bf16.xpose.msra.mxu0 %v2935
        %2947 = vmatprep.subr.bf16.mxu0 0
        %2948 = vmatpush1.bf16.xpose.msra.mxu0 %v2938
        %2949 = vmatprep.subr.bf16.mxu0 0
        %2950 = vmatpush1.bf16.xpose.msra.mxu0 %v2941
        %2951 = vmatprep.subr.bf16.mxu0 0
        %2952 = vmatpush1.bf16.xpose.msra.mxu0 0
        %2953 = vmatprep.subr.bf16.mxu0 0
        %2954 = vmatpush1.bf16.xpose.msra.mxu0 0
        %2955 = vmatprep.subr.bf16.mxu0 0
        %2956 = vmatpush1.bf16.xpose.msra.mxu0 0
        %2957 = vmatprep.subr.bf16.mxu0 0
        %2958 = vmatpush1.bf16.xpose.msra.mxu0 0
        %2959 = vmatprep.subr.bf16.mxu0 0
        %2960 = vmatpush1.bf16.xpose.msra.mxu0 0
        %2961 = vmatprep.subr.bf16.mxu0 0
        %2962 = vmatpush1.bf16.xpose.msra.mxu0 0
        %2963 = vmatprep.subr.bf16.mxu0 0
        %2964 = vmatpush1.bf16.xpose.msra.mxu0 0
        %2965 = vmatprep.subr.bf16.mxu0 0
        %2966 = vmatpush1.bf16.xpose.msra.mxu0 0
        %2967 = vmatprep.subr.bf16.mxu0 0
        %2968 = vmatpush1.bf16.xpose.msra.mxu0 0
        %2969 = vmatprep.subr.bf16.mxu0 0
        %2970 = vmatpush1.bf16.xpose.msra.mxu0 0
        %2971 = vmatprep.subr.bf16.mxu0 0
        %2972 = vmatpush1.bf16.xpose.msra.mxu0 0
        %2973 = vmatprep.subr.bf16.mxu0 0
        %2974 = vmatpush1.bf16.xpose.msra.mxu0 0
        %2975 = vmatprep.mubr.bf16.mxu0 0
        %2976 = vmatmul.mubr.bf16.gmra.mrb[0].mxu0 %v2920
        %v2977 = vpop.f32.mrb[0].mxu0
        %v2978 = vadd.f32 0.0, %v2977
        %v2979 = vpop.f32.mrb[0].mxu0
        %v2980 = vpop.f32.mrb[0].mxu0
        %v2981 = vadd.f32 0.0, %v2980
        %v2982 = vpop.f32.mrb[0].mxu0
        %2983 = vmatprep.mubr.bf16.mxu0 0
        %2984 = vmatmul.mubr.bf16.gmra.mrb[0].mxu0 %v2923
        %v2985 = vpop.f32.mrb[0].mxu0
        %v2986 = vadd.f32 0.0, %v2985
        %v2987 = vpop.f32.mrb[0].mxu0
        %v2988 = vpop.f32.mrb[0].mxu0
        %v2989 = vadd.f32 0.0, %v2988
        %v2990 = vpop.f32.mrb[0].mxu0
        %2991 = vmatprep.mubr.bf16.mxu0 0
        %2992 = vmatmul.mubr.bf16.gmra.mrb[0].mxu0 %v2926
        %v2993 = vpop.f32.mrb[0].mxu0
        %v2994 = vadd.f32 0.0, %v2993
        %v2995 = vpop.f32.mrb[0].mxu0
        %v2996 = vpop.f32.mrb[0].mxu0
        %v2997 = vadd.f32 0.0, %v2996
        %v2998 = vpop.f32.mrb[0].mxu0
        %2999 = vmatprep.mubr.bf16.mxu0 0
        %3000 = vmatmul.mubr.bf16.gmra.mrb[0].mxu0 %v2929
        %v3001 = vpop.f32.mrb[0].mxu0
        %v3002 = vadd.f32 0.0, %v3001
        %v3003 = vpop.f32.mrb[0].mxu0
        %v3004 = vpop.f32.mrb[0].mxu0
        %v3005 = vadd.f32 0.0, %v3004
        %v3006 = vpop.f32.mrb[0].mxu0
        %3007 = vdwg.mxu0
        %v3008 = vsel %vm1909, %v2978, -inf
        %3009 = vmax.xlane.f32.xlu0 %v3008
        %v3010 = vpop.xlane.xlu0 %3009
        %v3011 = vsel %vm1909, %v2981, -inf
        %3012 = vmax.xlane.f32.xlu0 %v3011
        %v3013 = vpop.xlane.xlu0 %3012
        %v3014 = vsel %vm1909, %v2986, -inf
        %3015 = vmax.xlane.f32.xlu0 %v3014
        %v3016 = vpop.xlane.xlu0 %3015
        %v3017 = vsel %vm1909, %v2989, -inf
        %3018 = vmax.xlane.f32.xlu0 %v3017
        %v3019 = vpop.xlane.xlu0 %3018
        %v3020 = vsel %vm1909, %v2994, -inf
        %3021 = vmax.xlane.f32.xlu0 %v3020
        %v3022 = vpop.xlane.xlu0 %3021
        %v3023 = vsel %vm1909, %v2997, -inf
        %3024 = vmax.xlane.f32.xlu0 %v3023
        %v3025 = vpop.xlane.xlu0 %3024
        %v3026 = vsel %vm1909, %v3002, -inf
        %3027 = vmax.xlane.f32.xlu0 %v3026
        %v3028 = vpop.xlane.xlu0 %3027
        %v3029 = vsel %vm1909, %v3005, -inf
        %3030 = vmax.xlane.f32.xlu0 %v3029
        %v3031 = vpop.xlane.xlu0 %3030
        %v3032 = vsub.f32 %v2978, %v3010
        %v3033 = vsub.f32 %v2981, %v3013
        %v3034 = vsub.f32 %v2986, %v3016
        %v3035 = vsub.f32 %v2989, %v3019
        %v3036 = vsub.f32 %v2994, %v3022
        %v3037 = vsub.f32 %v2997, %v3025
        %v3038 = vsub.f32 %v3002, %v3028
        %v3039 = vsub.f32 %v3005, %v3031
        %v3040 = vmul.f32 %v3032, 1.442695
        %v3041 = vpow.pop %v3040
        %v3042 = vmul.f32 %v3033, 1.442695
        %v3043 = vpow.pop %v3042
        %v3044 = vmul.f32 %v3034, 1.442695
        %v3045 = vpow.pop %v3044
        %v3046 = vmul.f32 %v3035, 1.442695
        %v3047 = vpow.pop %v3046
        %v3048 = vmul.f32 %v3036, 1.442695
        %v3049 = vpow.pop %v3048
        %v3050 = vmul.f32 %v3037, 1.442695
        %v3051 = vpow.pop %v3050
        %v3052 = vmul.f32 %v3038, 1.442695
        %v3053 = vpow.pop %v3052
        %v3054 = vmul.f32 %v3039, 1.442695
        %v3055 = vpow.pop %v3054
        %v3056 = vsel %vm1909, %v3041, 0.0
        %3057 = vadd.xlane.f32.xlu0 %v3056
        %v3058 = vpop.xlane.xlu0 %3057
        %v3059 = vsel %vm1909, %v3043, 0.0
        %3060 = vadd.xlane.f32.xlu0 %v3059
        %v3061 = vpop.xlane.xlu0 %3060
        %v3062 = vsel %vm1909, %v3045, 0.0
        %3063 = vadd.xlane.f32.xlu0 %v3062
        %v3064 = vpop.xlane.xlu0 %3063
        %v3065 = vsel %vm1909, %v3047, 0.0
        %3066 = vadd.xlane.f32.xlu0 %v3065
        %v3067 = vpop.xlane.xlu0 %3066
        %v3068 = vsel %vm1909, %v3049, 0.0
        %3069 = vadd.xlane.f32.xlu0 %v3068
        %v3070 = vpop.xlane.xlu0 %3069
        %v3071 = vsel %vm1909, %v3051, 0.0
        %3072 = vadd.xlane.f32.xlu0 %v3071
        %v3073 = vpop.xlane.xlu0 %3072
        %v3074 = vsel %vm1909, %v3053, 0.0
        %3075 = vadd.xlane.f32.xlu0 %v3074
        %v3076 = vpop.xlane.xlu0 %3075
        %v3077 = vsel %vm1909, %v3055, 0.0
        %3078 = vadd.xlane.f32.xlu0 %v3077
        %v3079 = vpop.xlane.xlu0 %3078
        %v3080 = vrcp.pop %v3058
        %v3081 = vmul.f32 %v3041, %v3080
        %v3082 = vrcp.pop %v3061
        %v3083 = vmul.f32 %v3043, %v3082
        %v3084 = vrcp.pop %v3064
        %v3085 = vmul.f32 %v3045, %v3084
        %v3086 = vrcp.pop %v3067
        %v3087 = vmul.f32 %v3047, %v3086
        %v3088 = vrcp.pop %v3070
        %v3089 = vmul.f32 %v3049, %v3088
        %v3090 = vrcp.pop %v3073
        %v3091 = vmul.f32 %v3051, %v3090
        %v3092 = vrcp.pop %v3076
        %v3093 = vmul.f32 %v3053, %v3092
        %v3094 = vrcp.pop %v3079
        %v3095 = vmul.f32 %v3055, %v3094
        %v3096 = vpack.c.bf16 %v3083, %v3081
        %v3097 = vpack.c.bf16 %v3087, %v3085
        %v3098 = vpack.c.bf16 %v3091, %v3089
        %v3099 = vpack.c.bf16 %v3095, %v3093
        %v3101 = vsel %vm1909, %v3096, 0
        %v3104 = vsel %vm1909, %v3097, 0
        %v3107 = vsel %vm1909, %v3098, 0
        %v3110 = vsel %vm1909, %v3099, 0
        %3112 = vmatprep.subr.bf16.mxu0 %v2273
        %3113 = vmatpush1.bf16.msra.mxu0 %v2272
        %3114 = vmatprep.subr.bf16.mxu0 %v2275
        %3115 = vmatpush1.bf16.msra.mxu0 %v2274
        %3116 = vmatprep.subr.bf16.mxu0 %v2277
        %3117 = vmatpush1.bf16.msra.mxu0 %v2276
        %3118 = vmatprep.subr.bf16.mxu0 %v2279
        %3119 = vmatpush1.bf16.msra.mxu0 %v2278
        %3120 = vmatprep.subr.bf16.mxu0 0
        %3121 = vmatpush1.bf16.msra.mxu0 0
        %3122 = vmatprep.subr.bf16.mxu0 0
        %3123 = vmatpush1.bf16.msra.mxu0 0
        %3124 = vmatprep.subr.bf16.mxu0 0
        %3125 = vmatpush1.bf16.msra.mxu0 0
        %3126 = vmatprep.subr.bf16.mxu0 0
        %3127 = vmatpush1.bf16.msra.mxu0 0
        %3128 = vmatprep.subr.bf16.mxu0 0
        %3129 = vmatpush1.bf16.msra.mxu0 0
        %3130 = vmatprep.subr.bf16.mxu0 0
        %3131 = vmatpush1.bf16.msra.mxu0 0
        %3132 = vmatprep.subr.bf16.mxu0 0
        %3133 = vmatpush1.bf16.msra.mxu0 0
        %3134 = vmatprep.subr.bf16.mxu0 0
        %3135 = vmatpush1.bf16.msra.mxu0 0
        %3136 = vmatprep.subr.bf16.mxu0 0
        %3137 = vmatpush1.bf16.msra.mxu0 0
        %3138 = vmatprep.subr.bf16.mxu0 0
        %3139 = vmatpush1.bf16.msra.mxu0 0
        %3140 = vmatprep.subr.bf16.mxu0 0
        %3141 = vmatpush1.bf16.msra.mxu0 0
        %3142 = vmatprep.subr.bf16.mxu0 0
        %3143 = vmatpush1.bf16.msra.mxu0 0
        %3144 = vmatprep.mubr.bf16.mxu0 0
        %3145 = vmatmul.mubr.bf16.gmra.mrb[0].mxu0 %v3101
        %v3146 = vpop.f32.mrb[0].mxu0
        %v3147 = vadd.f32 0.0, %v3146
        %v3148 = vpop.f32.mrb[0].mxu0
        %v3149 = vadd.f32 0.0, %v3148
        %v3150 = vpop.f32.mrb[0].mxu0
        %v3151 = vadd.f32 0.0, %v3150
        %v3152 = vpop.f32.mrb[0].mxu0
        %v3153 = vadd.f32 0.0, %v3152
        %3154 = vmatprep.mubr.bf16.mxu0 0
        %3155 = vmatmul.mubr.bf16.gmra.mrb[0].mxu0 %v3104
        %v3156 = vpop.f32.mrb[0].mxu0
        %v3157 = vadd.f32 0.0, %v3156
        %v3158 = vpop.f32.mrb[0].mxu0
        %v3159 = vadd.f32 0.0, %v3158
        %v3160 = vpop.f32.mrb[0].mxu0
        %v3161 = vadd.f32 0.0, %v3160
        %v3162 = vpop.f32.mrb[0].mxu0
        %v3163 = vadd.f32 0.0, %v3162
        %3164 = vmatprep.mubr.bf16.mxu0 0
        %3165 = vmatmul.mubr.bf16.gmra.mrb[0].mxu0 %v3107
        %v3166 = vpop.f32.mrb[0].mxu0
        %v3167 = vadd.f32 0.0, %v3166
        %v3168 = vpop.f32.mrb[0].mxu0
        %v3169 = vadd.f32 0.0, %v3168
        %v3170 = vpop.f32.mrb[0].mxu0
        %v3171 = vadd.f32 0.0, %v3170
        %v3172 = vpop.f32.mrb[0].mxu0
        %v3173 = vadd.f32 0.0, %v3172
        %3174 = vmatprep.mubr.bf16.mxu0 0
        %3175 = vmatmul.mubr.bf16.gmra.mrb[0].mxu0 %v3110
        %v3176 = vpop.f32.mrb[0].mxu0
        %v3177 = vadd.f32 0.0, %v3176
        %v3178 = vpop.f32.mrb[0].mxu0
        %v3179 = vadd.f32 0.0, %v3178
        %v3180 = vpop.f32.mrb[0].mxu0
        %v3181 = vadd.f32 0.0, %v3180
        %v3182 = vpop.f32.mrb[0].mxu0
        %v3183 = vadd.f32 0.0, %v3182
        %3184 = vdwg.mxu0
        %v3186 = vsel %vm1909, %v2891, 0
        %v3189 = vsel %vm1909, %v2892, 0
        %v3192 = vsel %vm1909, %v2893, 0
        %v3195 = vsel %vm1909, %v2894, 0
        %3197 = vmatprep.subr.bf16.mxu0 %v2048
        %3198 = vmatpush1.bf16.msra.mxu0 %v2047
        %3199 = vmatprep.subr.bf16.mxu0 %v2050
        %3200 = vmatpush1.bf16.msra.mxu0 %v2049
        %3201 = vmatprep.subr.bf16.mxu0 %v2052
        %3202 = vmatpush1.bf16.msra.mxu0 %v2051
        %3203 = vmatprep.subr.bf16.mxu0 %v2054
        %3204 = vmatpush1.bf16.msra.mxu0 %v2053
        %3205 = vmatprep.subr.bf16.mxu0 0
        %3206 = vmatpush1.bf16.msra.mxu0 0
        %3207 = vmatprep.subr.bf16.mxu0 0
        %3208 = vmatpush1.bf16.msra.mxu0 0
        %3209 = vmatprep.subr.bf16.mxu0 0
        %3210 = vmatpush1.bf16.msra.mxu0 0
        %3211 = vmatprep.subr.bf16.mxu0 0
        %3212 = vmatpush1.bf16.msra.mxu0 0
        %3213 = vmatprep.subr.bf16.mxu0 0
        %3214 = vmatpush1.bf16.msra.mxu0 0
        %3215 = vmatprep.subr.bf16.mxu0 0
        %3216 = vmatpush1.bf16.msra.mxu0 0
        %3217 = vmatprep.subr.bf16.mxu0 0
        %3218 = vmatpush1.bf16.msra.mxu0 0
        %3219 = vmatprep.subr.bf16.mxu0 0
        %3220 = vmatpush1.bf16.msra.mxu0 0
        %3221 = vmatprep.subr.bf16.mxu0 0
        %3222 = vmatpush1.bf16.msra.mxu0 0
        %3223 = vmatprep.subr.bf16.mxu0 0
        %3224 = vmatpush1.bf16.msra.mxu0 0
        %3225 = vmatprep.subr.bf16.mxu0 0
        %3226 = vmatpush1.bf16.msra.mxu0 0
        %3227 = vmatprep.subr.bf16.mxu0 0
        %3228 = vmatpush1.bf16.msra.mxu0 0
        %3229 = vmatprep.mubr.bf16.mxu0 0
        %3230 = vmatmul.mubr.bf16.gmra.mrb[0].mxu0 %v3186
        %v3231 = vpop.f32.mrb[0].mxu0
        %v3232 = vadd.f32 %v3147, %v3231
        %v3233 = vpop.f32.mrb[0].mxu0
        %v3234 = vadd.f32 %v3149, %v3233
        %v3235 = vpop.f32.mrb[0].mxu0
        %v3236 = vadd.f32 %v3151, %v3235
        %v3237 = vpop.f32.mrb[0].mxu0
        %v3238 = vadd.f32 %v3153, %v3237
        %3239 = vmatprep.mubr.bf16.mxu0 0
        %3240 = vmatmul.mubr.bf16.gmra.mrb[0].mxu0 %v3189
        %v3241 = vpop.f32.mrb[0].mxu0
        %v3242 = vadd.f32 %v3157, %v3241
        %v3243 = vpop.f32.mrb[0].mxu0
        %v3244 = vadd.f32 %v3159, %v3243
        %v3245 = vpop.f32.mrb[0].mxu0
        %v3246 = vadd.f32 %v3161, %v3245
        %v3247 = vpop.f32.mrb[0].mxu0
        %v3248 = vadd.f32 %v3163, %v3247
        %3249 = vmatprep.mubr.bf16.mxu0 0
        %3250 = vmatmul.mubr.bf16.gmra.mrb[0].mxu0 %v3192
        %v3251 = vpop.f32.mrb[0].mxu0
        %v3252 = vadd.f32 %v3167, %v3251
        %v3253 = vpop.f32.mrb[0].mxu0
        %v3254 = vadd.f32 %v3169, %v3253
        %v3255 = vpop.f32.mrb[0].mxu0
        %v3256 = vadd.f32 %v3171, %v3255
        %v3257 = vpop.f32.mrb[0].mxu0
        %v3258 = vadd.f32 %v3173, %v3257
        %3259 = vmatprep.mubr.bf16.mxu0 0
        %3260 = vmatmul.mubr.bf16.gmra.mrb[0].mxu0 %v3195
        %v3261 = vpop.f32.mrb[0].mxu0
        %v3262 = vadd.f32 %v3177, %v3261
        %v3263 = vpop.f32.mrb[0].mxu0
        %v3264 = vadd.f32 %v3179, %v3263
        %v3265 = vpop.f32.mrb[0].mxu0
        %v3266 = vadd.f32 %v3181, %v3265
        %v3267 = vpop.f32.mrb[0].mxu0
        %v3268 = vadd.f32 %v3183, %v3267
        %3269 = vdwg.mxu0
        %v3271 = vsel %vm1909, %v1814, 0
        %v3274 = vsel %vm1909, %v1820, 0
        %v3277 = vsel %vm1909, %v1826, 0
        %v3280 = vsel %vm1909, %v1832, 0
        %v3283 = vsel %vm1909, %v1816, 0
        %v3286 = vsel %vm1909, %v1822, 0
        %v3289 = vsel %vm1909, %v1828, 0
        %v3292 = vsel %vm1909, %v1834, 0
        %3294 = vmatprep.subr.bf16.mxu0 0
        %3295 = vmatpush1.bf16.xpose.msra.mxu0 %v3283
        %3296 = vmatprep.subr.bf16.mxu0 0
        %3297 = vmatpush1.bf16.xpose.msra.mxu0 %v3286
        %3298 = vmatprep.subr.bf16.mxu0 0
        %3299 = vmatpush1.bf16.xpose.msra.mxu0 %v3289
        %3300 = vmatprep.subr.bf16.mxu0 0
        %3301 = vmatpush1.bf16.xpose.msra.mxu0 %v3292
        %3302 = vmatprep.subr.bf16.mxu0 0
        %3303 = vmatpush1.bf16.xpose.msra.mxu0 0
        %3304 = vmatprep.subr.bf16.mxu0 0
        %3305 = vmatpush1.bf16.xpose.msra.mxu0 0
        %3306 = vmatprep.subr.bf16.mxu0 0
        %3307 = vmatpush1.bf16.xpose.msra.mxu0 0
        %3308 = vmatprep.subr.bf16.mxu0 0
        %3309 = vmatpush1.bf16.xpose.msra.mxu0 0
        %3310 = vmatprep.subr.bf16.mxu0 0
        %3311 = vmatpush1.bf16.xpose.msra.mxu0 0
        %3312 = vmatprep.subr.bf16.mxu0 0
        %3313 = vmatpush1.bf16.xpose.msra.mxu0 0
        %3314 = vmatprep.subr.bf16.mxu0 0
        %3315 = vmatpush1.bf16.xpose.msra.mxu0 0
        %3316 = vmatprep.subr.bf16.mxu0 0
        %3317 = vmatpush1.bf16.xpose.msra.mxu0 0
        %3318 = vmatprep.subr.bf16.mxu0 0
        %3319 = vmatpush1.bf16.xpose.msra.mxu0 0
        %3320 = vmatprep.subr.bf16.mxu0 0
        %3321 = vmatpush1.bf16.xpose.msra.mxu0 0
        %3322 = vmatprep.subr.bf16.mxu0 0
        %3323 = vmatpush1.bf16.xpose.msra.mxu0 0
        %3324 = vmatprep.subr.bf16.mxu0 0
        %3325 = vmatpush1.bf16.xpose.msra.mxu0 0
        %3326 = vmatprep.mubr.bf16.mxu0 0
        %3327 = vmatmul.mubr.bf16.gmra.mrb[0].mxu0 %v3271
        %v3328 = vpop.f32.mrb[0].mxu0
        %v3329 = vadd.f32 0.0, %v3328
        %v3330 = vpop.f32.mrb[0].mxu0
        %v3331 = vpop.f32.mrb[0].mxu0
        %v3332 = vadd.f32 0.0, %v3331
        %v3333 = vpop.f32.mrb[0].mxu0
        %3334 = vmatprep.mubr.bf16.mxu0 0
        %3335 = vmatmul.mubr.bf16.gmra.mrb[0].mxu0 %v3274
        %v3336 = vpop.f32.mrb[0].mxu0
        %v3337 = vadd.f32 0.0, %v3336
        %v3338 = vpop.f32.mrb[0].mxu0
        %v3339 = vpop.f32.mrb[0].mxu0
        %v3340 = vadd.f32 0.0, %v3339
        %v3341 = vpop.f32.mrb[0].mxu0
        %3342 = vmatprep.mubr.bf16.mxu0 0
        %3343 = vmatmul.mubr.bf16.gmra.mrb[0].mxu0 %v3277
        %v3344 = vpop.f32.mrb[0].mxu0
        %v3345 = vadd.f32 0.0, %v3344
        %v3346 = vpop.f32.mrb[0].mxu0
        %v3347 = vpop.f32.mrb[0].mxu0
        %v3348 = vadd.f32 0.0, %v3347
        %v3349 = vpop.f32.mrb[0].mxu0
        %3350 = vmatprep.mubr.bf16.mxu0 0
        %3351 = vmatmul.mubr.bf16.gmra.mrb[0].mxu0 %v3280
        %v3352 = vpop.f32.mrb[0].mxu0
        %v3353 = vadd.f32 0.0, %v3352
        %v3354 = vpop.f32.mrb[0].mxu0
        %v3355 = vpop.f32.mrb[0].mxu0
        %v3356 = vadd.f32 0.0, %v3355
        %v3357 = vpop.f32.mrb[0].mxu0
        %3358 = vdwg.mxu0
        %v3359 = vsel %vm1909, %v3329, -inf
        %3360 = vmax.xlane.f32.xlu0 %v3359
        %v3361 = vpop.xlane.xlu0 %3360
        %v3362 = vsel %vm1909, %v3332, -inf
        %3363 = vmax.xlane.f32.xlu0 %v3362
        %v3364 = vpop.xlane.xlu0 %3363
        %v3365 = vsel %vm1909, %v3337, -inf
        %3366 = vmax.xlane.f32.xlu0 %v3365
        %v3367 = vpop.xlane.xlu0 %3366
        %v3368 = vsel %vm1909, %v3340, -inf
        %3369 = vmax.xlane.f32.xlu0 %v3368
        %v3370 = vpop.xlane.xlu0 %3369
        %v3371 = vsel %vm1909, %v3345, -inf
        %3372 = vmax.xlane.f32.xlu0 %v3371
        %v3373 = vpop.xlane.xlu0 %3372
        %v3374 = vsel %vm1909, %v3348, -inf
        %3375 = vmax.xlane.f32.xlu0 %v3374
        %v3376 = vpop.xlane.xlu0 %3375
        %v3377 = vsel %vm1909, %v3353, -inf
        %3378 = vmax.xlane.f32.xlu0 %v3377
        %v3379 = vpop.xlane.xlu0 %3378
        %v3380 = vsel %vm1909, %v3356, -inf
        %3381 = vmax.xlane.f32.xlu0 %v3380
        %v3382 = vpop.xlane.xlu0 %3381
        %v3383 = vsub.f32 %v3329, %v3361
        %v3384 = vsub.f32 %v3332, %v3364
        %v3385 = vsub.f32 %v3337, %v3367
        %v3386 = vsub.f32 %v3340, %v3370
        %v3387 = vsub.f32 %v3345, %v3373
        %v3388 = vsub.f32 %v3348, %v3376
        %v3389 = vsub.f32 %v3353, %v3379
        %v3390 = vsub.f32 %v3356, %v3382
        %v3391 = vmul.f32 %v3383, 1.442695
        %v3392 = vpow.pop %v3391
        %v3393 = vmul.f32 %v3384, 1.442695
        %v3394 = vpow.pop %v3393
        %v3395 = vmul.f32 %v3385, 1.442695
        %v3396 = vpow.pop %v3395
        %v3397 = vmul.f32 %v3386, 1.442695
        %v3398 = vpow.pop %v3397
        %v3399 = vmul.f32 %v3387, 1.442695
        %v3400 = vpow.pop %v3399
        %v3401 = vmul.f32 %v3388, 1.442695
        %v3402 = vpow.pop %v3401
        %v3403 = vmul.f32 %v3389, 1.442695
        %v3404 = vpow.pop %v3403
        %v3405 = vmul.f32 %v3390, 1.442695
        %v3406 = vpow.pop %v3405
        %v3407 = vsel %vm1909, %v3392, 0.0
        %3408 = vadd.xlane.f32.xlu0 %v3407
        %v3409 = vpop.xlane.xlu0 %3408
        %v3410 = vsel %vm1909, %v3394, 0.0
        %3411 = vadd.xlane.f32.xlu0 %v3410
        %v3412 = vpop.xlane.xlu0 %3411
        %v3413 = vsel %vm1909, %v3396, 0.0
        %3414 = vadd.xlane.f32.xlu0 %v3413
        %v3415 = vpop.xlane.xlu0 %3414
        %v3416 = vsel %vm1909, %v3398, 0.0
        %3417 = vadd.xlane.f32.xlu0 %v3416
        %v3418 = vpop.xlane.xlu0 %3417
        %v3419 = vsel %vm1909, %v3400, 0.0
        %3420 = vadd.xlane.f32.xlu0 %v3419
        %v3421 = vpop.xlane.xlu0 %3420
        %v3422 = vsel %vm1909, %v3402, 0.0
        %3423 = vadd.xlane.f32.xlu0 %v3422
        %v3424 = vpop.xlane.xlu0 %3423
        %v3425 = vsel %vm1909, %v3404, 0.0
        %3426 = vadd.xlane.f32.xlu0 %v3425
        %v3427 = vpop.xlane.xlu0 %3426
        %v3428 = vsel %vm1909, %v3406, 0.0
        %3429 = vadd.xlane.f32.xlu0 %v3428
        %v3430 = vpop.xlane.xlu0 %3429
        %v3431 = vrcp.pop %v3409
        %v3432 = vmul.f32 %v3392, %v3431
        %v3433 = vrcp.pop %v3412
        %v3434 = vmul.f32 %v3394, %v3433
        %v3435 = vrcp.pop %v3415
        %v3436 = vmul.f32 %v3396, %v3435
        %v3437 = vrcp.pop %v3418
        %v3438 = vmul.f32 %v3398, %v3437
        %v3439 = vrcp.pop %v3421
        %v3440 = vmul.f32 %v3400, %v3439
        %v3441 = vrcp.pop %v3424
        %v3442 = vmul.f32 %v3402, %v3441
        %v3443 = vrcp.pop %v3427
        %v3444 = vmul.f32 %v3404, %v3443
        %v3445 = vrcp.pop %v3430
        %v3446 = vmul.f32 %v3406, %v3445
        %v3447 = vpack.c.bf16 %v3434, %v3432
        %v3448 = vpack.c.bf16 %v3438, %v3436
        %v3449 = vpack.c.bf16 %v3442, %v3440
        %v3450 = vpack.c.bf16 %v3446, %v3444
        %v3452 = vsel %vm1909, %v3447, 0
        %v3455 = vsel %vm1909, %v3448, 0
        %v3458 = vsel %vm1909, %v3449, 0
        %v3461 = vsel %vm1909, %v3450, 0
        %3463 = vmatprep.subr.bf16.mxu0 %v2474
        %3464 = vmatpush1.bf16.msra.mxu0 %v2473
        %3465 = vmatprep.subr.bf16.mxu0 %v2476
        %3466 = vmatpush1.bf16.msra.mxu0 %v2475
        %3467 = vmatprep.subr.bf16.mxu0 %v2478
        %3468 = vmatpush1.bf16.msra.mxu0 %v2477
        %3469 = vmatprep.subr.bf16.mxu0 %v2480
        %3470 = vmatpush1.bf16.msra.mxu0 %v2479
        %3471 = vmatprep.subr.bf16.mxu0 0
        %3472 = vmatpush1.bf16.msra.mxu0 0
        %3473 = vmatprep.subr.bf16.mxu0 0
        %3474 = vmatpush1.bf16.msra.mxu0 0
        %3475 = vmatprep.subr.bf16.mxu0 0
        %3476 = vmatpush1.bf16.msra.mxu0 0
        %3477 = vmatprep.subr.bf16.mxu0 0
        %3478 = vmatpush1.bf16.msra.mxu0 0
        %3479 = vmatprep.subr.bf16.mxu0 0
        %3480 = vmatpush1.bf16.msra.mxu0 0
        %3481 = vmatprep.subr.bf16.mxu0 0
        %3482 = vmatpush1.bf16.msra.mxu0 0
        %3483 = vmatprep.subr.bf16.mxu0 0
        %3484 = vmatpush1.bf16.msra.mxu0 0
        %3485 = vmatprep.subr.bf16.mxu0 0
        %3486 = vmatpush1.bf16.msra.mxu0 0
        %3487 = vmatprep.subr.bf16.mxu0 0
        %3488 = vmatpush1.bf16.msra.mxu0 0
        %3489 = vmatprep.subr.bf16.mxu0 0
        %3490 = vmatpush1.bf16.msra.mxu0 0
        %3491 = vmatprep.subr.bf16.mxu0 0
        %3492 = vmatpush1.bf16.msra.mxu0 0
        %3493 = vmatprep.subr.bf16.mxu0 0
        %3494 = vmatpush1.bf16.msra.mxu0 0
        %3495 = vmatprep.mubr.bf16.mxu0 0
        %3496 = vmatmul.mubr.bf16.gmra.mrb[0].mxu0 %v3452
        %v3497 = vpop.f32.mrb[0].mxu0
        %v3498 = vadd.f32 0.0, %v3497
        %v3499 = vpop.f32.mrb[0].mxu0
        %v3500 = vadd.f32 0.0, %v3499
        %v3501 = vpop.f32.mrb[0].mxu0
        %v3502 = vadd.f32 0.0, %v3501
        %v3503 = vpop.f32.mrb[0].mxu0
        %v3504 = vadd.f32 0.0, %v3503
        %3505 = vmatprep.mubr.bf16.mxu0 0
        %3506 = vmatmul.mubr.bf16.gmra.mrb[0].mxu0 %v3455
        %v3507 = vpop.f32.mrb[0].mxu0
        %v3508 = vadd.f32 0.0, %v3507
        %v3509 = vpop.f32.mrb[0].mxu0
        %v3510 = vadd.f32 0.0, %v3509
        %v3511 = vpop.f32.mrb[0].mxu0
        %v3512 = vadd.f32 0.0, %v3511
        %v3513 = vpop.f32.mrb[0].mxu0
        %v3514 = vadd.f32 0.0, %v3513
        %3515 = vmatprep.mubr.bf16.mxu0 0
        %3516 = vmatmul.mubr.bf16.gmra.mrb[0].mxu0 %v3458
        %v3517 = vpop.f32.mrb[0].mxu0
        %v3518 = vadd.f32 0.0, %v3517
        %v3519 = vpop.f32.mrb[0].mxu0
        %v3520 = vadd.f32 0.0, %v3519
        %v3521 = vpop.f32.mrb[0].mxu0
        %v3522 = vadd.f32 0.0, %v3521
        %v3523 = vpop.f32.mrb[0].mxu0
        %v3524 = vadd.f32 0.0, %v3523
        %3525 = vmatprep.mubr.bf16.mxu0 0
        %3526 = vmatmul.mubr.bf16.gmra.mrb[0].mxu0 %v3461
        %v3527 = vpop.f32.mrb[0].mxu0
        %v3528 = vadd.f32 0.0, %v3527
        %v3529 = vpop.f32.mrb[0].mxu0
        %v3530 = vadd.f32 0.0, %v3529
        %v3531 = vpop.f32.mrb[0].mxu0
        %v3532 = vadd.f32 0.0, %v3531
        %v3533 = vpop.f32.mrb[0].mxu0
        %v3534 = vadd.f32 0.0, %v3533
        %3535 = vdwg.mxu0
        %v3536 = vadd.f32 %v3232, %v3498
        %v3537 = vadd.f32 %v3234, %v3500
        %v3538 = vadd.f32 %v3236, %v3502
        %v3539 = vadd.f32 %v3238, %v3504
        %v3540 = vadd.f32 %v3242, %v3508
        %v3541 = vadd.f32 %v3244, %v3510
        %v3542 = vadd.f32 %v3246, %v3512
        %v3543 = vadd.f32 %v3248, %v3514
        %v3544 = vadd.f32 %v3252, %v3518
        %v3545 = vadd.f32 %v3254, %v3520
        %v3546 = vadd.f32 %v3256, %v3522
        %v3547 = vadd.f32 %v3258, %v3524
        %v3548 = vadd.f32 %v3262, %v3528
        %v3549 = vadd.f32 %v3264, %v3530
        %v3550 = vadd.f32 %v3266, %v3532
        %v3551 = vadd.f32 %v3268, %v3534
        %3556 = vrot.lane.b32.xlu0 %v1814, 64
        %v3557 = vpop.permute.xlu0 %3556
        %3558 = vrot.lane.b32.xlu0 %v1820, 64
        %v3559 = vpop.permute.xlu0 %3558
        %3560 = vrot.lane.b32.xlu0 %v1826, 64
        %v3561 = vpop.permute.xlu0 %3560
        %3562 = vrot.lane.b32.xlu0 %v1832, 64
        %v3563 = vpop.permute.xlu0 %3562
        %3568 = vrot.lane.b32.xlu0 %v1816, 64
        %v3569 = vpop.permute.xlu0 %3568
        %3570 = vrot.lane.b32.xlu0 %v1822, 64
        %v3571 = vpop.permute.xlu0 %3570
        %3572 = vrot.lane.b32.xlu0 %v1828, 64
        %v3573 = vpop.permute.xlu0 %3572
        %3574 = vrot.lane.b32.xlu0 %v1834, 64
        %v3575 = vpop.permute.xlu0 %3574
        %v3577 = vsel %vm1909, %v3557, 0
        %v3580 = vsel %vm1909, %v3559, 0
        %v3583 = vsel %vm1909, %v3561, 0
        %v3586 = vsel %vm1909, %v3563, 0
        %v3589 = vsel %vm1909, %v3569, 0
        %v3592 = vsel %vm1909, %v3571, 0
        %v3595 = vsel %vm1909, %v3573, 0
        %v3598 = vsel %vm1909, %v3575, 0
        %3600 = vmatprep.subr.bf16.mxu0 0
        %3601 = vmatpush1.bf16.xpose.msra.mxu0 %v3589
        %3602 = vmatprep.subr.bf16.mxu0 0
        %3603 = vmatpush1.bf16.xpose.msra.mxu0 %v3592
        %3604 = vmatprep.subr.bf16.mxu0 0
        %3605 = vmatpush1.bf16.xpose.msra.mxu0 %v3595
        %3606 = vmatprep.subr.bf16.mxu0 0
        %3607 = vmatpush1.bf16.xpose.msra.mxu0 %v3598
        %3608 = vmatprep.subr.bf16.mxu0 0
        %3609 = vmatpush1.bf16.xpose.msra.mxu0 0
        %3610 = vmatprep.subr.bf16.mxu0 0
        %3611 = vmatpush1.bf16.xpose.msra.mxu0 0
        %3612 = vmatprep.subr.bf16.mxu0 0
        %3613 = vmatpush1.bf16.xpose.msra.mxu0 0
        %3614 = vmatprep.subr.bf16.mxu0 0
        %3615 = vmatpush1.bf16.xpose.msra.mxu0 0
        %3616 = vmatprep.subr.bf16.mxu0 0
        %3617 = vmatpush1.bf16.xpose.msra.mxu0 0
        %3618 = vmatprep.subr.bf16.mxu0 0
        %3619 = vmatpush1.bf16.xpose.msra.mxu0 0
        %3620 = vmatprep.subr.bf16.mxu0 0
        %3621 = vmatpush1.bf16.xpose.msra.mxu0 0
        %3622 = vmatprep.subr.bf16.mxu0 0
        %3623 = vmatpush1.bf16.xpose.msra.mxu0 0
        %3624 = vmatprep.subr.bf16.mxu0 0
        %3625 = vmatpush1.bf16.xpose.msra.mxu0 0
        %3626 = vmatprep.subr.bf16.mxu0 0
        %3627 = vmatpush1.bf16.xpose.msra.mxu0 0
        %3628 = vmatprep.subr.bf16.mxu0 0
        %3629 = vmatpush1.bf16.xpose.msra.mxu0 0
        %3630 = vmatprep.subr.bf16.mxu0 0
        %3631 = vmatpush1.bf16.xpose.msra.mxu0 0
        %3632 = vmatprep.mubr.bf16.mxu0 0
        %3633 = vmatmul.mubr.bf16.gmra.mrb[0].mxu0 %v3577
        %v3634 = vpop.f32.mrb[0].mxu0
        %v3635 = vadd.f32 0.0, %v3634
        %v3636 = vpop.f32.mrb[0].mxu0
        %v3637 = vpop.f32.mrb[0].mxu0
        %v3638 = vadd.f32 0.0, %v3637
        %v3639 = vpop.f32.mrb[0].mxu0
        %3640 = vmatprep.mubr.bf16.mxu0 0
        %3641 = vmatmul.mubr.bf16.gmra.mrb[0].mxu0 %v3580
        %v3642 = vpop.f32.mrb[0].mxu0
        %v3643 = vadd.f32 0.0, %v3642
        %v3644 = vpop.f32.mrb[0].mxu0
        %v3645 = vpop.f32.mrb[0].mxu0
        %v3646 = vadd.f32 0.0, %v3645
        %v3647 = vpop.f32.mrb[0].mxu0
        %3648 = vmatprep.mubr.bf16.mxu0 0
        %3649 = vmatmul.mubr.bf16.gmra.mrb[0].mxu0 %v3583
        %v3650 = vpop.f32.mrb[0].mxu0
        %v3651 = vadd.f32 0.0, %v3650
        %v3652 = vpop.f32.mrb[0].mxu0
        %v3653 = vpop.f32.mrb[0].mxu0
        %v3654 = vadd.f32 0.0, %v3653
        %v3655 = vpop.f32.mrb[0].mxu0
        %3656 = vmatprep.mubr.bf16.mxu0 0
        %3657 = vmatmul.mubr.bf16.gmra.mrb[0].mxu0 %v3586
        %v3658 = vpop.f32.mrb[0].mxu0
        %v3659 = vadd.f32 0.0, %v3658
        %v3660 = vpop.f32.mrb[0].mxu0
        %v3661 = vpop.f32.mrb[0].mxu0
        %v3662 = vadd.f32 0.0, %v3661
        %v3663 = vpop.f32.mrb[0].mxu0
        %3664 = vdwg.mxu0
        %v3665 = vsel %vm1909, %v3635, -inf
        %3666 = vmax.xlane.f32.xlu0 %v3665
        %v3667 = vpop.xlane.xlu0 %3666
        %v3668 = vsel %vm1909, %v3638, -inf
        %3669 = vmax.xlane.f32.xlu0 %v3668
        %v3670 = vpop.xlane.xlu0 %3669
        %v3671 = vsel %vm1909, %v3643, -inf
        %3672 = vmax.xlane.f32.xlu0 %v3671
        %v3673 = vpop.xlane.xlu0 %3672
        %v3674 = vsel %vm1909, %v3646, -inf
        %3675 = vmax.xlane.f32.xlu0 %v3674
        %v3676 = vpop.xlane.xlu0 %3675
        %v3677 = vsel %vm1909, %v3651, -inf
        %3678 = vmax.xlane.f32.xlu0 %v3677
        %v3679 = vpop.xlane.xlu0 %3678
        %v3680 = vsel %vm1909, %v3654, -inf
        %3681 = vmax.xlane.f32.xlu0 %v3680
        %v3682 = vpop.xlane.xlu0 %3681
        %v3683 = vsel %vm1909, %v3659, -inf
        %3684 = vmax.xlane.f32.xlu0 %v3683
        %v3685 = vpop.xlane.xlu0 %3684
        %v3686 = vsel %vm1909, %v3662, -inf
        %3687 = vmax.xlane.f32.xlu0 %v3686
        %v3688 = vpop.xlane.xlu0 %3687
        %v3689 = vsub.f32 %v3635, %v3667
        %v3690 = vsub.f32 %v3638, %v3670
        %v3691 = vsub.f32 %v3643, %v3673
        %v3692 = vsub.f32 %v3646, %v3676
        %v3693 = vsub.f32 %v3651, %v3679
        %v3694 = vsub.f32 %v3654, %v3682
        %v3695 = vsub.f32 %v3659, %v3685
        %v3696 = vsub.f32 %v3662, %v3688
        %v3697 = vmul.f32 %v3689, 1.442695
        %v3698 = vpow.pop %v3697
        %v3699 = vmul.f32 %v3690, 1.442695
        %v3700 = vpow.pop %v3699
        %v3701 = vmul.f32 %v3691, 1.442695
        %v3702 = vpow.pop %v3701
        %v3703 = vmul.f32 %v3692, 1.442695
        %v3704 = vpow.pop %v3703
        %v3705 = vmul.f32 %v3693, 1.442695
        %v3706 = vpow.pop %v3705
        %v3707 = vmul.f32 %v3694, 1.442695
        %v3708 = vpow.pop %v3707
        %v3709 = vmul.f32 %v3695, 1.442695
        %v3710 = vpow.pop %v3709
        %v3711 = vmul.f32 %v3696, 1.442695
        %v3712 = vpow.pop %v3711
        %v3713 = vsel %vm1909, %v3698, 0.0
        %3714 = vadd.xlane.f32.xlu0 %v3713
        %v3715 = vpop.xlane.xlu0 %3714
        %v3716 = vsel %vm1909, %v3700, 0.0
        %3717 = vadd.xlane.f32.xlu0 %v3716
        %v3718 = vpop.xlane.xlu0 %3717
        %v3719 = vsel %vm1909, %v3702, 0.0
        %3720 = vadd.xlane.f32.xlu0 %v3719
        %v3721 = vpop.xlane.xlu0 %3720
        %v3722 = vsel %vm1909, %v3704, 0.0
        %3723 = vadd.xlane.f32.xlu0 %v3722
        %v3724 = vpop.xlane.xlu0 %3723
        %v3725 = vsel %vm1909, %v3706, 0.0
        %3726 = vadd.xlane.f32.xlu0 %v3725
        %v3727 = vpop.xlane.xlu0 %3726
        %v3728 = vsel %vm1909, %v3708, 0.0
        %3729 = vadd.xlane.f32.xlu0 %v3728
        %v3730 = vpop.xlane.xlu0 %3729
        %v3731 = vsel %vm1909, %v3710, 0.0
        %3732 = vadd.xlane.f32.xlu0 %v3731
        %v3733 = vpop.xlane.xlu0 %3732
        %v3734 = vsel %vm1909, %v3712, 0.0
        %3735 = vadd.xlane.f32.xlu0 %v3734
        %v3736 = vpop.xlane.xlu0 %3735
        %v3737 = vrcp.pop %v3715
        %v3738 = vmul.f32 %v3698, %v3737
        %v3739 = vrcp.pop %v3718
        %v3740 = vmul.f32 %v3700, %v3739
        %v3741 = vrcp.pop %v3721
        %v3742 = vmul.f32 %v3702, %v3741
        %v3743 = vrcp.pop %v3724
        %v3744 = vmul.f32 %v3704, %v3743
        %v3745 = vrcp.pop %v3727
        %v3746 = vmul.f32 %v3706, %v3745
        %v3747 = vrcp.pop %v3730
        %v3748 = vmul.f32 %v3708, %v3747
        %v3749 = vrcp.pop %v3733
        %v3750 = vmul.f32 %v3710, %v3749
        %v3751 = vrcp.pop %v3736
        %v3752 = vmul.f32 %v3712, %v3751
        %v3753 = vpack.c.bf16 %v3740, %v3738
        %v3754 = vpack.c.bf16 %v3744, %v3742
        %v3755 = vpack.c.bf16 %v3748, %v3746
        %v3756 = vpack.c.bf16 %v3752, %v3750
        %v3758 = vsel %vm1909, %v3753, 0
        %v3761 = vsel %vm1909, %v3754, 0
        %v3764 = vsel %vm1909, %v3755, 0
        %v3767 = vsel %vm1909, %v3756, 0
        %3769 = vmatprep.subr.bf16.mxu0 %v2699
        %3770 = vmatpush1.bf16.msra.mxu0 %v2698
        %3771 = vmatprep.subr.bf16.mxu0 %v2701
        %3772 = vmatpush1.bf16.msra.mxu0 %v2700
        %3773 = vmatprep.subr.bf16.mxu0 %v2703
        %3774 = vmatpush1.bf16.msra.mxu0 %v2702
        %3775 = vmatprep.subr.bf16.mxu0 %v2705
        %3776 = vmatpush1.bf16.msra.mxu0 %v2704
        %3777 = vmatprep.subr.bf16.mxu0 0
        %3778 = vmatpush1.bf16.msra.mxu0 0
        %3779 = vmatprep.subr.bf16.mxu0 0
        %3780 = vmatpush1.bf16.msra.mxu0 0
        %3781 = vmatprep.subr.bf16.mxu0 0
        %3782 = vmatpush1.bf16.msra.mxu0 0
        %3783 = vmatprep.subr.bf16.mxu0 0
        %3784 = vmatpush1.bf16.msra.mxu0 0
        %3785 = vmatprep.subr.bf16.mxu0 0
        %3786 = vmatpush1.bf16.msra.mxu0 0
        %3787 = vmatprep.subr.bf16.mxu0 0
        %3788 = vmatpush1.bf16.msra.mxu0 0
        %3789 = vmatprep.subr.bf16.mxu0 0
        %3790 = vmatpush1.bf16.msra.mxu0 0
        %3791 = vmatprep.subr.bf16.mxu0 0
        %3792 = vmatpush1.bf16.msra.mxu0 0
        %3793 = vmatprep.subr.bf16.mxu0 0
        %3794 = vmatpush1.bf16.msra.mxu0 0
        %3795 = vmatprep.subr.bf16.mxu0 0
        %3796 = vmatpush1.bf16.msra.mxu0 0
        %3797 = vmatprep.subr.bf16.mxu0 0
        %3798 = vmatpush1.bf16.msra.mxu0 0
        %3799 = vmatprep.subr.bf16.mxu0 0
        %3800 = vmatpush1.bf16.msra.mxu0 0
        %3801 = vmatprep.mubr.bf16.mxu0 0
        %3802 = vmatmul.mubr.bf16.gmra.mrb[0].mxu0 %v3758
        %v3803 = vpop.f32.mrb[0].mxu0
        %v3804 = vadd.f32 0.0, %v3803
        %v3805 = vpop.f32.mrb[0].mxu0
        %v3806 = vadd.f32 0.0, %v3805
        %v3807 = vpop.f32.mrb[0].mxu0
        %v3808 = vadd.f32 0.0, %v3807
        %v3809 = vpop.f32.mrb[0].mxu0
        %v3810 = vadd.f32 0.0, %v3809
        %3811 = vmatprep.mubr.bf16.mxu0 0
        %3812 = vmatmul.mubr.bf16.gmra.mrb[0].mxu0 %v3761
        %v3813 = vpop.f32.mrb[0].mxu0
        %v3814 = vadd.f32 0.0, %v3813
        %v3815 = vpop.f32.mrb[0].mxu0
        %v3816 = vadd.f32 0.0, %v3815
        %v3817 = vpop.f32.mrb[0].mxu0
        %v3818 = vadd.f32 0.0, %v3817
        %v3819 = vpop.f32.mrb[0].mxu0
        %v3820 = vadd.f32 0.0, %v3819
        %3821 = vmatprep.mubr.bf16.mxu0 0
        %3822 = vmatmul.mubr.bf16.gmra.mrb[0].mxu0 %v3764
        %v3823 = vpop.f32.mrb[0].mxu0
        %v3824 = vadd.f32 0.0, %v3823
        %v3825 = vpop.f32.mrb[0].mxu0
        %v3826 = vadd.f32 0.0, %v3825
        %v3827 = vpop.f32.mrb[0].mxu0
        %v3828 = vadd.f32 0.0, %v3827
        %v3829 = vpop.f32.mrb[0].mxu0
        %v3830 = vadd.f32 0.0, %v3829
        %3831 = vmatprep.mubr.bf16.mxu0 0
        %3832 = vmatmul.mubr.bf16.gmra.mrb[0].mxu0 %v3767
        %v3833 = vpop.f32.mrb[0].mxu0
        %v3834 = vadd.f32 0.0, %v3833
        %v3835 = vpop.f32.mrb[0].mxu0
        %v3836 = vadd.f32 0.0, %v3835
        %v3837 = vpop.f32.mrb[0].mxu0
        %v3838 = vadd.f32 0.0, %v3837
        %v3839 = vpop.f32.mrb[0].mxu0
        %v3840 = vadd.f32 0.0, %v3839
        %3841 = vdwg.mxu0
        %v3842 = vadd.f32 %v3536, %v3804
        %v3843 = vadd.f32 %v3537, %v3806
        %v3844 = vadd.f32 %v3538, %v3808
        %v3845 = vadd.f32 %v3539, %v3810
        %v3846 = vadd.f32 %v3540, %v3814
        %v3847 = vadd.f32 %v3541, %v3816
        %v3848 = vadd.f32 %v3542, %v3818
        %v3849 = vadd.f32 %v3543, %v3820
        %v3850 = vadd.f32 %v3544, %v3824
        %v3851 = vadd.f32 %v3545, %v3826
        %v3852 = vadd.f32 %v3546, %v3828
        %v3853 = vadd.f32 %v3547, %v3830
        %v3854 = vadd.f32 %v3548, %v3834
        %v3855 = vadd.f32 %v3549, %v3836
        %v3856 = vadd.f32 %v3550, %v3838
        %v3857 = vadd.f32 %v3551, %v3840
        %v3859 = vsel %vm1909, %v1837, 0
        %v3862 = vsel %vm1909, %v1843, 0
        %v3865 = vsel %vm1909, %v1849, 0
        %v3868 = vsel %vm1909, %v1855, 0
        %v3871 = vsel %vm1909, %v1839, 0
        %v3874 = vsel %vm1909, %v1845, 0
        %v3877 = vsel %vm1909, %v1851, 0
        %v3880 = vsel %vm1909, %v1857, 0
        %3882 = vmatprep.subr.bf16.mxu0 0
        %3883 = vmatpush1.bf16.xpose.msra.mxu0 %v3871
        %3884 = vmatprep.subr.bf16.mxu0 0
        %3885 = vmatpush1.bf16.xpose.msra.mxu0 %v3874
        %3886 = vmatprep.subr.bf16.mxu0 0
        %3887 = vmatpush1.bf16.xpose.msra.mxu0 %v3877
        %3888 = vmatprep.subr.bf16.mxu0 0
        %3889 = vmatpush1.bf16.xpose.msra.mxu0 %v3880
        %3890 = vmatprep.subr.bf16.mxu0 0
        %3891 = vmatpush1.bf16.xpose.msra.mxu0 0
        %3892 = vmatprep.subr.bf16.mxu0 0
        %3893 = vmatpush1.bf16.xpose.msra.mxu0 0
        %3894 = vmatprep.subr.bf16.mxu0 0
        %3895 = vmatpush1.bf16.xpose.msra.mxu0 0
        %3896 = vmatprep.subr.bf16.mxu0 0
        %3897 = vmatpush1.bf16.xpose.msra.mxu0 0
        %3898 = vmatprep.subr.bf16.mxu0 0
        %3899 = vmatpush1.bf16.xpose.msra.mxu0 0
        %3900 = vmatprep.subr.bf16.mxu0 0
        %3901 = vmatpush1.bf16.xpose.msra.mxu0 0
        %3902 = vmatprep.subr.bf16.mxu0 0
        %3903 = vmatpush1.bf16.xpose.msra.mxu0 0
        %3904 = vmatprep.subr.bf16.mxu0 0
        %3905 = vmatpush1.bf16.xpose.msra.mxu0 0
        %3906 = vmatprep.subr.bf16.mxu0 0
        %3907 = vmatpush1.bf16.xpose.msra.mxu0 0
        %3908 = vmatprep.subr.bf16.mxu0 0
        %3909 = vmatpush1.bf16.xpose.msra.mxu0 0
        %3910 = vmatprep.subr.bf16.mxu0 0
        %3911 = vmatpush1.bf16.xpose.msra.mxu0 0
        %3912 = vmatprep.subr.bf16.mxu0 0
        %3913 = vmatpush1.bf16.xpose.msra.mxu0 0
        %3914 = vmatprep.mubr.bf16.mxu0 0
        %3915 = vmatmul.mubr.bf16.gmra.mrb[0].mxu0 %v3859
        %v3916 = vpop.f32.mrb[0].mxu0
        %v3917 = vadd.f32 0.0, %v3916
        %v3918 = vpop.f32.mrb[0].mxu0
        %v3919 = vpop.f32.mrb[0].mxu0
        %v3920 = vadd.f32 0.0, %v3919
        %v3921 = vpop.f32.mrb[0].mxu0
        %3922 = vmatprep.mubr.bf16.mxu0 0
        %3923 = vmatmul.mubr.bf16.gmra.mrb[0].mxu0 %v3862
        %v3924 = vpop.f32.mrb[0].mxu0
        %v3925 = vadd.f32 0.0, %v3924
        %v3926 = vpop.f32.mrb[0].mxu0
        %v3927 = vpop.f32.mrb[0].mxu0
        %v3928 = vadd.f32 0.0, %v3927
        %v3929 = vpop.f32.mrb[0].mxu0
        %3930 = vmatprep.mubr.bf16.mxu0 0
        %3931 = vmatmul.mubr.bf16.gmra.mrb[0].mxu0 %v3865
        %v3932 = vpop.f32.mrb[0].mxu0
        %v3933 = vadd.f32 0.0, %v3932
        %v3934 = vpop.f32.mrb[0].mxu0
        %v3935 = vpop.f32.mrb[0].mxu0
        %v3936 = vadd.f32 0.0, %v3935
        %v3937 = vpop.f32.mrb[0].mxu0
        %3938 = vmatprep.mubr.bf16.mxu0 0
        %3939 = vmatmul.mubr.bf16.gmra.mrb[0].mxu0 %v3868
        %v3940 = vpop.f32.mrb[0].mxu0
        %v3941 = vadd.f32 0.0, %v3940
        %v3942 = vpop.f32.mrb[0].mxu0
        %v3943 = vpop.f32.mrb[0].mxu0
        %v3944 = vadd.f32 0.0, %v3943
        %v3945 = vpop.f32.mrb[0].mxu0
        %3946 = vdwg.mxu0
        %v3947 = vsel %vm1909, %v3917, -inf
        %3948 = vmax.xlane.f32.xlu0 %v3947
        %v3949 = vpop.xlane.xlu0 %3948
        %v3950 = vsel %vm1909, %v3920, -inf
        %3951 = vmax.xlane.f32.xlu0 %v3950
        %v3952 = vpop.xlane.xlu0 %3951
        %v3953 = vsel %vm1909, %v3925, -inf
        %3954 = vmax.xlane.f32.xlu0 %v3953
        %v3955 = vpop.xlane.xlu0 %3954
        %v3956 = vsel %vm1909, %v3928, -inf
        %3957 = vmax.xlane.f32.xlu0 %v3956
        %v3958 = vpop.xlane.xlu0 %3957
        %v3959 = vsel %vm1909, %v3933, -inf
        %3960 = vmax.xlane.f32.xlu0 %v3959
        %v3961 = vpop.xlane.xlu0 %3960
        %v3962 = vsel %vm1909, %v3936, -inf
        %3963 = vmax.xlane.f32.xlu0 %v3962
        %v3964 = vpop.xlane.xlu0 %3963
        %v3965 = vsel %vm1909, %v3941, -inf
        %3966 = vmax.xlane.f32.xlu0 %v3965
        %v3967 = vpop.xlane.xlu0 %3966
        %v3968 = vsel %vm1909, %v3944, -inf
        %3969 = vmax.xlane.f32.xlu0 %v3968
        %v3970 = vpop.xlane.xlu0 %3969
        %v3971 = vsub.f32 %v3917, %v3949
        %v3972 = vsub.f32 %v3920, %v3952
        %v3973 = vsub.f32 %v3925, %v3955
        %v3974 = vsub.f32 %v3928, %v3958
        %v3975 = vsub.f32 %v3933, %v3961
        %v3976 = vsub.f32 %v3936, %v3964
        %v3977 = vsub.f32 %v3941, %v3967
        %v3978 = vsub.f32 %v3944, %v3970
        %v3979 = vmul.f32 %v3971, 1.442695
        %v3980 = vpow.pop %v3979
        %v3981 = vmul.f32 %v3972, 1.442695
        %v3982 = vpow.pop %v3981
        %v3983 = vmul.f32 %v3973, 1.442695
        %v3984 = vpow.pop %v3983
        %v3985 = vmul.f32 %v3974, 1.442695
        %v3986 = vpow.pop %v3985
        %v3987 = vmul.f32 %v3975, 1.442695
        %v3988 = vpow.pop %v3987
        %v3989 = vmul.f32 %v3976, 1.442695
        %v3990 = vpow.pop %v3989
        %v3991 = vmul.f32 %v3977, 1.442695
        %v3992 = vpow.pop %v3991
        %v3993 = vmul.f32 %v3978, 1.442695
        %v3994 = vpow.pop %v3993
        %v3995 = vsel %vm1909, %v3980, 0.0
        %3996 = vadd.xlane.f32.xlu0 %v3995
        %v3997 = vpop.xlane.xlu0 %3996
        %v3998 = vsel %vm1909, %v3982, 0.0
        %3999 = vadd.xlane.f32.xlu0 %v3998
        %v4000 = vpop.xlane.xlu0 %3999
        %v4001 = vsel %vm1909, %v3984, 0.0
        %4002 = vadd.xlane.f32.xlu0 %v4001
        %v4003 = vpop.xlane.xlu0 %4002
        %v4004 = vsel %vm1909, %v3986, 0.0
        %4005 = vadd.xlane.f32.xlu0 %v4004
        %v4006 = vpop.xlane.xlu0 %4005
        %v4007 = vsel %vm1909, %v3988, 0.0
        %4008 = vadd.xlane.f32.xlu0 %v4007
        %v4009 = vpop.xlane.xlu0 %4008
        %v4010 = vsel %vm1909, %v3990, 0.0
        %4011 = vadd.xlane.f32.xlu0 %v4010
        %v4012 = vpop.xlane.xlu0 %4011
        %v4013 = vsel %vm1909, %v3992, 0.0
        %4014 = vadd.xlane.f32.xlu0 %v4013
        %v4015 = vpop.xlane.xlu0 %4014
        %v4016 = vsel %vm1909, %v3994, 0.0
        %4017 = vadd.xlane.f32.xlu0 %v4016
        %v4018 = vpop.xlane.xlu0 %4017
        %v4019 = vrcp.pop %v3997
        %v4020 = vmul.f32 %v3980, %v4019
        %v4021 = vrcp.pop %v4000
        %v4022 = vmul.f32 %v3982, %v4021
        %v4023 = vrcp.pop %v4003
        %v4024 = vmul.f32 %v3984, %v4023
        %v4025 = vrcp.pop %v4006
        %v4026 = vmul.f32 %v3986, %v4025
        %v4027 = vrcp.pop %v4009
        %v4028 = vmul.f32 %v3988, %v4027
        %v4029 = vrcp.pop %v4012
        %v4030 = vmul.f32 %v3990, %v4029
        %v4031 = vrcp.pop %v4015
        %v4032 = vmul.f32 %v3992, %v4031
        %v4033 = vrcp.pop %v4018
        %v4034 = vmul.f32 %v3994, %v4033
        %v4035 = vpack.c.bf16 %v4022, %v4020
        %v4036 = vpack.c.bf16 %v4026, %v4024
        %v4037 = vpack.c.bf16 %v4030, %v4028
        %v4038 = vpack.c.bf16 %v4034, %v4032
        %4043 = vrot.lane.b32.xlu0 %v1837, 64
        %v4044 = vpop.permute.xlu0 %4043
        %4045 = vrot.lane.b32.xlu0 %v1843, 64
        %v4046 = vpop.permute.xlu0 %4045
        %4047 = vrot.lane.b32.xlu0 %v1849, 64
        %v4048 = vpop.permute.xlu0 %4047
        %4049 = vrot.lane.b32.xlu0 %v1855, 64
        %v4050 = vpop.permute.xlu0 %4049
        %4055 = vrot.lane.b32.xlu0 %v1839, 64
        %v4056 = vpop.permute.xlu0 %4055
        %4057 = vrot.lane.b32.xlu0 %v1845, 64
        %v4058 = vpop.permute.xlu0 %4057
        %4059 = vrot.lane.b32.xlu0 %v1851, 64
        %v4060 = vpop.permute.xlu0 %4059
        %4061 = vrot.lane.b32.xlu0 %v1857, 64
        %v4062 = vpop.permute.xlu0 %4061
        %v4064 = vsel %vm1909, %v4044, 0
        %v4067 = vsel %vm1909, %v4046, 0
        %v4070 = vsel %vm1909, %v4048, 0
        %v4073 = vsel %vm1909, %v4050, 0
        %v4076 = vsel %vm1909, %v4056, 0
        %v4079 = vsel %vm1909, %v4058, 0
        %v4082 = vsel %vm1909, %v4060, 0
        %v4085 = vsel %vm1909, %v4062, 0
        %4087 = vmatprep.subr.bf16.mxu0 0
        %4088 = vmatpush1.bf16.xpose.msra.mxu0 %v4076
        %4089 = vmatprep.subr.bf16.mxu0 0
        %4090 = vmatpush1.bf16.xpose.msra.mxu0 %v4079
        %4091 = vmatprep.subr.bf16.mxu0 0
        %4092 = vmatpush1.bf16.xpose.msra.mxu0 %v4082
        %4093 = vmatprep.subr.bf16.mxu0 0
        %4094 = vmatpush1.bf16.xpose.msra.mxu0 %v4085
        %4095 = vmatprep.subr.bf16.mxu0 0
        %4096 = vmatpush1.bf16.xpose.msra.mxu0 0
        %4097 = vmatprep.subr.bf16.mxu0 0
        %4098 = vmatpush1.bf16.xpose.msra.mxu0 0
        %4099 = vmatprep.subr.bf16.mxu0 0
        %4100 = vmatpush1.bf16.xpose.msra.mxu0 0
        %4101 = vmatprep.subr.bf16.mxu0 0
        %4102 = vmatpush1.bf16.xpose.msra.mxu0 0
        %4103 = vmatprep.subr.bf16.mxu0 0
        %4104 = vmatpush1.bf16.xpose.msra.mxu0 0
        %4105 = vmatprep.subr.bf16.mxu0 0
        %4106 = vmatpush1.bf16.xpose.msra.mxu0 0
        %4107 = vmatprep.subr.bf16.mxu0 0
        %4108 = vmatpush1.bf16.xpose.msra.mxu0 0
        %4109 = vmatprep.subr.bf16.mxu0 0
        %4110 = vmatpush1.bf16.xpose.msra.mxu0 0
        %4111 = vmatprep.subr.bf16.mxu0 0
        %4112 = vmatpush1.bf16.xpose.msra.mxu0 0
        %4113 = vmatprep.subr.bf16.mxu0 0
        %4114 = vmatpush1.bf16.xpose.msra.mxu0 0
        %4115 = vmatprep.subr.bf16.mxu0 0
        %4116 = vmatpush1.bf16.xpose.msra.mxu0 0
        %4117 = vmatprep.subr.bf16.mxu0 0
        %4118 = vmatpush1.bf16.xpose.msra.mxu0 0
        %4119 = vmatprep.mubr.bf16.mxu0 0
        %4120 = vmatmul.mubr.bf16.gmra.mrb[0].mxu0 %v4064
        %v4121 = vpop.f32.mrb[0].mxu0
        %v4122 = vadd.f32 0.0, %v4121
        %v4123 = vpop.f32.mrb[0].mxu0
        %v4124 = vpop.f32.mrb[0].mxu0
        %v4125 = vadd.f32 0.0, %v4124
        %v4126 = vpop.f32.mrb[0].mxu0
        %4127 = vmatprep.mubr.bf16.mxu0 0
        %4128 = vmatmul.mubr.bf16.gmra.mrb[0].mxu0 %v4067
        %v4129 = vpop.f32.mrb[0].mxu0
        %v4130 = vadd.f32 0.0, %v4129
        %v4131 = vpop.f32.mrb[0].mxu0
        %v4132 = vpop.f32.mrb[0].mxu0
        %v4133 = vadd.f32 0.0, %v4132
        %v4134 = vpop.f32.mrb[0].mxu0
        %4135 = vmatprep.mubr.bf16.mxu0 0
        %4136 = vmatmul.mubr.bf16.gmra.mrb[0].mxu0 %v4070
        %v4137 = vpop.f32.mrb[0].mxu0
        %v4138 = vadd.f32 0.0, %v4137
        %v4139 = vpop.f32.mrb[0].mxu0
        %v4140 = vpop.f32.mrb[0].mxu0
        %v4141 = vadd.f32 0.0, %v4140
        %v4142 = vpop.f32.mrb[0].mxu0
        %4143 = vmatprep.mubr.bf16.mxu0 0
        %4144 = vmatmul.mubr.bf16.gmra.mrb[0].mxu0 %v4073
        %v4145 = vpop.f32.mrb[0].mxu0
        %v4146 = vadd.f32 0.0, %v4145
        %v4147 = vpop.f32.mrb[0].mxu0
        %v4148 = vpop.f32.mrb[0].mxu0
        %v4149 = vadd.f32 0.0, %v4148
        %v4150 = vpop.f32.mrb[0].mxu0
        %4151 = vdwg.mxu0
        %v4152 = vsel %vm1909, %v4122, -inf
        %4153 = vmax.xlane.f32.xlu0 %v4152
        %v4154 = vpop.xlane.xlu0 %4153
        %v4155 = vsel %vm1909, %v4125, -inf
        %4156 = vmax.xlane.f32.xlu0 %v4155
        %v4157 = vpop.xlane.xlu0 %4156
        %v4158 = vsel %vm1909, %v4130, -inf
        %4159 = vmax.xlane.f32.xlu0 %v4158
        %v4160 = vpop.xlane.xlu0 %4159
        %v4161 = vsel %vm1909, %v4133, -inf
        %4162 = vmax.xlane.f32.xlu0 %v4161
        %v4163 = vpop.xlane.xlu0 %4162
        %v4164 = vsel %vm1909, %v4138, -inf
        %4165 = vmax.xlane.f32.xlu0 %v4164
        %v4166 = vpop.xlane.xlu0 %4165
        %v4167 = vsel %vm1909, %v4141, -inf
        %4168 = vmax.xlane.f32.xlu0 %v4167
        %v4169 = vpop.xlane.xlu0 %4168
        %v4170 = vsel %vm1909, %v4146, -inf
        %4171 = vmax.xlane.f32.xlu0 %v4170
        %v4172 = vpop.xlane.xlu0 %4171
        %v4173 = vsel %vm1909, %v4149, -inf
        %4174 = vmax.xlane.f32.xlu0 %v4173
        %v4175 = vpop.xlane.xlu0 %4174
        %v4176 = vsub.f32 %v4122, %v4154
        %v4177 = vsub.f32 %v4125, %v4157
        %v4178 = vsub.f32 %v4130, %v4160
        %v4179 = vsub.f32 %v4133, %v4163
        %v4180 = vsub.f32 %v4138, %v4166
        %v4181 = vsub.f32 %v4141, %v4169
        %v4182 = vsub.f32 %v4146, %v4172
        %v4183 = vsub.f32 %v4149, %v4175
        %v4184 = vmul.f32 %v4176, 1.442695
        %v4185 = vpow.pop %v4184
        %v4186 = vmul.f32 %v4177, 1.442695
        %v4187 = vpow.pop %v4186
        %v4188 = vmul.f32 %v4178, 1.442695
        %v4189 = vpow.pop %v4188
        %v4190 = vmul.f32 %v4179, 1.442695
        %v4191 = vpow.pop %v4190
        %v4192 = vmul.f32 %v4180, 1.442695
        %v4193 = vpow.pop %v4192
        %v4194 = vmul.f32 %v4181, 1.442695
        %v4195 = vpow.pop %v4194
        %v4196 = vmul.f32 %v4182, 1.442695
        %v4197 = vpow.pop %v4196
        %v4198 = vmul.f32 %v4183, 1.442695
        %v4199 = vpow.pop %v4198
        %v4200 = vsel %vm1909, %v4185, 0.0
        %4201 = vadd.xlane.f32.xlu0 %v4200
        %v4202 = vpop.xlane.xlu0 %4201
        %v4203 = vsel %vm1909, %v4187, 0.0
        %4204 = vadd.xlane.f32.xlu0 %v4203
        %v4205 = vpop.xlane.xlu0 %4204
        %v4206 = vsel %vm1909, %v4189, 0.0
        %4207 = vadd.xlane.f32.xlu0 %v4206
        %v4208 = vpop.xlane.xlu0 %4207
        %v4209 = vsel %vm1909, %v4191, 0.0
        %4210 = vadd.xlane.f32.xlu0 %v4209
        %v4211 = vpop.xlane.xlu0 %4210
        %v4212 = vsel %vm1909, %v4193, 0.0
        %4213 = vadd.xlane.f32.xlu0 %v4212
        %v4214 = vpop.xlane.xlu0 %4213
        %v4215 = vsel %vm1909, %v4195, 0.0
        %4216 = vadd.xlane.f32.xlu0 %v4215
        %v4217 = vpop.xlane.xlu0 %4216
        %v4218 = vsel %vm1909, %v4197, 0.0
        %4219 = vadd.xlane.f32.xlu0 %v4218
        %v4220 = vpop.xlane.xlu0 %4219
        %v4221 = vsel %vm1909, %v4199, 0.0
        %4222 = vadd.xlane.f32.xlu0 %v4221
        %v4223 = vpop.xlane.xlu0 %4222
        %v4224 = vrcp.pop %v4202
        %v4225 = vmul.f32 %v4185, %v4224
        %v4226 = vrcp.pop %v4205
        %v4227 = vmul.f32 %v4187, %v4226
        %v4228 = vrcp.pop %v4208
        %v4229 = vmul.f32 %v4189, %v4228
        %v4230 = vrcp.pop %v4211
        %v4231 = vmul.f32 %v4191, %v4230
        %v4232 = vrcp.pop %v4214
        %v4233 = vmul.f32 %v4193, %v4232
        %v4234 = vrcp.pop %v4217
        %v4235 = vmul.f32 %v4195, %v4234
        %v4236 = vrcp.pop %v4220
        %v4237 = vmul.f32 %v4197, %v4236
        %v4238 = vrcp.pop %v4223
        %v4239 = vmul.f32 %v4199, %v4238
        %v4240 = vpack.c.bf16 %v4227, %v4225
        %v4241 = vpack.c.bf16 %v4231, %v4229
        %v4242 = vpack.c.bf16 %v4235, %v4233
        %v4243 = vpack.c.bf16 %v4239, %v4237
        %v4245 = vsel %vm1909, %v4240, 0
        %v4248 = vsel %vm1909, %v4241, 0
        %v4251 = vsel %vm1909, %v4242, 0
        %v4254 = vsel %vm1909, %v4243, 0
        %4256 = vmatprep.subr.bf16.mxu0 %v2281
        %4257 = vmatpush1.bf16.msra.mxu0 %v2280
        %4258 = vmatprep.subr.bf16.mxu0 %v2283
        %4259 = vmatpush1.bf16.msra.mxu0 %v2282
        %4260 = vmatprep.subr.bf16.mxu0 %v2285
        %4261 = vmatpush1.bf16.msra.mxu0 %v2284
        %4262 = vmatprep.subr.bf16.mxu0 %v2287
        %4263 = vmatpush1.bf16.msra.mxu0 %v2286
        %4264 = vmatprep.subr.bf16.mxu0 0
        %4265 = vmatpush1.bf16.msra.mxu0 0
        %4266 = vmatprep.subr.bf16.mxu0 0
        %4267 = vmatpush1.bf16.msra.mxu0 0
        %4268 = vmatprep.subr.bf16.mxu0 0
        %4269 = vmatpush1.bf16.msra.mxu0 0
        %4270 = vmatprep.subr.bf16.mxu0 0
        %4271 = vmatpush1.bf16.msra.mxu0 0
        %4272 = vmatprep.subr.bf16.mxu0 0
        %4273 = vmatpush1.bf16.msra.mxu0 0
        %4274 = vmatprep.subr.bf16.mxu0 0
        %4275 = vmatpush1.bf16.msra.mxu0 0
        %4276 = vmatprep.subr.bf16.mxu0 0
        %4277 = vmatpush1.bf16.msra.mxu0 0
        %4278 = vmatprep.subr.bf16.mxu0 0
        %4279 = vmatpush1.bf16.msra.mxu0 0
        %4280 = vmatprep.subr.bf16.mxu0 0
        %4281 = vmatpush1.bf16.msra.mxu0 0
        %4282 = vmatprep.subr.bf16.mxu0 0
        %4283 = vmatpush1.bf16.msra.mxu0 0
        %4284 = vmatprep.subr.bf16.mxu0 0
        %4285 = vmatpush1.bf16.msra.mxu0 0
        %4286 = vmatprep.subr.bf16.mxu0 0
        %4287 = vmatpush1.bf16.msra.mxu0 0
        %4288 = vmatprep.mubr.bf16.mxu0 0
        %4289 = vmatmul.mubr.bf16.gmra.mrb[0].mxu0 %v4245
        %v4290 = vpop.f32.mrb[0].mxu0
        %v4291 = vadd.f32 0.0, %v4290
        %v4292 = vpop.f32.mrb[0].mxu0
        %v4293 = vadd.f32 0.0, %v4292
        %v4294 = vpop.f32.mrb[0].mxu0
        %v4295 = vadd.f32 0.0, %v4294
        %v4296 = vpop.f32.mrb[0].mxu0
        %v4297 = vadd.f32 0.0, %v4296
        %4298 = vmatprep.mubr.bf16.mxu0 0
        %4299 = vmatmul.mubr.bf16.gmra.mrb[0].mxu0 %v4248
        %v4300 = vpop.f32.mrb[0].mxu0
        %v4301 = vadd.f32 0.0, %v4300
        %v4302 = vpop.f32.mrb[0].mxu0
        %v4303 = vadd.f32 0.0, %v4302
        %v4304 = vpop.f32.mrb[0].mxu0
        %v4305 = vadd.f32 0.0, %v4304
        %v4306 = vpop.f32.mrb[0].mxu0
        %v4307 = vadd.f32 0.0, %v4306
        %4308 = vmatprep.mubr.bf16.mxu0 0
        %4309 = vmatmul.mubr.bf16.gmra.mrb[0].mxu0 %v4251
        %v4310 = vpop.f32.mrb[0].mxu0
        %v4311 = vadd.f32 0.0, %v4310
        %v4312 = vpop.f32.mrb[0].mxu0
        %v4313 = vadd.f32 0.0, %v4312
        %v4314 = vpop.f32.mrb[0].mxu0
        %v4315 = vadd.f32 0.0, %v4314
        %v4316 = vpop.f32.mrb[0].mxu0
        %v4317 = vadd.f32 0.0, %v4316
        %4318 = vmatprep.mubr.bf16.mxu0 0
        %4319 = vmatmul.mubr.bf16.gmra.mrb[0].mxu0 %v4254
        %v4320 = vpop.f32.mrb[0].mxu0
        %v4321 = vadd.f32 0.0, %v4320
        %v4322 = vpop.f32.mrb[0].mxu0
        %v4323 = vadd.f32 0.0, %v4322
        %v4324 = vpop.f32.mrb[0].mxu0
        %v4325 = vadd.f32 0.0, %v4324
        %v4326 = vpop.f32.mrb[0].mxu0
        %v4327 = vadd.f32 0.0, %v4326
        %4328 = vdwg.mxu0
        %v4330 = vsel %vm1909, %v4035, 0
        %v4333 = vsel %vm1909, %v4036, 0
        %v4336 = vsel %vm1909, %v4037, 0
        %v4339 = vsel %vm1909, %v4038, 0
        %4341 = vmatprep.subr.bf16.mxu0 %v2056
        %4342 = vmatpush1.bf16.msra.mxu0 %v2055
        %4343 = vmatprep.subr.bf16.mxu0 %v2058
        %4344 = vmatpush1.bf16.msra.mxu0 %v2057
        %4345 = vmatprep.subr.bf16.mxu0 %v2060
        %4346 = vmatpush1.bf16.msra.mxu0 %v2059
        %4347 = vmatprep.subr.bf16.mxu0 %v2062
        %4348 = vmatpush1.bf16.msra.mxu0 %v2061
        %4349 = vmatprep.subr.bf16.mxu0 0
        %4350 = vmatpush1.bf16.msra.mxu0 0
        %4351 = vmatprep.subr.bf16.mxu0 0
        %4352 = vmatpush1.bf16.msra.mxu0 0
        %4353 = vmatprep.subr.bf16.mxu0 0
        %4354 = vmatpush1.bf16.msra.mxu0 0
        %4355 = vmatprep.subr.bf16.mxu0 0
        %4356 = vmatpush1.bf16.msra.mxu0 0
        %4357 = vmatprep.subr.bf16.mxu0 0
        %4358 = vmatpush1.bf16.msra.mxu0 0
        %4359 = vmatprep.subr.bf16.mxu0 0
        %4360 = vmatpush1.bf16.msra.mxu0 0
        %4361 = vmatprep.subr.bf16.mxu0 0
        %4362 = vmatpush1.bf16.msra.mxu0 0
        %4363 = vmatprep.subr.bf16.mxu0 0
        %4364 = vmatpush1.bf16.msra.mxu0 0
        %4365 = vmatprep.subr.bf16.mxu0 0
        %4366 = vmatpush1.bf16.msra.mxu0 0
        %4367 = vmatprep.subr.bf16.mxu0 0
        %4368 = vmatpush1.bf16.msra.mxu0 0
        %4369 = vmatprep.subr.bf16.mxu0 0
        %4370 = vmatpush1.bf16.msra.mxu0 0
        %4371 = vmatprep.subr.bf16.mxu0 0
        %4372 = vmatpush1.bf16.msra.mxu0 0
        %4373 = vmatprep.mubr.bf16.mxu0 0
        %4374 = vmatmul.mubr.bf16.gmra.mrb[0].mxu0 %v4330
        %v4375 = vpop.f32.mrb[0].mxu0
        %v4376 = vadd.f32 %v4291, %v4375
        %v4377 = vpop.f32.mrb[0].mxu0
        %v4378 = vadd.f32 %v4293, %v4377
        %v4379 = vpop.f32.mrb[0].mxu0
        %v4380 = vadd.f32 %v4295, %v4379
        %v4381 = vpop.f32.mrb[0].mxu0
        %v4382 = vadd.f32 %v4297, %v4381
        %4383 = vmatprep.mubr.bf16.mxu0 0
        %4384 = vmatmul.mubr.bf16.gmra.mrb[0].mxu0 %v4333
        %v4385 = vpop.f32.mrb[0].mxu0
        %v4386 = vadd.f32 %v4301, %v4385
        %v4387 = vpop.f32.mrb[0].mxu0
        %v4388 = vadd.f32 %v4303, %v4387
        %v4389 = vpop.f32.mrb[0].mxu0
        %v4390 = vadd.f32 %v4305, %v4389
        %v4391 = vpop.f32.mrb[0].mxu0
        %v4392 = vadd.f32 %v4307, %v4391
        %4393 = vmatprep.mubr.bf16.mxu0 0
        %4394 = vmatmul.mubr.bf16.gmra.mrb[0].mxu0 %v4336
        %v4395 = vpop.f32.mrb[0].mxu0
        %v4396 = vadd.f32 %v4311, %v4395
        %v4397 = vpop.f32.mrb[0].mxu0
        %v4398 = vadd.f32 %v4313, %v4397
        %v4399 = vpop.f32.mrb[0].mxu0
        %v4400 = vadd.f32 %v4315, %v4399
        %v4401 = vpop.f32.mrb[0].mxu0
        %v4402 = vadd.f32 %v4317, %v4401
        %4403 = vmatprep.mubr.bf16.mxu0 0
        %4404 = vmatmul.mubr.bf16.gmra.mrb[0].mxu0 %v4339
        %v4405 = vpop.f32.mrb[0].mxu0
        %v4406 = vadd.f32 %v4321, %v4405
        %v4407 = vpop.f32.mrb[0].mxu0
        %v4408 = vadd.f32 %v4323, %v4407
        %v4409 = vpop.f32.mrb[0].mxu0
        %v4410 = vadd.f32 %v4325, %v4409
        %v4411 = vpop.f32.mrb[0].mxu0
        %v4412 = vadd.f32 %v4327, %v4411
        %4413 = vdwg.mxu0
        %v4415 = vsel %vm1909, %v1838, 0
        %v4418 = vsel %vm1909, %v1844, 0
        %v4421 = vsel %vm1909, %v1850, 0
        %v4424 = vsel %vm1909, %v1856, 0
        %v4427 = vsel %vm1909, %v1840, 0
        %v4430 = vsel %vm1909, %v1846, 0
        %v4433 = vsel %vm1909, %v1852, 0
        %v4436 = vsel %vm1909, %v1858, 0
        %4438 = vmatprep.subr.bf16.mxu0 0
        %4439 = vmatpush1.bf16.xpose.msra.mxu0 %v4427
        %4440 = vmatprep.subr.bf16.mxu0 0
        %4441 = vmatpush1.bf16.xpose.msra.mxu0 %v4430
        %4442 = vmatprep.subr.bf16.mxu0 0
        %4443 = vmatpush1.bf16.xpose.msra.mxu0 %v4433
        %4444 = vmatprep.subr.bf16.mxu0 0
        %4445 = vmatpush1.bf16.xpose.msra.mxu0 %v4436
        %4446 = vmatprep.subr.bf16.mxu0 0
        %4447 = vmatpush1.bf16.xpose.msra.mxu0 0
        %4448 = vmatprep.subr.bf16.mxu0 0
        %4449 = vmatpush1.bf16.xpose.msra.mxu0 0
        %4450 = vmatprep.subr.bf16.mxu0 0
        %4451 = vmatpush1.bf16.xpose.msra.mxu0 0
        %4452 = vmatprep.subr.bf16.mxu0 0
        %4453 = vmatpush1.bf16.xpose.msra.mxu0 0
        %4454 = vmatprep.subr.bf16.mxu0 0
        %4455 = vmatpush1.bf16.xpose.msra.mxu0 0
        %4456 = vmatprep.subr.bf16.mxu0 0
        %4457 = vmatpush1.bf16.xpose.msra.mxu0 0
        %4458 = vmatprep.subr.bf16.mxu0 0
        %4459 = vmatpush1.bf16.xpose.msra.mxu0 0
        %4460 = vmatprep.subr.bf16.mxu0 0
        %4461 = vmatpush1.bf16.xpose.msra.mxu0 0
        %4462 = vmatprep.subr.bf16.mxu0 0
        %4463 = vmatpush1.bf16.xpose.msra.mxu0 0
        %4464 = vmatprep.subr.bf16.mxu0 0
        %4465 = vmatpush1.bf16.xpose.msra.mxu0 0
        %4466 = vmatprep.subr.bf16.mxu0 0
        %4467 = vmatpush1.bf16.xpose.msra.mxu0 0
        %4468 = vmatprep.subr.bf16.mxu0 0
        %4469 = vmatpush1.bf16.xpose.msra.mxu0 0
        %4470 = vmatprep.mubr.bf16.mxu0 0
        %4471 = vmatmul.mubr.bf16.gmra.mrb[0].mxu0 %v4415
        %v4472 = vpop.f32.mrb[0].mxu0
        %v4473 = vadd.f32 0.0, %v4472
        %v4474 = vpop.f32.mrb[0].mxu0
        %v4475 = vpop.f32.mrb[0].mxu0
        %v4476 = vadd.f32 0.0, %v4475
        %v4477 = vpop.f32.mrb[0].mxu0
        %4478 = vmatprep.mubr.bf16.mxu0 0
        %4479 = vmatmul.mubr.bf16.gmra.mrb[0].mxu0 %v4418
        %v4480 = vpop.f32.mrb[0].mxu0
        %v4481 = vadd.f32 0.0, %v4480
        %v4482 = vpop.f32.mrb[0].mxu0
        %v4483 = vpop.f32.mrb[0].mxu0
        %v4484 = vadd.f32 0.0, %v4483
        %v4485 = vpop.f32.mrb[0].mxu0
        %4486 = vmatprep.mubr.bf16.mxu0 0
        %4487 = vmatmul.mubr.bf16.gmra.mrb[0].mxu0 %v4421
        %v4488 = vpop.f32.mrb[0].mxu0
        %v4489 = vadd.f32 0.0, %v4488
        %v4490 = vpop.f32.mrb[0].mxu0
        %v4491 = vpop.f32.mrb[0].mxu0
        %v4492 = vadd.f32 0.0, %v4491
        %v4493 = vpop.f32.mrb[0].mxu0
        %4494 = vmatprep.mubr.bf16.mxu0 0
        %4495 = vmatmul.mubr.bf16.gmra.mrb[0].mxu0 %v4424
        %v4496 = vpop.f32.mrb[0].mxu0
        %v4497 = vadd.f32 0.0, %v4496
        %v4498 = vpop.f32.mrb[0].mxu0
        %v4499 = vpop.f32.mrb[0].mxu0
        %v4500 = vadd.f32 0.0, %v4499
        %v4501 = vpop.f32.mrb[0].mxu0
        %4502 = vdwg.mxu0
        %v4503 = vsel %vm1909, %v4473, -inf
        %4504 = vmax.xlane.f32.xlu0 %v4503
        %v4505 = vpop.xlane.xlu0 %4504
        %v4506 = vsel %vm1909, %v4476, -inf
        %4507 = vmax.xlane.f32.xlu0 %v4506
        %v4508 = vpop.xlane.xlu0 %4507
        %v4509 = vsel %vm1909, %v4481, -inf
        %4510 = vmax.xlane.f32.xlu0 %v4509
        %v4511 = vpop.xlane.xlu0 %4510
        %v4512 = vsel %vm1909, %v4484, -inf
        %4513 = vmax.xlane.f32.xlu0 %v4512
        %v4514 = vpop.xlane.xlu0 %4513
        %v4515 = vsel %vm1909, %v4489, -inf
        %4516 = vmax.xlane.f32.xlu0 %v4515
        %v4517 = vpop.xlane.xlu0 %4516
        %v4518 = vsel %vm1909, %v4492, -inf
        %4519 = vmax.xlane.f32.xlu0 %v4518
        %v4520 = vpop.xlane.xlu0 %4519
        %v4521 = vsel %vm1909, %v4497, -inf
        %4522 = vmax.xlane.f32.xlu0 %v4521
        %v4523 = vpop.xlane.xlu0 %4522
        %v4524 = vsel %vm1909, %v4500, -inf
        %4525 = vmax.xlane.f32.xlu0 %v4524
        %v4526 = vpop.xlane.xlu0 %4525
        %v4527 = vsub.f32 %v4473, %v4505
        %v4528 = vsub.f32 %v4476, %v4508
        %v4529 = vsub.f32 %v4481, %v4511
        %v4530 = vsub.f32 %v4484, %v4514
        %v4531 = vsub.f32 %v4489, %v4517
        %v4532 = vsub.f32 %v4492, %v4520
        %v4533 = vsub.f32 %v4497, %v4523
        %v4534 = vsub.f32 %v4500, %v4526
        %v4535 = vmul.f32 %v4527, 1.442695
        %v4536 = vpow.pop %v4535
        %v4537 = vmul.f32 %v4528, 1.442695
        %v4538 = vpow.pop %v4537
        %v4539 = vmul.f32 %v4529, 1.442695
        %v4540 = vpow.pop %v4539
        %v4541 = vmul.f32 %v4530, 1.442695
        %v4542 = vpow.pop %v4541
        %v4543 = vmul.f32 %v4531, 1.442695
        %v4544 = vpow.pop %v4543
        %v4545 = vmul.f32 %v4532, 1.442695
        %v4546 = vpow.pop %v4545
        %v4547 = vmul.f32 %v4533, 1.442695
        %v4548 = vpow.pop %v4547
        %v4549 = vmul.f32 %v4534, 1.442695
        %v4550 = vpow.pop %v4549
        %v4551 = vsel %vm1909, %v4536, 0.0
        %4552 = vadd.xlane.f32.xlu0 %v4551
        %v4553 = vpop.xlane.xlu0 %4552
        %v4554 = vsel %vm1909, %v4538, 0.0
        %4555 = vadd.xlane.f32.xlu0 %v4554
        %v4556 = vpop.xlane.xlu0 %4555
        %v4557 = vsel %vm1909, %v4540, 0.0
        %4558 = vadd.xlane.f32.xlu0 %v4557
        %v4559 = vpop.xlane.xlu0 %4558
        %v4560 = vsel %vm1909, %v4542, 0.0
        %4561 = vadd.xlane.f32.xlu0 %v4560
        %v4562 = vpop.xlane.xlu0 %4561
        %v4563 = vsel %vm1909, %v4544, 0.0
        %4564 = vadd.xlane.f32.xlu0 %v4563
        %v4565 = vpop.xlane.xlu0 %4564
        %v4566 = vsel %vm1909, %v4546, 0.0
        %4567 = vadd.xlane.f32.xlu0 %v4566
        %v4568 = vpop.xlane.xlu0 %4567
        %v4569 = vsel %vm1909, %v4548, 0.0
        %4570 = vadd.xlane.f32.xlu0 %v4569
        %v4571 = vpop.xlane.xlu0 %4570
        %v4572 = vsel %vm1909, %v4550, 0.0
        %4573 = vadd.xlane.f32.xlu0 %v4572
        %v4574 = vpop.xlane.xlu0 %4573
        %v4575 = vrcp.pop %v4553
        %v4576 = vmul.f32 %v4536, %v4575
        %v4577 = vrcp.pop %v4556
        %v4578 = vmul.f32 %v4538, %v4577
        %v4579 = vrcp.pop %v4559
        %v4580 = vmul.f32 %v4540, %v4579
        %v4581 = vrcp.pop %v4562
        %v4582 = vmul.f32 %v4542, %v4581
        %v4583 = vrcp.pop %v4565
        %v4584 = vmul.f32 %v4544, %v4583
        %v4585 = vrcp.pop %v4568
        %v4586 = vmul.f32 %v4546, %v4585
        %v4587 = vrcp.pop %v4571
        %v4588 = vmul.f32 %v4548, %v4587
        %v4589 = vrcp.pop %v4574
        %v4590 = vmul.f32 %v4550, %v4589
        %v4591 = vpack.c.bf16 %v4578, %v4576
        %v4592 = vpack.c.bf16 %v4582, %v4580
        %v4593 = vpack.c.bf16 %v4586, %v4584
        %v4594 = vpack.c.bf16 %v4590, %v4588
        %v4596 = vsel %vm1909, %v4591, 0
        %v4599 = vsel %vm1909, %v4592, 0
        %v4602 = vsel %vm1909, %v4593, 0
        %v4605 = vsel %vm1909, %v4594, 0
        %4607 = vmatprep.subr.bf16.mxu0 %v2482
        %4608 = vmatpush1.bf16.msra.mxu0 %v2481
        %4609 = vmatprep.subr.bf16.mxu0 %v2484
        %4610 = vmatpush1.bf16.msra.mxu0 %v2483
        %4611 = vmatprep.subr.bf16.mxu0 %v2486
        %4612 = vmatpush1.bf16.msra.mxu0 %v2485
        %4613 = vmatprep.subr.bf16.mxu0 %v2488
        %4614 = vmatpush1.bf16.msra.mxu0 %v2487
        %4615 = vmatprep.subr.bf16.mxu0 0
        %4616 = vmatpush1.bf16.msra.mxu0 0
        %4617 = vmatprep.subr.bf16.mxu0 0
        %4618 = vmatpush1.bf16.msra.mxu0 0
        %4619 = vmatprep.subr.bf16.mxu0 0
        %4620 = vmatpush1.bf16.msra.mxu0 0
        %4621 = vmatprep.subr.bf16.mxu0 0
        %4622 = vmatpush1.bf16.msra.mxu0 0
        %4623 = vmatprep.subr.bf16.mxu0 0
        %4624 = vmatpush1.bf16.msra.mxu0 0
        %4625 = vmatprep.subr.bf16.mxu0 0
        %4626 = vmatpush1.bf16.msra.mxu0 0
        %4627 = vmatprep.subr.bf16.mxu0 0
        %4628 = vmatpush1.bf16.msra.mxu0 0
        %4629 = vmatprep.subr.bf16.mxu0 0
        %4630 = vmatpush1.bf16.msra.mxu0 0
        %4631 = vmatprep.subr.bf16.mxu0 0
        %4632 = vmatpush1.bf16.msra.mxu0 0
        %4633 = vmatprep.subr.bf16.mxu0 0
        %4634 = vmatpush1.bf16.msra.mxu0 0
        %4635 = vmatprep.subr.bf16.mxu0 0
        %4636 = vmatpush1.bf16.msra.mxu0 0
        %4637 = vmatprep.subr.bf16.mxu0 0
        %4638 = vmatpush1.bf16.msra.mxu0 0
        %4639 = vmatprep.mubr.bf16.mxu0 0
        %4640 = vmatmul.mubr.bf16.gmra.mrb[0].mxu0 %v4596
        %v4641 = vpop.f32.mrb[0].mxu0
        %v4642 = vadd.f32 0.0, %v4641
        %v4643 = vpop.f32.mrb[0].mxu0
        %v4644 = vadd.f32 0.0, %v4643
        %v4645 = vpop.f32.mrb[0].mxu0
        %v4646 = vadd.f32 0.0, %v4645
        %v4647 = vpop.f32.mrb[0].mxu0
        %v4648 = vadd.f32 0.0, %v4647
        %4649 = vmatprep.mubr.bf16.mxu0 0
        %4650 = vmatmul.mubr.bf16.gmra.mrb[0].mxu0 %v4599
        %v4651 = vpop.f32.mrb[0].mxu0
        %v4652 = vadd.f32 0.0, %v4651
        %v4653 = vpop.f32.mrb[0].mxu0
        %v4654 = vadd.f32 0.0, %v4653
        %v4655 = vpop.f32.mrb[0].mxu0
        %v4656 = vadd.f32 0.0, %v4655
        %v4657 = vpop.f32.mrb[0].mxu0
        %v4658 = vadd.f32 0.0, %v4657
        %4659 = vmatprep.mubr.bf16.mxu0 0
        %4660 = vmatmul.mubr.bf16.gmra.mrb[0].mxu0 %v4602
        %v4661 = vpop.f32.mrb[0].mxu0
        %v4662 = vadd.f32 0.0, %v4661
        %v4663 = vpop.f32.mrb[0].mxu0
        %v4664 = vadd.f32 0.0, %v4663
        %v4665 = vpop.f32.mrb[0].mxu0
        %v4666 = vadd.f32 0.0, %v4665
        %v4667 = vpop.f32.mrb[0].mxu0
        %v4668 = vadd.f32 0.0, %v4667
        %4669 = vmatprep.mubr.bf16.mxu0 0
        %4670 = vmatmul.mubr.bf16.gmra.mrb[0].mxu0 %v4605
        %v4671 = vpop.f32.mrb[0].mxu0
        %v4672 = vadd.f32 0.0, %v4671
        %v4673 = vpop.f32.mrb[0].mxu0
        %v4674 = vadd.f32 0.0, %v4673
        %v4675 = vpop.f32.mrb[0].mxu0
        %v4676 = vadd.f32 0.0, %v4675
        %v4677 = vpop.f32.mrb[0].mxu0
        %v4678 = vadd.f32 0.0, %v4677
        %4679 = vdwg.mxu0
        %v4680 = vadd.f32 %v4376, %v4642
        %v4681 = vadd.f32 %v4378, %v4644
        %v4682 = vadd.f32 %v4380, %v4646
        %v4683 = vadd.f32 %v4382, %v4648
        %v4684 = vadd.f32 %v4386, %v4652
        %v4685 = vadd.f32 %v4388, %v4654
        %v4686 = vadd.f32 %v4390, %v4656
        %v4687 = vadd.f32 %v4392, %v4658
        %v4688 = vadd.f32 %v4396, %v4662
        %v4689 = vadd.f32 %v4398, %v4664
        %v4690 = vadd.f32 %v4400, %v4666
        %v4691 = vadd.f32 %v4402, %v4668
        %v4692 = vadd.f32 %v4406, %v4672
        %v4693 = vadd.f32 %v4408, %v4674
        %v4694 = vadd.f32 %v4410, %v4676
        %v4695 = vadd.f32 %v4412, %v4678
        %4700 = vrot.lane.b32.xlu0 %v1838, 64
        %v4701 = vpop.permute.xlu0 %4700
        %4702 = vrot.lane.b32.xlu0 %v1844, 64
        %v4703 = vpop.permute.xlu0 %4702
        %4704 = vrot.lane.b32.xlu0 %v1850, 64
        %v4705 = vpop.permute.xlu0 %4704
        %4706 = vrot.lane.b32.xlu0 %v1856, 64
        %v4707 = vpop.permute.xlu0 %4706
        %4712 = vrot.lane.b32.xlu0 %v1840, 64
        %v4713 = vpop.permute.xlu0 %4712
        %4714 = vrot.lane.b32.xlu0 %v1846, 64
        %v4715 = vpop.permute.xlu0 %4714
        %4716 = vrot.lane.b32.xlu0 %v1852, 64
        %v4717 = vpop.permute.xlu0 %4716
        %4718 = vrot.lane.b32.xlu0 %v1858, 64
        %v4719 = vpop.permute.xlu0 %4718
        %v4721 = vsel %vm1909, %v4701, 0
        %v4724 = vsel %vm1909, %v4703, 0
        %v4727 = vsel %vm1909, %v4705, 0
        %v4730 = vsel %vm1909, %v4707, 0
        %v4733 = vsel %vm1909, %v4713, 0
        %v4736 = vsel %vm1909, %v4715, 0
        %v4739 = vsel %vm1909, %v4717, 0
        %v4742 = vsel %vm1909, %v4719, 0
        %4744 = vmatprep.subr.bf16.mxu0 0
        %4745 = vmatpush1.bf16.xpose.msra.mxu0 %v4733
        %4746 = vmatprep.subr.bf16.mxu0 0
        %4747 = vmatpush1.bf16.xpose.msra.mxu0 %v4736
        %4748 = vmatprep.subr.bf16.mxu0 0
        %4749 = vmatpush1.bf16.xpose.msra.mxu0 %v4739
        %4750 = vmatprep.subr.bf16.mxu0 0
        %4751 = vmatpush1.bf16.xpose.msra.mxu0 %v4742
        %4752 = vmatprep.subr.bf16.mxu0 0
        %4753 = vmatpush1.bf16.xpose.msra.mxu0 0
        %4754 = vmatprep.subr.bf16.mxu0 0
        %4755 = vmatpush1.bf16.xpose.msra.mxu0 0
        %4756 = vmatprep.subr.bf16.mxu0 0
        %4757 = vmatpush1.bf16.xpose.msra.mxu0 0
        %4758 = vmatprep.subr.bf16.mxu0 0
        %4759 = vmatpush1.bf16.xpose.msra.mxu0 0
        %4760 = vmatprep.subr.bf16.mxu0 0
        %4761 = vmatpush1.bf16.xpose.msra.mxu0 0
        %4762 = vmatprep.subr.bf16.mxu0 0
        %4763 = vmatpush1.bf16.xpose.msra.mxu0 0
        %4764 = vmatprep.subr.bf16.mxu0 0
        %4765 = vmatpush1.bf16.xpose.msra.mxu0 0
        %4766 = vmatprep.subr.bf16.mxu0 0
        %4767 = vmatpush1.bf16.xpose.msra.mxu0 0
        %4768 = vmatprep.subr.bf16.mxu0 0
        %4769 = vmatpush1.bf16.xpose.msra.mxu0 0
        %4770 = vmatprep.subr.bf16.mxu0 0
        %4771 = vmatpush1.bf16.xpose.msra.mxu0 0
        %4772 = vmatprep.subr.bf16.mxu0 0
        %4773 = vmatpush1.bf16.xpose.msra.mxu0 0
        %4774 = vmatprep.subr.bf16.mxu0 0
        %4775 = vmatpush1.bf16.xpose.msra.mxu0 0
        %4776 = vmatprep.mubr.bf16.mxu0 0
        %4777 = vmatmul.mubr.bf16.gmra.mrb[0].mxu0 %v4721
        %v4778 = vpop.f32.mrb[0].mxu0
        %v4779 = vadd.f32 0.0, %v4778
        %v4780 = vpop.f32.mrb[0].mxu0
        %v4781 = vpop.f32.mrb[0].mxu0
        %v4782 = vadd.f32 0.0, %v4781
        %v4783 = vpop.f32.mrb[0].mxu0
        %4784 = vmatprep.mubr.bf16.mxu0 0
        %4785 = vmatmul.mubr.bf16.gmra.mrb[0].mxu0 %v4724
        %v4786 = vpop.f32.mrb[0].mxu0
        %v4787 = vadd.f32 0.0, %v4786
        %v4788 = vpop.f32.mrb[0].mxu0
        %v4789 = vpop.f32.mrb[0].mxu0
        %v4790 = vadd.f32 0.0, %v4789
        %v4791 = vpop.f32.mrb[0].mxu0
        %4792 = vmatprep.mubr.bf16.mxu0 0
        %4793 = vmatmul.mubr.bf16.gmra.mrb[0].mxu0 %v4727
        %v4794 = vpop.f32.mrb[0].mxu0
        %v4795 = vadd.f32 0.0, %v4794
        %v4796 = vpop.f32.mrb[0].mxu0
        %v4797 = vpop.f32.mrb[0].mxu0
        %v4798 = vadd.f32 0.0, %v4797
        %v4799 = vpop.f32.mrb[0].mxu0
        %4800 = vmatprep.mubr.bf16.mxu0 0
        %4801 = vmatmul.mubr.bf16.gmra.mrb[0].mxu0 %v4730
        %v4802 = vpop.f32.mrb[0].mxu0
        %v4803 = vadd.f32 0.0, %v4802
        %v4804 = vpop.f32.mrb[0].mxu0
        %v4805 = vpop.f32.mrb[0].mxu0
        %v4806 = vadd.f32 0.0, %v4805
        %v4807 = vpop.f32.mrb[0].mxu0
        %4808 = vdwg.mxu0
        %v4809 = vsel %vm1909, %v4779, -inf
        %4810 = vmax.xlane.f32.xlu0 %v4809
        %v4811 = vpop.xlane.xlu0 %4810
        %v4812 = vsel %vm1909, %v4782, -inf
        %4813 = vmax.xlane.f32.xlu0 %v4812
        %v4814 = vpop.xlane.xlu0 %4813
        %v4815 = vsel %vm1909, %v4787, -inf
        %4816 = vmax.xlane.f32.xlu0 %v4815
        %v4817 = vpop.xlane.xlu0 %4816
        %v4818 = vsel %vm1909, %v4790, -inf
        %4819 = vmax.xlane.f32.xlu0 %v4818
        %v4820 = vpop.xlane.xlu0 %4819
        %v4821 = vsel %vm1909, %v4795, -inf
        %4822 = vmax.xlane.f32.xlu0 %v4821
        %v4823 = vpop.xlane.xlu0 %4822
        %v4824 = vsel %vm1909, %v4798, -inf
        %4825 = vmax.xlane.f32.xlu0 %v4824
        %v4826 = vpop.xlane.xlu0 %4825
        %v4827 = vsel %vm1909, %v4803, -inf
        %4828 = vmax.xlane.f32.xlu0 %v4827
        %v4829 = vpop.xlane.xlu0 %4828
        %v4830 = vsel %vm1909, %v4806, -inf
        %4831 = vmax.xlane.f32.xlu0 %v4830
        %v4832 = vpop.xlane.xlu0 %4831
        %v4833 = vsub.f32 %v4779, %v4811
        %v4834 = vsub.f32 %v4782, %v4814
        %v4835 = vsub.f32 %v4787, %v4817
        %v4836 = vsub.f32 %v4790, %v4820
        %v4837 = vsub.f32 %v4795, %v4823
        %v4838 = vsub.f32 %v4798, %v4826
        %v4839 = vsub.f32 %v4803, %v4829
        %v4840 = vsub.f32 %v4806, %v4832
        %v4841 = vmul.f32 %v4833, 1.442695
        %v4842 = vpow.pop %v4841
        %v4843 = vmul.f32 %v4834, 1.442695
        %v4844 = vpow.pop %v4843
        %v4845 = vmul.f32 %v4835, 1.442695
        %v4846 = vpow.pop %v4845
        %v4847 = vmul.f32 %v4836, 1.442695
        %v4848 = vpow.pop %v4847
        %v4849 = vmul.f32 %v4837, 1.442695
        %v4850 = vpow.pop %v4849
        %v4851 = vmul.f32 %v4838, 1.442695
        %v4852 = vpow.pop %v4851
        %v4853 = vmul.f32 %v4839, 1.442695
        %v4854 = vpow.pop %v4853
        %v4855 = vmul.f32 %v4840, 1.442695
        %v4856 = vpow.pop %v4855
        %v4857 = vsel %vm1909, %v4842, 0.0
        %4858 = vadd.xlane.f32.xlu0 %v4857
        %v4859 = vpop.xlane.xlu0 %4858
        %v4860 = vsel %vm1909, %v4844, 0.0
        %4861 = vadd.xlane.f32.xlu0 %v4860
        %v4862 = vpop.xlane.xlu0 %4861
        %v4863 = vsel %vm1909, %v4846, 0.0
        %4864 = vadd.xlane.f32.xlu0 %v4863
        %v4865 = vpop.xlane.xlu0 %4864
        %v4866 = vsel %vm1909, %v4848, 0.0
        %4867 = vadd.xlane.f32.xlu0 %v4866
        %v4868 = vpop.xlane.xlu0 %4867
        %v4869 = vsel %vm1909, %v4850, 0.0
        %4870 = vadd.xlane.f32.xlu0 %v4869
        %v4871 = vpop.xlane.xlu0 %4870
        %v4872 = vsel %vm1909, %v4852, 0.0
        %4873 = vadd.xlane.f32.xlu0 %v4872
        %v4874 = vpop.xlane.xlu0 %4873
        %v4875 = vsel %vm1909, %v4854, 0.0
        %4876 = vadd.xlane.f32.xlu0 %v4875
        %v4877 = vpop.xlane.xlu0 %4876
        %v4878 = vsel %vm1909, %v4856, 0.0
        %4879 = vadd.xlane.f32.xlu0 %v4878
        %v4880 = vpop.xlane.xlu0 %4879
        %v4881 = vrcp.pop %v4859
        %v4882 = vmul.f32 %v4842, %v4881
        %v4883 = vrcp.pop %v4862
        %v4884 = vmul.f32 %v4844, %v4883
        %v4885 = vrcp.pop %v4865
        %v4886 = vmul.f32 %v4846, %v4885
        %v4887 = vrcp.pop %v4868
        %v4888 = vmul.f32 %v4848, %v4887
        %v4889 = vrcp.pop %v4871
        %v4890 = vmul.f32 %v4850, %v4889
        %v4891 = vrcp.pop %v4874
        %v4892 = vmul.f32 %v4852, %v4891
        %v4893 = vrcp.pop %v4877
        %v4894 = vmul.f32 %v4854, %v4893
        %v4895 = vrcp.pop %v4880
        %v4896 = vmul.f32 %v4856, %v4895
        %v4897 = vpack.c.bf16 %v4884, %v4882
        %v4898 = vpack.c.bf16 %v4888, %v4886
        %v4899 = vpack.c.bf16 %v4892, %v4890
        %v4900 = vpack.c.bf16 %v4896, %v4894
        %v4902 = vsel %vm1909, %v4897, 0
        %v4905 = vsel %vm1909, %v4898, 0
        %v4908 = vsel %vm1909, %v4899, 0
        %v4911 = vsel %vm1909, %v4900, 0
        %4913 = vmatprep.subr.bf16.mxu0 %v2707
        %4914 = vmatpush1.bf16.msra.mxu0 %v2706
        %4915 = vmatprep.subr.bf16.mxu0 %v2709
        %4916 = vmatpush1.bf16.msra.mxu0 %v2708
        %4917 = vmatprep.subr.bf16.mxu0 %v2711
        %4918 = vmatpush1.bf16.msra.mxu0 %v2710
        %4919 = vmatprep.subr.bf16.mxu0 %v2713
        %4920 = vmatpush1.bf16.msra.mxu0 %v2712
        %4921 = vmatprep.subr.bf16.mxu0 0
        %4922 = vmatpush1.bf16.msra.mxu0 0
        %4923 = vmatprep.subr.bf16.mxu0 0
        %4924 = vmatpush1.bf16.msra.mxu0 0
        %4925 = vmatprep.subr.bf16.mxu0 0
        %4926 = vmatpush1.bf16.msra.mxu0 0
        %4927 = vmatprep.subr.bf16.mxu0 0
        %4928 = vmatpush1.bf16.msra.mxu0 0
        %4929 = vmatprep.subr.bf16.mxu0 0
        %4930 = vmatpush1.bf16.msra.mxu0 0
        %4931 = vmatprep.subr.bf16.mxu0 0
        %4932 = vmatpush1.bf16.msra.mxu0 0
        %4933 = vmatprep.subr.bf16.mxu0 0
        %4934 = vmatpush1.bf16.msra.mxu0 0
        %4935 = vmatprep.subr.bf16.mxu0 0
        %4936 = vmatpush1.bf16.msra.mxu0 0
        %4937 = vmatprep.subr.bf16.mxu0 0
        %4938 = vmatpush1.bf16.msra.mxu0 0
        %4939 = vmatprep.subr.bf16.mxu0 0
        %4940 = vmatpush1.bf16.msra.mxu0 0
        %4941 = vmatprep.subr.bf16.mxu0 0
        %4942 = vmatpush1.bf16.msra.mxu0 0
        %4943 = vmatprep.subr.bf16.mxu0 0
        %4944 = vmatpush1.bf16.msra.mxu0 0
        %4945 = vmatprep.mubr.bf16.mxu0 0
        %4946 = vmatmul.mubr.bf16.gmra.mrb[0].mxu0 %v4902
        %v4947 = vpop.f32.mrb[0].mxu0
        %v4948 = vadd.f32 0.0, %v4947
        %v4949 = vpop.f32.mrb[0].mxu0
        %v4950 = vadd.f32 0.0, %v4949
        %v4951 = vpop.f32.mrb[0].mxu0
        %v4952 = vadd.f32 0.0, %v4951
        %v4953 = vpop.f32.mrb[0].mxu0
        %v4954 = vadd.f32 0.0, %v4953
        %4955 = vmatprep.mubr.bf16.mxu0 0
        %4956 = vmatmul.mubr.bf16.gmra.mrb[0].mxu0 %v4905
        %v4957 = vpop.f32.mrb[0].mxu0
        %v4958 = vadd.f32 0.0, %v4957
        %v4959 = vpop.f32.mrb[0].mxu0
        %v4960 = vadd.f32 0.0, %v4959
        %v4961 = vpop.f32.mrb[0].mxu0
        %v4962 = vadd.f32 0.0, %v4961
        %v4963 = vpop.f32.mrb[0].mxu0
        %v4964 = vadd.f32 0.0, %v4963
        %4965 = vmatprep.mubr.bf16.mxu0 0
        %4966 = vmatmul.mubr.bf16.gmra.mrb[0].mxu0 %v4908
        %v4967 = vpop.f32.mrb[0].mxu0
        %v4968 = vadd.f32 0.0, %v4967
        %v4969 = vpop.f32.mrb[0].mxu0
        %v4970 = vadd.f32 0.0, %v4969
        %v4971 = vpop.f32.mrb[0].mxu0
        %v4972 = vadd.f32 0.0, %v4971
        %v4973 = vpop.f32.mrb[0].mxu0
        %v4974 = vadd.f32 0.0, %v4973
        %4975 = vmatprep.mubr.bf16.mxu0 0
        %4976 = vmatmul.mubr.bf16.gmra.mrb[0].mxu0 %v4911
        %v4977 = vpop.f32.mrb[0].mxu0
        %v4978 = vadd.f32 0.0, %v4977
        %v4979 = vpop.f32.mrb[0].mxu0
        %v4980 = vadd.f32 0.0, %v4979
        %v4981 = vpop.f32.mrb[0].mxu0
        %v4982 = vadd.f32 0.0, %v4981
        %v4983 = vpop.f32.mrb[0].mxu0
        %v4984 = vadd.f32 0.0, %v4983
        %4985 = vdwg.mxu0
        %v4986 = vadd.f32 %v4680, %v4948
        %v4987 = vadd.f32 %v4681, %v4950
        %v4988 = vadd.f32 %v4682, %v4952
        %v4989 = vadd.f32 %v4683, %v4954
        %v4990 = vadd.f32 %v4684, %v4958
        %v4991 = vadd.f32 %v4685, %v4960
        %v4992 = vadd.f32 %v4686, %v4962
        %v4993 = vadd.f32 %v4687, %v4964
        %v4994 = vadd.f32 %v4688, %v4968
        %v4995 = vadd.f32 %v4689, %v4970
        %v4996 = vadd.f32 %v4690, %v4972
        %v4997 = vadd.f32 %v4691, %v4974
        %v4998 = vadd.f32 %v4692, %v4978
        %v4999 = vadd.f32 %v4693, %v4980
        %v5000 = vadd.f32 %v4694, %v4982
        %v5001 = vadd.f32 %v4695, %v4984
        %v5003 = vlaneseq
        %v5004 = vshrl.u32 %v5003, 7
        %v5005 = vsub.s32 0, %v5004
        %v5006 = vrot.slane %v840, %v5005
        %v5007 = vlaneseq
        %v5008 = vshrl.u32 %v5007, 7
        %v5009 = vsub.s32 1, %v5008
        %v5010 = vrot.slane %v840, %v5009
        %v5013 = vadd.f32 %v3842, %v5006
        %v5014 = vadd.f32 %v3843, %v5010
        %v5015 = vadd.f32 %v3844, %v5006
        %v5016 = vadd.f32 %v3845, %v5010
        %v5017 = vadd.f32 %v3846, %v5006
        %v5018 = vadd.f32 %v3847, %v5010
        %v5019 = vadd.f32 %v3848, %v5006
        %v5020 = vadd.f32 %v3849, %v5010
        %v5021 = vadd.f32 %v3850, %v5006
        %v5022 = vadd.f32 %v3851, %v5010
        %v5023 = vadd.f32 %v3852, %v5006
        %v5024 = vadd.f32 %v3853, %v5010
        %v5025 = vadd.f32 %v3854, %v5006
        %v5026 = vadd.f32 %v3855, %v5010
        %v5027 = vadd.f32 %v3856, %v5006
        %v5028 = vadd.f32 %v3857, %v5010
        %v5029 = vadd.f32 %v4986, %v5006
        %v5030 = vadd.f32 %v4987, %v5010
        %v5031 = vadd.f32 %v4988, %v5006
        %v5032 = vadd.f32 %v4989, %v5010
        %v5033 = vadd.f32 %v4990, %v5006
        %v5034 = vadd.f32 %v4991, %v5010
        %v5035 = vadd.f32 %v4992, %v5006
        %v5036 = vadd.f32 %v4993, %v5010
        %v5037 = vadd.f32 %v4994, %v5006
        %v5038 = vadd.f32 %v4995, %v5010
        %v5039 = vadd.f32 %v4996, %v5006
        %v5040 = vadd.f32 %v4997, %v5010
        %v5041 = vadd.f32 %v4998, %v5006
        %v5042 = vadd.f32 %v4999, %v5010
        %v5043 = vadd.f32 %v5000, %v5006
        %v5044 = vadd.f32 %v5001, %v5010
        %v5045 = vadd.f32 %v800, %v5013
        %v5046 = vadd.f32 %v801, %v5014
        %v5047 = vadd.f32 %v802, %v5015
        %v5048 = vadd.f32 %v803, %v5016
        %v5049 = vadd.f32 %v804, %v5017
        %v5050 = vadd.f32 %v805, %v5018
        %v5051 = vadd.f32 %v806, %v5019
        %v5052 = vadd.f32 %v807, %v5020
        %v5053 = vadd.f32 %v808, %v5021
        %v5054 = vadd.f32 %v809, %v5022
        %v5055 = vadd.f32 %v810, %v5023
        %v5056 = vadd.f32 %v811, %v5024
        %v5057 = vadd.f32 %v812, %v5025
        %v5058 = vadd.f32 %v813, %v5026
        %v5059 = vadd.f32 %v814, %v5027
        %v5060 = vadd.f32 %v815, %v5028
        %v5061 = vadd.f32 %v816, %v5029
        %v5062 = vadd.f32 %v817, %v5030
        %v5063 = vadd.f32 %v818, %v5031
        %v5064 = vadd.f32 %v819, %v5032
        %v5065 = vadd.f32 %v820, %v5033
        %v5066 = vadd.f32 %v821, %v5034
        %v5067 = vadd.f32 %v822, %v5035
        %v5068 = vadd.f32 %v823, %v5036
        %v5069 = vadd.f32 %v824, %v5037
        %v5070 = vadd.f32 %v825, %v5038
        %v5071 = vadd.f32 %v826, %v5039
        %v5072 = vadd.f32 %v827, %v5040
        %v5073 = vadd.f32 %v828, %v5041
        %v5074 = vadd.f32 %v829, %v5042
        %v5075 = vadd.f32 %v830, %v5043
        %v5076 = vadd.f32 %v831, %v5044
        %v5077 = vadd.f32 %v5045, %v5046
        %5078 = vadd.xlane.f32.xlu0 %v5077
        %v5079 = vpop.xlane.xlu0 %5078
        %v5080 = vadd.f32 %v5047, %v5048
        %5081 = vadd.xlane.f32.xlu0 %v5080
        %v5082 = vpop.xlane.xlu0 %5081
        %v5083 = vadd.f32 %v5049, %v5050
        %5084 = vadd.xlane.f32.xlu0 %v5083
        %v5085 = vpop.xlane.xlu0 %5084
        %v5086 = vadd.f32 %v5051, %v5052
        %5087 = vadd.xlane.f32.xlu0 %v5086
        %v5088 = vpop.xlane.xlu0 %5087
        %v5089 = vadd.f32 %v5053, %v5054
        %5090 = vadd.xlane.f32.xlu0 %v5089
        %v5091 = vpop.xlane.xlu0 %5090
        %v5092 = vadd.f32 %v5055, %v5056
        %5093 = vadd.xlane.f32.xlu0 %v5092
        %v5094 = vpop.xlane.xlu0 %5093
        %v5095 = vadd.f32 %v5057, %v5058
        %5096 = vadd.xlane.f32.xlu0 %v5095
        %v5097 = vpop.xlane.xlu0 %5096
        %v5098 = vadd.f32 %v5059, %v5060
        %5099 = vadd.xlane.f32.xlu0 %v5098
        %v5100 = vpop.xlane.xlu0 %5099
        %v5101 = vadd.f32 %v5061, %v5062
        %5102 = vadd.xlane.f32.xlu0 %v5101
        %v5103 = vpop.xlane.xlu0 %5102
        %v5104 = vadd.f32 %v5063, %v5064
        %5105 = vadd.xlane.f32.xlu0 %v5104
        %v5106 = vpop.xlane.xlu0 %5105
        %v5107 = vadd.f32 %v5065, %v5066
        %5108 = vadd.xlane.f32.xlu0 %v5107
        %v5109 = vpop.xlane.xlu0 %5108
        %v5110 = vadd.f32 %v5067, %v5068
        %5111 = vadd.xlane.f32.xlu0 %v5110
        %v5112 = vpop.xlane.xlu0 %5111
        %v5113 = vadd.f32 %v5069, %v5070
        %5114 = vadd.xlane.f32.xlu0 %v5113
        %v5115 = vpop.xlane.xlu0 %5114
        %v5116 = vadd.f32 %v5071, %v5072
        %5117 = vadd.xlane.f32.xlu0 %v5116
        %v5118 = vpop.xlane.xlu0 %5117
        %v5119 = vadd.f32 %v5073, %v5074
        %5120 = vadd.xlane.f32.xlu0 %v5119
        %v5121 = vpop.xlane.xlu0 %5120
        %v5122 = vadd.f32 %v5075, %v5076
        %5123 = vadd.xlane.f32.xlu0 %v5122
        %v5124 = vpop.xlane.xlu0 %5123
        %v5125 = vrcp.pop 256.0
        %v5126 = vmul.f32 %v5079, %v5125
        %v5127 = vmul.f32 %v5082, %v5125
        %v5128 = vmul.f32 %v5085, %v5125
        %v5129 = vmul.f32 %v5088, %v5125
        %v5130 = vmul.f32 %v5091, %v5125
        %v5131 = vmul.f32 %v5094, %v5125
        %v5132 = vmul.f32 %v5097, %v5125
        %v5133 = vmul.f32 %v5100, %v5125
        %v5134 = vmul.f32 %v5103, %v5125
        %v5135 = vmul.f32 %v5106, %v5125
        %v5136 = vmul.f32 %v5109, %v5125
        %v5137 = vmul.f32 %v5112, %v5125
        %v5138 = vmul.f32 %v5115, %v5125
        %v5139 = vmul.f32 %v5118, %v5125
        %v5140 = vmul.f32 %v5121, %v5125
        %v5141 = vmul.f32 %v5124, %v5125
        %v5142 = vsub.f32 %v5045, %v5126
        %v5143 = vsub.f32 %v5046, %v5126
        %v5144 = vsub.f32 %v5047, %v5127
        %v5145 = vsub.f32 %v5048, %v5127
        %v5146 = vsub.f32 %v5049, %v5128
        %v5147 = vsub.f32 %v5050, %v5128
        %v5148 = vsub.f32 %v5051, %v5129
        %v5149 = vsub.f32 %v5052, %v5129
        %v5150 = vsub.f32 %v5053, %v5130
        %v5151 = vsub.f32 %v5054, %v5130
        %v5152 = vsub.f32 %v5055, %v5131
        %v5153 = vsub.f32 %v5056, %v5131
        %v5154 = vsub.f32 %v5057, %v5132
        %v5155 = vsub.f32 %v5058, %v5132
        %v5156 = vsub.f32 %v5059, %v5133
        %v5157 = vsub.f32 %v5060, %v5133
        %v5158 = vsub.f32 %v5061, %v5134
        %v5159 = vsub.f32 %v5062, %v5134
        %v5160 = vsub.f32 %v5063, %v5135
        %v5161 = vsub.f32 %v5064, %v5135
        %v5162 = vsub.f32 %v5065, %v5136
        %v5163 = vsub.f32 %v5066, %v5136
        %v5164 = vsub.f32 %v5067, %v5137
        %v5165 = vsub.f32 %v5068, %v5137
        %v5166 = vsub.f32 %v5069, %v5138
        %v5167 = vsub.f32 %v5070, %v5138
        %v5168 = vsub.f32 %v5071, %v5139
        %v5169 = vsub.f32 %v5072, %v5139
        %v5170 = vsub.f32 %v5073, %v5140
        %v5171 = vsub.f32 %v5074, %v5140
        %v5172 = vsub.f32 %v5075, %v5141
        %v5173 = vsub.f32 %v5076, %v5141
        %v5174 = vmul.f32 %v5142, %v5142
        %v5175 = vmul.f32 %v5143, %v5143
        %v5176 = vmul.f32 %v5144, %v5144
        %v5177 = vmul.f32 %v5145, %v5145
        %v5178 = vmul.f32 %v5146, %v5146
        %v5179 = vmul.f32 %v5147, %v5147
        %v5180 = vmul.f32 %v5148, %v5148
        %v5181 = vmul.f32 %v5149, %v5149
        %v5182 = vmul.f32 %v5150, %v5150
        %v5183 = vmul.f32 %v5151, %v5151
        %v5184 = vmul.f32 %v5152, %v5152
        %v5185 = vmul.f32 %v5153, %v5153
        %v5186 = vmul.f32 %v5154, %v5154
        %v5187 = vmul.f32 %v5155, %v5155
        %v5188 = vmul.f32 %v5156, %v5156
        %v5189 = vmul.f32 %v5157, %v5157
        %v5190 = vmul.f32 %v5158, %v5158
        %v5191 = vmul.f32 %v5159, %v5159
        %v5192 = vmul.f32 %v5160, %v5160
        %v5193 = vmul.f32 %v5161, %v5161
        %v5194 = vmul.f32 %v5162, %v5162
        %v5195 = vmul.f32 %v5163, %v5163
        %v5196 = vmul.f32 %v5164, %v5164
        %v5197 = vmul.f32 %v5165, %v5165
        %v5198 = vmul.f32 %v5166, %v5166
        %v5199 = vmul.f32 %v5167, %v5167
        %v5200 = vmul.f32 %v5168, %v5168
        %v5201 = vmul.f32 %v5169, %v5169
        %v5202 = vmul.f32 %v5170, %v5170
        %v5203 = vmul.f32 %v5171, %v5171
        %v5204 = vmul.f32 %v5172, %v5172
        %v5205 = vmul.f32 %v5173, %v5173
        %v5206 = vadd.f32 %v5174, %v5175
        %5207 = vadd.xlane.f32.xlu0 %v5206
        %v5208 = vpop.xlane.xlu0 %5207
        %v5209 = vadd.f32 %v5176, %v5177
        %5210 = vadd.xlane.f32.xlu0 %v5209
        %v5211 = vpop.xlane.xlu0 %5210
        %v5212 = vadd.f32 %v5178, %v5179
        %5213 = vadd.xlane.f32.xlu0 %v5212
        %v5214 = vpop.xlane.xlu0 %5213
        %v5215 = vadd.f32 %v5180, %v5181
        %5216 = vadd.xlane.f32.xlu0 %v5215
        %v5217 = vpop.xlane.xlu0 %5216
        %v5218 = vadd.f32 %v5182, %v5183
        %5219 = vadd.xlane.f32.xlu0 %v5218
        %v5220 = vpop.xlane.xlu0 %5219
        %v5221 = vadd.f32 %v5184, %v5185
        %5222 = vadd.xlane.f32.xlu0 %v5221
        %v5223 = vpop.xlane.xlu0 %5222
        %v5224 = vadd.f32 %v5186, %v5187
        %5225 = vadd.xlane.f32.xlu0 %v5224
        %v5226 = vpop.xlane.xlu0 %5225
        %v5227 = vadd.f32 %v5188, %v5189
        %5228 = vadd.xlane.f32.xlu0 %v5227
        %v5229 = vpop.xlane.xlu0 %5228
        %v5230 = vadd.f32 %v5190, %v5191
        %5231 = vadd.xlane.f32.xlu0 %v5230
        %v5232 = vpop.xlane.xlu0 %5231
        %v5233 = vadd.f32 %v5192, %v5193
        %5234 = vadd.xlane.f32.xlu0 %v5233
        %v5235 = vpop.xlane.xlu0 %5234
        %v5236 = vadd.f32 %v5194, %v5195
        %5237 = vadd.xlane.f32.xlu0 %v5236
        %v5238 = vpop.xlane.xlu0 %5237
        %v5239 = vadd.f32 %v5196, %v5197
        %5240 = vadd.xlane.f32.xlu0 %v5239
        %v5241 = vpop.xlane.xlu0 %5240
        %v5242 = vadd.f32 %v5198, %v5199
        %5243 = vadd.xlane.f32.xlu0 %v5242
        %v5244 = vpop.xlane.xlu0 %5243
        %v5245 = vadd.f32 %v5200, %v5201
        %5246 = vadd.xlane.f32.xlu0 %v5245
        %v5247 = vpop.xlane.xlu0 %5246
        %v5248 = vadd.f32 %v5202, %v5203
        %5249 = vadd.xlane.f32.xlu0 %v5248
        %v5250 = vpop.xlane.xlu0 %5249
        %v5251 = vadd.f32 %v5204, %v5205
        %5252 = vadd.xlane.f32.xlu0 %v5251
        %v5253 = vpop.xlane.xlu0 %5252
        %v5254 = vmul.f32 %v5208, %v5125
        %v5255 = vmul.f32 %v5211, %v5125
        %v5256 = vmul.f32 %v5214, %v5125
        %v5257 = vmul.f32 %v5217, %v5125
        %v5258 = vmul.f32 %v5220, %v5125
        %v5259 = vmul.f32 %v5223, %v5125
        %v5260 = vmul.f32 %v5226, %v5125
        %v5261 = vmul.f32 %v5229, %v5125
        %v5262 = vmul.f32 %v5232, %v5125
        %v5263 = vmul.f32 %v5235, %v5125
        %v5264 = vmul.f32 %v5238, %v5125
        %v5265 = vmul.f32 %v5241, %v5125
        %v5266 = vmul.f32 %v5244, %v5125
        %v5267 = vmul.f32 %v5247, %v5125
        %v5268 = vmul.f32 %v5250, %v5125
        %v5269 = vmul.f32 %v5253, %v5125
        %v5270 = vadd.f32 %v5254, 1e-12
        %v5271 = vadd.f32 %v5255, 1e-12
        %v5272 = vadd.f32 %v5256, 1e-12
        %v5273 = vadd.f32 %v5257, 1e-12
        %v5274 = vadd.f32 %v5258, 1e-12
        %v5275 = vadd.f32 %v5259, 1e-12
        %v5276 = vadd.f32 %v5260, 1e-12
        %v5277 = vadd.f32 %v5261, 1e-12
        %v5278 = vadd.f32 %v5262, 1e-12
        %v5279 = vadd.f32 %v5263, 1e-12
        %v5280 = vadd.f32 %v5264, 1e-12
        %v5281 = vadd.f32 %v5265, 1e-12
        %v5282 = vadd.f32 %v5266, 1e-12
        %v5283 = vadd.f32 %v5267, 1e-12
        %v5284 = vadd.f32 %v5268, 1e-12
        %v5285 = vadd.f32 %v5269, 1e-12
        %v5286 = vrsqrt.pop %v5270
        %v5287 = vrsqrt.pop %v5271
        %v5288 = vrsqrt.pop %v5272
        %v5289 = vrsqrt.pop %v5273
        %v5290 = vrsqrt.pop %v5274
        %v5291 = vrsqrt.pop %v5275
        %v5292 = vrsqrt.pop %v5276
        %v5293 = vrsqrt.pop %v5277
        %v5294 = vrsqrt.pop %v5278
        %v5295 = vrsqrt.pop %v5279
        %v5296 = vrsqrt.pop %v5280
        %v5297 = vrsqrt.pop %v5281
        %v5298 = vrsqrt.pop %v5282
        %v5299 = vrsqrt.pop %v5283
        %v5300 = vrsqrt.pop %v5284
        %v5301 = vrsqrt.pop %v5285
        %v5302 = vmul.f32 %v5142, %v5286
        %v5303 = vmul.f32 %v5143, %v5286
        %v5304 = vmul.f32 %v5144, %v5287
        %v5305 = vmul.f32 %v5145, %v5287
        %v5306 = vmul.f32 %v5146, %v5288
        %v5307 = vmul.f32 %v5147, %v5288
        %v5308 = vmul.f32 %v5148, %v5289
        %v5309 = vmul.f32 %v5149, %v5289
        %v5310 = vmul.f32 %v5150, %v5290
        %v5311 = vmul.f32 %v5151, %v5290
        %v5312 = vmul.f32 %v5152, %v5291
        %v5313 = vmul.f32 %v5153, %v5291
        %v5314 = vmul.f32 %v5154, %v5292
        %v5315 = vmul.f32 %v5155, %v5292
        %v5316 = vmul.f32 %v5156, %v5293
        %v5317 = vmul.f32 %v5157, %v5293
        %v5318 = vmul.f32 %v5158, %v5294
        %v5319 = vmul.f32 %v5159, %v5294
        %v5320 = vmul.f32 %v5160, %v5295
        %v5321 = vmul.f32 %v5161, %v5295
        %v5322 = vmul.f32 %v5162, %v5296
        %v5323 = vmul.f32 %v5163, %v5296
        %v5324 = vmul.f32 %v5164, %v5297
        %v5325 = vmul.f32 %v5165, %v5297
        %v5326 = vmul.f32 %v5166, %v5298
        %v5327 = vmul.f32 %v5167, %v5298
        %v5328 = vmul.f32 %v5168, %v5299
        %v5329 = vmul.f32 %v5169, %v5299
        %v5330 = vmul.f32 %v5170, %v5300
        %v5331 = vmul.f32 %v5171, %v5300
        %v5332 = vmul.f32 %v5172, %v5301
        %v5333 = vmul.f32 %v5173, %v5301
        %v5335 = vlaneseq
        %v5336 = vshrl.u32 %v5335, 7
        %v5337 = vsub.s32 0, %v5336
        %v5338 = vrot.slane %v844, %v5337
        %v5339 = vlaneseq
        %v5340 = vshrl.u32 %v5339, 7
        %v5341 = vsub.s32 1, %v5340
        %v5342 = vrot.slane %v844, %v5341
        %v5345 = vmul.f32 %v5302, %v5338
        %v5346 = vmul.f32 %v5303, %v5342
        %v5347 = vmul.f32 %v5304, %v5338
        %v5348 = vmul.f32 %v5305, %v5342
        %v5349 = vmul.f32 %v5306, %v5338
        %v5350 = vmul.f32 %v5307, %v5342
        %v5351 = vmul.f32 %v5308, %v5338
        %v5352 = vmul.f32 %v5309, %v5342
        %v5353 = vmul.f32 %v5310, %v5338
        %v5354 = vmul.f32 %v5311, %v5342
        %v5355 = vmul.f32 %v5312, %v5338
        %v5356 = vmul.f32 %v5313, %v5342
        %v5357 = vmul.f32 %v5314, %v5338
        %v5358 = vmul.f32 %v5315, %v5342
        %v5359 = vmul.f32 %v5316, %v5338
        %v5360 = vmul.f32 %v5317, %v5342
        %v5361 = vmul.f32 %v5318, %v5338
        %v5362 = vmul.f32 %v5319, %v5342
        %v5363 = vmul.f32 %v5320, %v5338
        %v5364 = vmul.f32 %v5321, %v5342
        %v5365 = vmul.f32 %v5322, %v5338
        %v5366 = vmul.f32 %v5323, %v5342
        %v5367 = vmul.f32 %v5324, %v5338
        %v5368 = vmul.f32 %v5325, %v5342
        %v5369 = vmul.f32 %v5326, %v5338
        %v5370 = vmul.f32 %v5327, %v5342
        %v5371 = vmul.f32 %v5328, %v5338
        %v5372 = vmul.f32 %v5329, %v5342
        %v5373 = vmul.f32 %v5330, %v5338
        %v5374 = vmul.f32 %v5331, %v5342
        %v5375 = vmul.f32 %v5332, %v5338
        %v5376 = vmul.f32 %v5333, %v5342
        %v5378 = vlaneseq
        %v5379 = vshrl.u32 %v5378, 7
        %v5380 = vsub.s32 0, %v5379
        %v5381 = vrot.slane %v846, %v5380
        %v5382 = vlaneseq
        %v5383 = vshrl.u32 %v5382, 7
        %v5384 = vsub.s32 1, %v5383
        %v5385 = vrot.slane %v846, %v5384
        %v5388 = vadd.f32 %v5345, %v5381
        %v5389 = vadd.f32 %v5346, %v5385
        %v5390 = vadd.f32 %v5347, %v5381
        %v5391 = vadd.f32 %v5348, %v5385
        %v5392 = vadd.f32 %v5349, %v5381
        %v5393 = vadd.f32 %v5350, %v5385
        %v5394 = vadd.f32 %v5351, %v5381
        %v5395 = vadd.f32 %v5352, %v5385
        %v5396 = vadd.f32 %v5353, %v5381
        %v5397 = vadd.f32 %v5354, %v5385
        %v5398 = vadd.f32 %v5355, %v5381
        %v5399 = vadd.f32 %v5356, %v5385
        %v5400 = vadd.f32 %v5357, %v5381
        %v5401 = vadd.f32 %v5358, %v5385
        %v5402 = vadd.f32 %v5359, %v5381
        %v5403 = vadd.f32 %v5360, %v5385
        %v5404 = vadd.f32 %v5361, %v5381
        %v5405 = vadd.f32 %v5362, %v5385
        %v5406 = vadd.f32 %v5363, %v5381
        %v5407 = vadd.f32 %v5364, %v5385
        %v5408 = vadd.f32 %v5365, %v5381
        %v5409 = vadd.f32 %v5366, %v5385
        %v5410 = vadd.f32 %v5367, %v5381
        %v5411 = vadd.f32 %v5368, %v5385
        %v5412 = vadd.f32 %v5369, %v5381
        %v5413 = vadd.f32 %v5370, %v5385
        %v5414 = vadd.f32 %v5371, %v5381
        %v5415 = vadd.f32 %v5372, %v5385
        %v5416 = vadd.f32 %v5373, %v5381
        %v5417 = vadd.f32 %v5374, %v5385
        %v5418 = vadd.f32 %v5375, %v5381
        %v5419 = vadd.f32 %v5376, %v5385
        %v5420 = vpack.c.bf16 %v5390, %v5388
        %v5421 = vpack.c.bf16 %v5391, %v5389
        %v5422 = vpack.c.bf16 %v5394, %v5392
        %v5423 = vpack.c.bf16 %v5395, %v5393
        %v5424 = vpack.c.bf16 %v5398, %v5396
        %v5425 = vpack.c.bf16 %v5399, %v5397
        %v5426 = vpack.c.bf16 %v5402, %v5400
        %v5427 = vpack.c.bf16 %v5403, %v5401
        %v5428 = vpack.c.bf16 %v5406, %v5404
        %v5429 = vpack.c.bf16 %v5407, %v5405
        %v5430 = vpack.c.bf16 %v5410, %v5408
        %v5431 = vpack.c.bf16 %v5411, %v5409
        %v5432 = vpack.c.bf16 %v5414, %v5412
        %v5433 = vpack.c.bf16 %v5415, %v5413
        %v5434 = vpack.c.bf16 %v5418, %v5416
        %v5435 = vpack.c.bf16 %v5419, %v5417
        %v5436 = vld [vmem:[%s379] sm:$0xff]
        %v5437 = vld [vmem:[%s379 + $0x8] sm:$0xff]
        %v5438 = vld [vmem:[%s379 + $0x10] sm:$0xff]
        %v5439 = vld [vmem:[%s379 + $0x18] sm:$0xff]
        %v5440 = vld [vmem:[%s379 + $0x20] sm:$0xff]
        %v5441 = vld [vmem:[%s379 + $0x28] sm:$0xff]
        %v5442 = vld [vmem:[%s379 + $0x30] sm:$0xff]
        %v5443 = vld [vmem:[%s379 + $0x38] sm:$0xff]
        %v5444 = vld [vmem:[%s379 + $0x40] sm:$0xff]
        %v5445 = vld [vmem:[%s379 + $0x48] sm:$0xff]
        %v5446 = vld [vmem:[%s379 + $0x50] sm:$0xff]
        %v5447 = vld [vmem:[%s379 + $0x58] sm:$0xff]
        %v5448 = vld [vmem:[%s379 + $0x60] sm:$0xff]
        %v5449 = vld [vmem:[%s379 + $0x68] sm:$0xff]
        %v5450 = vld [vmem:[%s379 + $0x70] sm:$0xff]
        %v5451 = vld [vmem:[%s379 + $0x78] sm:$0xff]
        %v5452 = vld [vmem:[%s379 + $0x80] sm:$0xff]
        %v5453 = vld [vmem:[%s379 + $0x88] sm:$0xff]
        %v5454 = vld [vmem:[%s379 + $0x90] sm:$0xff]
        %v5455 = vld [vmem:[%s379 + $0x98] sm:$0xff]
        %v5456 = vld [vmem:[%s379 + $0xa0] sm:$0xff]
        %v5457 = vld [vmem:[%s379 + $0xa8] sm:$0xff]
        %v5458 = vld [vmem:[%s379 + $0xb0] sm:$0xff]
        %v5459 = vld [vmem:[%s379 + $0xb8] sm:$0xff]
        %v5460 = vld [vmem:[%s379 + $0xc0] sm:$0xff]
        %v5461 = vld [vmem:[%s379 + $0xc8] sm:$0xff]
        %v5462 = vld [vmem:[%s379 + $0xd0] sm:$0xff]
        %v5463 = vld [vmem:[%s379 + $0xd8] sm:$0xff]
        %v5464 = vld [vmem:[%s379 + $0xe0] sm:$0xff]
        %v5465 = vld [vmem:[%s379 + $0xe8] sm:$0xff]
        %v5466 = vld [vmem:[%s379 + $0xf0] sm:$0xff]
        %v5467 = vld [vmem:[%s379 + $0xf8] sm:$0xff]
        %v5468 = vld [vmem:[%s379 + $0x100] sm:$0xff]
        %v5469 = vld [vmem:[%s379 + $0x108] sm:$0xff]
        %v5470 = vld [vmem:[%s379 + $0x110] sm:$0xff]
        %v5471 = vld [vmem:[%s379 + $0x118] sm:$0xff]
        %v5472 = vld [vmem:[%s379 + $0x120] sm:$0xff]
        %v5473 = vld [vmem:[%s379 + $0x128] sm:$0xff]
        %v5474 = vld [vmem:[%s379 + $0x130] sm:$0xff]
        %v5475 = vld [vmem:[%s379 + $0x138] sm:$0xff]
        %v5476 = vld [vmem:[%s379 + $0x140] sm:$0xff]
        %v5477 = vld [vmem:[%s379 + $0x148] sm:$0xff]
        %v5478 = vld [vmem:[%s379 + $0x150] sm:$0xff]
        %v5479 = vld [vmem:[%s379 + $0x158] sm:$0xff]
        %v5480 = vld [vmem:[%s379 + $0x160] sm:$0xff]
        %v5481 = vld [vmem:[%s379 + $0x168] sm:$0xff]
        %v5482 = vld [vmem:[%s379 + $0x170] sm:$0xff]
        %v5483 = vld [vmem:[%s379 + $0x178] sm:$0xff]
        %v5484 = vld [vmem:[%s379 + $0x180] sm:$0xff]
        %v5485 = vld [vmem:[%s379 + $0x188] sm:$0xff]
        %v5486 = vld [vmem:[%s379 + $0x190] sm:$0xff]
        %v5487 = vld [vmem:[%s379 + $0x198] sm:$0xff]
        %v5488 = vld [vmem:[%s379 + $0x1a0] sm:$0xff]
        %v5489 = vld [vmem:[%s379 + $0x1a8] sm:$0xff]
        %v5490 = vld [vmem:[%s379 + $0x1b0] sm:$0xff]
        %v5491 = vld [vmem:[%s379 + $0x1b8] sm:$0xff]
        %v5492 = vld [vmem:[%s379 + $0x1c0] sm:$0xff]
        %v5493 = vld [vmem:[%s379 + $0x1c8] sm:$0xff]
        %v5494 = vld [vmem:[%s379 + $0x1d0] sm:$0xff]
        %v5495 = vld [vmem:[%s379 + $0x1d8] sm:$0xff]
        %v5496 = vld [vmem:[%s379 + $0x1e0] sm:$0xff]
        %v5497 = vld [vmem:[%s379 + $0x1e8] sm:$0xff]
        %v5498 = vld [vmem:[%s379 + $0x1f0] sm:$0xff]
        %v5499 = vld [vmem:[%s379 + $0x1f8] sm:$0xff]
        %v5500 = vld [vmem:[%s379 + $0x200] sm:$0xff]
        %v5501 = vld [vmem:[%s379 + $0x208] sm:$0xff]
        %v5502 = vld [vmem:[%s379 + $0x210] sm:$0xff]
        %v5503 = vld [vmem:[%s379 + $0x218] sm:$0xff]
        %v5504 = vld [vmem:[%s379 + $0x220] sm:$0xff]
        %v5505 = vld [vmem:[%s379 + $0x228] sm:$0xff]
        %v5506 = vld [vmem:[%s379 + $0x230] sm:$0xff]
        %v5507 = vld [vmem:[%s379 + $0x238] sm:$0xff]
        %v5508 = vld [vmem:[%s379 + $0x240] sm:$0xff]
        %v5509 = vld [vmem:[%s379 + $0x248] sm:$0xff]
        %v5510 = vld [vmem:[%s379 + $0x250] sm:$0xff]
        %v5511 = vld [vmem:[%s379 + $0x258] sm:$0xff]
        %v5512 = vld [vmem:[%s379 + $0x260] sm:$0xff]
        %v5513 = vld [vmem:[%s379 + $0x268] sm:$0xff]
        %v5514 = vld [vmem:[%s379 + $0x270] sm:$0xff]
        %v5515 = vld [vmem:[%s379 + $0x278] sm:$0xff]
        %v5516 = vld [vmem:[%s379 + $0x280] sm:$0xff]
        %v5517 = vld [vmem:[%s379 + $0x288] sm:$0xff]
        %v5518 = vld [vmem:[%s379 + $0x290] sm:$0xff]
        %v5519 = vld [vmem:[%s379 + $0x298] sm:$0xff]
        %v5520 = vld [vmem:[%s379 + $0x2a0] sm:$0xff]
        %v5521 = vld [vmem:[%s379 + $0x2a8] sm:$0xff]
        %v5522 = vld [vmem:[%s379 + $0x2b0] sm:$0xff]
        %v5523 = vld [vmem:[%s379 + $0x2b8] sm:$0xff]
        %v5524 = vld [vmem:[%s379 + $0x2c0] sm:$0xff]
        %v5525 = vld [vmem:[%s379 + $0x2c8] sm:$0xff]
        %v5526 = vld [vmem:[%s379 + $0x2d0] sm:$0xff]
        %v5527 = vld [vmem:[%s379 + $0x2d8] sm:$0xff]
        %v5528 = vld [vmem:[%s379 + $0x2e0] sm:$0xff]
        %v5529 = vld [vmem:[%s379 + $0x2e8] sm:$0xff]
        %v5530 = vld [vmem:[%s379 + $0x2f0] sm:$0xff]
        %v5531 = vld [vmem:[%s379 + $0x2f8] sm:$0xff]
        %v5532 = vld [vmem:[%s379 + $0x300] sm:$0xff]
        %v5533 = vld [vmem:[%s379 + $0x308] sm:$0xff]
        %v5534 = vld [vmem:[%s379 + $0x310] sm:$0xff]
        %v5535 = vld [vmem:[%s379 + $0x318] sm:$0xff]
        %v5536 = vld [vmem:[%s379 + $0x320] sm:$0xff]
        %v5537 = vld [vmem:[%s379 + $0x328] sm:$0xff]
        %v5538 = vld [vmem:[%s379 + $0x330] sm:$0xff]
        %v5539 = vld [vmem:[%s379 + $0x338] sm:$0xff]
        %v5540 = vld [vmem:[%s379 + $0x340] sm:$0xff]
        %v5541 = vld [vmem:[%s379 + $0x348] sm:$0xff]
        %v5542 = vld [vmem:[%s379 + $0x350] sm:$0xff]
        %v5543 = vld [vmem:[%s379 + $0x358] sm:$0xff]
        %v5544 = vld [vmem:[%s379 + $0x360] sm:$0xff]
        %v5545 = vld [vmem:[%s379 + $0x368] sm:$0xff]
        %v5546 = vld [vmem:[%s379 + $0x370] sm:$0xff]
        %v5547 = vld [vmem:[%s379 + $0x378] sm:$0xff]
        %v5548 = vld [vmem:[%s379 + $0x380] sm:$0xff]
        %v5549 = vld [vmem:[%s379 + $0x388] sm:$0xff]
        %v5550 = vld [vmem:[%s379 + $0x390] sm:$0xff]
        %v5551 = vld [vmem:[%s379 + $0x398] sm:$0xff]
        %v5552 = vld [vmem:[%s379 + $0x3a0] sm:$0xff]
        %v5553 = vld [vmem:[%s379 + $0x3a8] sm:$0xff]
        %v5554 = vld [vmem:[%s379 + $0x3b0] sm:$0xff]
        %v5555 = vld [vmem:[%s379 + $0x3b8] sm:$0xff]
        %v5556 = vld [vmem:[%s379 + $0x3c0] sm:$0xff]
        %v5557 = vld [vmem:[%s379 + $0x3c8] sm:$0xff]
        %v5558 = vld [vmem:[%s379 + $0x3d0] sm:$0xff]
        %v5559 = vld [vmem:[%s379 + $0x3d8] sm:$0xff]
        %v5560 = vld [vmem:[%s379 + $0x3e0] sm:$0xff]
        %v5561 = vld [vmem:[%s379 + $0x3e8] sm:$0xff]
        %v5562 = vld [vmem:[%s379 + $0x3f0] sm:$0xff]
        %v5563 = vld [vmem:[%s379 + $0x3f8] sm:$0xff]
        %v5565 = vlaneseq
        %v5566 = vshrl.u32 %v5565, 7
        %v5567 = vsub.s32 0, %v5566
        %v5568 = vrot.slane %v838, %v5567
        %v5569 = vlaneseq
        %v5570 = vshrl.u32 %v5569, 7
        %v5571 = vsub.s32 1, %v5570
        %v5572 = vrot.slane %v838, %v5571
        %v5573 = vlaneseq
        %v5574 = vshrl.u32 %v5573, 7
        %v5575 = vsub.s32 2, %v5574
        %v5576 = vrot.slane %v838, %v5575
        %v5577 = vlaneseq
        %v5578 = vshrl.u32 %v5577, 7
        %v5579 = vsub.s32 3, %v5578
        %v5580 = vrot.slane %v838, %v5579
        %v5581 = vlaneseq
        %v5582 = vshrl.u32 %v5581, 7
        %v5583 = vsub.s32 4, %v5582
        %v5584 = vrot.slane %v838, %v5583
        %v5585 = vlaneseq
        %v5586 = vshrl.u32 %v5585, 7
        %v5587 = vsub.s32 5, %v5586
        %v5588 = vrot.slane %v838, %v5587
        %v5589 = vlaneseq
        %v5590 = vshrl.u32 %v5589, 7
        %v5591 = vsub.s32 6, %v5590
        %v5592 = vrot.slane %v838, %v5591
        %v5593 = vlaneseq
        %v5594 = vshrl.u32 %v5593, 7
        %v5595 = vsub.s32 7, %v5594
        %v5596 = vrot.slane %v838, %v5595
        %v5733 = vunpack.c.l.b16 %v5436
        %v5734 = vunpack.c.h.b16 %v5436
        %v5735 = vunpack.c.l.b16 %v5437
        %v5736 = vunpack.c.h.b16 %v5437
        %v5737 = vunpack.c.l.b16 %v5438
        %v5738 = vunpack.c.h.b16 %v5438
        %v5739 = vunpack.c.l.b16 %v5439
        %v5740 = vunpack.c.h.b16 %v5439
        %v5741 = vunpack.c.l.b16 %v5440
        %v5742 = vunpack.c.h.b16 %v5440
        %v5743 = vunpack.c.l.b16 %v5441
        %v5744 = vunpack.c.h.b16 %v5441
        %v5745 = vunpack.c.l.b16 %v5442
        %v5746 = vunpack.c.h.b16 %v5442
        %v5747 = vunpack.c.l.b16 %v5443
        %v5748 = vunpack.c.h.b16 %v5443
        %v5749 = vunpack.c.l.b16 %v5444
        %v5750 = vunpack.c.h.b16 %v5444
        %v5751 = vunpack.c.l.b16 %v5445
        %v5752 = vunpack.c.h.b16 %v5445
        %v5753 = vunpack.c.l.b16 %v5446
        %v5754 = vunpack.c.h.b16 %v5446
        %v5755 = vunpack.c.l.b16 %v5447
        %v5756 = vunpack.c.h.b16 %v5447
        %v5757 = vunpack.c.l.b16 %v5448
        %v5758 = vunpack.c.h.b16 %v5448
        %v5759 = vunpack.c.l.b16 %v5449
        %v5760 = vunpack.c.h.b16 %v5449
        %v5761 = vunpack.c.l.b16 %v5450
        %v5762 = vunpack.c.h.b16 %v5450
        %v5763 = vunpack.c.l.b16 %v5451
        %v5764 = vunpack.c.h.b16 %v5451
        %v5765 = vunpack.c.l.b16 %v5452
        %v5766 = vunpack.c.h.b16 %v5452
        %v5767 = vunpack.c.l.b16 %v5453
        %v5768 = vunpack.c.h.b16 %v5453
        %v5769 = vunpack.c.l.b16 %v5454
        %v5770 = vunpack.c.h.b16 %v5454
        %v5771 = vunpack.c.l.b16 %v5455
        %v5772 = vunpack.c.h.b16 %v5455
        %v5773 = vunpack.c.l.b16 %v5456
        %v5774 = vunpack.c.h.b16 %v5456
        %v5775 = vunpack.c.l.b16 %v5457
        %v5776 = vunpack.c.h.b16 %v5457
        %v5777 = vunpack.c.l.b16 %v5458
        %v5778 = vunpack.c.h.b16 %v5458
        %v5779 = vunpack.c.l.b16 %v5459
        %v5780 = vunpack.c.h.b16 %v5459
        %v5781 = vunpack.c.l.b16 %v5460
        %v5782 = vunpack.c.h.b16 %v5460
        %v5783 = vunpack.c.l.b16 %v5461
        %v5784 = vunpack.c.h.b16 %v5461
        %v5785 = vunpack.c.l.b16 %v5462
        %v5786 = vunpack.c.h.b16 %v5462
        %v5787 = vunpack.c.l.b16 %v5463
        %v5788 = vunpack.c.h.b16 %v5463
        %v5789 = vunpack.c.l.b16 %v5464
        %v5790 = vunpack.c.h.b16 %v5464
        %v5791 = vunpack.c.l.b16 %v5465
        %v5792 = vunpack.c.h.b16 %v5465
        %v5793 = vunpack.c.l.b16 %v5466
        %v5794 = vunpack.c.h.b16 %v5466
        %v5795 = vunpack.c.l.b16 %v5467
        %v5796 = vunpack.c.h.b16 %v5467
        %v5797 = vunpack.c.l.b16 %v5468
        %v5798 = vunpack.c.h.b16 %v5468
        %v5799 = vunpack.c.l.b16 %v5469
        %v5800 = vunpack.c.h.b16 %v5469
        %v5801 = vunpack.c.l.b16 %v5470
        %v5802 = vunpack.c.h.b16 %v5470
        %v5803 = vunpack.c.l.b16 %v5471
        %v5804 = vunpack.c.h.b16 %v5471
        %v5805 = vunpack.c.l.b16 %v5472
        %v5806 = vunpack.c.h.b16 %v5472
        %v5807 = vunpack.c.l.b16 %v5473
        %v5808 = vunpack.c.h.b16 %v5473
        %v5809 = vunpack.c.l.b16 %v5474
        %v5810 = vunpack.c.h.b16 %v5474
        %v5811 = vunpack.c.l.b16 %v5475
        %v5812 = vunpack.c.h.b16 %v5475
        %v5813 = vunpack.c.l.b16 %v5476
        %v5814 = vunpack.c.h.b16 %v5476
        %v5815 = vunpack.c.l.b16 %v5477
        %v5816 = vunpack.c.h.b16 %v5477
        %v5817 = vunpack.c.l.b16 %v5478
        %v5818 = vunpack.c.h.b16 %v5478
        %v5819 = vunpack.c.l.b16 %v5479
        %v5820 = vunpack.c.h.b16 %v5479
        %v5821 = vunpack.c.l.b16 %v5480
        %v5822 = vunpack.c.h.b16 %v5480
        %v5823 = vunpack.c.l.b16 %v5481
        %v5824 = vunpack.c.h.b16 %v5481
        %v5825 = vunpack.c.l.b16 %v5482
        %v5826 = vunpack.c.h.b16 %v5482
        %v5827 = vunpack.c.l.b16 %v5483
        %v5828 = vunpack.c.h.b16 %v5483
        %v5829 = vunpack.c.l.b16 %v5484
        %v5830 = vunpack.c.h.b16 %v5484
        %v5831 = vunpack.c.l.b16 %v5485
        %v5832 = vunpack.c.h.b16 %v5485
        %v5833 = vunpack.c.l.b16 %v5486
        %v5834 = vunpack.c.h.b16 %v5486
        %v5835 = vunpack.c.l.b16 %v5487
        %v5836 = vunpack.c.h.b16 %v5487
        %v5837 = vunpack.c.l.b16 %v5488
        %v5838 = vunpack.c.h.b16 %v5488
        %v5839 = vunpack.c.l.b16 %v5489
        %v5840 = vunpack.c.h.b16 %v5489
        %v5841 = vunpack.c.l.b16 %v5490
        %v5842 = vunpack.c.h.b16 %v5490
        %v5843 = vunpack.c.l.b16 %v5491
        %v5844 = vunpack.c.h.b16 %v5491
        %v5845 = vunpack.c.l.b16 %v5492
        %v5846 = vunpack.c.h.b16 %v5492
        %v5847 = vunpack.c.l.b16 %v5493
        %v5848 = vunpack.c.h.b16 %v5493
        %v5849 = vunpack.c.l.b16 %v5494
        %v5850 = vunpack.c.h.b16 %v5494
        %v5851 = vunpack.c.l.b16 %v5495
        %v5852 = vunpack.c.h.b16 %v5495
        %v5853 = vunpack.c.l.b16 %v5496
        %v5854 = vunpack.c.h.b16 %v5496
        %v5855 = vunpack.c.l.b16 %v5497
        %v5856 = vunpack.c.h.b16 %v5497
        %v5857 = vunpack.c.l.b16 %v5498
        %v5858 = vunpack.c.h.b16 %v5498
        %v5859 = vunpack.c.l.b16 %v5499
        %v5860 = vunpack.c.h.b16 %v5499
        %v5861 = vunpack.c.l.b16 %v5500
        %v5862 = vunpack.c.h.b16 %v5500
        %v5863 = vunpack.c.l.b16 %v5501
        %v5864 = vunpack.c.h.b16 %v5501
        %v5865 = vunpack.c.l.b16 %v5502
        %v5866 = vunpack.c.h.b16 %v5502
        %v5867 = vunpack.c.l.b16 %v5503
        %v5868 = vunpack.c.h.b16 %v5503
        %v5869 = vunpack.c.l.b16 %v5504
        %v5870 = vunpack.c.h.b16 %v5504
        %v5871 = vunpack.c.l.b16 %v5505
        %v5872 = vunpack.c.h.b16 %v5505
        %v5873 = vunpack.c.l.b16 %v5506
        %v5874 = vunpack.c.h.b16 %v5506
        %v5875 = vunpack.c.l.b16 %v5507
        %v5876 = vunpack.c.h.b16 %v5507
        %v5877 = vunpack.c.l.b16 %v5508
        %v5878 = vunpack.c.h.b16 %v5508
        %v5879 = vunpack.c.l.b16 %v5509
        %v5880 = vunpack.c.h.b16 %v5509
        %v5881 = vunpack.c.l.b16 %v5510
        %v5882 = vunpack.c.h.b16 %v5510
        %v5883 = vunpack.c.l.b16 %v5511
        %v5884 = vunpack.c.h.b16 %v5511
        %v5885 = vunpack.c.l.b16 %v5512
        %v5886 = vunpack.c.h.b16 %v5512
        %v5887 = vunpack.c.l.b16 %v5513
        %v5888 = vunpack.c.h.b16 %v5513
        %v5889 = vunpack.c.l.b16 %v5514
        %v5890 = vunpack.c.h.b16 %v5514
        %v5891 = vunpack.c.l.b16 %v5515
        %v5892 = vunpack.c.h.b16 %v5515
        %v5893 = vunpack.c.l.b16 %v5516
        %v5894 = vunpack.c.h.b16 %v5516
        %v5895 = vunpack.c.l.b16 %v5517
        %v5896 = vunpack.c.h.b16 %v5517
        %v5897 = vunpack.c.l.b16 %v5518
        %v5898 = vunpack.c.h.b16 %v5518
        %v5899 = vunpack.c.l.b16 %v5519
        %v5900 = vunpack.c.h.b16 %v5519
        %v5901 = vunpack.c.l.b16 %v5520
        %v5902 = vunpack.c.h.b16 %v5520
        %v5903 = vunpack.c.l.b16 %v5521
        %v5904 = vunpack.c.h.b16 %v5521
        %v5905 = vunpack.c.l.b16 %v5522
        %v5906 = vunpack.c.h.b16 %v5522
        %v5907 = vunpack.c.l.b16 %v5523
        %v5908 = vunpack.c.h.b16 %v5523
        %v5909 = vunpack.c.l.b16 %v5524
        %v5910 = vunpack.c.h.b16 %v5524
        %v5911 = vunpack.c.l.b16 %v5525
        %v5912 = vunpack.c.h.b16 %v5525
        %v5913 = vunpack.c.l.b16 %v5526
        %v5914 = vunpack.c.h.b16 %v5526
        %v5915 = vunpack.c.l.b16 %v5527
        %v5916 = vunpack.c.h.b16 %v5527
        %v5917 = vunpack.c.l.b16 %v5528
        %v5918 = vunpack.c.h.b16 %v5528
        %v5919 = vunpack.c.l.b16 %v5529
        %v5920 = vunpack.c.h.b16 %v5529
        %v5921 = vunpack.c.l.b16 %v5530
        %v5922 = vunpack.c.h.b16 %v5530
        %v5923 = vunpack.c.l.b16 %v5531
        %v5924 = vunpack.c.h.b16 %v5531
        %v5925 = vunpack.c.l.b16 %v5532
        %v5926 = vunpack.c.h.b16 %v5532
        %v5927 = vunpack.c.l.b16 %v5533
        %v5928 = vunpack.c.h.b16 %v5533
        %v5929 = vunpack.c.l.b16 %v5534
        %v5930 = vunpack.c.h.b16 %v5534
        %v5931 = vunpack.c.l.b16 %v5535
        %v5932 = vunpack.c.h.b16 %v5535
        %v5933 = vunpack.c.l.b16 %v5536
        %v5934 = vunpack.c.h.b16 %v5536
        %v5935 = vunpack.c.l.b16 %v5537
        %v5936 = vunpack.c.h.b16 %v5537
        %v5937 = vunpack.c.l.b16 %v5538
        %v5938 = vunpack.c.h.b16 %v5538
        %v5939 = vunpack.c.l.b16 %v5539
        %v5940 = vunpack.c.h.b16 %v5539
        %v5941 = vunpack.c.l.b16 %v5540
        %v5942 = vunpack.c.h.b16 %v5540
        %v5943 = vunpack.c.l.b16 %v5541
        %v5944 = vunpack.c.h.b16 %v5541
        %v5945 = vunpack.c.l.b16 %v5542
        %v5946 = vunpack.c.h.b16 %v5542
        %v5947 = vunpack.c.l.b16 %v5543
        %v5948 = vunpack.c.h.b16 %v5543
        %v5949 = vunpack.c.l.b16 %v5544
        %v5950 = vunpack.c.h.b16 %v5544
        %v5951 = vunpack.c.l.b16 %v5545
        %v5952 = vunpack.c.h.b16 %v5545
        %v5953 = vunpack.c.l.b16 %v5546
        %v5954 = vunpack.c.h.b16 %v5546
        %v5955 = vunpack.c.l.b16 %v5547
        %v5956 = vunpack.c.h.b16 %v5547
        %v5957 = vunpack.c.l.b16 %v5548
        %v5958 = vunpack.c.h.b16 %v5548
        %v5959 = vunpack.c.l.b16 %v5549
        %v5960 = vunpack.c.h.b16 %v5549
        %v5961 = vunpack.c.l.b16 %v5550
        %v5962 = vunpack.c.h.b16 %v5550
        %v5963 = vunpack.c.l.b16 %v5551
        %v5964 = vunpack.c.h.b16 %v5551
        %v5965 = vunpack.c.l.b16 %v5552
        %v5966 = vunpack.c.h.b16 %v5552
        %v5967 = vunpack.c.l.b16 %v5553
        %v5968 = vunpack.c.h.b16 %v5553
        %v5969 = vunpack.c.l.b16 %v5554
        %v5970 = vunpack.c.h.b16 %v5554
        %v5971 = vunpack.c.l.b16 %v5555
        %v5972 = vunpack.c.h.b16 %v5555
        %v5973 = vunpack.c.l.b16 %v5556
        %v5974 = vunpack.c.h.b16 %v5556
        %v5975 = vunpack.c.l.b16 %v5557
        %v5976 = vunpack.c.h.b16 %v5557
        %v5977 = vunpack.c.l.b16 %v5558
        %v5978 = vunpack.c.h.b16 %v5558
        %v5979 = vunpack.c.l.b16 %v5559
        %v5980 = vunpack.c.h.b16 %v5559
        %v5981 = vunpack.c.l.b16 %v5560
        %v5982 = vunpack.c.h.b16 %v5560
        %v5983 = vunpack.c.l.b16 %v5561
        %v5984 = vunpack.c.h.b16 %v5561
        %v5985 = vunpack.c.l.b16 %v5562
        %v5986 = vunpack.c.h.b16 %v5562
        %v5987 = vunpack.c.l.b16 %v5563
        %v5988 = vunpack.c.h.b16 %v5563
        %v5989 = vpack.c.b16 %v5741, %v5733
        %v5990 = vpack.c.b16 %v5742, %v5734
        %v5991 = vpack.c.b16 %v5743, %v5735
        %v5992 = vpack.c.b16 %v5744, %v5736
        %v5993 = vpack.c.b16 %v5745, %v5737
        %v5994 = vpack.c.b16 %v5746, %v5738
        %v5995 = vpack.c.b16 %v5747, %v5739
        %v5996 = vpack.c.b16 %v5748, %v5740
        %v5997 = vpack.c.b16 %v5757, %v5749
        %v5998 = vpack.c.b16 %v5758, %v5750
        %v5999 = vpack.c.b16 %v5759, %v5751
        %v6000 = vpack.c.b16 %v5760, %v5752
        %v6001 = vpack.c.b16 %v5761, %v5753
        %v6002 = vpack.c.b16 %v5762, %v5754
        %v6003 = vpack.c.b16 %v5763, %v5755
        %v6004 = vpack.c.b16 %v5764, %v5756
        %v6005 = vpack.c.b16 %v5773, %v5765
        %v6006 = vpack.c.b16 %v5774, %v5766
        %v6007 = vpack.c.b16 %v5775, %v5767
        %v6008 = vpack.c.b16 %v5776, %v5768
        %v6009 = vpack.c.b16 %v5777, %v5769
        %v6010 = vpack.c.b16 %v5778, %v5770
        %v6011 = vpack.c.b16 %v5779, %v5771
        %v6012 = vpack.c.b16 %v5780, %v5772
        %v6013 = vpack.c.b16 %v5789, %v5781
        %v6014 = vpack.c.b16 %v5790, %v5782
        %v6015 = vpack.c.b16 %v5791, %v5783
        %v6016 = vpack.c.b16 %v5792, %v5784
        %v6017 = vpack.c.b16 %v5793, %v5785
        %v6018 = vpack.c.b16 %v5794, %v5786
        %v6019 = vpack.c.b16 %v5795, %v5787
        %v6020 = vpack.c.b16 %v5796, %v5788
        %v6021 = vpack.c.b16 %v5805, %v5797
        %v6022 = vpack.c.b16 %v5806, %v5798
        %v6023 = vpack.c.b16 %v5807, %v5799
        %v6024 = vpack.c.b16 %v5808, %v5800
        %v6025 = vpack.c.b16 %v5809, %v5801
        %v6026 = vpack.c.b16 %v5810, %v5802
        %v6027 = vpack.c.b16 %v5811, %v5803
        %v6028 = vpack.c.b16 %v5812, %v5804
        %v6029 = vpack.c.b16 %v5821, %v5813
        %v6030 = vpack.c.b16 %v5822, %v5814
        %v6031 = vpack.c.b16 %v5823, %v5815
        %v6032 = vpack.c.b16 %v5824, %v5816
        %v6033 = vpack.c.b16 %v5825, %v5817
        %v6034 = vpack.c.b16 %v5826, %v5818
        %v6035 = vpack.c.b16 %v5827, %v5819
        %v6036 = vpack.c.b16 %v5828, %v5820
        %v6037 = vpack.c.b16 %v5837, %v5829
        %v6038 = vpack.c.b16 %v5838, %v5830
        %v6039 = vpack.c.b16 %v5839, %v5831
        %v6040 = vpack.c.b16 %v5840, %v5832
        %v6041 = vpack.c.b16 %v5841, %v5833
        %v6042 = vpack.c.b16 %v5842, %v5834
        %v6043 = vpack.c.b16 %v5843, %v5835
        %v6044 = vpack.c.b16 %v5844, %v5836
        %v6045 = vpack.c.b16 %v5853, %v5845
        %v6046 = vpack.c.b16 %v5854, %v5846
        %v6047 = vpack.c.b16 %v5855, %v5847
        %v6048 = vpack.c.b16 %v5856, %v5848
        %v6049 = vpack.c.b16 %v5857, %v5849
        %v6050 = vpack.c.b16 %v5858, %v5850
        %v6051 = vpack.c.b16 %v5859, %v5851
        %v6052 = vpack.c.b16 %v5860, %v5852
        %v6053 = vpack.c.b16 %v5869, %v5861
        %v6054 = vpack.c.b16 %v5870, %v5862
        %v6055 = vpack.c.b16 %v5871, %v5863
        %v6056 = vpack.c.b16 %v5872, %v5864
        %v6057 = vpack.c.b16 %v5873, %v5865
        %v6058 = vpack.c.b16 %v5874, %v5866
        %v6059 = vpack.c.b16 %v5875, %v5867
        %v6060 = vpack.c.b16 %v5876, %v5868
        %v6061 = vpack.c.b16 %v5885, %v5877
        %v6062 = vpack.c.b16 %v5886, %v5878
        %v6063 = vpack.c.b16 %v5887, %v5879
        %v6064 = vpack.c.b16 %v5888, %v5880
        %v6065 = vpack.c.b16 %v5889, %v5881
        %v6066 = vpack.c.b16 %v5890, %v5882
        %v6067 = vpack.c.b16 %v5891, %v5883
        %v6068 = vpack.c.b16 %v5892, %v5884
        %v6069 = vpack.c.b16 %v5901, %v5893
        %v6070 = vpack.c.b16 %v5902, %v5894
        %v6071 = vpack.c.b16 %v5903, %v5895
        %v6072 = vpack.c.b16 %v5904, %v5896
        %v6073 = vpack.c.b16 %v5905, %v5897
        %v6074 = vpack.c.b16 %v5906, %v5898
        %v6075 = vpack.c.b16 %v5907, %v5899
        %v6076 = vpack.c.b16 %v5908, %v5900
        %v6077 = vpack.c.b16 %v5917, %v5909
        %v6078 = vpack.c.b16 %v5918, %v5910
        %v6079 = vpack.c.b16 %v5919, %v5911
        %v6080 = vpack.c.b16 %v5920, %v5912
        %v6081 = vpack.c.b16 %v5921, %v5913
        %v6082 = vpack.c.b16 %v5922, %v5914
        %v6083 = vpack.c.b16 %v5923, %v5915
        %v6084 = vpack.c.b16 %v5924, %v5916
        %v6085 = vpack.c.b16 %v5933, %v5925
        %v6086 = vpack.c.b16 %v5934, %v5926
        %v6087 = vpack.c.b16 %v5935, %v5927
        %v6088 = vpack.c.b16 %v5936, %v5928
        %v6089 = vpack.c.b16 %v5937, %v5929
        %v6090 = vpack.c.b16 %v5938, %v5930
        %v6091 = vpack.c.b16 %v5939, %v5931
        %v6092 = vpack.c.b16 %v5940, %v5932
        %v6093 = vpack.c.b16 %v5949, %v5941
        %v6094 = vpack.c.b16 %v5950, %v5942
        %v6095 = vpack.c.b16 %v5951, %v5943
        %v6096 = vpack.c.b16 %v5952, %v5944
        %v6097 = vpack.c.b16 %v5953, %v5945
        %v6098 = vpack.c.b16 %v5954, %v5946
        %v6099 = vpack.c.b16 %v5955, %v5947
        %v6100 = vpack.c.b16 %v5956, %v5948
        %v6101 = vpack.c.b16 %v5965, %v5957
        %v6102 = vpack.c.b16 %v5966, %v5958
        %v6103 = vpack.c.b16 %v5967, %v5959
        %v6104 = vpack.c.b16 %v5968, %v5960
        %v6105 = vpack.c.b16 %v5969, %v5961
        %v6106 = vpack.c.b16 %v5970, %v5962
        %v6107 = vpack.c.b16 %v5971, %v5963
        %v6108 = vpack.c.b16 %v5972, %v5964
        %v6109 = vpack.c.b16 %v5981, %v5973
        %v6110 = vpack.c.b16 %v5982, %v5974
        %v6111 = vpack.c.b16 %v5983, %v5975
        %v6112 = vpack.c.b16 %v5984, %v5976
        %v6113 = vpack.c.b16 %v5985, %v5977
        %v6114 = vpack.c.b16 %v5986, %v5978
        %v6115 = vpack.c.b16 %v5987, %v5979
        %v6116 = vpack.c.b16 %v5988, %v5980
        %6245 = vmatprep.subr.bf16.mxu0 %v5990
        %6246 = vmatpush1.bf16.msra.mxu0 %v5989
        %6247 = vmatprep.subr.bf16.mxu0 %v5998
        %6248 = vmatpush1.bf16.msra.mxu0 %v5997
        %6249 = vmatprep.subr.bf16.mxu0 %v6006
        %6250 = vmatpush1.bf16.msra.mxu0 %v6005
        %6251 = vmatprep.subr.bf16.mxu0 %v6014
        %6252 = vmatpush1.bf16.msra.mxu0 %v6013
        %6253 = vmatprep.subr.bf16.mxu0 %v6022
        %6254 = vmatpush1.bf16.msra.mxu0 %v6021
        %6255 = vmatprep.subr.bf16.mxu0 %v6030
        %6256 = vmatpush1.bf16.msra.mxu0 %v6029
        %6257 = vmatprep.subr.bf16.mxu0 %v6038
        %6258 = vmatpush1.bf16.msra.mxu0 %v6037
        %6259 = vmatprep.subr.bf16.mxu0 %v6046
        %6260 = vmatpush1.bf16.msra.mxu0 %v6045
        %6261 = vmatprep.subr.bf16.mxu0 %v6054
        %6262 = vmatpush1.bf16.msra.mxu0 %v6053
        %6263 = vmatprep.subr.bf16.mxu0 %v6062
        %6264 = vmatpush1.bf16.msra.mxu0 %v6061
        %6265 = vmatprep.subr.bf16.mxu0 %v6070
        %6266 = vmatpush1.bf16.msra.mxu0 %v6069
        %6267 = vmatprep.subr.bf16.mxu0 %v6078
        %6268 = vmatpush1.bf16.msra.mxu0 %v6077
        %6269 = vmatprep.subr.bf16.mxu0 %v6086
        %6270 = vmatpush1.bf16.msra.mxu0 %v6085
        %6271 = vmatprep.subr.bf16.mxu0 %v6094
        %6272 = vmatpush1.bf16.msra.mxu0 %v6093
        %6273 = vmatprep.subr.bf16.mxu0 %v6102
        %6274 = vmatpush1.bf16.msra.mxu0 %v6101
        %6275 = vmatprep.subr.bf16.mxu0 %v6110
        %6276 = vmatpush1.bf16.msra.mxu0 %v6109
        %6277 = vmatprep.mubr.bf16.mxu0 %v5421
        %6278 = vmatmul.mubr.bf16.gmra.mrb[0].mxu0 %v5420
        %v6279 = vpop.f32.mrb[0].mxu0
        %v6280 = vadd.f32 %v5568, %v6279
        %v6281 = vpop.f32.mrb[0].mxu0
        %v6282 = vadd.f32 %v5572, %v6281
        %v6283 = vpop.f32.mrb[0].mxu0
        %v6284 = vadd.f32 %v5568, %v6283
        %v6285 = vpop.f32.mrb[0].mxu0
        %v6286 = vadd.f32 %v5572, %v6285
        %6287 = vmatprep.mubr.bf16.mxu0 %v5423
        %6288 = vmatmul.mubr.bf16.gmra.mrb[0].mxu0 %v5422
        %v6289 = vpop.f32.mrb[0].mxu0
        %v6290 = vadd.f32 %v5568, %v6289
        %v6291 = vpop.f32.mrb[0].mxu0
        %v6292 = vadd.f32 %v5572, %v6291
        %v6293 = vpop.f32.mrb[0].mxu0
        %v6294 = vadd.f32 %v5568, %v6293
        %v6295 = vpop.f32.mrb[0].mxu0
        %v6296 = vadd.f32 %v5572, %v6295
        %6297 = vmatprep.mubr.bf16.mxu0 %v5425
        %6298 = vmatmul.mubr.bf16.gmra.mrb[0].mxu0 %v5424
        %v6299 = vpop.f32.mrb[0].mxu0
        %v6300 = vadd.f32 %v5568, %v6299
        %v6301 = vpop.f32.mrb[0].mxu0
        %v6302 = vadd.f32 %v5572, %v6301
        %v6303 = vpop.f32.mrb[0].mxu0
        %v6304 = vadd.f32 %v5568, %v6303
        %v6305 = vpop.f32.mrb[0].mxu0
        %v6306 = vadd.f32 %v5572, %v6305
        %6307 = vmatprep.mubr.bf16.mxu0 %v5427
        %6308 = vmatmul.mubr.bf16.gmra.mrb[0].mxu0 %v5426
        %v6309 = vpop.f32.mrb[0].mxu0
        %v6310 = vadd.f32 %v5568, %v6309
        %v6311 = vpop.f32.mrb[0].mxu0
        %v6312 = vadd.f32 %v5572, %v6311
        %v6313 = vpop.f32.mrb[0].mxu0
        %v6314 = vadd.f32 %v5568, %v6313
        %v6315 = vpop.f32.mrb[0].mxu0
        %v6316 = vadd.f32 %v5572, %v6315
        %6317 = vmatprep.mubr.bf16.mxu0 %v5429
        %6318 = vmatmul.mubr.bf16.gmra.mrb[0].mxu0 %v5428
        %v6319 = vpop.f32.mrb[0].mxu0
        %v6320 = vadd.f32 %v5568, %v6319
        %v6321 = vpop.f32.mrb[0].mxu0
        %v6322 = vadd.f32 %v5572, %v6321
        %v6323 = vpop.f32.mrb[0].mxu0
        %v6324 = vadd.f32 %v5568, %v6323
        %v6325 = vpop.f32.mrb[0].mxu0
        %v6326 = vadd.f32 %v5572, %v6325
        %6327 = vmatprep.mubr.bf16.mxu0 %v5431
        %6328 = vmatmul.mubr.bf16.gmra.mrb[0].mxu0 %v5430
        %v6329 = vpop.f32.mrb[0].mxu0
        %v6330 = vadd.f32 %v5568, %v6329
        %v6331 = vpop.f32.mrb[0].mxu0
        %v6332 = vadd.f32 %v5572, %v6331
        %v6333 = vpop.f32.mrb[0].mxu0
        %v6334 = vadd.f32 %v5568, %v6333
        %v6335 = vpop.f32.mrb[0].mxu0
        %v6336 = vadd.f32 %v5572, %v6335
        %6337 = vmatprep.mubr.bf16.mxu0 %v5433
        %6338 = vmatmul.mubr.bf16.gmra.mrb[0].mxu0 %v5432
        %v6339 = vpop.f32.mrb[0].mxu0
        %v6340 = vadd.f32 %v5568, %v6339
        %v6341 = vpop.f32.mrb[0].mxu0
        %v6342 = vadd.f32 %v5572, %v6341
        %v6343 = vpop.f32.mrb[0].mxu0
        %v6344 = vadd.f32 %v5568, %v6343
        %v6345 = vpop.f32.mrb[0].mxu0
        %v6346 = vadd.f32 %v5572, %v6345
        %6347 = vmatprep.mubr.bf16.mxu0 %v5435
        %6348 = vmatmul.mubr.bf16.gmra.mrb[0].mxu0 %v5434
        %v6349 = vpop.f32.mrb[0].mxu0
        %v6350 = vadd.f32 %v5568, %v6349
        %v6351 = vpop.f32.mrb[0].mxu0
        %v6352 = vadd.f32 %v5572, %v6351
        %v6353 = vpop.f32.mrb[0].mxu0
        %v6354 = vadd.f32 %v5568, %v6353
        %v6355 = vpop.f32.mrb[0].mxu0
        %v6356 = vadd.f32 %v5572, %v6355
        %6357 = vdwg.mxu0
        %6358 = vmatprep.subr.bf16.mxu0 %v5992
        %6359 = vmatpush1.bf16.msra.mxu0 %v5991
        %6360 = vmatprep.subr.bf16.mxu0 %v6000
        %6361 = vmatpush1.bf16.msra.mxu0 %v5999
        %6362 = vmatprep.subr.bf16.mxu0 %v6008
        %6363 = vmatpush1.bf16.msra.mxu0 %v6007
        %6364 = vmatprep.subr.bf16.mxu0 %v6016
        %6365 = vmatpush1.bf16.msra.mxu0 %v6015
        %6366 = vmatprep.subr.bf16.mxu0 %v6024
        %6367 = vmatpush1.bf16.msra.mxu0 %v6023
        %6368 = vmatprep.subr.bf16.mxu0 %v6032
        %6369 = vmatpush1.bf16.msra.mxu0 %v6031
        %6370 = vmatprep.subr.bf16.mxu0 %v6040
        %6371 = vmatpush1.bf16.msra.mxu0 %v6039
        %6372 = vmatprep.subr.bf16.mxu0 %v6048
        %6373 = vmatpush1.bf16.msra.mxu0 %v6047
        %6374 = vmatprep.subr.bf16.mxu0 %v6056
        %6375 = vmatpush1.bf16.msra.mxu0 %v6055
        %6376 = vmatprep.subr.bf16.mxu0 %v6064
        %6377 = vmatpush1.bf16.msra.mxu0 %v6063
        %6378 = vmatprep.subr.bf16.mxu0 %v6072
        %6379 = vmatpush1.bf16.msra.mxu0 %v6071
        %6380 = vmatprep.subr.bf16.mxu0 %v6080
        %6381 = vmatpush1.bf16.msra.mxu0 %v6079
        %6382 = vmatprep.subr.bf16.mxu0 %v6088
        %6383 = vmatpush1.bf16.msra.mxu0 %v6087
        %6384 = vmatprep.subr.bf16.mxu0 %v6096
        %6385 = vmatpush1.bf16.msra.mxu0 %v6095
        %6386 = vmatprep.subr.bf16.mxu0 %v6104
        %6387 = vmatpush1.bf16.msra.mxu0 %v6103
        %6388 = vmatprep.subr.bf16.mxu0 %v6112
        %6389 = vmatpush1.bf16.msra.mxu0 %v6111
        %6390 = vmatprep.mubr.bf16.mxu0 %v5421
        %6391 = vmatmul.mubr.bf16.gmra.mrb[0].mxu0 %v5420
        %v6392 = vpop.f32.mrb[0].mxu0
        %v6393 = vadd.f32 %v5576, %v6392
        %v6394 = vpop.f32.mrb[0].mxu0
        %v6395 = vadd.f32 %v5580, %v6394
        %v6396 = vpop.f32.mrb[0].mxu0
        %v6397 = vadd.f32 %v5576, %v6396
        %v6398 = vpop.f32.mrb[0].mxu0
        %v6399 = vadd.f32 %v5580, %v6398
        %6400 = vmatprep.mubr.bf16.mxu0 %v5423
        %6401 = vmatmul.mubr.bf16.gmra.mrb[0].mxu0 %v5422
        %v6402 = vpop.f32.mrb[0].mxu0
        %v6403 = vadd.f32 %v5576, %v6402
        %v6404 = vpop.f32.mrb[0].mxu0
        %v6405 = vadd.f32 %v5580, %v6404
        %v6406 = vpop.f32.mrb[0].mxu0
        %v6407 = vadd.f32 %v5576, %v6406
        %v6408 = vpop.f32.mrb[0].mxu0
        %v6409 = vadd.f32 %v5580, %v6408
        %6410 = vmatprep.mubr.bf16.mxu0 %v5425
        %6411 = vmatmul.mubr.bf16.gmra.mrb[0].mxu0 %v5424
        %v6412 = vpop.f32.mrb[0].mxu0
        %v6413 = vadd.f32 %v5576, %v6412
        %v6414 = vpop.f32.mrb[0].mxu0
        %v6415 = vadd.f32 %v5580, %v6414
        %v6416 = vpop.f32.mrb[0].mxu0
        %v6417 = vadd.f32 %v5576, %v6416
        %v6418 = vpop.f32.mrb[0].mxu0
        %v6419 = vadd.f32 %v5580, %v6418
        %6420 = vmatprep.mubr.bf16.mxu0 %v5427
        %6421 = vmatmul.mubr.bf16.gmra.mrb[0].mxu0 %v5426
        %v6422 = vpop.f32.mrb[0].mxu0
        %v6423 = vadd.f32 %v5576, %v6422
        %v6424 = vpop.f32.mrb[0].mxu0
        %v6425 = vadd.f32 %v5580, %v6424
        %v6426 = vpop.f32.mrb[0].mxu0
        %v6427 = vadd.f32 %v5576, %v6426
        %v6428 = vpop.f32.mrb[0].mxu0
        %v6429 = vadd.f32 %v5580, %v6428
        %6430 = vmatprep.mubr.bf16.mxu0 %v5429
        %6431 = vmatmul.mubr.bf16.gmra.mrb[0].mxu0 %v5428
        %v6432 = vpop.f32.mrb[0].mxu0
        %v6433 = vadd.f32 %v5576, %v6432
        %v6434 = vpop.f32.mrb[0].mxu0
        %v6435 = vadd.f32 %v5580, %v6434
        %v6436 = vpop.f32.mrb[0].mxu0
        %v6437 = vadd.f32 %v5576, %v6436
        %v6438 = vpop.f32.mrb[0].mxu0
        %v6439 = vadd.f32 %v5580, %v6438
        %6440 = vmatprep.mubr.bf16.mxu0 %v5431
        %6441 = vmatmul.mubr.bf16.gmra.mrb[0].mxu0 %v5430
        %v6442 = vpop.f32.mrb[0].mxu0
        %v6443 = vadd.f32 %v5576, %v6442
        %v6444 = vpop.f32.mrb[0].mxu0
        %v6445 = vadd.f32 %v5580, %v6444
        %v6446 = vpop.f32.mrb[0].mxu0
        %v6447 = vadd.f32 %v5576, %v6446
        %v6448 = vpop.f32.mrb[0].mxu0
        %v6449 = vadd.f32 %v5580, %v6448
        %6450 = vmatprep.mubr.bf16.mxu0 %v5433
        %6451 = vmatmul.mubr.bf16.gmra.mrb[0].mxu0 %v5432
        %v6452 = vpop.f32.mrb[0].mxu0
        %v6453 = vadd.f32 %v5576, %v6452
        %v6454 = vpop.f32.mrb[0].mxu0
        %v6455 = vadd.f32 %v5580, %v6454
        %v6456 = vpop.f32.mrb[0].mxu0
        %v6457 = vadd.f32 %v5576, %v6456
        %v6458 = vpop.f32.mrb[0].mxu0
        %v6459 = vadd.f32 %v5580, %v6458
        %6460 = vmatprep.mubr.bf16.mxu0 %v5435
        %6461 = vmatmul.mubr.bf16.gmra.mrb[0].mxu0 %v5434
        %v6462 = vpop.f32.mrb[0].mxu0
        %v6463 = vadd.f32 %v5576, %v6462
        %v6464 = vpop.f32.mrb[0].mxu0
        %v6465 = vadd.f32 %v5580, %v6464
        %v6466 = vpop.f32.mrb[0].mxu0
        %v6467 = vadd.f32 %v5576, %v6466
        %v6468 = vpop.f32.mrb[0].mxu0
        %v6469 = vadd.f32 %v5580, %v6468
        %6470 = vdwg.mxu0
        %6471 = vmatprep.subr.bf16.mxu0 %v5994
        %6472 = vmatpush1.bf16.msra.mxu0 %v5993
        %6473 = vmatprep.subr.bf16.mxu0 %v6002
        %6474 = vmatpush1.bf16.msra.mxu0 %v6001
        %6475 = vmatprep.subr.bf16.mxu0 %v6010
        %6476 = vmatpush1.bf16.msra.mxu0 %v6009
        %6477 = vmatprep.subr.bf16.mxu0 %v6018
        %6478 = vmatpush1.bf16.msra.mxu0 %v6017
        %6479 = vmatprep.subr.bf16.mxu0 %v6026
        %6480 = vmatpush1.bf16.msra.mxu0 %v6025
        %6481 = vmatprep.subr.bf16.mxu0 %v6034
        %6482 = vmatpush1.bf16.msra.mxu0 %v6033
        %6483 = vmatprep.subr.bf16.mxu0 %v6042
        %6484 = vmatpush1.bf16.msra.mxu0 %v6041
        %6485 = vmatprep.subr.bf16.mxu0 %v6050
        %6486 = vmatpush1.bf16.msra.mxu0 %v6049
        %6487 = vmatprep.subr.bf16.mxu0 %v6058
        %6488 = vmatpush1.bf16.msra.mxu0 %v6057
        %6489 = vmatprep.subr.bf16.mxu0 %v6066
        %6490 = vmatpush1.bf16.msra.mxu0 %v6065
        %6491 = vmatprep.subr.bf16.mxu0 %v6074
        %6492 = vmatpush1.bf16.msra.mxu0 %v6073
        %6493 = vmatprep.subr.bf16.mxu0 %v6082
        %6494 = vmatpush1.bf16.msra.mxu0 %v6081
        %6495 = vmatprep.subr.bf16.mxu0 %v6090
        %6496 = vmatpush1.bf16.msra.mxu0 %v6089
        %6497 = vmatprep.subr.bf16.mxu0 %v6098
        %6498 = vmatpush1.bf16.msra.mxu0 %v6097
        %6499 = vmatprep.subr.bf16.mxu0 %v6106
        %6500 = vmatpush1.bf16.msra.mxu0 %v6105
        %6501 = vmatprep.subr.bf16.mxu0 %v6114
        %6502 = vmatpush1.bf16.msra.mxu0 %v6113
        %6503 = vmatprep.mubr.bf16.mxu0 %v5421
        %6504 = vmatmul.mubr.bf16.gmra.mrb[0].mxu0 %v5420
        %v6505 = vpop.f32.mrb[0].mxu0
        %v6506 = vadd.f32 %v5584, %v6505
        %v6507 = vpop.f32.mrb[0].mxu0
        %v6508 = vadd.f32 %v5588, %v6507
        %v6509 = vpop.f32.mrb[0].mxu0
        %v6510 = vadd.f32 %v5584, %v6509
        %v6511 = vpop.f32.mrb[0].mxu0
        %v6512 = vadd.f32 %v5588, %v6511
        %6513 = vmatprep.mubr.bf16.mxu0 %v5423
        %6514 = vmatmul.mubr.bf16.gmra.mrb[0].mxu0 %v5422
        %v6515 = vpop.f32.mrb[0].mxu0
        %v6516 = vadd.f32 %v5584, %v6515
        %v6517 = vpop.f32.mrb[0].mxu0
        %v6518 = vadd.f32 %v5588, %v6517
        %v6519 = vpop.f32.mrb[0].mxu0
        %v6520 = vadd.f32 %v5584, %v6519
        %v6521 = vpop.f32.mrb[0].mxu0
        %v6522 = vadd.f32 %v5588, %v6521
        %6523 = vmatprep.mubr.bf16.mxu0 %v5425
        %6524 = vmatmul.mubr.bf16.gmra.mrb[0].mxu0 %v5424
        %v6525 = vpop.f32.mrb[0].mxu0
        %v6526 = vadd.f32 %v5584, %v6525
        %v6527 = vpop.f32.mrb[0].mxu0
        %v6528 = vadd.f32 %v5588, %v6527
        %v6529 = vpop.f32.mrb[0].mxu0
        %v6530 = vadd.f32 %v5584, %v6529
        %v6531 = vpop.f32.mrb[0].mxu0
        %v6532 = vadd.f32 %v5588, %v6531
        %6533 = vmatprep.mubr.bf16.mxu0 %v5427
        %6534 = vmatmul.mubr.bf16.gmra.mrb[0].mxu0 %v5426
        %v6535 = vpop.f32.mrb[0].mxu0
        %v6536 = vadd.f32 %v5584, %v6535
        %v6537 = vpop.f32.mrb[0].mxu0
        %v6538 = vadd.f32 %v5588, %v6537
        %v6539 = vpop.f32.mrb[0].mxu0
        %v6540 = vadd.f32 %v5584, %v6539
        %v6541 = vpop.f32.mrb[0].mxu0
        %v6542 = vadd.f32 %v5588, %v6541
        %6543 = vmatprep.mubr.bf16.mxu0 %v5429
        %6544 = vmatmul.mubr.bf16.gmra.mrb[0].mxu0 %v5428
        %v6545 = vpop.f32.mrb[0].mxu0
        %v6546 = vadd.f32 %v5584, %v6545
        %v6547 = vpop.f32.mrb[0].mxu0
        %v6548 = vadd.f32 %v5588, %v6547
        %v6549 = vpop.f32.mrb[0].mxu0
        %v6550 = vadd.f32 %v5584, %v6549
        %v6551 = vpop.f32.mrb[0].mxu0
        %v6552 = vadd.f32 %v5588, %v6551
        %6553 = vmatprep.mubr.bf16.mxu0 %v5431
        %6554 = vmatmul.mubr.bf16.gmra.mrb[0].mxu0 %v5430
        %v6555 = vpop.f32.mrb[0].mxu0
        %v6556 = vadd.f32 %v5584, %v6555
        %v6557 = vpop.f32.mrb[0].mxu0
        %v6558 = vadd.f32 %v5588, %v6557
        %v6559 = vpop.f32.mrb[0].mxu0
        %v6560 = vadd.f32 %v5584, %v6559
        %v6561 = vpop.f32.mrb[0].mxu0
        %v6562 = vadd.f32 %v5588, %v6561
        %6563 = vmatprep.mubr.bf16.mxu0 %v5433
        %6564 = vmatmul.mubr.bf16.gmra.mrb[0].mxu0 %v5432
        %v6565 = vpop.f32.mrb[0].mxu0
        %v6566 = vadd.f32 %v5584, %v6565
        %v6567 = vpop.f32.mrb[0].mxu0
        %v6568 = vadd.f32 %v5588, %v6567
        %v6569 = vpop.f32.mrb[0].mxu0
        %v6570 = vadd.f32 %v5584, %v6569
        %v6571 = vpop.f32.mrb[0].mxu0
        %v6572 = vadd.f32 %v5588, %v6571
        %6573 = vmatprep.mubr.bf16.mxu0 %v5435
        %6574 = vmatmul.mubr.bf16.gmra.mrb[0].mxu0 %v5434
        %v6575 = vpop.f32.mrb[0].mxu0
        %v6576 = vadd.f32 %v5584, %v6575
        %v6577 = vpop.f32.mrb[0].mxu0
        %v6578 = vadd.f32 %v5588, %v6577
        %v6579 = vpop.f32.mrb[0].mxu0
        %v6580 = vadd.f32 %v5584, %v6579
        %v6581 = vpop.f32.mrb[0].mxu0
        %v6582 = vadd.f32 %v5588, %v6581
        %6583 = vdwg.mxu0
        %6584 = vmatprep.subr.bf16.mxu0 %v5996
        %6585 = vmatpush1.bf16.msra.mxu0 %v5995
        %6586 = vmatprep.subr.bf16.mxu0 %v6004
        %6587 = vmatpush1.bf16.msra.mxu0 %v6003
        %6588 = vmatprep.subr.bf16.mxu0 %v6012
        %6589 = vmatpush1.bf16.msra.mxu0 %v6011
        %6590 = vmatprep.subr.bf16.mxu0 %v6020
        %6591 = vmatpush1.bf16.msra.mxu0 %v6019
        %6592 = vmatprep.subr.bf16.mxu0 %v6028
        %6593 = vmatpush1.bf16.msra.mxu0 %v6027
        %6594 = vmatprep.subr.bf16.mxu0 %v6036
        %6595 = vmatpush1.bf16.msra.mxu0 %v6035
        %6596 = vmatprep.subr.bf16.mxu0 %v6044
        %6597 = vmatpush1.bf16.msra.mxu0 %v6043
        %6598 = vmatprep.subr.bf16.mxu0 %v6052
        %6599 = vmatpush1.bf16.msra.mxu0 %v6051
        %6600 = vmatprep.subr.bf16.mxu0 %v6060
        %6601 = vmatpush1.bf16.msra.mxu0 %v6059
        %6602 = vmatprep.subr.bf16.mxu0 %v6068
        %6603 = vmatpush1.bf16.msra.mxu0 %v6067
        %6604 = vmatprep.subr.bf16.mxu0 %v6076
        %6605 = vmatpush1.bf16.msra.mxu0 %v6075
        %6606 = vmatprep.subr.bf16.mxu0 %v6084
        %6607 = vmatpush1.bf16.msra.mxu0 %v6083
        %6608 = vmatprep.subr.bf16.mxu0 %v6092
        %6609 = vmatpush1.bf16.msra.mxu0 %v6091
        %6610 = vmatprep.subr.bf16.mxu0 %v6100
        %6611 = vmatpush1.bf16.msra.mxu0 %v6099
        %6612 = vmatprep.subr.bf16.mxu0 %v6108
        %6613 = vmatpush1.bf16.msra.mxu0 %v6107
        %6614 = vmatprep.subr.bf16.mxu0 %v6116
        %6615 = vmatpush1.bf16.msra.mxu0 %v6115
        %6616 = vmatprep.mubr.bf16.mxu0 %v5421
        %6617 = vmatmul.mubr.bf16.gmra.mrb[0].mxu0 %v5420
        %v6618 = vpop.f32.mrb[0].mxu0
        %v6619 = vadd.f32 %v5592, %v6618
        %v6620 = vpop.f32.mrb[0].mxu0
        %v6621 = vadd.f32 %v5596, %v6620
        %v6622 = vpop.f32.mrb[0].mxu0
        %v6623 = vadd.f32 %v5592, %v6622
        %v6624 = vpop.f32.mrb[0].mxu0
        %v6625 = vadd.f32 %v5596, %v6624
        %6626 = vmatprep.mubr.bf16.mxu0 %v5423
        %6627 = vmatmul.mubr.bf16.gmra.mrb[0].mxu0 %v5422
        %v6628 = vpop.f32.mrb[0].mxu0
        %v6629 = vadd.f32 %v5592, %v6628
        %v6630 = vpop.f32.mrb[0].mxu0
        %v6631 = vadd.f32 %v5596, %v6630
        %v6632 = vpop.f32.mrb[0].mxu0
        %v6633 = vadd.f32 %v5592, %v6632
        %v6634 = vpop.f32.mrb[0].mxu0
        %v6635 = vadd.f32 %v5596, %v6634
        %6636 = vmatprep.mubr.bf16.mxu0 %v5425
        %6637 = vmatmul.mubr.bf16.gmra.mrb[0].mxu0 %v5424
        %v6638 = vpop.f32.mrb[0].mxu0
        %v6639 = vadd.f32 %v5592, %v6638
        %v6640 = vpop.f32.mrb[0].mxu0
        %v6641 = vadd.f32 %v5596, %v6640
        %v6642 = vpop.f32.mrb[0].mxu0
        %v6643 = vadd.f32 %v5592, %v6642
        %v6644 = vpop.f32.mrb[0].mxu0
        %v6645 = vadd.f32 %v5596, %v6644
        %6646 = vmatprep.mubr.bf16.mxu0 %v5427
        %6647 = vmatmul.mubr.bf16.gmra.mrb[0].mxu0 %v5426
        %v6648 = vpop.f32.mrb[0].mxu0
        %v6649 = vadd.f32 %v5592, %v6648
        %v6650 = vpop.f32.mrb[0].mxu0
        %v6651 = vadd.f32 %v5596, %v6650
        %v6652 = vpop.f32.mrb[0].mxu0
        %v6653 = vadd.f32 %v5592, %v6652
        %v6654 = vpop.f32.mrb[0].mxu0
        %v6655 = vadd.f32 %v5596, %v6654
        %6656 = vmatprep.mubr.bf16.mxu0 %v5429
        %6657 = vmatmul.mubr.bf16.gmra.mrb[0].mxu0 %v5428
        %v6658 = vpop.f32.mrb[0].mxu0
        %v6659 = vadd.f32 %v5592, %v6658
        %v6660 = vpop.f32.mrb[0].mxu0
        %v6661 = vadd.f32 %v5596, %v6660
        %v6662 = vpop.f32.mrb[0].mxu0
        %v6663 = vadd.f32 %v5592, %v6662
        %v6664 = vpop.f32.mrb[0].mxu0
        %v6665 = vadd.f32 %v5596, %v6664
        %6666 = vmatprep.mubr.bf16.mxu0 %v5431
        %6667 = vmatmul.mubr.bf16.gmra.mrb[0].mxu0 %v5430
        %v6668 = vpop.f32.mrb[0].mxu0
        %v6669 = vadd.f32 %v5592, %v6668
        %v6670 = vpop.f32.mrb[0].mxu0
        %v6671 = vadd.f32 %v5596, %v6670
        %v6672 = vpop.f32.mrb[0].mxu0
        %v6673 = vadd.f32 %v5592, %v6672
        %v6674 = vpop.f32.mrb[0].mxu0
        %v6675 = vadd.f32 %v5596, %v6674
        %6676 = vmatprep.mubr.bf16.mxu0 %v5433
        %6677 = vmatmul.mubr.bf16.gmra.mrb[0].mxu0 %v5432
        %v6678 = vpop.f32.mrb[0].mxu0
        %v6679 = vadd.f32 %v5592, %v6678
        %v6680 = vpop.f32.mrb[0].mxu0
        %v6681 = vadd.f32 %v5596, %v6680
        %v6682 = vpop.f32.mrb[0].mxu0
        %v6683 = vadd.f32 %v5592, %v6682
        %v6684 = vpop.f32.mrb[0].mxu0
        %v6685 = vadd.f32 %v5596, %v6684
        %6686 = vmatprep.mubr.bf16.mxu0 %v5435
        %6687 = vmatmul.mubr.bf16.gmra.mrb[0].mxu0 %v5434
        %v6688 = vpop.f32.mrb[0].mxu0
        %v6689 = vadd.f32 %v5592, %v6688
        %v6690 = vpop.f32.mrb[0].mxu0
        %v6691 = vadd.f32 %v5596, %v6690
        %v6692 = vpop.f32.mrb[0].mxu0
        %v6693 = vadd.f32 %v5592, %v6692
        %v6694 = vpop.f32.mrb[0].mxu0
        %v6695 = vadd.f32 %v5596, %v6694
        %6696 = vdwg.mxu0
        %v6697 = vmul.f32 %v6280, 0.5
        %v6698 = vmul.f32 %v6282, 0.5
        %v6699 = vmul.f32 %v6393, 0.5
        %v6700 = vmul.f32 %v6395, 0.5
        %v6701 = vmul.f32 %v6506, 0.5
        %v6702 = vmul.f32 %v6508, 0.5
        %v6703 = vmul.f32 %v6619, 0.5
        %v6704 = vmul.f32 %v6621, 0.5
        %v6705 = vmul.f32 %v6284, 0.5
        %v6706 = vmul.f32 %v6286, 0.5
        %v6707 = vmul.f32 %v6397, 0.5
        %v6708 = vmul.f32 %v6399, 0.5
        %v6709 = vmul.f32 %v6510, 0.5
        %v6710 = vmul.f32 %v6512, 0.5
        %v6711 = vmul.f32 %v6623, 0.5
        %v6712 = vmul.f32 %v6625, 0.5
        %v6713 = vmul.f32 %v6290, 0.5
        %v6714 = vmul.f32 %v6292, 0.5
        %v6715 = vmul.f32 %v6403, 0.5
        %v6716 = vmul.f32 %v6405, 0.5
        %v6717 = vmul.f32 %v6516, 0.5
        %v6718 = vmul.f32 %v6518, 0.5
        %v6719 = vmul.f32 %v6629, 0.5
        %v6720 = vmul.f32 %v6631, 0.5
        %v6721 = vmul.f32 %v6294, 0.5
        %v6722 = vmul.f32 %v6296, 0.5
        %v6723 = vmul.f32 %v6407, 0.5
        %v6724 = vmul.f32 %v6409, 0.5
        %v6725 = vmul.f32 %v6520, 0.5
        %v6726 = vmul.f32 %v6522, 0.5
        %v6727 = vmul.f32 %v6633, 0.5
        %v6728 = vmul.f32 %v6635, 0.5
        %v6729 = vmul.f32 %v6300, 0.5
        %v6730 = vmul.f32 %v6302, 0.5
        %v6731 = vmul.f32 %v6413, 0.5
        %v6732 = vmul.f32 %v6415, 0.5
        %v6733 = vmul.f32 %v6526, 0.5
        %v6734 = vmul.f32 %v6528, 0.5
        %v6735 = vmul.f32 %v6639, 0.5
        %v6736 = vmul.f32 %v6641, 0.5
        %v6737 = vmul.f32 %v6304, 0.5
        %v6738 = vmul.f32 %v6306, 0.5
        %v6739 = vmul.f32 %v6417, 0.5
        %v6740 = vmul.f32 %v6419, 0.5
        %v6741 = vmul.f32 %v6530, 0.5
        %v6742 = vmul.f32 %v6532, 0.5
        %v6743 = vmul.f32 %v6643, 0.5
        %v6744 = vmul.f32 %v6645, 0.5
        %v6745 = vmul.f32 %v6310, 0.5
        %v6746 = vmul.f32 %v6312, 0.5
        %v6747 = vmul.f32 %v6423, 0.5
        %v6748 = vmul.f32 %v6425, 0.5
        %v6749 = vmul.f32 %v6536, 0.5
        %v6750 = vmul.f32 %v6538, 0.5
        %v6751 = vmul.f32 %v6649, 0.5
        %v6752 = vmul.f32 %v6651, 0.5
        %v6753 = vmul.f32 %v6314, 0.5
        %v6754 = vmul.f32 %v6316, 0.5
        %v6755 = vmul.f32 %v6427, 0.5
        %v6756 = vmul.f32 %v6429, 0.5
        %v6757 = vmul.f32 %v6540, 0.5
        %v6758 = vmul.f32 %v6542, 0.5
        %v6759 = vmul.f32 %v6653, 0.5
        %v6760 = vmul.f32 %v6655, 0.5
        %v6761 = vmul.f32 %v6320, 0.5
        %v6762 = vmul.f32 %v6322, 0.5
        %v6763 = vmul.f32 %v6433, 0.5
        %v6764 = vmul.f32 %v6435, 0.5
        %v6765 = vmul.f32 %v6546, 0.5
        %v6766 = vmul.f32 %v6548, 0.5
        %v6767 = vmul.f32 %v6659, 0.5
        %v6768 = vmul.f32 %v6661, 0.5
        %v6769 = vmul.f32 %v6324, 0.5
        %v6770 = vmul.f32 %v6326, 0.5
        %v6771 = vmul.f32 %v6437, 0.5
        %v6772 = vmul.f32 %v6439, 0.5
        %v6773 = vmul.f32 %v6550, 0.5
        %v6774 = vmul.f32 %v6552, 0.5
        %v6775 = vmul.f32 %v6663, 0.5
        %v6776 = vmul.f32 %v6665, 0.5
        %v6777 = vmul.f32 %v6330, 0.5
        %v6778 = vmul.f32 %v6332, 0.5
        %v6779 = vmul.f32 %v6443, 0.5
        %v6780 = vmul.f32 %v6445, 0.5
        %v6781 = vmul.f32 %v6556, 0.5
        %v6782 = vmul.f32 %v6558, 0.5
        %v6783 = vmul.f32 %v6669, 0.5
        %v6784 = vmul.f32 %v6671, 0.5
        %v6785 = vmul.f32 %v6334, 0.5
        %v6786 = vmul.f32 %v6336, 0.5
        %v6787 = vmul.f32 %v6447, 0.5
        %v6788 = vmul.f32 %v6449, 0.5
        %v6789 = vmul.f32 %v6560, 0.5
        %v6790 = vmul.f32 %v6562, 0.5
        %v6791 = vmul.f32 %v6673, 0.5
        %v6792 = vmul.f32 %v6675, 0.5
        %v6793 = vmul.f32 %v6340, 0.5
        %v6794 = vmul.f32 %v6342, 0.5
        %v6795 = vmul.f32 %v6453, 0.5
        %v6796 = vmul.f32 %v6455, 0.5
        %v6797 = vmul.f32 %v6566, 0.5
        %v6798 = vmul.f32 %v6568, 0.5
        %v6799 = vmul.f32 %v6679, 0.5
        %v6800 = vmul.f32 %v6681, 0.5
        %v6801 = vmul.f32 %v6344, 0.5
        %v6802 = vmul.f32 %v6346, 0.5
        %v6803 = vmul.f32 %v6457, 0.5
        %v6804 = vmul.f32 %v6459, 0.5
        %v6805 = vmul.f32 %v6570, 0.5
        %v6806 = vmul.f32 %v6572, 0.5
        %v6807 = vmul.f32 %v6683, 0.5
        %v6808 = vmul.f32 %v6685, 0.5
        %v6809 = vmul.f32 %v6350, 0.5
        %v6810 = vmul.f32 %v6352, 0.5
        %v6811 = vmul.f32 %v6463, 0.5
        %v6812 = vmul.f32 %v6465, 0.5
        %v6813 = vmul.f32 %v6576, 0.5
        %v6814 = vmul.f32 %v6578, 0.5
        %v6815 = vmul.f32 %v6689, 0.5
        %v6816 = vmul.f32 %v6691, 0.5
        %v6817 = vmul.f32 %v6354, 0.5
        %v6818 = vmul.f32 %v6356, 0.5
        %v6819 = vmul.f32 %v6467, 0.5
        %v6820 = vmul.f32 %v6469, 0.5
        %v6821 = vmul.f32 %v6580, 0.5
        %v6822 = vmul.f32 %v6582, 0.5
        %v6823 = vmul.f32 %v6693, 0.5
        %v6824 = vmul.f32 %v6695, 0.5
        %v6825 = vmul.f32 %v6280, 0.70710677
        %v6826 = vmul.f32 %v6282, 0.70710677
        %v6827 = vmul.f32 %v6393, 0.70710677
        %v6828 = vmul.f32 %v6395, 0.70710677
        %v6829 = vmul.f32 %v6506, 0.70710677
        %v6830 = vmul.f32 %v6508, 0.70710677
        %v6831 = vmul.f32 %v6619, 0.70710677
        %v6832 = vmul.f32 %v6621, 0.70710677
        %v6833 = vmul.f32 %v6284, 0.70710677
        %v6834 = vmul.f32 %v6286, 0.70710677
        %v6835 = vmul.f32 %v6397, 0.70710677
        %v6836 = vmul.f32 %v6399, 0.70710677
        %v6837 = vmul.f32 %v6510, 0.70710677
        %v6838 = vmul.f32 %v6512, 0.70710677
        %v6839 = vmul.f32 %v6623, 0.70710677
        %v6840 = vmul.f32 %v6625, 0.70710677
        %v6841 = vmul.f32 %v6290, 0.70710677
        %v6842 = vmul.f32 %v6292, 0.70710677
        %v6843 = vmul.f32 %v6403, 0.70710677
        %v6844 = vmul.f32 %v6405, 0.70710677
        %v6845 = vmul.f32 %v6516, 0.70710677
        %v6846 = vmul.f32 %v6518, 0.70710677
        %v6847 = vmul.f32 %v6629, 0.70710677
        %v6848 = vmul.f32 %v6631, 0.70710677
        %v6849 = vmul.f32 %v6294, 0.70710677
        %v6850 = vmul.f32 %v6296, 0.70710677
        %v6851 = vmul.f32 %v6407, 0.70710677
        %v6852 = vmul.f32 %v6409, 0.70710677
        %v6853 = vmul.f32 %v6520, 0.70710677
        %v6854 = vmul.f32 %v6522, 0.70710677
        %v6855 = vmul.f32 %v6633, 0.70710677
        %v6856 = vmul.f32 %v6635, 0.70710677
        %v6857 = vmul.f32 %v6300, 0.70710677
        %v6858 = vmul.f32 %v6302, 0.70710677
        %v6859 = vmul.f32 %v6413, 0.70710677
        %v6860 = vmul.f32 %v6415, 0.70710677
        %v6861 = vmul.f32 %v6526, 0.70710677
        %v6862 = vmul.f32 %v6528, 0.70710677
        %v6863 = vmul.f32 %v6639, 0.70710677
        %v6864 = vmul.f32 %v6641, 0.70710677
        %v6865 = vmul.f32 %v6304, 0.70710677
        %v6866 = vmul.f32 %v6306, 0.70710677
        %v6867 = vmul.f32 %v6417, 0.70710677
        %v6868 = vmul.f32 %v6419, 0.70710677
        %v6869 = vmul.f32 %v6530, 0.70710677
        %v6870 = vmul.f32 %v6532, 0.70710677
        %v6871 = vmul.f32 %v6643, 0.70710677
        %v6872 = vmul.f32 %v6645, 0.70710677
        %v6873 = vmul.f32 %v6310, 0.70710677
        %v6874 = vmul.f32 %v6312, 0.70710677
        %v6875 = vmul.f32 %v6423, 0.70710677
        %v6876 = vmul.f32 %v6425, 0.70710677
        %v6877 = vmul.f32 %v6536, 0.70710677
        %v6878 = vmul.f32 %v6538, 0.70710677
        %v6879 = vmul.f32 %v6649, 0.70710677
        %v6880 = vmul.f32 %v6651, 0.70710677
        %v6881 = vmul.f32 %v6314, 0.70710677
        %v6882 = vmul.f32 %v6316, 0.70710677
        %v6883 = vmul.f32 %v6427, 0.70710677
        %v6884 = vmul.f32 %v6429, 0.70710677
        %v6885 = vmul.f32 %v6540, 0.70710677
        %v6886 = vmul.f32 %v6542, 0.70710677
        %v6887 = vmul.f32 %v6653, 0.70710677
        %v6888 = vmul.f32 %v6655, 0.70710677
        %v6889 = vmul.f32 %v6320, 0.70710677
        %v6890 = vmul.f32 %v6322, 0.70710677
        %v6891 = vmul.f32 %v6433, 0.70710677
        %v6892 = vmul.f32 %v6435, 0.70710677
        %v6893 = vmul.f32 %v6546, 0.70710677
        %v6894 = vmul.f32 %v6548, 0.70710677
        %v6895 = vmul.f32 %v6659, 0.70710677
        %v6896 = vmul.f32 %v6661, 0.70710677
        %v6897 = vmul.f32 %v6324, 0.70710677
        %v6898 = vmul.f32 %v6326, 0.70710677
        %v6899 = vmul.f32 %v6437, 0.70710677
        %v6900 = vmul.f32 %v6439, 0.70710677
        %v6901 = vmul.f32 %v6550, 0.70710677
        %v6902 = vmul.f32 %v6552, 0.70710677
        %v6903 = vmul.f32 %v6663, 0.70710677
        %v6904 = vmul.f32 %v6665, 0.70710677
        %v6905 = vmul.f32 %v6330, 0.70710677
        %v6906 = vmul.f32 %v6332, 0.70710677
        %v6907 = vmul.f32 %v6443, 0.70710677
        %v6908 = vmul.f32 %v6445, 0.70710677
        %v6909 = vmul.f32 %v6556, 0.70710677
        %v6910 = vmul.f32 %v6558, 0.70710677
        %v6911 = vmul.f32 %v6669, 0.70710677
        %v6912 = vmul.f32 %v6671, 0.70710677
        %v6913 = vmul.f32 %v6334, 0.70710677
        %v6914 = vmul.f32 %v6336, 0.70710677
        %v6915 = vmul.f32 %v6447, 0.70710677
        %v6916 = vmul.f32 %v6449, 0.70710677
        %v6917 = vmul.f32 %v6560, 0.70710677
        %v6918 = vmul.f32 %v6562, 0.70710677
        %v6919 = vmul.f32 %v6673, 0.70710677
        %v6920 = vmul.f32 %v6675, 0.70710677
        %v6921 = vmul.f32 %v6340, 0.70710677
        %v6922 = vmul.f32 %v6342, 0.70710677
        %v6923 = vmul.f32 %v6453, 0.70710677
        %v6924 = vmul.f32 %v6455, 0.70710677
        %v6925 = vmul.f32 %v6566, 0.70710677
        %v6926 = vmul.f32 %v6568, 0.70710677
        %v6927 = vmul.f32 %v6679, 0.70710677
        %v6928 = vmul.f32 %v6681, 0.70710677
        %v6929 = vmul.f32 %v6344, 0.70710677
        %v6930 = vmul.f32 %v6346, 0.70710677
        %v6931 = vmul.f32 %v6457, 0.70710677
        %v6932 = vmul.f32 %v6459, 0.70710677
        %v6933 = vmul.f32 %v6570, 0.70710677
        %v6934 = vmul.f32 %v6572, 0.70710677
        %v6935 = vmul.f32 %v6683, 0.70710677
        %v6936 = vmul.f32 %v6685, 0.70710677
        %v6937 = vmul.f32 %v6350, 0.70710677
        %v6938 = vmul.f32 %v6352, 0.70710677
        %v6939 = vmul.f32 %v6463, 0.70710677
        %v6940 = vmul.f32 %v6465, 0.70710677
        %v6941 = vmul.f32 %v6576, 0.70710677
        %v6942 = vmul.f32 %v6578, 0.70710677
        %v6943 = vmul.f32 %v6689, 0.70710677
        %v6944 = vmul.f32 %v6691, 0.70710677
        %v6945 = vmul.f32 %v6354, 0.70710677
        %v6946 = vmul.f32 %v6356, 0.70710677
        %v6947 = vmul.f32 %v6467, 0.70710677
        %v6948 = vmul.f32 %v6469, 0.70710677
        %v6949 = vmul.f32 %v6580, 0.70710677
        %v6950 = vmul.f32 %v6582, 0.70710677
        %v6951 = vmul.f32 %v6693, 0.70710677
        %v6952 = vmul.f32 %v6695, 0.70710677
        %v6953 = verf.f32.pop %v6825
        %v6954 = verf.f32.pop %v6826
        %v6955 = verf.f32.pop %v6827
        %v6956 = verf.f32.pop %v6828
        %v6957 = verf.f32.pop %v6829
        %v6958 = verf.f32.pop %v6830
        %v6959 = verf.f32.pop %v6831
        %v6960 = verf.f32.pop %v6832
        %v6961 = verf.f32.pop %v6833
        %v6962 = verf.f32.pop %v6834
        %v6963 = verf.f32.pop %v6835
        %v6964 = verf.f32.pop %v6836
        %v6965 = verf.f32.pop %v6837
        %v6966 = verf.f32.pop %v6838
        %v6967 = verf.f32.pop %v6839
        %v6968 = verf.f32.pop %v6840
        %v6969 = verf.f32.pop %v6841
        %v6970 = verf.f32.pop %v6842
        %v6971 = verf.f32.pop %v6843
        %v6972 = verf.f32.pop %v6844
        %v6973 = verf.f32.pop %v6845
        %v6974 = verf.f32.pop %v6846
        %v6975 = verf.f32.pop %v6847
        %v6976 = verf.f32.pop %v6848
        %v6977 = verf.f32.pop %v6849
        %v6978 = verf.f32.pop %v6850
        %v6979 = verf.f32.pop %v6851
        %v6980 = verf.f32.pop %v6852
        %v6981 = verf.f32.pop %v6853
        %v6982 = verf.f32.pop %v6854
        %v6983 = verf.f32.pop %v6855
        %v6984 = verf.f32.pop %v6856
        %v6985 = verf.f32.pop %v6857
        %v6986 = verf.f32.pop %v6858
        %v6987 = verf.f32.pop %v6859
        %v6988 = verf.f32.pop %v6860
        %v6989 = verf.f32.pop %v6861
        %v6990 = verf.f32.pop %v6862
        %v6991 = verf.f32.pop %v6863
        %v6992 = verf.f32.pop %v6864
        %v6993 = verf.f32.pop %v6865
        %v6994 = verf.f32.pop %v6866
        %v6995 = verf.f32.pop %v6867
        %v6996 = verf.f32.pop %v6868
        %v6997 = verf.f32.pop %v6869
        %v6998 = verf.f32.pop %v6870
        %v6999 = verf.f32.pop %v6871
        %v7000 = verf.f32.pop %v6872
        %v7001 = verf.f32.pop %v6873
        %v7002 = verf.f32.pop %v6874
        %v7003 = verf.f32.pop %v6875
        %v7004 = verf.f32.pop %v6876
        %v7005 = verf.f32.pop %v6877
        %v7006 = verf.f32.pop %v6878
        %v7007 = verf.f32.pop %v6879
        %v7008 = verf.f32.pop %v6880
        %v7009 = verf.f32.pop %v6881
        %v7010 = verf.f32.pop %v6882
        %v7011 = verf.f32.pop %v6883
        %v7012 = verf.f32.pop %v6884
        %v7013 = verf.f32.pop %v6885
        %v7014 = verf.f32.pop %v6886
        %v7015 = verf.f32.pop %v6887
        %v7016 = verf.f32.pop %v6888
        %v7017 = verf.f32.pop %v6889
        %v7018 = verf.f32.pop %v6890
        %v7019 = verf.f32.pop %v6891
        %v7020 = verf.f32.pop %v6892
        %v7021 = verf.f32.pop %v6893
        %v7022 = verf.f32.pop %v6894
        %v7023 = verf.f32.pop %v6895
        %v7024 = verf.f32.pop %v6896
        %v7025 = verf.f32.pop %v6897
        %v7026 = verf.f32.pop %v6898
        %v7027 = verf.f32.pop %v6899
        %v7028 = verf.f32.pop %v6900
        %v7029 = verf.f32.pop %v6901
        %v7030 = verf.f32.pop %v6902
        %v7031 = verf.f32.pop %v6903
        %v7032 = verf.f32.pop %v6904
        %v7033 = verf.f32.pop %v6905
        %v7034 = verf.f32.pop %v6906
        %v7035 = verf.f32.pop %v6907
        %v7036 = verf.f32.pop %v6908
        %v7037 = verf.f32.pop %v6909
        %v7038 = verf.f32.pop %v6910
        %v7039 = verf.f32.pop %v6911
        %v7040 = verf.f32.pop %v6912
        %v7041 = verf.f32.pop %v6913
        %v7042 = verf.f32.pop %v6914
        %v7043 = verf.f32.pop %v6915
        %v7044 = verf.f32.pop %v6916
        %v7045 = verf.f32.pop %v6917
        %v7046 = verf.f32.pop %v6918
        %v7047 = verf.f32.pop %v6919
        %v7048 = verf.f32.pop %v6920
        %v7049 = verf.f32.pop %v6921
        %v7050 = verf.f32.pop %v6922
        %v7051 = verf.f32.pop %v6923
        %v7052 = verf.f32.pop %v6924
        %v7053 = verf.f32.pop %v6925
        %v7054 = verf.f32.pop %v6926
        %v7055 = verf.f32.pop %v6927
        %v7056 = verf.f32.pop %v6928
        %v7057 = verf.f32.pop %v6929
        %v7058 = verf.f32.pop %v6930
        %v7059 = verf.f32.pop %v6931
        %v7060 = verf.f32.pop %v6932
        %v7061 = verf.f32.pop %v6933
        %v7062 = verf.f32.pop %v6934
        %v7063 = verf.f32.pop %v6935
        %v7064 = verf.f32.pop %v6936
        %v7065 = verf.f32.pop %v6937
        %v7066 = verf.f32.pop %v6938
        %v7067 = verf.f32.pop %v6939
        %v7068 = verf.f32.pop %v6940
        %v7069 = verf.f32.pop %v6941
        %v7070 = verf.f32.pop %v6942
        %v7071 = verf.f32.pop %v6943
        %v7072 = verf.f32.pop %v6944
        %v7073 = verf.f32.pop %v6945
        %v7074 = verf.f32.pop %v6946
        %v7075 = verf.f32.pop %v6947
        %v7076 = verf.f32.pop %v6948
        %v7077 = verf.f32.pop %v6949
        %v7078 = verf.f32.pop %v6950
        %v7079 = verf.f32.pop %v6951
        %v7080 = verf.f32.pop %v6952
        %v7081 = vadd.f32 %v6953, 1.0
        %v7082 = vadd.f32 %v6954, 1.0
        %v7083 = vadd.f32 %v6955, 1.0
        %v7084 = vadd.f32 %v6956, 1.0
        %v7085 = vadd.f32 %v6957, 1.0
        %v7086 = vadd.f32 %v6958, 1.0
        %v7087 = vadd.f32 %v6959, 1.0
        %v7088 = vadd.f32 %v6960, 1.0
        %v7089 = vadd.f32 %v6961, 1.0
        %v7090 = vadd.f32 %v6962, 1.0
        %v7091 = vadd.f32 %v6963, 1.0
        %v7092 = vadd.f32 %v6964, 1.0
        %v7093 = vadd.f32 %v6965, 1.0
        %v7094 = vadd.f32 %v6966, 1.0
        %v7095 = vadd.f32 %v6967, 1.0
        %v7096 = vadd.f32 %v6968, 1.0
        %v7097 = vadd.f32 %v6969, 1.0
        %v7098 = vadd.f32 %v6970, 1.0
        %v7099 = vadd.f32 %v6971, 1.0
        %v7100 = vadd.f32 %v6972, 1.0
        %v7101 = vadd.f32 %v6973, 1.0
        %v7102 = vadd.f32 %v6974, 1.0
        %v7103 = vadd.f32 %v6975, 1.0
        %v7104 = vadd.f32 %v6976, 1.0
        %v7105 = vadd.f32 %v6977, 1.0
        %v7106 = vadd.f32 %v6978, 1.0
        %v7107 = vadd.f32 %v6979, 1.0
        %v7108 = vadd.f32 %v6980, 1.0
        %v7109 = vadd.f32 %v6981, 1.0
        %v7110 = vadd.f32 %v6982, 1.0
        %v7111 = vadd.f32 %v6983, 1.0
        %v7112 = vadd.f32 %v6984, 1.0
        %v7113 = vadd.f32 %v6985, 1.0
        %v7114 = vadd.f32 %v6986, 1.0
        %v7115 = vadd.f32 %v6987, 1.0
        %v7116 = vadd.f32 %v6988, 1.0
        %v7117 = vadd.f32 %v6989, 1.0
        %v7118 = vadd.f32 %v6990, 1.0
        %v7119 = vadd.f32 %v6991, 1.0
        %v7120 = vadd.f32 %v6992, 1.0
        %v7121 = vadd.f32 %v6993, 1.0
        %v7122 = vadd.f32 %v6994, 1.0
        %v7123 = vadd.f32 %v6995, 1.0
        %v7124 = vadd.f32 %v6996, 1.0
        %v7125 = vadd.f32 %v6997, 1.0
        %v7126 = vadd.f32 %v6998, 1.0
        %v7127 = vadd.f32 %v6999, 1.0
        %v7128 = vadd.f32 %v7000, 1.0
        %v7129 = vadd.f32 %v7001, 1.0
        %v7130 = vadd.f32 %v7002, 1.0
        %v7131 = vadd.f32 %v7003, 1.0
        %v7132 = vadd.f32 %v7004, 1.0
        %v7133 = vadd.f32 %v7005, 1.0
        %v7134 = vadd.f32 %v7006, 1.0
        %v7135 = vadd.f32 %v7007, 1.0
        %v7136 = vadd.f32 %v7008, 1.0
        %v7137 = vadd.f32 %v7009, 1.0
        %v7138 = vadd.f32 %v7010, 1.0
        %v7139 = vadd.f32 %v7011, 1.0
        %v7140 = vadd.f32 %v7012, 1.0
        %v7141 = vadd.f32 %v7013, 1.0
        %v7142 = vadd.f32 %v7014, 1.0
        %v7143 = vadd.f32 %v7015, 1.0
        %v7144 = vadd.f32 %v7016, 1.0
        %v7145 = vadd.f32 %v7017, 1.0
        %v7146 = vadd.f32 %v7018, 1.0
        %v7147 = vadd.f32 %v7019, 1.0
        %v7148 = vadd.f32 %v7020, 1.0
        %v7149 = vadd.f32 %v7021, 1.0
        %v7150 = vadd.f32 %v7022, 1.0
        %v7151 = vadd.f32 %v7023, 1.0
        %v7152 = vadd.f32 %v7024, 1.0
        %v7153 = vadd.f32 %v7025, 1.0
        %v7154 = vadd.f32 %v7026, 1.0
        %v7155 = vadd.f32 %v7027, 1.0
        %v7156 = vadd.f32 %v7028, 1.0
        %v7157 = vadd.f32 %v7029, 1.0
        %v7158 = vadd.f32 %v7030, 1.0
        %v7159 = vadd.f32 %v7031, 1.0
        %v7160 = vadd.f32 %v7032, 1.0
        %v7161 = vadd.f32 %v7033, 1.0
        %v7162 = vadd.f32 %v7034, 1.0
        %v7163 = vadd.f32 %v7035, 1.0
        %v7164 = vadd.f32 %v7036, 1.0
        %v7165 = vadd.f32 %v7037, 1.0
        %v7166 = vadd.f32 %v7038, 1.0
        %v7167 = vadd.f32 %v7039, 1.0
        %v7168 = vadd.f32 %v7040, 1.0
        %v7169 = vadd.f32 %v7041, 1.0
        %v7170 = vadd.f32 %v7042, 1.0
        %v7171 = vadd.f32 %v7043, 1.0
        %v7172 = vadd.f32 %v7044, 1.0
        %v7173 = vadd.f32 %v7045, 1.0
        %v7174 = vadd.f32 %v7046, 1.0
        %v7175 = vadd.f32 %v7047, 1.0
        %v7176 = vadd.f32 %v7048, 1.0
        %v7177 = vadd.f32 %v7049, 1.0
        %v7178 = vadd.f32 %v7050, 1.0
        %v7179 = vadd.f32 %v7051, 1.0
        %v7180 = vadd.f32 %v7052, 1.0
        %v7181 = vadd.f32 %v7053, 1.0
        %v7182 = vadd.f32 %v7054, 1.0
        %v7183 = vadd.f32 %v7055, 1.0
        %v7184 = vadd.f32 %v7056, 1.0
        %v7185 = vadd.f32 %v7057, 1.0
        %v7186 = vadd.f32 %v7058, 1.0
        %v7187 = vadd.f32 %v7059, 1.0
        %v7188 = vadd.f32 %v7060, 1.0
        %v7189 = vadd.f32 %v7061, 1.0
        %v7190 = vadd.f32 %v7062, 1.0
        %v7191 = vadd.f32 %v7063, 1.0
        %v7192 = vadd.f32 %v7064, 1.0
        %v7193 = vadd.f32 %v7065, 1.0
        %v7194 = vadd.f32 %v7066, 1.0
        %v7195 = vadd.f32 %v7067, 1.0
        %v7196 = vadd.f32 %v7068, 1.0
        %v7197 = vadd.f32 %v7069, 1.0
        %v7198 = vadd.f32 %v7070, 1.0
        %v7199 = vadd.f32 %v7071, 1.0
        %v7200 = vadd.f32 %v7072, 1.0
        %v7201 = vadd.f32 %v7073, 1.0
        %v7202 = vadd.f32 %v7074, 1.0
        %v7203 = vadd.f32 %v7075, 1.0
        %v7204 = vadd.f32 %v7076, 1.0
        %v7205 = vadd.f32 %v7077, 1.0
        %v7206 = vadd.f32 %v7078, 1.0
        %v7207 = vadd.f32 %v7079, 1.0
        %v7208 = vadd.f32 %v7080, 1.0
        %v7209 = vmul.f32 %v6697, %v7081
        %v7210 = vmul.f32 %v6698, %v7082
        %v7211 = vmul.f32 %v6699, %v7083
        %v7212 = vmul.f32 %v6700, %v7084
        %v7213 = vmul.f32 %v6701, %v7085
        %v7214 = vmul.f32 %v6702, %v7086
        %v7215 = vmul.f32 %v6703, %v7087
        %v7216 = vmul.f32 %v6704, %v7088
        %v7217 = vmul.f32 %v6705, %v7089
        %v7218 = vmul.f32 %v6706, %v7090
        %v7219 = vmul.f32 %v6707, %v7091
        %v7220 = vmul.f32 %v6708, %v7092
        %v7221 = vmul.f32 %v6709, %v7093
        %v7222 = vmul.f32 %v6710, %v7094
        %v7223 = vmul.f32 %v6711, %v7095
        %v7224 = vmul.f32 %v6712, %v7096
        %v7225 = vmul.f32 %v6713, %v7097
        %v7226 = vmul.f32 %v6714, %v7098
        %v7227 = vmul.f32 %v6715, %v7099
        %v7228 = vmul.f32 %v6716, %v7100
        %v7229 = vmul.f32 %v6717, %v7101
        %v7230 = vmul.f32 %v6718, %v7102
        %v7231 = vmul.f32 %v6719, %v7103
        %v7232 = vmul.f32 %v6720, %v7104
        %v7233 = vmul.f32 %v6721, %v7105
        %v7234 = vmul.f32 %v6722, %v7106
        %v7235 = vmul.f32 %v6723, %v7107
        %v7236 = vmul.f32 %v6724, %v7108
        %v7237 = vmul.f32 %v6725, %v7109
        %v7238 = vmul.f32 %v6726, %v7110
        %v7239 = vmul.f32 %v6727, %v7111
        %v7240 = vmul.f32 %v6728, %v7112
        %v7241 = vmul.f32 %v6729, %v7113
        %v7242 = vmul.f32 %v6730, %v7114
        %v7243 = vmul.f32 %v6731, %v7115
        %v7244 = vmul.f32 %v6732, %v7116
        %v7245 = vmul.f32 %v6733, %v7117
        %v7246 = vmul.f32 %v6734, %v7118
        %v7247 = vmul.f32 %v6735, %v7119
        %v7248 = vmul.f32 %v6736, %v7120
        %v7249 = vmul.f32 %v6737, %v7121
        %v7250 = vmul.f32 %v6738, %v7122
        %v7251 = vmul.f32 %v6739, %v7123
        %v7252 = vmul.f32 %v6740, %v7124
        %v7253 = vmul.f32 %v6741, %v7125
        %v7254 = vmul.f32 %v6742, %v7126
        %v7255 = vmul.f32 %v6743, %v7127
        %v7256 = vmul.f32 %v6744, %v7128
        %v7257 = vmul.f32 %v6745, %v7129
        %v7258 = vmul.f32 %v6746, %v7130
        %v7259 = vmul.f32 %v6747, %v7131
        %v7260 = vmul.f32 %v6748, %v7132
        %v7261 = vmul.f32 %v6749, %v7133
        %v7262 = vmul.f32 %v6750, %v7134
        %v7263 = vmul.f32 %v6751, %v7135
        %v7264 = vmul.f32 %v6752, %v7136
        %v7265 = vmul.f32 %v6753, %v7137
        %v7266 = vmul.f32 %v6754, %v7138
        %v7267 = vmul.f32 %v6755, %v7139
        %v7268 = vmul.f32 %v6756, %v7140
        %v7269 = vmul.f32 %v6757, %v7141
        %v7270 = vmul.f32 %v6758, %v7142
        %v7271 = vmul.f32 %v6759, %v7143
        %v7272 = vmul.f32 %v6760, %v7144
        %v7273 = vmul.f32 %v6761, %v7145
        %v7274 = vmul.f32 %v6762, %v7146
        %v7275 = vmul.f32 %v6763, %v7147
        %v7276 = vmul.f32 %v6764, %v7148
        %v7277 = vmul.f32 %v6765, %v7149
        %v7278 = vmul.f32 %v6766, %v7150
        %v7279 = vmul.f32 %v6767, %v7151
        %v7280 = vmul.f32 %v6768, %v7152
        %v7281 = vmul.f32 %v6769, %v7153
        %v7282 = vmul.f32 %v6770, %v7154
        %v7283 = vmul.f32 %v6771, %v7155
        %v7284 = vmul.f32 %v6772, %v7156
        %v7285 = vmul.f32 %v6773, %v7157
        %v7286 = vmul.f32 %v6774, %v7158
        %v7287 = vmul.f32 %v6775, %v7159
        %v7288 = vmul.f32 %v6776, %v7160
        %v7289 = vmul.f32 %v6777, %v7161
        %v7290 = vmul.f32 %v6778, %v7162
        %v7291 = vmul.f32 %v6779, %v7163
        %v7292 = vmul.f32 %v6780, %v7164
        %v7293 = vmul.f32 %v6781, %v7165
        %v7294 = vmul.f32 %v6782, %v7166
        %v7295 = vmul.f32 %v6783, %v7167
        %v7296 = vmul.f32 %v6784, %v7168
        %v7297 = vmul.f32 %v6785, %v7169
        %v7298 = vmul.f32 %v6786, %v7170
        %v7299 = vmul.f32 %v6787, %v7171
        %v7300 = vmul.f32 %v6788, %v7172
        %v7301 = vmul.f32 %v6789, %v7173
        %v7302 = vmul.f32 %v6790, %v7174
        %v7303 = vmul.f32 %v6791, %v7175
        %v7304 = vmul.f32 %v6792, %v7176
        %v7305 = vmul.f32 %v6793, %v7177
        %v7306 = vmul.f32 %v6794, %v7178
        %v7307 = vmul.f32 %v6795, %v7179
        %v7308 = vmul.f32 %v6796, %v7180
        %v7309 = vmul.f32 %v6797, %v7181
        %v7310 = vmul.f32 %v6798, %v7182
        %v7311 = vmul.f32 %v6799, %v7183
        %v7312 = vmul.f32 %v6800, %v7184
        %v7313 = vmul.f32 %v6801, %v7185
        %v7314 = vmul.f32 %v6802, %v7186
        %v7315 = vmul.f32 %v6803, %v7187
        %v7316 = vmul.f32 %v6804, %v7188
        %v7317 = vmul.f32 %v6805, %v7189
        %v7318 = vmul.f32 %v6806, %v7190
        %v7319 = vmul.f32 %v6807, %v7191
        %v7320 = vmul.f32 %v6808, %v7192
        %v7321 = vmul.f32 %v6809, %v7193
        %v7322 = vmul.f32 %v6810, %v7194
        %v7323 = vmul.f32 %v6811, %v7195
        %v7324 = vmul.f32 %v6812, %v7196
        %v7325 = vmul.f32 %v6813, %v7197
        %v7326 = vmul.f32 %v6814, %v7198
        %v7327 = vmul.f32 %v6815, %v7199
        %v7328 = vmul.f32 %v6816, %v7200
        %v7329 = vmul.f32 %v6817, %v7201
        %v7330 = vmul.f32 %v6818, %v7202
        %v7331 = vmul.f32 %v6819, %v7203
        %v7332 = vmul.f32 %v6820, %v7204
        %v7333 = vmul.f32 %v6821, %v7205
        %v7334 = vmul.f32 %v6822, %v7206
        %v7335 = vmul.f32 %v6823, %v7207
        %v7336 = vmul.f32 %v6824, %v7208
        %v7337 = vpack.c.bf16 %v7217, %v7209
        %v7338 = vpack.c.bf16 %v7218, %v7210
        %v7339 = vpack.c.bf16 %v7219, %v7211
        %v7340 = vpack.c.bf16 %v7220, %v7212
        %v7341 = vpack.c.bf16 %v7221, %v7213
        %v7342 = vpack.c.bf16 %v7222, %v7214
        %v7343 = vpack.c.bf16 %v7223, %v7215
        %v7344 = vpack.c.bf16 %v7224, %v7216
        %v7345 = vpack.c.bf16 %v7233, %v7225
        %v7346 = vpack.c.bf16 %v7234, %v7226
        %v7347 = vpack.c.bf16 %v7235, %v7227
        %v7348 = vpack.c.bf16 %v7236, %v7228
        %v7349 = vpack.c.bf16 %v7237, %v7229
        %v7350 = vpack.c.bf16 %v7238, %v7230
        %v7351 = vpack.c.bf16 %v7239, %v7231
        %v7352 = vpack.c.bf16 %v7240, %v7232
        %v7353 = vpack.c.bf16 %v7249, %v7241
        %v7354 = vpack.c.bf16 %v7250, %v7242
        %v7355 = vpack.c.bf16 %v7251, %v7243
        %v7356 = vpack.c.bf16 %v7252, %v7244
        %v7357 = vpack.c.bf16 %v7253, %v7245
        %v7358 = vpack.c.bf16 %v7254, %v7246
        %v7359 = vpack.c.bf16 %v7255, %v7247
        %v7360 = vpack.c.bf16 %v7256, %v7248
        %v7361 = vpack.c.bf16 %v7265, %v7257
        %v7362 = vpack.c.bf16 %v7266, %v7258
        %v7363 = vpack.c.bf16 %v7267, %v7259
        %v7364 = vpack.c.bf16 %v7268, %v7260
        %v7365 = vpack.c.bf16 %v7269, %v7261
        %v7366 = vpack.c.bf16 %v7270, %v7262
        %v7367 = vpack.c.bf16 %v7271, %v7263
        %v7368 = vpack.c.bf16 %v7272, %v7264
        %v7369 = vpack.c.bf16 %v7281, %v7273
        %v7370 = vpack.c.bf16 %v7282, %v7274
        %v7371 = vpack.c.bf16 %v7283, %v7275
        %v7372 = vpack.c.bf16 %v7284, %v7276
        %v7373 = vpack.c.bf16 %v7285, %v7277
        %v7374 = vpack.c.bf16 %v7286, %v7278
        %v7375 = vpack.c.bf16 %v7287, %v7279
        %v7376 = vpack.c.bf16 %v7288, %v7280
        %v7377 = vpack.c.bf16 %v7297, %v7289
        %v7378 = vpack.c.bf16 %v7298, %v7290
        %v7379 = vpack.c.bf16 %v7299, %v7291
        %v7380 = vpack.c.bf16 %v7300, %v7292
        %v7381 = vpack.c.bf16 %v7301, %v7293
        %v7382 = vpack.c.bf16 %v7302, %v7294
        %v7383 = vpack.c.bf16 %v7303, %v7295
        %v7384 = vpack.c.bf16 %v7304, %v7296
        %v7385 = vpack.c.bf16 %v7313, %v7305
        %v7386 = vpack.c.bf16 %v7314, %v7306
        %v7387 = vpack.c.bf16 %v7315, %v7307
        %v7388 = vpack.c.bf16 %v7316, %v7308
        %v7389 = vpack.c.bf16 %v7317, %v7309
        %v7390 = vpack.c.bf16 %v7318, %v7310
        %v7391 = vpack.c.bf16 %v7319, %v7311
        %v7392 = vpack.c.bf16 %v7320, %v7312
        %v7393 = vpack.c.bf16 %v7329, %v7321
        %v7394 = vpack.c.bf16 %v7330, %v7322
        %v7395 = vpack.c.bf16 %v7331, %v7323
        %v7396 = vpack.c.bf16 %v7332, %v7324
        %v7397 = vpack.c.bf16 %v7333, %v7325
        %v7398 = vpack.c.bf16 %v7334, %v7326
        %v7399 = vpack.c.bf16 %v7335, %v7327
        %v7400 = vpack.c.bf16 %v7336, %v7328
        %v7401 = vld [vmem:[%s324] sm:$0xff]
        %v7402 = vld [vmem:[%s324 + $0x8] sm:$0xff]
        %v7403 = vld [vmem:[%s324 + $0x10] sm:$0xff]
        %v7404 = vld [vmem:[%s324 + $0x18] sm:$0xff]
        %v7405 = vld [vmem:[%s324 + $0x20] sm:$0xff]
        %v7406 = vld [vmem:[%s324 + $0x28] sm:$0xff]
        %v7407 = vld [vmem:[%s324 + $0x30] sm:$0xff]
        %v7408 = vld [vmem:[%s324 + $0x38] sm:$0xff]
        %v7409 = vld [vmem:[%s324 + $0x40] sm:$0xff]
        %v7410 = vld [vmem:[%s324 + $0x48] sm:$0xff]
        %v7411 = vld [vmem:[%s324 + $0x50] sm:$0xff]
        %v7412 = vld [vmem:[%s324 + $0x58] sm:$0xff]
        %v7413 = vld [vmem:[%s324 + $0x60] sm:$0xff]
        %v7414 = vld [vmem:[%s324 + $0x68] sm:$0xff]
        %v7415 = vld [vmem:[%s324 + $0x70] sm:$0xff]
        %v7416 = vld [vmem:[%s324 + $0x78] sm:$0xff]
        %v7417 = vld [vmem:[%s324 + $0x80] sm:$0xff]
        %v7418 = vld [vmem:[%s324 + $0x88] sm:$0xff]
        %v7419 = vld [vmem:[%s324 + $0x90] sm:$0xff]
        %v7420 = vld [vmem:[%s324 + $0x98] sm:$0xff]
        %v7421 = vld [vmem:[%s324 + $0xa0] sm:$0xff]
        %v7422 = vld [vmem:[%s324 + $0xa8] sm:$0xff]
        %v7423 = vld [vmem:[%s324 + $0xb0] sm:$0xff]
        %v7424 = vld [vmem:[%s324 + $0xb8] sm:$0xff]
        %v7425 = vld [vmem:[%s324 + $0xc0] sm:$0xff]
        %v7426 = vld [vmem:[%s324 + $0xc8] sm:$0xff]
        %v7427 = vld [vmem:[%s324 + $0xd0] sm:$0xff]
        %v7428 = vld [vmem:[%s324 + $0xd8] sm:$0xff]
        %v7429 = vld [vmem:[%s324 + $0xe0] sm:$0xff]
        %v7430 = vld [vmem:[%s324 + $0xe8] sm:$0xff]
        %v7431 = vld [vmem:[%s324 + $0xf0] sm:$0xff]
        %v7432 = vld [vmem:[%s324 + $0xf8] sm:$0xff]
        %v7433 = vld [vmem:[%s324 + $0x100] sm:$0xff]
        %v7434 = vld [vmem:[%s324 + $0x108] sm:$0xff]
        %v7435 = vld [vmem:[%s324 + $0x110] sm:$0xff]
        %v7436 = vld [vmem:[%s324 + $0x118] sm:$0xff]
        %v7437 = vld [vmem:[%s324 + $0x120] sm:$0xff]
        %v7438 = vld [vmem:[%s324 + $0x128] sm:$0xff]
        %v7439 = vld [vmem:[%s324 + $0x130] sm:$0xff]
        %v7440 = vld [vmem:[%s324 + $0x138] sm:$0xff]
        %v7441 = vld [vmem:[%s324 + $0x140] sm:$0xff]
        %v7442 = vld [vmem:[%s324 + $0x148] sm:$0xff]
        %v7443 = vld [vmem:[%s324 + $0x150] sm:$0xff]
        %v7444 = vld [vmem:[%s324 + $0x158] sm:$0xff]
        %v7445 = vld [vmem:[%s324 + $0x160] sm:$0xff]
        %v7446 = vld [vmem:[%s324 + $0x168] sm:$0xff]
        %v7447 = vld [vmem:[%s324 + $0x170] sm:$0xff]
        %v7448 = vld [vmem:[%s324 + $0x178] sm:$0xff]
        %v7449 = vld [vmem:[%s324 + $0x180] sm:$0xff]
        %v7450 = vld [vmem:[%s324 + $0x188] sm:$0xff]
        %v7451 = vld [vmem:[%s324 + $0x190] sm:$0xff]
        %v7452 = vld [vmem:[%s324 + $0x198] sm:$0xff]
        %v7453 = vld [vmem:[%s324 + $0x1a0] sm:$0xff]
        %v7454 = vld [vmem:[%s324 + $0x1a8] sm:$0xff]
        %v7455 = vld [vmem:[%s324 + $0x1b0] sm:$0xff]
        %v7456 = vld [vmem:[%s324 + $0x1b8] sm:$0xff]
        %v7457 = vld [vmem:[%s324 + $0x1c0] sm:$0xff]
        %v7458 = vld [vmem:[%s324 + $0x1c8] sm:$0xff]
        %v7459 = vld [vmem:[%s324 + $0x1d0] sm:$0xff]
        %v7460 = vld [vmem:[%s324 + $0x1d8] sm:$0xff]
        %v7461 = vld [vmem:[%s324 + $0x1e0] sm:$0xff]
        %v7462 = vld [vmem:[%s324 + $0x1e8] sm:$0xff]
        %v7463 = vld [vmem:[%s324 + $0x1f0] sm:$0xff]
        %v7464 = vld [vmem:[%s324 + $0x1f8] sm:$0xff]
        %v7465 = vld [vmem:[%s324 + $0x200] sm:$0xff]
        %v7466 = vld [vmem:[%s324 + $0x208] sm:$0xff]
        %v7467 = vld [vmem:[%s324 + $0x210] sm:$0xff]
        %v7468 = vld [vmem:[%s324 + $0x218] sm:$0xff]
        %v7469 = vld [vmem:[%s324 + $0x220] sm:$0xff]
        %v7470 = vld [vmem:[%s324 + $0x228] sm:$0xff]
        %v7471 = vld [vmem:[%s324 + $0x230] sm:$0xff]
        %v7472 = vld [vmem:[%s324 + $0x238] sm:$0xff]
        %v7473 = vld [vmem:[%s324 + $0x240] sm:$0xff]
        %v7474 = vld [vmem:[%s324 + $0x248] sm:$0xff]
        %v7475 = vld [vmem:[%s324 + $0x250] sm:$0xff]
        %v7476 = vld [vmem:[%s324 + $0x258] sm:$0xff]
        %v7477 = vld [vmem:[%s324 + $0x260] sm:$0xff]
        %v7478 = vld [vmem:[%s324 + $0x268] sm:$0xff]
        %v7479 = vld [vmem:[%s324 + $0x270] sm:$0xff]
        %v7480 = vld [vmem:[%s324 + $0x278] sm:$0xff]
        %v7481 = vld [vmem:[%s324 + $0x280] sm:$0xff]
        %v7482 = vld [vmem:[%s324 + $0x288] sm:$0xff]
        %v7483 = vld [vmem:[%s324 + $0x290] sm:$0xff]
        %v7484 = vld [vmem:[%s324 + $0x298] sm:$0xff]
        %v7485 = vld [vmem:[%s324 + $0x2a0] sm:$0xff]
        %v7486 = vld [vmem:[%s324 + $0x2a8] sm:$0xff]
        %v7487 = vld [vmem:[%s324 + $0x2b0] sm:$0xff]
        %v7488 = vld [vmem:[%s324 + $0x2b8] sm:$0xff]
        %v7489 = vld [vmem:[%s324 + $0x2c0] sm:$0xff]
        %v7490 = vld [vmem:[%s324 + $0x2c8] sm:$0xff]
        %v7491 = vld [vmem:[%s324 + $0x2d0] sm:$0xff]
        %v7492 = vld [vmem:[%s324 + $0x2d8] sm:$0xff]
        %v7493 = vld [vmem:[%s324 + $0x2e0] sm:$0xff]
        %v7494 = vld [vmem:[%s324 + $0x2e8] sm:$0xff]
        %v7495 = vld [vmem:[%s324 + $0x2f0] sm:$0xff]
        %v7496 = vld [vmem:[%s324 + $0x2f8] sm:$0xff]
        %v7497 = vld [vmem:[%s324 + $0x300] sm:$0xff]
        %v7498 = vld [vmem:[%s324 + $0x308] sm:$0xff]
        %v7499 = vld [vmem:[%s324 + $0x310] sm:$0xff]
        %v7500 = vld [vmem:[%s324 + $0x318] sm:$0xff]
        %v7501 = vld [vmem:[%s324 + $0x320] sm:$0xff]
        %v7502 = vld [vmem:[%s324 + $0x328] sm:$0xff]
        %v7503 = vld [vmem:[%s324 + $0x330] sm:$0xff]
        %v7504 = vld [vmem:[%s324 + $0x338] sm:$0xff]
        %v7505 = vld [vmem:[%s324 + $0x340] sm:$0xff]
        %v7506 = vld [vmem:[%s324 + $0x348] sm:$0xff]
        %v7507 = vld [vmem:[%s324 + $0x350] sm:$0xff]
        %v7508 = vld [vmem:[%s324 + $0x358] sm:$0xff]
        %v7509 = vld [vmem:[%s324 + $0x360] sm:$0xff]
        %v7510 = vld [vmem:[%s324 + $0x368] sm:$0xff]
        %v7511 = vld [vmem:[%s324 + $0x370] sm:$0xff]
        %v7512 = vld [vmem:[%s324 + $0x378] sm:$0xff]
        %v7513 = vld [vmem:[%s324 + $0x380] sm:$0xff]
        %v7514 = vld [vmem:[%s324 + $0x388] sm:$0xff]
        %v7515 = vld [vmem:[%s324 + $0x390] sm:$0xff]
        %v7516 = vld [vmem:[%s324 + $0x398] sm:$0xff]
        %v7517 = vld [vmem:[%s324 + $0x3a0] sm:$0xff]
        %v7518 = vld [vmem:[%s324 + $0x3a8] sm:$0xff]
        %v7519 = vld [vmem:[%s324 + $0x3b0] sm:$0xff]
        %v7520 = vld [vmem:[%s324 + $0x3b8] sm:$0xff]
        %v7521 = vld [vmem:[%s324 + $0x3c0] sm:$0xff]
        %v7522 = vld [vmem:[%s324 + $0x3c8] sm:$0xff]
        %v7523 = vld [vmem:[%s324 + $0x3d0] sm:$0xff]
        %v7524 = vld [vmem:[%s324 + $0x3d8] sm:$0xff]
        %v7525 = vld [vmem:[%s324 + $0x3e0] sm:$0xff]
        %v7526 = vld [vmem:[%s324 + $0x3e8] sm:$0xff]
        %v7527 = vld [vmem:[%s324 + $0x3f0] sm:$0xff]
        %v7528 = vld [vmem:[%s324 + $0x3f8] sm:$0xff]
        %v7530 = vlaneseq
        %v7531 = vshrl.u32 %v7530, 7
        %v7532 = vsub.s32 0, %v7531
        %v7533 = vrot.slane %v842, %v7532
        %v7534 = vlaneseq
        %v7535 = vshrl.u32 %v7534, 7
        %v7536 = vsub.s32 1, %v7535
        %v7537 = vrot.slane %v842, %v7536
        %v7668 = vunpack.c.l.b16 %v7401
        %v7669 = vunpack.c.h.b16 %v7401
        %v7670 = vunpack.c.l.b16 %v7402
        %v7671 = vunpack.c.h.b16 %v7402
        %v7672 = vunpack.c.l.b16 %v7403
        %v7673 = vunpack.c.h.b16 %v7403
        %v7674 = vunpack.c.l.b16 %v7404
        %v7675 = vunpack.c.h.b16 %v7404
        %v7676 = vunpack.c.l.b16 %v7405
        %v7677 = vunpack.c.h.b16 %v7405
        %v7678 = vunpack.c.l.b16 %v7406
        %v7679 = vunpack.c.h.b16 %v7406
        %v7680 = vunpack.c.l.b16 %v7407
        %v7681 = vunpack.c.h.b16 %v7407
        %v7682 = vunpack.c.l.b16 %v7408
        %v7683 = vunpack.c.h.b16 %v7408
        %v7684 = vunpack.c.l.b16 %v7409
        %v7685 = vunpack.c.h.b16 %v7409
        %v7686 = vunpack.c.l.b16 %v7410
        %v7687 = vunpack.c.h.b16 %v7410
        %v7688 = vunpack.c.l.b16 %v7411
        %v7689 = vunpack.c.h.b16 %v7411
        %v7690 = vunpack.c.l.b16 %v7412
        %v7691 = vunpack.c.h.b16 %v7412
        %v7692 = vunpack.c.l.b16 %v7413
        %v7693 = vunpack.c.h.b16 %v7413
        %v7694 = vunpack.c.l.b16 %v7414
        %v7695 = vunpack.c.h.b16 %v7414
        %v7696 = vunpack.c.l.b16 %v7415
        %v7697 = vunpack.c.h.b16 %v7415
        %v7698 = vunpack.c.l.b16 %v7416
        %v7699 = vunpack.c.h.b16 %v7416
        %v7700 = vunpack.c.l.b16 %v7417
        %v7701 = vunpack.c.h.b16 %v7417
        %v7702 = vunpack.c.l.b16 %v7418
        %v7703 = vunpack.c.h.b16 %v7418
        %v7704 = vunpack.c.l.b16 %v7419
        %v7705 = vunpack.c.h.b16 %v7419
        %v7706 = vunpack.c.l.b16 %v7420
        %v7707 = vunpack.c.h.b16 %v7420
        %v7708 = vunpack.c.l.b16 %v7421
        %v7709 = vunpack.c.h.b16 %v7421
        %v7710 = vunpack.c.l.b16 %v7422
        %v7711 = vunpack.c.h.b16 %v7422
        %v7712 = vunpack.c.l.b16 %v7423
        %v7713 = vunpack.c.h.b16 %v7423
        %v7714 = vunpack.c.l.b16 %v7424
        %v7715 = vunpack.c.h.b16 %v7424
        %v7716 = vunpack.c.l.b16 %v7425
        %v7717 = vunpack.c.h.b16 %v7425
        %v7718 = vunpack.c.l.b16 %v7426
        %v7719 = vunpack.c.h.b16 %v7426
        %v7720 = vunpack.c.l.b16 %v7427
        %v7721 = vunpack.c.h.b16 %v7427
        %v7722 = vunpack.c.l.b16 %v7428
        %v7723 = vunpack.c.h.b16 %v7428
        %v7724 = vunpack.c.l.b16 %v7429
        %v7725 = vunpack.c.h.b16 %v7429
        %v7726 = vunpack.c.l.b16 %v7430
        %v7727 = vunpack.c.h.b16 %v7430
        %v7728 = vunpack.c.l.b16 %v7431
        %v7729 = vunpack.c.h.b16 %v7431
        %v7730 = vunpack.c.l.b16 %v7432
        %v7731 = vunpack.c.h.b16 %v7432
        %v7732 = vunpack.c.l.b16 %v7433
        %v7733 = vunpack.c.h.b16 %v7433
        %v7734 = vunpack.c.l.b16 %v7434
        %v7735 = vunpack.c.h.b16 %v7434
        %v7736 = vunpack.c.l.b16 %v7435
        %v7737 = vunpack.c.h.b16 %v7435
        %v7738 = vunpack.c.l.b16 %v7436
        %v7739 = vunpack.c.h.b16 %v7436
        %v7740 = vunpack.c.l.b16 %v7437
        %v7741 = vunpack.c.h.b16 %v7437
        %v7742 = vunpack.c.l.b16 %v7438
        %v7743 = vunpack.c.h.b16 %v7438
        %v7744 = vunpack.c.l.b16 %v7439
        %v7745 = vunpack.c.h.b16 %v7439
        %v7746 = vunpack.c.l.b16 %v7440
        %v7747 = vunpack.c.h.b16 %v7440
        %v7748 = vunpack.c.l.b16 %v7441
        %v7749 = vunpack.c.h.b16 %v7441
        %v7750 = vunpack.c.l.b16 %v7442
        %v7751 = vunpack.c.h.b16 %v7442
        %v7752 = vunpack.c.l.b16 %v7443
        %v7753 = vunpack.c.h.b16 %v7443
        %v7754 = vunpack.c.l.b16 %v7444
        %v7755 = vunpack.c.h.b16 %v7444
        %v7756 = vunpack.c.l.b16 %v7445
        %v7757 = vunpack.c.h.b16 %v7445
        %v7758 = vunpack.c.l.b16 %v7446
        %v7759 = vunpack.c.h.b16 %v7446
        %v7760 = vunpack.c.l.b16 %v7447
        %v7761 = vunpack.c.h.b16 %v7447
        %v7762 = vunpack.c.l.b16 %v7448
        %v7763 = vunpack.c.h.b16 %v7448
        %v7764 = vunpack.c.l.b16 %v7449
        %v7765 = vunpack.c.h.b16 %v7449
        %v7766 = vunpack.c.l.b16 %v7450
        %v7767 = vunpack.c.h.b16 %v7450
        %v7768 = vunpack.c.l.b16 %v7451
        %v7769 = vunpack.c.h.b16 %v7451
        %v7770 = vunpack.c.l.b16 %v7452
        %v7771 = vunpack.c.h.b16 %v7452
        %v7772 = vunpack.c.l.b16 %v7453
        %v7773 = vunpack.c.h.b16 %v7453
        %v7774 = vunpack.c.l.b16 %v7454
        %v7775 = vunpack.c.h.b16 %v7454
        %v7776 = vunpack.c.l.b16 %v7455
        %v7777 = vunpack.c.h.b16 %v7455
        %v7778 = vunpack.c.l.b16 %v7456
        %v7779 = vunpack.c.h.b16 %v7456
        %v7780 = vunpack.c.l.b16 %v7457
        %v7781 = vunpack.c.h.b16 %v7457
        %v7782 = vunpack.c.l.b16 %v7458
        %v7783 = vunpack.c.h.b16 %v7458
        %v7784 = vunpack.c.l.b16 %v7459
        %v7785 = vunpack.c.h.b16 %v7459
        %v7786 = vunpack.c.l.b16 %v7460
        %v7787 = vunpack.c.h.b16 %v7460
        %v7788 = vunpack.c.l.b16 %v7461
        %v7789 = vunpack.c.h.b16 %v7461
        %v7790 = vunpack.c.l.b16 %v7462
        %v7791 = vunpack.c.h.b16 %v7462
        %v7792 = vunpack.c.l.b16 %v7463
        %v7793 = vunpack.c.h.b16 %v7463
        %v7794 = vunpack.c.l.b16 %v7464
        %v7795 = vunpack.c.h.b16 %v7464
        %v7796 = vunpack.c.l.b16 %v7465
        %v7797 = vunpack.c.h.b16 %v7465
        %v7798 = vunpack.c.l.b16 %v7466
        %v7799 = vunpack.c.h.b16 %v7466
        %v7800 = vunpack.c.l.b16 %v7467
        %v7801 = vunpack.c.h.b16 %v7467
        %v7802 = vunpack.c.l.b16 %v7468
        %v7803 = vunpack.c.h.b16 %v7468
        %v7804 = vunpack.c.l.b16 %v7469
        %v7805 = vunpack.c.h.b16 %v7469
        %v7806 = vunpack.c.l.b16 %v7470
        %v7807 = vunpack.c.h.b16 %v7470
        %v7808 = vunpack.c.l.b16 %v7471
        %v7809 = vunpack.c.h.b16 %v7471
        %v7810 = vunpack.c.l.b16 %v7472
        %v7811 = vunpack.c.h.b16 %v7472
        %v7812 = vunpack.c.l.b16 %v7473
        %v7813 = vunpack.c.h.b16 %v7473
        %v7814 = vunpack.c.l.b16 %v7474
        %v7815 = vunpack.c.h.b16 %v7474
        %v7816 = vunpack.c.l.b16 %v7475
        %v7817 = vunpack.c.h.b16 %v7475
        %v7818 = vunpack.c.l.b16 %v7476
        %v7819 = vunpack.c.h.b16 %v7476
        %v7820 = vunpack.c.l.b16 %v7477
        %v7821 = vunpack.c.h.b16 %v7477
        %v7822 = vunpack.c.l.b16 %v7478
        %v7823 = vunpack.c.h.b16 %v7478
        %v7824 = vunpack.c.l.b16 %v7479
        %v7825 = vunpack.c.h.b16 %v7479
        %v7826 = vunpack.c.l.b16 %v7480
        %v7827 = vunpack.c.h.b16 %v7480
        %v7828 = vunpack.c.l.b16 %v7481
        %v7829 = vunpack.c.h.b16 %v7481
        %v7830 = vunpack.c.l.b16 %v7482
        %v7831 = vunpack.c.h.b16 %v7482
        %v7832 = vunpack.c.l.b16 %v7483
        %v7833 = vunpack.c.h.b16 %v7483
        %v7834 = vunpack.c.l.b16 %v7484
        %v7835 = vunpack.c.h.b16 %v7484
        %v7836 = vunpack.c.l.b16 %v7485
        %v7837 = vunpack.c.h.b16 %v7485
        %v7838 = vunpack.c.l.b16 %v7486
        %v7839 = vunpack.c.h.b16 %v7486
        %v7840 = vunpack.c.l.b16 %v7487
        %v7841 = vunpack.c.h.b16 %v7487
        %v7842 = vunpack.c.l.b16 %v7488
        %v7843 = vunpack.c.h.b16 %v7488
        %v7844 = vunpack.c.l.b16 %v7489
        %v7845 = vunpack.c.h.b16 %v7489
        %v7846 = vunpack.c.l.b16 %v7490
        %v7847 = vunpack.c.h.b16 %v7490
        %v7848 = vunpack.c.l.b16 %v7491
        %v7849 = vunpack.c.h.b16 %v7491
        %v7850 = vunpack.c.l.b16 %v7492
        %v7851 = vunpack.c.h.b16 %v7492
        %v7852 = vunpack.c.l.b16 %v7493
        %v7853 = vunpack.c.h.b16 %v7493
        %v7854 = vunpack.c.l.b16 %v7494
        %v7855 = vunpack.c.h.b16 %v7494
        %v7856 = vunpack.c.l.b16 %v7495
        %v7857 = vunpack.c.h.b16 %v7495
        %v7858 = vunpack.c.l.b16 %v7496
        %v7859 = vunpack.c.h.b16 %v7496
        %v7860 = vunpack.c.l.b16 %v7497
        %v7861 = vunpack.c.h.b16 %v7497
        %v7862 = vunpack.c.l.b16 %v7498
        %v7863 = vunpack.c.h.b16 %v7498
        %v7864 = vunpack.c.l.b16 %v7499
        %v7865 = vunpack.c.h.b16 %v7499
        %v7866 = vunpack.c.l.b16 %v7500
        %v7867 = vunpack.c.h.b16 %v7500
        %v7868 = vunpack.c.l.b16 %v7501
        %v7869 = vunpack.c.h.b16 %v7501
        %v7870 = vunpack.c.l.b16 %v7502
        %v7871 = vunpack.c.h.b16 %v7502
        %v7872 = vunpack.c.l.b16 %v7503
        %v7873 = vunpack.c.h.b16 %v7503
        %v7874 = vunpack.c.l.b16 %v7504
        %v7875 = vunpack.c.h.b16 %v7504
        %v7876 = vunpack.c.l.b16 %v7505
        %v7877 = vunpack.c.h.b16 %v7505
        %v7878 = vunpack.c.l.b16 %v7506
        %v7879 = vunpack.c.h.b16 %v7506
        %v7880 = vunpack.c.l.b16 %v7507
        %v7881 = vunpack.c.h.b16 %v7507
        %v7882 = vunpack.c.l.b16 %v7508
        %v7883 = vunpack.c.h.b16 %v7508
        %v7884 = vunpack.c.l.b16 %v7509
        %v7885 = vunpack.c.h.b16 %v7509
        %v7886 = vunpack.c.l.b16 %v7510
        %v7887 = vunpack.c.h.b16 %v7510
        %v7888 = vunpack.c.l.b16 %v7511
        %v7889 = vunpack.c.h.b16 %v7511
        %v7890 = vunpack.c.l.b16 %v7512
        %v7891 = vunpack.c.h.b16 %v7512
        %v7892 = vunpack.c.l.b16 %v7513
        %v7893 = vunpack.c.h.b16 %v7513
        %v7894 = vunpack.c.l.b16 %v7514
        %v7895 = vunpack.c.h.b16 %v7514
        %v7896 = vunpack.c.l.b16 %v7515
        %v7897 = vunpack.c.h.b16 %v7515
        %v7898 = vunpack.c.l.b16 %v7516
        %v7899 = vunpack.c.h.b16 %v7516
        %v7900 = vunpack.c.l.b16 %v7517
        %v7901 = vunpack.c.h.b16 %v7517
        %v7902 = vunpack.c.l.b16 %v7518
        %v7903 = vunpack.c.h.b16 %v7518
        %v7904 = vunpack.c.l.b16 %v7519
        %v7905 = vunpack.c.h.b16 %v7519
        %v7906 = vunpack.c.l.b16 %v7520
        %v7907 = vunpack.c.h.b16 %v7520
        %v7908 = vunpack.c.l.b16 %v7521
        %v7909 = vunpack.c.h.b16 %v7521
        %v7910 = vunpack.c.l.b16 %v7522
        %v7911 = vunpack.c.h.b16 %v7522
        %v7912 = vunpack.c.l.b16 %v7523
        %v7913 = vunpack.c.h.b16 %v7523
        %v7914 = vunpack.c.l.b16 %v7524
        %v7915 = vunpack.c.h.b16 %v7524
        %v7916 = vunpack.c.l.b16 %v7525
        %v7917 = vunpack.c.h.b16 %v7525
        %v7918 = vunpack.c.l.b16 %v7526
        %v7919 = vunpack.c.h.b16 %v7526
        %v7920 = vunpack.c.l.b16 %v7527
        %v7921 = vunpack.c.h.b16 %v7527
        %v7922 = vunpack.c.l.b16 %v7528
        %v7923 = vunpack.c.h.b16 %v7528
        %v7924 = vpack.c.b16 %v7670, %v7668
        %v7925 = vpack.c.b16 %v7671, %v7669
        %v7926 = vpack.c.b16 %v7674, %v7672
        %v7927 = vpack.c.b16 %v7675, %v7673
        %v7928 = vpack.c.b16 %v7678, %v7676
        %v7929 = vpack.c.b16 %v7679, %v7677
        %v7930 = vpack.c.b16 %v7682, %v7680
        %v7931 = vpack.c.b16 %v7683, %v7681
        %v7932 = vpack.c.b16 %v7686, %v7684
        %v7933 = vpack.c.b16 %v7687, %v7685
        %v7934 = vpack.c.b16 %v7690, %v7688
        %v7935 = vpack.c.b16 %v7691, %v7689
        %v7936 = vpack.c.b16 %v7694, %v7692
        %v7937 = vpack.c.b16 %v7695, %v7693
        %v7938 = vpack.c.b16 %v7698, %v7696
        %v7939 = vpack.c.b16 %v7699, %v7697
        %v7940 = vpack.c.b16 %v7702, %v7700
        %v7941 = vpack.c.b16 %v7703, %v7701
        %v7942 = vpack.c.b16 %v7706, %v7704
        %v7943 = vpack.c.b16 %v7707, %v7705
        %v7944 = vpack.c.b16 %v7710, %v7708
        %v7945 = vpack.c.b16 %v7711, %v7709
        %v7946 = vpack.c.b16 %v7714, %v7712
        %v7947 = vpack.c.b16 %v7715, %v7713
        %v7948 = vpack.c.b16 %v7718, %v7716
        %v7949 = vpack.c.b16 %v7719, %v7717
        %v7950 = vpack.c.b16 %v7722, %v7720
        %v7951 = vpack.c.b16 %v7723, %v7721
        %v7952 = vpack.c.b16 %v7726, %v7724
        %v7953 = vpack.c.b16 %v7727, %v7725
        %v7954 = vpack.c.b16 %v7730, %v7728
        %v7955 = vpack.c.b16 %v7731, %v7729
        %v7956 = vpack.c.b16 %v7734, %v7732
        %v7957 = vpack.c.b16 %v7735, %v7733
        %v7958 = vpack.c.b16 %v7738, %v7736
        %v7959 = vpack.c.b16 %v7739, %v7737
        %v7960 = vpack.c.b16 %v7742, %v7740
        %v7961 = vpack.c.b16 %v7743, %v7741
        %v7962 = vpack.c.b16 %v7746, %v7744
        %v7963 = vpack.c.b16 %v7747, %v7745
        %v7964 = vpack.c.b16 %v7750, %v7748
        %v7965 = vpack.c.b16 %v7751, %v7749
        %v7966 = vpack.c.b16 %v7754, %v7752
        %v7967 = vpack.c.b16 %v7755, %v7753
        %v7968 = vpack.c.b16 %v7758, %v7756
        %v7969 = vpack.c.b16 %v7759, %v7757
        %v7970 = vpack.c.b16 %v7762, %v7760
        %v7971 = vpack.c.b16 %v7763, %v7761
        %v7972 = vpack.c.b16 %v7766, %v7764
        %v7973 = vpack.c.b16 %v7767, %v7765
        %v7974 = vpack.c.b16 %v7770, %v7768
        %v7975 = vpack.c.b16 %v7771, %v7769
        %v7976 = vpack.c.b16 %v7774, %v7772
        %v7977 = vpack.c.b16 %v7775, %v7773
        %v7978 = vpack.c.b16 %v7778, %v7776
        %v7979 = vpack.c.b16 %v7779, %v7777
        %v7980 = vpack.c.b16 %v7782, %v7780
        %v7981 = vpack.c.b16 %v7783, %v7781
        %v7982 = vpack.c.b16 %v7786, %v7784
        %v7983 = vpack.c.b16 %v7787, %v7785
        %v7984 = vpack.c.b16 %v7790, %v7788
        %v7985 = vpack.c.b16 %v7791, %v7789
        %v7986 = vpack.c.b16 %v7794, %v7792
        %v7987 = vpack.c.b16 %v7795, %v7793
        %v7988 = vpack.c.b16 %v7798, %v7796
        %v7989 = vpack.c.b16 %v7799, %v7797
        %v7990 = vpack.c.b16 %v7802, %v7800
        %v7991 = vpack.c.b16 %v7803, %v7801
        %v7992 = vpack.c.b16 %v7806, %v7804
        %v7993 = vpack.c.b16 %v7807, %v7805
        %v7994 = vpack.c.b16 %v7810, %v7808
        %v7995 = vpack.c.b16 %v7811, %v7809
        %v7996 = vpack.c.b16 %v7814, %v7812
        %v7997 = vpack.c.b16 %v7815, %v7813
        %v7998 = vpack.c.b16 %v7818, %v7816
        %v7999 = vpack.c.b16 %v7819, %v7817
        %v8000 = vpack.c.b16 %v7822, %v7820
        %v8001 = vpack.c.b16 %v7823, %v7821
        %v8002 = vpack.c.b16 %v7826, %v7824
        %v8003 = vpack.c.b16 %v7827, %v7825
        %v8004 = vpack.c.b16 %v7830, %v7828
        %v8005 = vpack.c.b16 %v7831, %v7829
        %v8006 = vpack.c.b16 %v7834, %v7832
        %v8007 = vpack.c.b16 %v7835, %v7833
        %v8008 = vpack.c.b16 %v7838, %v7836
        %v8009 = vpack.c.b16 %v7839, %v7837
        %v8010 = vpack.c.b16 %v7842, %v7840
        %v8011 = vpack.c.b16 %v7843, %v7841
        %v8012 = vpack.c.b16 %v7846, %v7844
        %v8013 = vpack.c.b16 %v7847, %v7845
        %v8014 = vpack.c.b16 %v7850, %v7848
        %v8015 = vpack.c.b16 %v7851, %v7849
        %v8016 = vpack.c.b16 %v7854, %v7852
        %v8017 = vpack.c.b16 %v7855, %v7853
        %v8018 = vpack.c.b16 %v7858, %v7856
        %v8019 = vpack.c.b16 %v7859, %v7857
        %v8020 = vpack.c.b16 %v7862, %v7860
        %v8021 = vpack.c.b16 %v7863, %v7861
        %v8022 = vpack.c.b16 %v7866, %v7864
        %v8023 = vpack.c.b16 %v7867, %v7865
        %v8024 = vpack.c.b16 %v7870, %v7868
        %v8025 = vpack.c.b16 %v7871, %v7869
        %v8026 = vpack.c.b16 %v7874, %v7872
        %v8027 = vpack.c.b16 %v7875, %v7873
        %v8028 = vpack.c.b16 %v7878, %v7876
        %v8029 = vpack.c.b16 %v7879, %v7877
        %v8030 = vpack.c.b16 %v7882, %v7880
        %v8031 = vpack.c.b16 %v7883, %v7881
        %v8032 = vpack.c.b16 %v7886, %v7884
        %v8033 = vpack.c.b16 %v7887, %v7885
        %v8034 = vpack.c.b16 %v7890, %v7888
        %v8035 = vpack.c.b16 %v7891, %v7889
        %v8036 = vpack.c.b16 %v7894, %v7892
        %v8037 = vpack.c.b16 %v7895, %v7893
        %v8038 = vpack.c.b16 %v7898, %v7896
        %v8039 = vpack.c.b16 %v7899, %v7897
        %v8040 = vpack.c.b16 %v7902, %v7900
        %v8041 = vpack.c.b16 %v7903, %v7901
        %v8042 = vpack.c.b16 %v7906, %v7904
        %v8043 = vpack.c.b16 %v7907, %v7905
        %v8044 = vpack.c.b16 %v7910, %v7908
        %v8045 = vpack.c.b16 %v7911, %v7909
        %v8046 = vpack.c.b16 %v7914, %v7912
        %v8047 = vpack.c.b16 %v7915, %v7913
        %v8048 = vpack.c.b16 %v7918, %v7916
        %v8049 = vpack.c.b16 %v7919, %v7917
        %v8050 = vpack.c.b16 %v7922, %v7920
        %v8051 = vpack.c.b16 %v7923, %v7921
        %8180 = vmatprep.subr.bf16.mxu0 %v7925
        %8181 = vmatpush1.bf16.msra.mxu0 %v7924
        %8182 = vmatprep.subr.bf16.mxu0 %v7927
        %8183 = vmatpush1.bf16.msra.mxu0 %v7926
        %8184 = vmatprep.subr.bf16.mxu0 %v7929
        %8185 = vmatpush1.bf16.msra.mxu0 %v7928
        %8186 = vmatprep.subr.bf16.mxu0 %v7931
        %8187 = vmatpush1.bf16.msra.mxu0 %v7930
        %8188 = vmatprep.subr.bf16.mxu0 %v7933
        %8189 = vmatpush1.bf16.msra.mxu0 %v7932
        %8190 = vmatprep.subr.bf16.mxu0 %v7935
        %8191 = vmatpush1.bf16.msra.mxu0 %v7934
        %8192 = vmatprep.subr.bf16.mxu0 %v7937
        %8193 = vmatpush1.bf16.msra.mxu0 %v7936
        %8194 = vmatprep.subr.bf16.mxu0 %v7939
        %8195 = vmatpush1.bf16.msra.mxu0 %v7938
        %8196 = vmatprep.subr.bf16.mxu0 %v7941
        %8197 = vmatpush1.bf16.msra.mxu0 %v7940
        %8198 = vmatprep.subr.bf16.mxu0 %v7943
        %8199 = vmatpush1.bf16.msra.mxu0 %v7942
        %8200 = vmatprep.subr.bf16.mxu0 %v7945
        %8201 = vmatpush1.bf16.msra.mxu0 %v7944
        %8202 = vmatprep.subr.bf16.mxu0 %v7947
        %8203 = vmatpush1.bf16.msra.mxu0 %v7946
        %8204 = vmatprep.subr.bf16.mxu0 %v7949
        %8205 = vmatpush1.bf16.msra.mxu0 %v7948
        %8206 = vmatprep.subr.bf16.mxu0 %v7951
        %8207 = vmatpush1.bf16.msra.mxu0 %v7950
        %8208 = vmatprep.subr.bf16.mxu0 %v7953
        %8209 = vmatpush1.bf16.msra.mxu0 %v7952
        %8210 = vmatprep.subr.bf16.mxu0 %v7955
        %8211 = vmatpush1.bf16.msra.mxu0 %v7954
        %8212 = vmatprep.mubr.bf16.mxu0 %v7338
        %8213 = vmatmul.mubr.bf16.gmra.mrb[0].mxu0 %v7337
        %v8214 = vpop.f32.mrb[0].mxu0
        %v8215 = vadd.f32 %v7533, %v8214
        %v8216 = vpop.f32.mrb[0].mxu0
        %v8217 = vadd.f32 %v7537, %v8216
        %v8218 = vpop.f32.mrb[0].mxu0
        %v8219 = vadd.f32 %v7533, %v8218
        %v8220 = vpop.f32.mrb[0].mxu0
        %v8221 = vadd.f32 %v7537, %v8220
        %8222 = vmatprep.mubr.bf16.mxu0 %v7346
        %8223 = vmatmul.mubr.bf16.gmra.mrb[0].mxu0 %v7345
        %v8224 = vpop.f32.mrb[0].mxu0
        %v8225 = vadd.f32 %v7533, %v8224
        %v8226 = vpop.f32.mrb[0].mxu0
        %v8227 = vadd.f32 %v7537, %v8226
        %v8228 = vpop.f32.mrb[0].mxu0
        %v8229 = vadd.f32 %v7533, %v8228
        %v8230 = vpop.f32.mrb[0].mxu0
        %v8231 = vadd.f32 %v7537, %v8230
        %8232 = vmatprep.mubr.bf16.mxu0 %v7354
        %8233 = vmatmul.mubr.bf16.gmra.mrb[0].mxu0 %v7353
        %v8234 = vpop.f32.mrb[0].mxu0
        %v8235 = vadd.f32 %v7533, %v8234
        %v8236 = vpop.f32.mrb[0].mxu0
        %v8237 = vadd.f32 %v7537, %v8236
        %v8238 = vpop.f32.mrb[0].mxu0
        %v8239 = vadd.f32 %v7533, %v8238
        %v8240 = vpop.f32.mrb[0].mxu0
        %v8241 = vadd.f32 %v7537, %v8240
        %8242 = vmatprep.mubr.bf16.mxu0 %v7362
        %8243 = vmatmul.mubr.bf16.gmra.mrb[0].mxu0 %v7361
        %v8244 = vpop.f32.mrb[0].mxu0
        %v8245 = vadd.f32 %v7533, %v8244
        %v8246 = vpop.f32.mrb[0].mxu0
        %v8247 = vadd.f32 %v7537, %v8246
        %v8248 = vpop.f32.mrb[0].mxu0
        %v8249 = vadd.f32 %v7533, %v8248
        %v8250 = vpop.f32.mrb[0].mxu0
        %v8251 = vadd.f32 %v7537, %v8250
        %8252 = vmatprep.mubr.bf16.mxu0 %v7370
        %8253 = vmatmul.mubr.bf16.gmra.mrb[0].mxu0 %v7369
        %v8254 = vpop.f32.mrb[0].mxu0
        %v8255 = vadd.f32 %v7533, %v8254
        %v8256 = vpop.f32.mrb[0].mxu0
        %v8257 = vadd.f32 %v7537, %v8256
        %v8258 = vpop.f32.mrb[0].mxu0
        %v8259 = vadd.f32 %v7533, %v8258
        %v8260 = vpop.f32.mrb[0].mxu0
        %v8261 = vadd.f32 %v7537, %v8260
        %8262 = vmatprep.mubr.bf16.mxu0 %v7378
        %8263 = vmatmul.mubr.bf16.gmra.mrb[0].mxu0 %v7377
        %v8264 = vpop.f32.mrb[0].mxu0
        %v8265 = vadd.f32 %v7533, %v8264
        %v8266 = vpop.f32.mrb[0].mxu0
        %v8267 = vadd.f32 %v7537, %v8266
        %v8268 = vpop.f32.mrb[0].mxu0
        %v8269 = vadd.f32 %v7533, %v8268
        %v8270 = vpop.f32.mrb[0].mxu0
        %v8271 = vadd.f32 %v7537, %v8270
        %8272 = vmatprep.mubr.bf16.mxu0 %v7386
        %8273 = vmatmul.mubr.bf16.gmra.mrb[0].mxu0 %v7385
        %v8274 = vpop.f32.mrb[0].mxu0
        %v8275 = vadd.f32 %v7533, %v8274
        %v8276 = vpop.f32.mrb[0].mxu0
        %v8277 = vadd.f32 %v7537, %v8276
        %v8278 = vpop.f32.mrb[0].mxu0
        %v8279 = vadd.f32 %v7533, %v8278
        %v8280 = vpop.f32.mrb[0].mxu0
        %v8281 = vadd.f32 %v7537, %v8280
        %8282 = vmatprep.mubr.bf16.mxu0 %v7394
        %8283 = vmatmul.mubr.bf16.gmra.mrb[0].mxu0 %v7393
        %v8284 = vpop.f32.mrb[0].mxu0
        %v8285 = vadd.f32 %v7533, %v8284
        %v8286 = vpop.f32.mrb[0].mxu0
        %v8287 = vadd.f32 %v7537, %v8286
        %v8288 = vpop.f32.mrb[0].mxu0
        %v8289 = vadd.f32 %v7533, %v8288
        %v8290 = vpop.f32.mrb[0].mxu0
        %v8291 = vadd.f32 %v7537, %v8290
        %8292 = vdwg.mxu0
        %8293 = vmatprep.subr.bf16.mxu0 %v7957
        %8294 = vmatpush1.bf16.msra.mxu0 %v7956
        %8295 = vmatprep.subr.bf16.mxu0 %v7959
        %8296 = vmatpush1.bf16.msra.mxu0 %v7958
        %8297 = vmatprep.subr.bf16.mxu0 %v7961
        %8298 = vmatpush1.bf16.msra.mxu0 %v7960
        %8299 = vmatprep.subr.bf16.mxu0 %v7963
        %8300 = vmatpush1.bf16.msra.mxu0 %v7962
        %8301 = vmatprep.subr.bf16.mxu0 %v7965
        %8302 = vmatpush1.bf16.msra.mxu0 %v7964
        %8303 = vmatprep.subr.bf16.mxu0 %v7967
        %8304 = vmatpush1.bf16.msra.mxu0 %v7966
        %8305 = vmatprep.subr.bf16.mxu0 %v7969
        %8306 = vmatpush1.bf16.msra.mxu0 %v7968
        %8307 = vmatprep.subr.bf16.mxu0 %v7971
        %8308 = vmatpush1.bf16.msra.mxu0 %v7970
        %8309 = vmatprep.subr.bf16.mxu0 %v7973
        %8310 = vmatpush1.bf16.msra.mxu0 %v7972
        %8311 = vmatprep.subr.bf16.mxu0 %v7975
        %8312 = vmatpush1.bf16.msra.mxu0 %v7974
        %8313 = vmatprep.subr.bf16.mxu0 %v7977
        %8314 = vmatpush1.bf16.msra.mxu0 %v7976
        %8315 = vmatprep.subr.bf16.mxu0 %v7979
        %8316 = vmatpush1.bf16.msra.mxu0 %v7978
        %8317 = vmatprep.subr.bf16.mxu0 %v7981
        %8318 = vmatpush1.bf16.msra.mxu0 %v7980
        %8319 = vmatprep.subr.bf16.mxu0 %v7983
        %8320 = vmatpush1.bf16.msra.mxu0 %v7982
        %8321 = vmatprep.subr.bf16.mxu0 %v7985
        %8322 = vmatpush1.bf16.msra.mxu0 %v7984
        %8323 = vmatprep.subr.bf16.mxu0 %v7987
        %8324 = vmatpush1.bf16.msra.mxu0 %v7986
        %8325 = vmatprep.mubr.bf16.mxu0 %v7340
        %8326 = vmatmul.mubr.bf16.gmra.mrb[0].mxu0 %v7339
        %v8327 = vpop.f32.mrb[0].mxu0
        %v8328 = vadd.f32 %v8215, %v8327
        %v8329 = vpop.f32.mrb[0].mxu0
        %v8330 = vadd.f32 %v8217, %v8329
        %v8331 = vpop.f32.mrb[0].mxu0
        %v8332 = vadd.f32 %v8219, %v8331
        %v8333 = vpop.f32.mrb[0].mxu0
        %v8334 = vadd.f32 %v8221, %v8333
        %8335 = vmatprep.mubr.bf16.mxu0 %v7348
        %8336 = vmatmul.mubr.bf16.gmra.mrb[0].mxu0 %v7347
        %v8337 = vpop.f32.mrb[0].mxu0
        %v8338 = vadd.f32 %v8225, %v8337
        %v8339 = vpop.f32.mrb[0].mxu0
        %v8340 = vadd.f32 %v8227, %v8339
        %v8341 = vpop.f32.mrb[0].mxu0
        %v8342 = vadd.f32 %v8229, %v8341
        %v8343 = vpop.f32.mrb[0].mxu0
        %v8344 = vadd.f32 %v8231, %v8343
        %8345 = vmatprep.mubr.bf16.mxu0 %v7356
        %8346 = vmatmul.mubr.bf16.gmra.mrb[0].mxu0 %v7355
        %v8347 = vpop.f32.mrb[0].mxu0
        %v8348 = vadd.f32 %v8235, %v8347
        %v8349 = vpop.f32.mrb[0].mxu0
        %v8350 = vadd.f32 %v8237, %v8349
        %v8351 = vpop.f32.mrb[0].mxu0
        %v8352 = vadd.f32 %v8239, %v8351
        %v8353 = vpop.f32.mrb[0].mxu0
        %v8354 = vadd.f32 %v8241, %v8353
        %8355 = vmatprep.mubr.bf16.mxu0 %v7364
        %8356 = vmatmul.mubr.bf16.gmra.mrb[0].mxu0 %v7363
        %v8357 = vpop.f32.mrb[0].mxu0
        %v8358 = vadd.f32 %v8245, %v8357
        %v8359 = vpop.f32.mrb[0].mxu0
        %v8360 = vadd.f32 %v8247, %v8359
        %v8361 = vpop.f32.mrb[0].mxu0
        %v8362 = vadd.f32 %v8249, %v8361
        %v8363 = vpop.f32.mrb[0].mxu0
        %v8364 = vadd.f32 %v8251, %v8363
        %8365 = vmatprep.mubr.bf16.mxu0 %v7372
        %8366 = vmatmul.mubr.bf16.gmra.mrb[0].mxu0 %v7371
        %v8367 = vpop.f32.mrb[0].mxu0
        %v8368 = vadd.f32 %v8255, %v8367
        %v8369 = vpop.f32.mrb[0].mxu0
        %v8370 = vadd.f32 %v8257, %v8369
        %v8371 = vpop.f32.mrb[0].mxu0
        %v8372 = vadd.f32 %v8259, %v8371
        %v8373 = vpop.f32.mrb[0].mxu0
        %v8374 = vadd.f32 %v8261, %v8373
        %8375 = vmatprep.mubr.bf16.mxu0 %v7380
        %8376 = vmatmul.mubr.bf16.gmra.mrb[0].mxu0 %v7379
        %v8377 = vpop.f32.mrb[0].mxu0
        %v8378 = vadd.f32 %v8265, %v8377
        %v8379 = vpop.f32.mrb[0].mxu0
        %v8380 = vadd.f32 %v8267, %v8379
        %v8381 = vpop.f32.mrb[0].mxu0
        %v8382 = vadd.f32 %v8269, %v8381
        %v8383 = vpop.f32.mrb[0].mxu0
        %v8384 = vadd.f32 %v8271, %v8383
        %8385 = vmatprep.mubr.bf16.mxu0 %v7388
        %8386 = vmatmul.mubr.bf16.gmra.mrb[0].mxu0 %v7387
        %v8387 = vpop.f32.mrb[0].mxu0
        %v8388 = vadd.f32 %v8275, %v8387
        %v8389 = vpop.f32.mrb[0].mxu0
        %v8390 = vadd.f32 %v8277, %v8389
        %v8391 = vpop.f32.mrb[0].mxu0
        %v8392 = vadd.f32 %v8279, %v8391
        %v8393 = vpop.f32.mrb[0].mxu0
        %v8394 = vadd.f32 %v8281, %v8393
        %8395 = vmatprep.mubr.bf16.mxu0 %v7396
        %8396 = vmatmul.mubr.bf16.gmra.mrb[0].mxu0 %v7395
        %v8397 = vpop.f32.mrb[0].mxu0
        %v8398 = vadd.f32 %v8285, %v8397
        %v8399 = vpop.f32.mrb[0].mxu0
        %v8400 = vadd.f32 %v8287, %v8399
        %v8401 = vpop.f32.mrb[0].mxu0
        %v8402 = vadd.f32 %v8289, %v8401
        %v8403 = vpop.f32.mrb[0].mxu0
        %v8404 = vadd.f32 %v8291, %v8403
        %8405 = vdwg.mxu0
        %8406 = vmatprep.subr.bf16.mxu0 %v7989
        %8407 = vmatpush1.bf16.msra.mxu0 %v7988
        %8408 = vmatprep.subr.bf16.mxu0 %v7991
        %8409 = vmatpush1.bf16.msra.mxu0 %v7990
        %8410 = vmatprep.subr.bf16.mxu0 %v7993
        %8411 = vmatpush1.bf16.msra.mxu0 %v7992
        %8412 = vmatprep.subr.bf16.mxu0 %v7995
        %8413 = vmatpush1.bf16.msra.mxu0 %v7994
        %8414 = vmatprep.subr.bf16.mxu0 %v7997
        %8415 = vmatpush1.bf16.msra.mxu0 %v7996
        %8416 = vmatprep.subr.bf16.mxu0 %v7999
        %8417 = vmatpush1.bf16.msra.mxu0 %v7998
        %8418 = vmatprep.subr.bf16.mxu0 %v8001
        %8419 = vmatpush1.bf16.msra.mxu0 %v8000
        %8420 = vmatprep.subr.bf16.mxu0 %v8003
        %8421 = vmatpush1.bf16.msra.mxu0 %v8002
        %8422 = vmatprep.subr.bf16.mxu0 %v8005
        %8423 = vmatpush1.bf16.msra.mxu0 %v8004
        %8424 = vmatprep.subr.bf16.mxu0 %v8007
        %8425 = vmatpush1.bf16.msra.mxu0 %v8006
        %8426 = vmatprep.subr.bf16.mxu0 %v8009
        %8427 = vmatpush1.bf16.msra.mxu0 %v8008
        %8428 = vmatprep.subr.bf16.mxu0 %v8011
        %8429 = vmatpush1.bf16.msra.mxu0 %v8010
        %8430 = vmatprep.subr.bf16.mxu0 %v8013
        %8431 = vmatpush1.bf16.msra.mxu0 %v8012
        %8432 = vmatprep.subr.bf16.mxu0 %v8015
        %8433 = vmatpush1.bf16.msra.mxu0 %v8014
        %8434 = vmatprep.subr.bf16.mxu0 %v8017
        %8435 = vmatpush1.bf16.msra.mxu0 %v8016
        %8436 = vmatprep.subr.bf16.mxu0 %v8019
        %8437 = vmatpush1.bf16.msra.mxu0 %v8018
        %8438 = vmatprep.mubr.bf16.mxu0 %v7342
        %8439 = vmatmul.mubr.bf16.gmra.mrb[0].mxu0 %v7341
        %v8440 = vpop.f32.mrb[0].mxu0
        %v8441 = vadd.f32 %v8328, %v8440
        %v8442 = vpop.f32.mrb[0].mxu0
        %v8443 = vadd.f32 %v8330, %v8442
        %v8444 = vpop.f32.mrb[0].mxu0
        %v8445 = vadd.f32 %v8332, %v8444
        %v8446 = vpop.f32.mrb[0].mxu0
        %v8447 = vadd.f32 %v8334, %v8446
        %8448 = vmatprep.mubr.bf16.mxu0 %v7350
        %8449 = vmatmul.mubr.bf16.gmra.mrb[0].mxu0 %v7349
        %v8450 = vpop.f32.mrb[0].mxu0
        %v8451 = vadd.f32 %v8338, %v8450
        %v8452 = vpop.f32.mrb[0].mxu0
        %v8453 = vadd.f32 %v8340, %v8452
        %v8454 = vpop.f32.mrb[0].mxu0
        %v8455 = vadd.f32 %v8342, %v8454
        %v8456 = vpop.f32.mrb[0].mxu0
        %v8457 = vadd.f32 %v8344, %v8456
        %8458 = vmatprep.mubr.bf16.mxu0 %v7358
        %8459 = vmatmul.mubr.bf16.gmra.mrb[0].mxu0 %v7357
        %v8460 = vpop.f32.mrb[0].mxu0
        %v8461 = vadd.f32 %v8348, %v8460
        %v8462 = vpop.f32.mrb[0].mxu0
        %v8463 = vadd.f32 %v8350, %v8462
        %v8464 = vpop.f32.mrb[0].mxu0
        %v8465 = vadd.f32 %v8352, %v8464
        %v8466 = vpop.f32.mrb[0].mxu0
        %v8467 = vadd.f32 %v8354, %v8466
        %8468 = vmatprep.mubr.bf16.mxu0 %v7366
        %8469 = vmatmul.mubr.bf16.gmra.mrb[0].mxu0 %v7365
        %v8470 = vpop.f32.mrb[0].mxu0
        %v8471 = vadd.f32 %v8358, %v8470
        %v8472 = vpop.f32.mrb[0].mxu0
        %v8473 = vadd.f32 %v8360, %v8472
        %v8474 = vpop.f32.mrb[0].mxu0
        %v8475 = vadd.f32 %v8362, %v8474
        %v8476 = vpop.f32.mrb[0].mxu0
        %v8477 = vadd.f32 %v8364, %v8476
        %8478 = vmatprep.mubr.bf16.mxu0 %v7374
        %8479 = vmatmul.mubr.bf16.gmra.mrb[0].mxu0 %v7373
        %v8480 = vpop.f32.mrb[0].mxu0
        %v8481 = vadd.f32 %v8368, %v8480
        %v8482 = vpop.f32.mrb[0].mxu0
        %v8483 = vadd.f32 %v8370, %v8482
        %v8484 = vpop.f32.mrb[0].mxu0
        %v8485 = vadd.f32 %v8372, %v8484
        %v8486 = vpop.f32.mrb[0].mxu0
        %v8487 = vadd.f32 %v8374, %v8486
        %8488 = vmatprep.mubr.bf16.mxu0 %v7382
        %8489 = vmatmul.mubr.bf16.gmra.mrb[0].mxu0 %v7381
        %v8490 = vpop.f32.mrb[0].mxu0
        %v8491 = vadd.f32 %v8378, %v8490
        %v8492 = vpop.f32.mrb[0].mxu0
        %v8493 = vadd.f32 %v8380, %v8492
        %v8494 = vpop.f32.mrb[0].mxu0
        %v8495 = vadd.f32 %v8382, %v8494
        %v8496 = vpop.f32.mrb[0].mxu0
        %v8497 = vadd.f32 %v8384, %v8496
        %8498 = vmatprep.mubr.bf16.mxu0 %v7390
        %8499 = vmatmul.mubr.bf16.gmra.mrb[0].mxu0 %v7389
        %v8500 = vpop.f32.mrb[0].mxu0
        %v8501 = vadd.f32 %v8388, %v8500
        %v8502 = vpop.f32.mrb[0].mxu0
        %v8503 = vadd.f32 %v8390, %v8502
        %v8504 = vpop.f32.mrb[0].mxu0
        %v8505 = vadd.f32 %v8392, %v8504
        %v8506 = vpop.f32.mrb[0].mxu0
        %v8507 = vadd.f32 %v8394, %v8506
        %8508 = vmatprep.mubr.bf16.mxu0 %v7398
        %8509 = vmatmul.mubr.bf16.gmra.mrb[0].mxu0 %v7397
        %v8510 = vpop.f32.mrb[0].mxu0
        %v8511 = vadd.f32 %v8398, %v8510
        %v8512 = vpop.f32.mrb[0].mxu0
        %v8513 = vadd.f32 %v8400, %v8512
        %v8514 = vpop.f32.mrb[0].mxu0
        %v8515 = vadd.f32 %v8402, %v8514
        %v8516 = vpop.f32.mrb[0].mxu0
        %v8517 = vadd.f32 %v8404, %v8516
        %8518 = vdwg.mxu0
        %8519 = vmatprep.subr.bf16.mxu0 %v8021
        %8520 = vmatpush1.bf16.msra.mxu0 %v8020
        %8521 = vmatprep.subr.bf16.mxu0 %v8023
        %8522 = vmatpush1.bf16.msra.mxu0 %v8022
        %8523 = vmatprep.subr.bf16.mxu0 %v8025
        %8524 = vmatpush1.bf16.msra.mxu0 %v8024
        %8525 = vmatprep.subr.bf16.mxu0 %v8027
        %8526 = vmatpush1.bf16.msra.mxu0 %v8026
        %8527 = vmatprep.subr.bf16.mxu0 %v8029
        %8528 = vmatpush1.bf16.msra.mxu0 %v8028
        %8529 = vmatprep.subr.bf16.mxu0 %v8031
        %8530 = vmatpush1.bf16.msra.mxu0 %v8030
        %8531 = vmatprep.subr.bf16.mxu0 %v8033
        %8532 = vmatpush1.bf16.msra.mxu0 %v8032
        %8533 = vmatprep.subr.bf16.mxu0 %v8035
        %8534 = vmatpush1.bf16.msra.mxu0 %v8034
        %8535 = vmatprep.subr.bf16.mxu0 %v8037
        %8536 = vmatpush1.bf16.msra.mxu0 %v8036
        %8537 = vmatprep.subr.bf16.mxu0 %v8039
        %8538 = vmatpush1.bf16.msra.mxu0 %v8038
        %8539 = vmatprep.subr.bf16.mxu0 %v8041
        %8540 = vmatpush1.bf16.msra.mxu0 %v8040
        %8541 = vmatprep.subr.bf16.mxu0 %v8043
        %8542 = vmatpush1.bf16.msra.mxu0 %v8042
        %8543 = vmatprep.subr.bf16.mxu0 %v8045
        %8544 = vmatpush1.bf16.msra.mxu0 %v8044
        %8545 = vmatprep.subr.bf16.mxu0 %v8047
        %8546 = vmatpush1.bf16.msra.mxu0 %v8046
        %8547 = vmatprep.subr.bf16.mxu0 %v8049
        %8548 = vmatpush1.bf16.msra.mxu0 %v8048
        %8549 = vmatprep.subr.bf16.mxu0 %v8051
        %8550 = vmatpush1.bf16.msra.mxu0 %v8050
        %8551 = vmatprep.mubr.bf16.mxu0 %v7344
        %8552 = vmatmul.mubr.bf16.gmra.mrb[0].mxu0 %v7343
        %v8553 = vpop.f32.mrb[0].mxu0
        %v8554 = vadd.f32 %v8441, %v8553
        %v8555 = vpop.f32.mrb[0].mxu0
        %v8556 = vadd.f32 %v8443, %v8555
        %v8557 = vpop.f32.mrb[0].mxu0
        %v8558 = vadd.f32 %v8445, %v8557
        %v8559 = vpop.f32.mrb[0].mxu0
        %v8560 = vadd.f32 %v8447, %v8559
        %8561 = vmatprep.mubr.bf16.mxu0 %v7352
        %8562 = vmatmul.mubr.bf16.gmra.mrb[0].mxu0 %v7351
        %v8563 = vpop.f32.mrb[0].mxu0
        %v8564 = vadd.f32 %v8451, %v8563
        %v8565 = vpop.f32.mrb[0].mxu0
        %v8566 = vadd.f32 %v8453, %v8565
        %v8567 = vpop.f32.mrb[0].mxu0
        %v8568 = vadd.f32 %v8455, %v8567
        %v8569 = vpop.f32.mrb[0].mxu0
        %v8570 = vadd.f32 %v8457, %v8569
        %8571 = vmatprep.mubr.bf16.mxu0 %v7360
        %8572 = vmatmul.mubr.bf16.gmra.mrb[0].mxu0 %v7359
        %v8573 = vpop.f32.mrb[0].mxu0
        %v8574 = vadd.f32 %v8461, %v8573
        %v8575 = vpop.f32.mrb[0].mxu0
        %v8576 = vadd.f32 %v8463, %v8575
        %v8577 = vpop.f32.mrb[0].mxu0
        %v8578 = vadd.f32 %v8465, %v8577
        %v8579 = vpop.f32.mrb[0].mxu0
        %v8580 = vadd.f32 %v8467, %v8579
        %8581 = vmatprep.mubr.bf16.mxu0 %v7368
        %8582 = vmatmul.mubr.bf16.gmra.mrb[0].mxu0 %v7367
        %v8583 = vpop.f32.mrb[0].mxu0
        %v8584 = vadd.f32 %v8471, %v8583
        %v8585 = vpop.f32.mrb[0].mxu0
        %v8586 = vadd.f32 %v8473, %v8585
        %v8587 = vpop.f32.mrb[0].mxu0
        %v8588 = vadd.f32 %v8475, %v8587
        %v8589 = vpop.f32.mrb[0].mxu0
        %v8590 = vadd.f32 %v8477, %v8589
        %8591 = vmatprep.mubr.bf16.mxu0 %v7376
        %8592 = vmatmul.mubr.bf16.gmra.mrb[0].mxu0 %v7375
        %v8593 = vpop.f32.mrb[0].mxu0
        %v8594 = vadd.f32 %v8481, %v8593
        %v8595 = vpop.f32.mrb[0].mxu0
        %v8596 = vadd.f32 %v8483, %v8595
        %v8597 = vpop.f32.mrb[0].mxu0
        %v8598 = vadd.f32 %v8485, %v8597
        %v8599 = vpop.f32.mrb[0].mxu0
        %v8600 = vadd.f32 %v8487, %v8599
        %8601 = vmatprep.mubr.bf16.mxu0 %v7384
        %8602 = vmatmul.mubr.bf16.gmra.mrb[0].mxu0 %v7383
        %v8603 = vpop.f32.mrb[0].mxu0
        %v8604 = vadd.f32 %v8491, %v8603
        %v8605 = vpop.f32.mrb[0].mxu0
        %v8606 = vadd.f32 %v8493, %v8605
        %v8607 = vpop.f32.mrb[0].mxu0
        %v8608 = vadd.f32 %v8495, %v8607
        %v8609 = vpop.f32.mrb[0].mxu0
        %v8610 = vadd.f32 %v8497, %v8609
        %8611 = vmatprep.mubr.bf16.mxu0 %v7392
        %8612 = vmatmul.mubr.bf16.gmra.mrb[0].mxu0 %v7391
        %v8613 = vpop.f32.mrb[0].mxu0
        %v8614 = vadd.f32 %v8501, %v8613
        %v8615 = vpop.f32.mrb[0].mxu0
        %v8616 = vadd.f32 %v8503, %v8615
        %v8617 = vpop.f32.mrb[0].mxu0
        %v8618 = vadd.f32 %v8505, %v8617
        %v8619 = vpop.f32.mrb[0].mxu0
        %v8620 = vadd.f32 %v8507, %v8619
        %8621 = vmatprep.mubr.bf16.mxu0 %v7400
        %8622 = vmatmul.mubr.bf16.gmra.mrb[0].mxu0 %v7399
        %v8623 = vpop.f32.mrb[0].mxu0
        %v8624 = vadd.f32 %v8511, %v8623
        %v8625 = vpop.f32.mrb[0].mxu0
        %v8626 = vadd.f32 %v8513, %v8625
        %v8627 = vpop.f32.mrb[0].mxu0
        %v8628 = vadd.f32 %v8515, %v8627
        %v8629 = vpop.f32.mrb[0].mxu0
        %v8630 = vadd.f32 %v8517, %v8629
        %8631 = vdwg.mxu0
        %v8632 = vadd.f32 %v5388, %v8554
        %v8633 = vadd.f32 %v5389, %v8556
        %v8634 = vadd.f32 %v5390, %v8558
        %v8635 = vadd.f32 %v5391, %v8560
        %v8636 = vadd.f32 %v5392, %v8564
        %v8637 = vadd.f32 %v5393, %v8566
        %v8638 = vadd.f32 %v5394, %v8568
        %v8639 = vadd.f32 %v5395, %v8570
        %v8640 = vadd.f32 %v5396, %v8574
        %v8641 = vadd.f32 %v5397, %v8576
        %v8642 = vadd.f32 %v5398, %v8578
        %v8643 = vadd.f32 %v5399, %v8580
        %v8644 = vadd.f32 %v5400, %v8584
        %v8645 = vadd.f32 %v5401, %v8586
        %v8646 = vadd.f32 %v5402, %v8588
        %v8647 = vadd.f32 %v5403, %v8590
        %v8648 = vadd.f32 %v5404, %v8594
        %v8649 = vadd.f32 %v5405, %v8596
        %v8650 = vadd.f32 %v5406, %v8598
        %v8651 = vadd.f32 %v5407, %v8600
        %v8652 = vadd.f32 %v5408, %v8604
        %v8653 = vadd.f32 %v5409, %v8606
        %v8654 = vadd.f32 %v5410, %v8608
        %v8655 = vadd.f32 %v5411, %v8610
        %v8656 = vadd.f32 %v5412, %v8614
        %v8657 = vadd.f32 %v5413, %v8616
        %v8658 = vadd.f32 %v5414, %v8618
        %v8659 = vadd.f32 %v5415, %v8620
        %v8660 = vadd.f32 %v5416, %v8624
        %v8661 = vadd.f32 %v5417, %v8626
        %v8662 = vadd.f32 %v5418, %v8628
        %v8663 = vadd.f32 %v5419, %v8630
        %v8664 = vadd.f32 %v8632, %v8633
        %8665 = vadd.xlane.f32.xlu0 %v8664
        %v8666 = vpop.xlane.xlu0 %8665
        %v8667 = vadd.f32 %v8634, %v8635
        %8668 = vadd.xlane.f32.xlu0 %v8667
        %v8669 = vpop.xlane.xlu0 %8668
        %v8670 = vadd.f32 %v8636, %v8637
        %8671 = vadd.xlane.f32.xlu0 %v8670
        %v8672 = vpop.xlane.xlu0 %8671
        %v8673 = vadd.f32 %v8638, %v8639
        %8674 = vadd.xlane.f32.xlu0 %v8673
        %v8675 = vpop.xlane.xlu0 %8674
        %v8676 = vadd.f32 %v8640, %v8641
        %8677 = vadd.xlane.f32.xlu0 %v8676
        %v8678 = vpop.xlane.xlu0 %8677
        %v8679 = vadd.f32 %v8642, %v8643
        %8680 = vadd.xlane.f32.xlu0 %v8679
        %v8681 = vpop.xlane.xlu0 %8680
        %v8682 = vadd.f32 %v8644, %v8645
        %8683 = vadd.xlane.f32.xlu0 %v8682
        %v8684 = vpop.xlane.xlu0 %8683
        %v8685 = vadd.f32 %v8646, %v8647
        %8686 = vadd.xlane.f32.xlu0 %v8685
        %v8687 = vpop.xlane.xlu0 %8686
        %v8688 = vadd.f32 %v8648, %v8649
        %8689 = vadd.xlane.f32.xlu0 %v8688
        %v8690 = vpop.xlane.xlu0 %8689
        %v8691 = vadd.f32 %v8650, %v8651
        %8692 = vadd.xlane.f32.xlu0 %v8691
        %v8693 = vpop.xlane.xlu0 %8692
        %v8694 = vadd.f32 %v8652, %v8653
        %8695 = vadd.xlane.f32.xlu0 %v8694
        %v8696 = vpop.xlane.xlu0 %8695
        %v8697 = vadd.f32 %v8654, %v8655
        %8698 = vadd.xlane.f32.xlu0 %v8697
        %v8699 = vpop.xlane.xlu0 %8698
        %v8700 = vadd.f32 %v8656, %v8657
        %8701 = vadd.xlane.f32.xlu0 %v8700
        %v8702 = vpop.xlane.xlu0 %8701
        %v8703 = vadd.f32 %v8658, %v8659
        %8704 = vadd.xlane.f32.xlu0 %v8703
        %v8705 = vpop.xlane.xlu0 %8704
        %v8706 = vadd.f32 %v8660, %v8661
        %8707 = vadd.xlane.f32.xlu0 %v8706
        %v8708 = vpop.xlane.xlu0 %8707
        %v8709 = vadd.f32 %v8662, %v8663
        %8710 = vadd.xlane.f32.xlu0 %v8709
        %v8711 = vpop.xlane.xlu0 %8710
        %v8712 = vmul.f32 %v8666, %v5125
        %v8713 = vmul.f32 %v8669, %v5125
        %v8714 = vmul.f32 %v8672, %v5125
        %v8715 = vmul.f32 %v8675, %v5125
        %v8716 = vmul.f32 %v8678, %v5125
        %v8717 = vmul.f32 %v8681, %v5125
        %v8718 = vmul.f32 %v8684, %v5125
        %v8719 = vmul.f32 %v8687, %v5125
        %v8720 = vmul.f32 %v8690, %v5125
        %v8721 = vmul.f32 %v8693, %v5125
        %v8722 = vmul.f32 %v8696, %v5125
        %v8723 = vmul.f32 %v8699, %v5125
        %v8724 = vmul.f32 %v8702, %v5125
        %v8725 = vmul.f32 %v8705, %v5125
        %v8726 = vmul.f32 %v8708, %v5125
        %v8727 = vmul.f32 %v8711, %v5125
        %v8728 = vsub.f32 %v8632, %v8712
        %v8729 = vsub.f32 %v8633, %v8712
        %v8730 = vsub.f32 %v8634, %v8713
        %v8731 = vsub.f32 %v8635, %v8713
        %v8732 = vsub.f32 %v8636, %v8714
        %v8733 = vsub.f32 %v8637, %v8714
        %v8734 = vsub.f32 %v8638, %v8715
        %v8735 = vsub.f32 %v8639, %v8715
        %v8736 = vsub.f32 %v8640, %v8716
        %v8737 = vsub.f32 %v8641, %v8716
        %v8738 = vsub.f32 %v8642, %v8717
        %v8739 = vsub.f32 %v8643, %v8717
        %v8740 = vsub.f32 %v8644, %v8718
        %v8741 = vsub.f32 %v8645, %v8718
        %v8742 = vsub.f32 %v8646, %v8719
        %v8743 = vsub.f32 %v8647, %v8719
        %v8744 = vsub.f32 %v8648, %v8720
        %v8745 = vsub.f32 %v8649, %v8720
        %v8746 = vsub.f32 %v8650, %v8721
        %v8747 = vsub.f32 %v8651, %v8721
        %v8748 = vsub.f32 %v8652, %v8722
        %v8749 = vsub.f32 %v8653, %v8722
        %v8750 = vsub.f32 %v8654, %v8723
        %v8751 = vsub.f32 %v8655, %v8723
        %v8752 = vsub.f32 %v8656, %v8724
        %v8753 = vsub.f32 %v8657, %v8724
        %v8754 = vsub.f32 %v8658, %v8725
        %v8755 = vsub.f32 %v8659, %v8725
        %v8756 = vsub.f32 %v8660, %v8726
        %v8757 = vsub.f32 %v8661, %v8726
        %v8758 = vsub.f32 %v8662, %v8727
        %v8759 = vsub.f32 %v8663, %v8727
        %v8760 = vmul.f32 %v8728, %v8728
        %v8761 = vmul.f32 %v8729, %v8729
        %v8762 = vmul.f32 %v8730, %v8730
        %v8763 = vmul.f32 %v8731, %v8731
        %v8764 = vmul.f32 %v8732, %v8732
        %v8765 = vmul.f32 %v8733, %v8733
        %v8766 = vmul.f32 %v8734, %v8734
        %v8767 = vmul.f32 %v8735, %v8735
        %v8768 = vmul.f32 %v8736, %v8736
        %v8769 = vmul.f32 %v8737, %v8737
        %v8770 = vmul.f32 %v8738, %v8738
        %v8771 = vmul.f32 %v8739, %v8739
        %v8772 = vmul.f32 %v8740, %v8740
        %v8773 = vmul.f32 %v8741, %v8741
        %v8774 = vmul.f32 %v8742, %v8742
        %v8775 = vmul.f32 %v8743, %v8743
        %v8776 = vmul.f32 %v8744, %v8744
        %v8777 = vmul.f32 %v8745, %v8745
        %v8778 = vmul.f32 %v8746, %v8746
        %v8779 = vmul.f32 %v8747, %v8747
        %v8780 = vmul.f32 %v8748, %v8748
        %v8781 = vmul.f32 %v8749, %v8749
        %v8782 = vmul.f32 %v8750, %v8750
        %v8783 = vmul.f32 %v8751, %v8751
        %v8784 = vmul.f32 %v8752, %v8752
        %v8785 = vmul.f32 %v8753, %v8753
        %v8786 = vmul.f32 %v8754, %v8754
        %v8787 = vmul.f32 %v8755, %v8755
        %v8788 = vmul.f32 %v8756, %v8756
        %v8789 = vmul.f32 %v8757, %v8757
        %v8790 = vmul.f32 %v8758, %v8758
        %v8791 = vmul.f32 %v8759, %v8759
        %v8792 = vadd.f32 %v8760, %v8761
        %8793 = vadd.xlane.f32.xlu0 %v8792
        %v8794 = vpop.xlane.xlu0 %8793
        %v8795 = vadd.f32 %v8762, %v8763
        %8796 = vadd.xlane.f32.xlu0 %v8795
        %v8797 = vpop.xlane.xlu0 %8796
        %v8798 = vadd.f32 %v8764, %v8765
        %8799 = vadd.xlane.f32.xlu0 %v8798
        %v8800 = vpop.xlane.xlu0 %8799
        %v8801 = vadd.f32 %v8766, %v8767
        %8802 = vadd.xlane.f32.xlu0 %v8801
        %v8803 = vpop.xlane.xlu0 %8802
        %v8804 = vadd.f32 %v8768, %v8769
        %8805 = vadd.xlane.f32.xlu0 %v8804
        %v8806 = vpop.xlane.xlu0 %8805
        %v8807 = vadd.f32 %v8770, %v8771
        %8808 = vadd.xlane.f32.xlu0 %v8807
        %v8809 = vpop.xlane.xlu0 %8808
        %v8810 = vadd.f32 %v8772, %v8773
        %8811 = vadd.xlane.f32.xlu0 %v8810
        %v8812 = vpop.xlane.xlu0 %8811
        %v8813 = vadd.f32 %v8774, %v8775
        %8814 = vadd.xlane.f32.xlu0 %v8813
        %v8815 = vpop.xlane.xlu0 %8814
        %v8816 = vadd.f32 %v8776, %v8777
        %8817 = vadd.xlane.f32.xlu0 %v8816
        %v8818 = vpop.xlane.xlu0 %8817
        %v8819 = vadd.f32 %v8778, %v8779
        %8820 = vadd.xlane.f32.xlu0 %v8819
        %v8821 = vpop.xlane.xlu0 %8820
        %v8822 = vadd.f32 %v8780, %v8781
        %8823 = vadd.xlane.f32.xlu0 %v8822
        %v8824 = vpop.xlane.xlu0 %8823
        %v8825 = vadd.f32 %v8782, %v8783
        %8826 = vadd.xlane.f32.xlu0 %v8825
        %v8827 = vpop.xlane.xlu0 %8826
        %v8828 = vadd.f32 %v8784, %v8785
        %8829 = vadd.xlane.f32.xlu0 %v8828
        %v8830 = vpop.xlane.xlu0 %8829
        %v8831 = vadd.f32 %v8786, %v8787
        %8832 = vadd.xlane.f32.xlu0 %v8831
        %v8833 = vpop.xlane.xlu0 %8832
        %v8834 = vadd.f32 %v8788, %v8789
        %8835 = vadd.xlane.f32.xlu0 %v8834
        %v8836 = vpop.xlane.xlu0 %8835
        %v8837 = vadd.f32 %v8790, %v8791
        %8838 = vadd.xlane.f32.xlu0 %v8837
        %v8839 = vpop.xlane.xlu0 %8838
        %v8840 = vmul.f32 %v8794, %v5125
        %v8841 = vmul.f32 %v8797, %v5125
        %v8842 = vmul.f32 %v8800, %v5125
        %v8843 = vmul.f32 %v8803, %v5125
        %v8844 = vmul.f32 %v8806, %v5125
        %v8845 = vmul.f32 %v8809, %v5125
        %v8846 = vmul.f32 %v8812, %v5125
        %v8847 = vmul.f32 %v8815, %v5125
        %v8848 = vmul.f32 %v8818, %v5125
        %v8849 = vmul.f32 %v8821, %v5125
        %v8850 = vmul.f32 %v8824, %v5125
        %v8851 = vmul.f32 %v8827, %v5125
        %v8852 = vmul.f32 %v8830, %v5125
        %v8853 = vmul.f32 %v8833, %v5125
        %v8854 = vmul.f32 %v8836, %v5125
        %v8855 = vmul.f32 %v8839, %v5125
        %v8856 = vadd.f32 %v8840, 1e-12
        %v8857 = vadd.f32 %v8841, 1e-12
        %v8858 = vadd.f32 %v8842, 1e-12
        %v8859 = vadd.f32 %v8843, 1e-12
        %v8860 = vadd.f32 %v8844, 1e-12
        %v8861 = vadd.f32 %v8845, 1e-12
        %v8862 = vadd.f32 %v8846, 1e-12
        %v8863 = vadd.f32 %v8847, 1e-12
        %v8864 = vadd.f32 %v8848, 1e-12
        %v8865 = vadd.f32 %v8849, 1e-12
        %v8866 = vadd.f32 %v8850, 1e-12
        %v8867 = vadd.f32 %v8851, 1e-12
        %v8868 = vadd.f32 %v8852, 1e-12
        %v8869 = vadd.f32 %v8853, 1e-12
        %v8870 = vadd.f32 %v8854, 1e-12
        %v8871 = vadd.f32 %v8855, 1e-12
        %v8872 = vrsqrt.pop %v8856
        %v8873 = vrsqrt.pop %v8857
        %v8874 = vrsqrt.pop %v8858
        %v8875 = vrsqrt.pop %v8859
        %v8876 = vrsqrt.pop %v8860
        %v8877 = vrsqrt.pop %v8861
        %v8878 = vrsqrt.pop %v8862
        %v8879 = vrsqrt.pop %v8863
        %v8880 = vrsqrt.pop %v8864
        %v8881 = vrsqrt.pop %v8865
        %v8882 = vrsqrt.pop %v8866
        %v8883 = vrsqrt.pop %v8867
        %v8884 = vrsqrt.pop %v8868
        %v8885 = vrsqrt.pop %v8869
        %v8886 = vrsqrt.pop %v8870
        %v8887 = vrsqrt.pop %v8871
        %v8888 = vmul.f32 %v8728, %v8872
        %v8889 = vmul.f32 %v8729, %v8872
        %v8890 = vmul.f32 %v8730, %v8873
        %v8891 = vmul.f32 %v8731, %v8873
        %v8892 = vmul.f32 %v8732, %v8874
        %v8893 = vmul.f32 %v8733, %v8874
        %v8894 = vmul.f32 %v8734, %v8875
        %v8895 = vmul.f32 %v8735, %v8875
        %v8896 = vmul.f32 %v8736, %v8876
        %v8897 = vmul.f32 %v8737, %v8876
        %v8898 = vmul.f32 %v8738, %v8877
        %v8899 = vmul.f32 %v8739, %v8877
        %v8900 = vmul.f32 %v8740, %v8878
        %v8901 = vmul.f32 %v8741, %v8878
        %v8902 = vmul.f32 %v8742, %v8879
        %v8903 = vmul.f32 %v8743, %v8879
        %v8904 = vmul.f32 %v8744, %v8880
        %v8905 = vmul.f32 %v8745, %v8880
        %v8906 = vmul.f32 %v8746, %v8881
        %v8907 = vmul.f32 %v8747, %v8881
        %v8908 = vmul.f32 %v8748, %v8882
        %v8909 = vmul.f32 %v8749, %v8882
        %v8910 = vmul.f32 %v8750, %v8883
        %v8911 = vmul.f32 %v8751, %v8883
        %v8912 = vmul.f32 %v8752, %v8884
        %v8913 = vmul.f32 %v8753, %v8884
        %v8914 = vmul.f32 %v8754, %v8885
        %v8915 = vmul.f32 %v8755, %v8885
        %v8916 = vmul.f32 %v8756, %v8886
        %v8917 = vmul.f32 %v8757, %v8886
        %v8918 = vmul.f32 %v8758, %v8887
        %v8919 = vmul.f32 %v8759, %v8887
        %v8921 = vlaneseq
        %v8922 = vshrl.u32 %v8921, 7
        %v8923 = vsub.s32 0, %v8922
        %v8924 = vrot.slane %v848, %v8923
        %v8925 = vlaneseq
        %v8926 = vshrl.u32 %v8925, 7
        %v8927 = vsub.s32 1, %v8926
        %v8928 = vrot.slane %v848, %v8927
        %v8931 = vmul.f32 %v8888, %v8924
        %v8932 = vmul.f32 %v8889, %v8928
        %v8933 = vmul.f32 %v8890, %v8924
        %v8934 = vmul.f32 %v8891, %v8928
        %v8935 = vmul.f32 %v8892, %v8924
        %v8936 = vmul.f32 %v8893, %v8928
        %v8937 = vmul.f32 %v8894, %v8924
        %v8938 = vmul.f32 %v8895, %v8928
        %v8939 = vmul.f32 %v8896, %v8924
        %v8940 = vmul.f32 %v8897, %v8928
        %v8941 = vmul.f32 %v8898, %v8924
        %v8942 = vmul.f32 %v8899, %v8928
        %v8943 = vmul.f32 %v8900, %v8924
        %v8944 = vmul.f32 %v8901, %v8928
        %v8945 = vmul.f32 %v8902, %v8924
        %v8946 = vmul.f32 %v8903, %v8928
        %v8947 = vmul.f32 %v8904, %v8924
        %v8948 = vmul.f32 %v8905, %v8928
        %v8949 = vmul.f32 %v8906, %v8924
        %v8950 = vmul.f32 %v8907, %v8928
        %v8951 = vmul.f32 %v8908, %v8924
        %v8952 = vmul.f32 %v8909, %v8928
        %v8953 = vmul.f32 %v8910, %v8924
        %v8954 = vmul.f32 %v8911, %v8928
        %v8955 = vmul.f32 %v8912, %v8924
        %v8956 = vmul.f32 %v8913, %v8928
        %v8957 = vmul.f32 %v8914, %v8924
        %v8958 = vmul.f32 %v8915, %v8928
        %v8959 = vmul.f32 %v8916, %v8924
        %v8960 = vmul.f32 %v8917, %v8928
        %v8961 = vmul.f32 %v8918, %v8924
        %v8962 = vmul.f32 %v8919, %v8928
        %v8964 = vlaneseq
        %v8965 = vshrl.u32 %v8964, 7
        %v8966 = vsub.s32 0, %v8965
        %v8967 = vrot.slane %v850, %v8966
        %v8968 = vlaneseq
        %v8969 = vshrl.u32 %v8968, 7
        %v8970 = vsub.s32 1, %v8969
        %v8971 = vrot.slane %v850, %v8970
        %v8974 = vadd.f32 %v8931, %v8967
        %v8975 = vadd.f32 %v8932, %v8971
        %v8976 = vadd.f32 %v8933, %v8967
        %v8977 = vadd.f32 %v8934, %v8971
        %v8978 = vadd.f32 %v8935, %v8967
        %v8979 = vadd.f32 %v8936, %v8971
        %v8980 = vadd.f32 %v8937, %v8967
        %v8981 = vadd.f32 %v8938, %v8971
        %v8982 = vadd.f32 %v8939, %v8967
        %v8983 = vadd.f32 %v8940, %v8971
        %v8984 = vadd.f32 %v8941, %v8967
        %v8985 = vadd.f32 %v8942, %v8971
        %v8986 = vadd.f32 %v8943, %v8967
        %v8987 = vadd.f32 %v8944, %v8971
        %v8988 = vadd.f32 %v8945, %v8967
        %v8989 = vadd.f32 %v8946, %v8971
        %v8990 = vadd.f32 %v8947, %v8967
        %v8991 = vadd.f32 %v8948, %v8971
        %v8992 = vadd.f32 %v8949, %v8967
        %v8993 = vadd.f32 %v8950, %v8971
        %v8994 = vadd.f32 %v8951, %v8967
        %v8995 = vadd.f32 %v8952, %v8971
        %v8996 = vadd.f32 %v8953, %v8967
        %v8997 = vadd.f32 %v8954, %v8971
        %v8998 = vadd.f32 %v8955, %v8967
        %v8999 = vadd.f32 %v8956, %v8971
        %v9000 = vadd.f32 %v8957, %v8967
        %v9001 = vadd.f32 %v8958, %v8971
        %v9002 = vadd.f32 %v8959, %v8967
        %v9003 = vadd.f32 %v8960, %v8971
        %v9004 = vadd.f32 %v8961, %v8967
        %v9005 = vadd.f32 %v8962, %v8971
        %9006 = vst [vmem:[#allocation7] sm:$0xff] %v8974
        %9007 = vst [vmem:[#allocation7 + $0x8] sm:$0xff] %v8975
        %9008 = vst [vmem:[#allocation7 + $0x10] sm:$0xff] %v8976
        %9009 = vst [vmem:[#allocation7 + $0x18] sm:$0xff] %v8977
        %9010 = vst [vmem:[#allocation7 + $0x20] sm:$0xff] %v8978
        %9011 = vst [vmem:[#allocation7 + $0x28] sm:$0xff] %v8979
        %9012 = vst [vmem:[#allocation7 + $0x30] sm:$0xff] %v8980
        %9013 = vst [vmem:[#allocation7 + $0x38] sm:$0xff] %v8981
        %9014 = vst [vmem:[#allocation7 + $0x40] sm:$0xff] %v8982
        %9015 = vst [vmem:[#allocation7 + $0x48] sm:$0xff] %v8983
        %9016 = vst [vmem:[#allocation7 + $0x50] sm:$0xff] %v8984
        %9017 = vst [vmem:[#allocation7 + $0x58] sm:$0xff] %v8985
        %9018 = vst [vmem:[#allocation7 + $0x60] sm:$0xff] %v8986
        %9019 = vst [vmem:[#allocation7 + $0x68] sm:$0xff] %v8987
        %9020 = vst [vmem:[#allocation7 + $0x70] sm:$0xff] %v8988
        %9021 = vst [vmem:[#allocation7 + $0x78] sm:$0xff] %v8989
        %9022 = vst [vmem:[#allocation7 + $0x80] sm:$0xff] %v8990
        %9023 = vst [vmem:[#allocation7 + $0x88] sm:$0xff] %v8991
        %9024 = vst [vmem:[#allocation7 + $0x90] sm:$0xff] %v8992
        %9025 = vst [vmem:[#allocation7 + $0x98] sm:$0xff] %v8993
        %9026 = vst [vmem:[#allocation7 + $0xa0] sm:$0xff] %v8994
        %9027 = vst [vmem:[#allocation7 + $0xa8] sm:$0xff] %v8995
        %9028 = vst [vmem:[#allocation7 + $0xb0] sm:$0xff] %v8996
        %9029 = vst [vmem:[#allocation7 + $0xb8] sm:$0xff] %v8997
        %9030 = vst [vmem:[#allocation7 + $0xc0] sm:$0xff] %v8998
        %9031 = vst [vmem:[#allocation7 + $0xc8] sm:$0xff] %v8999
        %9032 = vst [vmem:[#allocation7 + $0xd0] sm:$0xff] %v9000
        %9033 = vst [vmem:[#allocation7 + $0xd8] sm:$0xff] %v9001
        %9034 = vst [vmem:[#allocation7 + $0xe0] sm:$0xff] %v9002
        %9035 = vst [vmem:[#allocation7 + $0xe8] sm:$0xff] %v9003
        %9036 = vst [vmem:[#allocation7 + $0xf0] sm:$0xff] %v9004
        %9037 = vst [vmem:[#allocation7 + $0xf8] sm:$0xff] %v9005
        // Predicated region
        $region61: #{bert_encoder_forward.1} parent=47 // pred_check
          %p9038 = pneg %p210
        $region62: #{bert_encoder_forward.1} parent=47 // pred_check_branch
          %9040 = sbr.rel (%p9038) target = $region64
        $region63: #{bert_encoder_forward.1} parent=47 // pred_region
          %s9042 = ssub.s32 4096, 4096
          %9043 = vsyncadd [#allocation4], %s9042
          %s9044 = sshll.u32 [#allocation7], 4
          %s9045 = int_to_ptr.vmem [resolvable:$true] %s9044
          %9050 = dma.vmem_to_hbm [thread:$0]  %s9045, 4096, %s7, [#allocation4], 256, 256, 16
        $region64: #{bert_encoder_forward.1} parent=47 // pred_fallthru
          _
        // Predicated region
        $region65: #{bert_encoder_forward.1} parent=47 // pred_check
          %p9051 = pneg %p210
        $region66: #{bert_encoder_forward.1} parent=47 // pred_check_branch
          %9053 = sbr.rel (%p9051) target = $region68
        $region67: #{bert_encoder_forward.1} parent=47 // pred_region
          %9054 = dma.done [#allocation4], 4096
        $region68: #{bert_encoder_forward.1} parent=47 // pred_fallthru
          _
      $region48: #{bert_encoder_forward.1} parent=5 // pred_fallthru
        _
      %p9055 = scmp.le.s32.totalorder 2, %s20
      // Predicated region
      $region69: #{bert_encoder_forward.1} parent=5 // pred_check
        %p9056 = pneg %p9055
      $region70: #{bert_encoder_forward.1} parent=5 // pred_check_branch
        %9058 = sbr.rel (%p9056) target = $region72
      $region71: #{bert_encoder_forward.1} parent=5 // pred_region
        %s9059 = ssub.s32 %s20, 2
      $region72: #{bert_encoder_forward.1} parent=5 // pred_fallthru
        _
    $region6: #{bert_encoder_forward.1} parent=1 // loop_footer
      %s24 = sadd.s32 1, %s20
    $region7: #{bert_encoder_forward.1} parent=1 // loop_footer_branch
      %19 = sbr.rel target = $region3
    $region8: #{bert_encoder_forward.1} parent=1 // loop_exit
      _
    %9060 = vsyncpa [#allocation3], 1
    %s9061 = scalar_lea.sflag [#allocation3], 1
    %9062 = vsyncpa %s9061, 1
    %9063 = vsyncpa [#allocation6], 1
    %s9064 = scalar_lea.sflag [#allocation6], 1
    %9065 = vsyncpa %s9064, 1
    %9066 = vsyncpa [#allocation4], 1
    %s9067 = scalar_lea.sflag [#allocation4], 1
    %9068 = vsyncpa %s9067, 1

</llo_original>
